<compile_context>
chip_gen: v6e
topology: v6e:2x2x1
jax: 0.10.0
libtpu: 0.0.40
codegen_flags: <defaults>
</compile_context>

<pallas_src>
import numpy as np
import jax
import jax.numpy as jnp
from jax.experimental import pallas as pl
from jax.experimental.pallas import tpu as pltpu


DIMS = [3600, 1800, 300, 100, 20, 1]          # PyTorch layer sizes
PD_IN = [3840, 1920, 384, 128, 128]           # padded input dim per layer
PD_OUT = [1920, 384, 128, 128, 128]           # padded output dim per layer


# ---------------------------------------------------------------------------
# Fused kernel: int8-W1 K-streamed accumulation + small-MLP tail on last step
# ---------------------------------------------------------------------------
def _dense_relu(h, w_ref, b_ref):
    z = jnp.dot(h.astype(jnp.bfloat16), w_ref[...],
                preferred_element_type=jnp.float32) + b_ref[...]
    return jnp.maximum(z, 0.0)


def classify_fused_kernel(x_ref, w1_ref, s1_ref, b1_ref,
                          w2_ref, b2_ref, w3_ref, b3_ref,
                          w4_ref, b4_ref, w5_ref, b5_ref,
                          o_ref, acc_ref):
    k = pl.program_id(0)

    @pl.when(k == 0)
    def _():
        acc_ref[...] = jnp.zeros_like(acc_ref)

    # Layer-1 partial product for this K tile.  W1 is stored int8 in HBM; the
    # int8 -> bf16 widen is a VPU op (free filler while HBM-bound), so the MXU
    # always sees a bf16 x bf16 contraction with f32 accumulation.
    acc_ref[...] += jnp.dot(x_ref[...], w1_ref[...].astype(jnp.bfloat16),
                            preferred_element_type=jnp.float32)

    @pl.when(k == pl.num_programs(0) - 1)
    def _():
        # Fold per-output-channel dequant scale into the epilogue, then bias/ReLU.
        h = jnp.maximum(acc_ref[...] * s1_ref[...] + b1_ref[...], 0.0)
        h = _dense_relu(h, w2_ref, b2_ref)                 # relu(.@W2+b2)
        h = _dense_relu(h, w3_ref, b3_ref)                 # relu(.@W3+b3)
        h = _dense_relu(h, w4_ref, b4_ref)                 # relu(.@W4+b4)
        h = _dense_relu(h, w5_ref, b5_ref)                 # relu(.@W5+b5)
        o_ref[...] = jax.nn.sigmoid(h).astype(o_ref.dtype)


def classify_pallas(xp, w1q, s1, b1, tail, *, tk=1280):
    """xp: (Bp, Kp) bf16; w1q: (Kp, N1) int8; s1, b1: (1, N1) f32;
    tail: list of (w bf16 (in,out), b f32 (1,out)) already padded/laid out."""
    Bp, Kp = xp.shape
    N1 = w1q.shape[1]
    Nout = tail[-1][0].shape[1]
    assert Kp % tk == 0

    in_specs = [
        pl.BlockSpec((Bp, tk), lambda k: (0, k)),      # x : K-streamed
        pl.BlockSpec((tk, N1), lambda k: (k, 0)),      # W1: K-streamed, full N
        pl.BlockSpec((1, N1), lambda k: (0, 0)),       # s1: resident
        pl.BlockSpec((1, N1), lambda k: (0, 0)),       # b1: resident
    ]
    flat = []
    for w, b in tail:                                  # tail weights: resident
        in_specs.append(pl.BlockSpec(w.shape, lambda k: (0, 0)))
        in_specs.append(pl.BlockSpec(b.shape, lambda k: (0, 0)))
        flat.extend([w, b])

    # Advisory cost: the kernel is HBM-bandwidth bound on the int8 W1 stream.
    flops = 2 * Bp * Kp * N1 + sum(2 * Bp * w.shape[0] * w.shape[1] for w, _ in tail)
    bytes_accessed = (Bp * Kp * 2                      # x  (bf16)
                      + Kp * N1 * 1                    # W1 (int8)
                      + 2 * N1 * 4                     # s1, b1 (f32)
                      + sum(w.size * 2 + b.size * 4 for w, b in tail)
                      + Bp * Nout * 4)                 # output (f32)

    return pl.pallas_call(
        classify_fused_kernel,
        out_shape=jax.ShapeDtypeStruct((Bp, Nout), jnp.float32),
        grid_spec=pltpu.PrefetchScalarGridSpec(
            num_scalar_prefetch=0,
            grid=(Kp // tk,),
            in_specs=in_specs,
            out_specs=pl.BlockSpec((Bp, Nout), lambda k: (0, 0)),
            scratch_shapes=[pltpu.VMEM((Bp, N1), jnp.float32)],
        ),
        compiler_params=pltpu.CompilerParams(
            dimension_semantics=("arbitrary",),        # K is a reduction axis
            vmem_limit_bytes=32 << 20,                 # ~8.5 MB used; safe on v7x (64 MiB)
        ),
        cost_estimate=pl.CostEstimate(flops=flops,
                                      transcendentals=Bp * Nout,
                                      bytes_accessed=bytes_accessed),
    )(xp, w1q, s1, b1, *flat)


# ---------------------------------------------------------------------------
# One-time parameter preparation (hoisted out of the forward path)
# ---------------------------------------------------------------------------
def _round_up(n, m):
    return ((n + m - 1) // m) * m


def _pad2d(x, rows, cols):
    return jnp.pad(x, ((0, rows - x.shape[0]), (0, cols - x.shape[1])))


def init_params(key):
    """PyTorch nn.Linear-style init; weights stored (out, in) like torch."""
    params = []
    for i in range(5):
        fan_in, fan_out = DIMS[i], DIMS[i + 1]
        key, kw, kb = jax.random.split(key, 3)
        bound = 1.0 / np.sqrt(fan_in)
        w = jax.random.uniform(kw, (fan_out, fan_in), jnp.float32, -bound, bound)
        b = jax.random.uniform(kb, (fan_out,), jnp.float32, -bound, bound)
        params.append((w, b))
    return params


def prepare_params(params):
    """Done ONCE: transpose to (in,out), zero-pad, quantize W1 to int8 with a
    per-output-channel scale, cast tail weights to bf16.  Returns device arrays
    in exactly the layout the kernel's BlockSpecs expect."""
    # Layer 1: int8 + per-output-channel f32 scale (symmetric quant).
    w1t = _pad2d(params[0][0].T, PD_IN[0], PD_OUT[0])             # (3840, 1920) f32
    absmax = jnp.max(jnp.abs(w1t), axis=0, keepdims=True)          # (1, 1920)
    s1 = jnp.where(absmax > 0, absmax / 127.0, 1.0)
    w1q = jnp.clip(jnp.round(w1t / s1), -127.0, 127.0).astype(jnp.int8)
    b1 = _pad2d(params[0][1][None, :], 1, PD_OUT[0])

    tail = []
    for i in range(1, 5):
        w, b = params[i]
        tail.append((
            _pad2d(w.T, PD_IN[i], PD_OUT[i]).astype(jnp.bfloat16),
            _pad2d(b[None, :], 1, PD_OUT[i]),
        ))
    return {"w1": w1q, "s1": s1, "b1": b1, "tail": tail}


# ---------------------------------------------------------------------------
# Forward pass (only pads/casts x; all weight layout work already done)
# ---------------------------------------------------------------------------
def classify_forward(x, prepped):
    B = x.shape[0]
    Bp = _round_up(max(B, 8), 8)
    xp = _pad2d(x, Bp, PD_IN[0]).astype(jnp.bfloat16)
    out_p = classify_pallas(xp, prepped["w1"], prepped["s1"], prepped["b1"],
                            prepped["tail"], tk=1280)
    return out_p[:B, :1]


classify_forward_jit = jax.jit(classify_forward)


def classify_reference(x, params):
    h = x
    for w, b in params:
        h = jnp.maximum(h @ w.T + b, 0.0)
    return jax.nn.sigmoid(h)


if __name__ == "__main__":
    key = jax.random.PRNGKey(0)
    kx, kp = jax.random.split(key)

    B = 4
    x = jax.random.normal(kx, (B, 3600), jnp.float32)
    params = init_params(kp)
    prepped = jax.tree_util.tree_map(lambda a: a, prepare_params(params))  # one-time prep

    out = classify_forward_jit(x, prepped)
    out = jax.block_until_ready(out)

    ref = classify_reference(x, params)
    assert out.shape == (B, 1), out.shape
    np.testing.assert_allclose(np.asarray(out), np.asarray(ref),
                               rtol=1e-3, atol=1e-2)
    print("KERNEL_OK")
</pallas_src>

<mosaic_0001>
module attributes {stable_mosaic.version = 11 : i64} {
  func.func @classify_fused_kernel(%arg0: i32, %arg1: memref<8x1280xbf16, #tpu.memory_space<vmem>>, %arg2: memref<1280x1920xi8, #tpu.memory_space<vmem>>, %arg3: memref<1x1920xf32, #tpu.memory_space<vmem>>, %arg4: memref<1x1920xf32, #tpu.memory_space<vmem>>, %arg5: memref<1920x384xbf16, #tpu.memory_space<vmem>>, %arg6: memref<1x384xf32, #tpu.memory_space<vmem>>, %arg7: memref<384x128xbf16, #tpu.memory_space<vmem>>, %arg8: memref<1x128xf32, #tpu.memory_space<vmem>>, %arg9: memref<128x128xbf16, #tpu.memory_space<vmem>>, %arg10: memref<1x128xf32, #tpu.memory_space<vmem>>, %arg11: memref<128x128xbf16, #tpu.memory_space<vmem>>, %arg12: memref<1x128xf32, #tpu.memory_space<vmem>>, %arg13: memref<8x128xf32, #tpu.memory_space<vmem>>, %arg14: memref<8x1920xf32, #tpu.memory_space<vmem>>) attributes {dimension_semantics = [#tpu.dimension_semantics<arbitrary>], iteration_bounds = array<i64: 3>, scalar_prefetch = 0 : i64, scratch_operands = 1 : i64, tpu.core_type = #tpu.core_type<tc>, window_params = [{transform_indices = @transform_0, window_bounds = array<i64: 8, 1280>}, {transform_indices = @transform_1, window_bounds = array<i64: 1280, 1920>}, {pipeline_mode = #tpu.pipeline_mode<synchronous>, transform_indices = @transform_2, window_bounds = array<i64: 1, 1920>}, {pipeline_mode = #tpu.pipeline_mode<synchronous>, transform_indices = @transform_3, window_bounds = array<i64: 1, 1920>}, {pipeline_mode = #tpu.pipeline_mode<synchronous>, transform_indices = @transform_4, window_bounds = array<i64: 1920, 384>}, {pipeline_mode = #tpu.pipeline_mode<synchronous>, transform_indices = @transform_5, window_bounds = array<i64: 1, 384>}, {pipeline_mode = #tpu.pipeline_mode<synchronous>, transform_indices = @transform_6, window_bounds = array<i64: 384, 128>}, {pipeline_mode = #tpu.pipeline_mode<synchronous>, transform_indices = @transform_7, window_bounds = array<i64: 1, 128>}, {pipeline_mode = #tpu.pipeline_mode<synchronous>, transform_indices = @transform_8, window_bounds = array<i64: 128, 128>}, {pipeline_mode = #tpu.pipeline_mode<synchronous>, transform_indices = @transform_9, window_bounds = array<i64: 1, 128>}, {pipeline_mode = #tpu.pipeline_mode<synchronous>, transform_indices = @transform_10, window_bounds = array<i64: 128, 128>}, {pipeline_mode = #tpu.pipeline_mode<synchronous>, transform_indices = @transform_11, window_bounds = array<i64: 1, 128>}, {pipeline_mode = #tpu.pipeline_mode<synchronous>, transform_indices = @transform_12, window_bounds = array<i64: 8, 128>}]} {
    %c0_i32 = arith.constant 0 : i32
    %0 = arith.cmpi eq, %arg0, %c0_i32 : i32
    %1 = arith.extui %0 : i1 to i32
    %c0_i32_0 = arith.constant 0 : i32
    %2 = arith.cmpi ne, %1, %c0_i32_0 : i32
    scf.if %2 {
      %cst_9 = arith.constant 0.000000e+00 : f32
      %13 = vector.broadcast %cst_9 : f32 to vector<8x1920xf32>
      %c0_10 = arith.constant 0 : index
      %c0_11 = arith.constant 0 : index
      %14 = vector.load %arg14[%c0_10, %c0_11] : memref<8x1920xf32, #tpu.memory_space<vmem>>, vector<8x1920xf32>
      tpu.vector_store %arg14[%c0_10, %c0_11], %13 {strides = array<i32>} : memref<8x1920xf32, #tpu.memory_space<vmem>>, vector<8x1920xf32>,
    } else {
    }
    %c0 = arith.constant 0 : index
    %c0_1 = arith.constant 0 : index
    %3 = vector.load %arg14[%c0, %c0_1] : memref<8x1920xf32, #tpu.memory_space<vmem>>, vector<8x1920xf32>
    %c0_2 = arith.constant 0 : index
    %c0_3 = arith.constant 0 : index
    %4 = vector.load %arg1[%c0_2, %c0_3] : memref<8x1280xbf16, #tpu.memory_space<vmem>>, vector<8x1280xbf16>
    %c0_4 = arith.constant 0 : index
    %c0_5 = arith.constant 0 : index
    %5 = vector.load %arg2[%c0_4, %c0_5] : memref<1280x1920xi8, #tpu.memory_space<vmem>>, vector<1280x1920xi8>
    %6 = arith.sitofp %5 : vector<1280x1920xi8> to vector<1280x1920xbf16>
    %cst = arith.constant dense<0.000000e+00> : vector<8x1920xf32>
    %7 = tpu.matmul %4, %6, %cst {dimension_numbers = #tpu.dot_dimension_numbers<[1], [0], [0], [1], [0, 0, 1, 1], [], []>} : vector<8x1280xbf16>, vector<1280x1920xbf16>, vector<8x1920xf32> -> vector<8x1920xf32>
    %8 = arith.addf %3, %7 : vector<8x1920xf32>
    %c0_6 = arith.constant 0 : index
    %c0_7 = arith.constant 0 : index
    %9 = vector.load %arg14[%c0_6, %c0_7] : memref<8x1920xf32, #tpu.memory_space<vmem>>, vector<8x1920xf32>
    tpu.vector_store %arg14[%c0_6, %c0_7], %8 {strides = array<i32>} : memref<8x1920xf32, #tpu.memory_space<vmem>>, vector<8x1920xf32>,
    %c2_i32 = arith.constant 2 : i32
    %10 = arith.cmpi eq, %arg0, %c2_i32 : i32
    %11 = arith.extui %10 : i1 to i32
    %c0_i32_8 = arith.constant 0 : i32
    %12 = arith.cmpi ne, %11, %c0_i32_8 : i32
    scf.if %12 {
      %c0_9 = arith.constant 0 : index
      %c0_10 = arith.constant 0 : index
      %13 = vector.load %arg14[%c0_9, %c0_10] : memref<8x1920xf32, #tpu.memory_space<vmem>>, vector<8x1920xf32>
      %c0_11 = arith.constant 0 : index
      %c0_12 = arith.constant 0 : index
      %14 = vector.load %arg3[%c0_11, %c0_12] : memref<1x1920xf32, #tpu.memory_space<vmem>>, vector<1x1920xf32>
      %15 = vector.broadcast %14 : vector<1x1920xf32> to vector<8x1920xf32>
      %16 = arith.mulf %13, %15 : vector<8x1920xf32>
      %c0_13 = arith.constant 0 : index
      %c0_14 = arith.constant 0 : index
      %17 = vector.load %arg4[%c0_13, %c0_14] : memref<1x1920xf32, #tpu.memory_space<vmem>>, vector<1x1920xf32>
      %18 = vector.broadcast %17 : vector<1x1920xf32> to vector<8x1920xf32>
      %19 = arith.addf %16, %18 : vector<8x1920xf32>
      %cst_15 = arith.constant 0.000000e+00 : f32
      %20 = vector.broadcast %cst_15 : f32 to vector<8x1920xf32>
      %21 = arith.maximumf %19, %20 : vector<8x1920xf32>
      %22 = arith.truncf %21 : vector<8x1920xf32> to vector<8x1920xbf16>
      %c0_16 = arith.constant 0 : index
      %c0_17 = arith.constant 0 : index
      %23 = vector.load %arg5[%c0_16, %c0_17] : memref<1920x384xbf16, #tpu.memory_space<vmem>>, vector<1920x384xbf16>
      %cst_18 = arith.constant dense<0.000000e+00> : vector<8x384xf32>
      %24 = tpu.matmul %22, %23, %cst_18 {dimension_numbers = #tpu.dot_dimension_numbers<[1], [0], [0], [1], [0, 0, 1, 1], [], []>} : vector<8x1920xbf16>, vector<1920x384xbf16>, vector<8x384xf32> -> vector<8x384xf32>
      %c0_19 = arith.constant 0 : index
      %c0_20 = arith.constant 0 : index
      %25 = vector.load %arg6[%c0_19, %c0_20] : memref<1x384xf32, #tpu.memory_space<vmem>>, vector<1x384xf32>
      %26 = vector.broadcast %25 : vector<1x384xf32> to vector<8x384xf32>
      %27 = arith.addf %24, %26 : vector<8x384xf32>
      %cst_21 = arith.constant 0.000000e+00 : f32
      %28 = vector.broadcast %cst_21 : f32 to vector<8x384xf32>
      %29 = arith.maximumf %27, %28 : vector<8x384xf32>
      %30 = arith.truncf %29 : vector<8x384xf32> to vector<8x384xbf16>
      %c0_22 = arith.constant 0 : index
      %c0_23 = arith.constant 0 : index
      %31 = vector.load %arg7[%c0_22, %c0_23] : memref<384x128xbf16, #tpu.memory_space<vmem>>, vector<384x128xbf16>
      %cst_24 = arith.constant dense<0.000000e+00> : vector<8x128xf32>
      %32 = tpu.matmul %30, %31, %cst_24 {dimension_numbers = #tpu.dot_dimension_numbers<[1], [0], [0], [1], [0, 0, 1, 1], [], []>} : vector<8x384xbf16>, vector<384x128xbf16>, vector<8x128xf32> -> vector<8x128xf32>
      %c0_25 = arith.constant 0 : index
      %c0_26 = arith.constant 0 : index
      %33 = vector.load %arg8[%c0_25, %c0_26] : memref<1x128xf32, #tpu.memory_space<vmem>>, vector<1x128xf32>
      %34 = vector.broadcast %33 : vector<1x128xf32> to vector<8x128xf32>
      %35 = arith.addf %32, %34 : vector<8x128xf32>
      %cst_27 = arith.constant 0.000000e+00 : f32
      %36 = vector.broadcast %cst_27 : f32 to vector<8x128xf32>
      %37 = arith.maximumf %35, %36 : vector<8x128xf32>
      %38 = arith.truncf %37 : vector<8x128xf32> to vector<8x128xbf16>
      %c0_28 = arith.constant 0 : index
      %c0_29 = arith.constant 0 : index
      %39 = vector.load %arg9[%c0_28, %c0_29] : memref<128x128xbf16, #tpu.memory_space<vmem>>, vector<128x128xbf16>
      %cst_30 = arith.constant dense<0.000000e+00> : vector<8x128xf32>
      %40 = tpu.matmul %38, %39, %cst_30 {dimension_numbers = #tpu.dot_dimension_numbers<[1], [0], [0], [1], [0, 0, 1, 1], [], []>} : vector<8x128xbf16>, vector<128x128xbf16>, vector<8x128xf32> -> vector<8x128xf32>
      %c0_31 = arith.constant 0 : index
      %c0_32 = arith.constant 0 : index
      %41 = vector.load %arg10[%c0_31, %c0_32] : memref<1x128xf32, #tpu.memory_space<vmem>>, vector<1x128xf32>
      %42 = vector.broadcast %41 : vector<1x128xf32> to vector<8x128xf32>
      %43 = arith.addf %40, %42 : vector<8x128xf32>
      %cst_33 = arith.constant 0.000000e+00 : f32
      %44 = vector.broadcast %cst_33 : f32 to vector<8x128xf32>
      %45 = arith.maximumf %43, %44 : vector<8x128xf32>
      %46 = arith.truncf %45 : vector<8x128xf32> to vector<8x128xbf16>
      %c0_34 = arith.constant 0 : index
      %c0_35 = arith.constant 0 : index
      %47 = vector.load %arg11[%c0_34, %c0_35] : memref<128x128xbf16, #tpu.memory_space<vmem>>, vector<128x128xbf16>
      %cst_36 = arith.constant dense<0.000000e+00> : vector<8x128xf32>
      %48 = tpu.matmul %46, %47, %cst_36 {dimension_numbers = #tpu.dot_dimension_numbers<[1], [0], [0], [1], [0, 0, 1, 1], [], []>} : vector<8x128xbf16>, vector<128x128xbf16>, vector<8x128xf32> -> vector<8x128xf32>
      %c0_37 = arith.constant 0 : index
      %c0_38 = arith.constant 0 : index
      %49 = vector.load %arg12[%c0_37, %c0_38] : memref<1x128xf32, #tpu.memory_space<vmem>>, vector<1x128xf32>
      %50 = vector.broadcast %49 : vector<1x128xf32> to vector<8x128xf32>
      %51 = arith.addf %48, %50 : vector<8x128xf32>
      %cst_39 = arith.constant 0.000000e+00 : f32
      %52 = vector.broadcast %cst_39 : f32 to vector<8x128xf32>
      %53 = arith.maximumf %51, %52 : vector<8x128xf32>
      %54 = arith.negf %53 : vector<8x128xf32>
      %55 = math.exp %54 : vector<8x128xf32>
      %cst_40 = arith.constant 1.000000e+00 : f32
      %56 = vector.broadcast %cst_40 : f32 to vector<8x128xf32>
      %57 = arith.addf %56, %55 : vector<8x128xf32>
      %58 = arith.divf %56, %57 : vector<8x128xf32>
      %c0_41 = arith.constant 0 : index
      %c0_42 = arith.constant 0 : index
      %59 = vector.load %arg13[%c0_41, %c0_42] : memref<8x128xf32, #tpu.memory_space<vmem>>, vector<8x128xf32>
      tpu.vector_store %arg13[%c0_41, %c0_42], %58 {strides = array<i32>} : memref<8x128xf32, #tpu.memory_space<vmem>>, vector<8x128xf32>,
    } else {
    }
    return
  }
  func.func @transform_0(%arg0: i32) -> (i32, i32) {
    %c0_i32 = arith.constant 0 : i32
    %c0_i32_0 = arith.constant 0 : i32
    return %c0_i32, %arg0 : i32, i32
  }
  func.func @transform_1(%arg0: i32) -> (i32, i32) {
    %c0_i32 = arith.constant 0 : i32
    %c0_i32_0 = arith.constant 0 : i32
    return %arg0, %c0_i32 : i32, i32
  }
  func.func @transform_2(%arg0: i32) -> (i32, i32) {
    %c0_i32 = arith.constant 0 : i32
    %c0_i32_0 = arith.constant 0 : i32
    %c0_i32_1 = arith.constant 0 : i32
    return %c0_i32, %c0_i32_0 : i32, i32
  }
  func.func @transform_3(%arg0: i32) -> (i32, i32) {
    %c0_i32 = arith.constant 0 : i32
    %c0_i32_0 = arith.constant 0 : i32
    %c0_i32_1 = arith.constant 0 : i32
    return %c0_i32, %c0_i32_0 : i32, i32
  }
  func.func @transform_4(%arg0: i32) -> (i32, i32) {
    %c0_i32 = arith.constant 0 : i32
    %c0_i32_0 = arith.constant 0 : i32
    %c0_i32_1 = arith.constant 0 : i32
    return %c0_i32, %c0_i32_0 : i32, i32
  }
  func.func @transform_5(%arg0: i32) -> (i32, i32) {
    %c0_i32 = arith.constant 0 : i32
    %c0_i32_0 = arith.constant 0 : i32
    %c0_i32_1 = arith.constant 0 : i32
    return %c0_i32, %c0_i32_0 : i32, i32
  }
  func.func @transform_6(%arg0: i32) -> (i32, i32) {
    %c0_i32 = arith.constant 0 : i32
    %c0_i32_0 = arith.constant 0 : i32
    %c0_i32_1 = arith.constant 0 : i32
    return %c0_i32, %c0_i32_0 : i32, i32
  }
  func.func @transform_7(%arg0: i32) -> (i32, i32) {
    %c0_i32 = arith.constant 0 : i32
    %c0_i32_0 = arith.constant 0 : i32
    %c0_i32_1 = arith.constant 0 : i32
    return %c0_i32, %c0_i32_0 : i32, i32
  }
  func.func @transform_8(%arg0: i32) -> (i32, i32) {
    %c0_i32 = arith.constant 0 : i32
    %c0_i32_0 = arith.constant 0 : i32
    %c0_i32_1 = arith.constant 0 : i32
    return %c0_i32, %c0_i32_0 : i32, i32
  }
  func.func @transform_9(%arg0: i32) -> (i32, i32) {
    %c0_i32 = arith.constant 0 : i32
    %c0_i32_0 = arith.constant 0 : i32
    %c0_i32_1 = arith.constant 0 : i32
    return %c0_i32, %c0_i32_0 : i32, i32
  }
  func.func @transform_10(%arg0: i32) -> (i32, i32) {
    %c0_i32 = arith.constant 0 : i32
    %c0_i32_0 = arith.constant 0 : i32
    %c0_i32_1 = arith.constant 0 : i32
    return %c0_i32, %c0_i32_0 : i32, i32
  }
  func.func @transform_11(%arg0: i32) -> (i32, i32) {
    %c0_i32 = arith.constant 0 : i32
    %c0_i32_0 = arith.constant 0 : i32
    %c0_i32_1 = arith.constant 0 : i32
    return %c0_i32, %c0_i32_0 : i32, i32
  }
  func.func @transform_12(%arg0: i32) -> (i32, i32) {
    %c0_i32 = arith.constant 0 : i32
    %c0_i32_0 = arith.constant 0 : i32
    %c0_i32_1 = arith.constant 0 : i32
    return %c0_i32, %c0_i32_0 : i32, i32
  }
}

</mosaic_0001>

<llo_original>
// kernel: classify_forward.1
$region0: #{classify_forward.1}
  #allocation0 [shape = 'u32[]', space=smem, size = 0x4, offset = 0x4, fixed_abs, tag = 'smem constant byte address 0x4 - core index']
  #allocation1 [shape = 'u32[144,128]{1,0:T(1,128)}', space=vmem, size = 0x12000, scoped, tag = 'internal scratch']
  #allocation2 [shape = 'f32[8,1920]{1,0:T(8,128)}', space=vmem, size = 0xf000, scoped, tag = 'scratch operand']
  %s0 = inlined_call_operand.vmem [shape: bf16[8,3840], index: 0, kind: input, shape index: {}]
  %s1 = inlined_call_operand.hbm [shape: s8[3840,1920], index: 1, kind: input, shape index: {}]
  %s2 = inlined_call_operand.hbm [shape: f32[1,1920], index: 2, kind: input, shape index: {}]
  %s3 = inlined_call_operand.hbm [shape: f32[1,1920], index: 3, kind: input, shape index: {}]
  %s4 = inlined_call_operand.hbm [shape: bf16[1920,384], index: 4, kind: input, shape index: {}]
  %s5 = inlined_call_operand.hbm [shape: f32[1,384], index: 5, kind: input, shape index: {}]
  %s6 = inlined_call_operand.hbm [shape: bf16[384,128], index: 6, kind: input, shape index: {}]
  %s7 = inlined_call_operand.hbm [shape: f32[1,128], index: 7, kind: input, shape index: {}]
  %s8 = inlined_call_operand.hbm [shape: bf16[128,128], index: 8, kind: input, shape index: {}]
  %s9 = inlined_call_operand.hbm [shape: f32[1,128], index: 9, kind: input, shape index: {}]
  %s10 = inlined_call_operand.hbm [shape: bf16[128,128], index: 10, kind: input, shape index: {}]
  %s11 = inlined_call_operand.hbm [shape: f32[1,128], index: 11, kind: input, shape index: {}]
  %s12 = inlined_call_operand.vmem [shape: f32[8,128], index: 12, kind: output, shape index: {}]
  %s13 = sld [smem:[#allocation0]]
  $region133: #{classify_forward.1} parent=0
    _
  %s15 = ssub.s32 1, %s13
  %s16 = scalar_select 0, %s15, %s13
  $region1: #{classify_forward.1} parent=0
    #allocation3 [shape = 'u8[4915200]{0}', space=vmem, size = 0x4b0000, scoped, tag = 'input window, operand 1']
    #allocation4 [shape = 's32[2]{0}', space=sflag, size = 0x8, scoped, tag = 'scoped memory for classify_forward.1']
    #allocation5 [shape = 'u8[7680]{0}', space=vmem, size = 0x2000, scoped, tag = 'input window, operand 2, single buffered']
    #allocation6 [shape = 's32[1]{0}', space=sflag, size = 0x4, scoped, tag = 'scoped memory for classify_forward.1']
    #allocation7 [shape = 'u8[7680]{0}', space=vmem, size = 0x2000, scoped, tag = 'input window, operand 3, single buffered']
    #allocation8 [shape = 'u8[1474560]{0}', space=vmem, size = 0x168000, scoped, tag = 'input window, operand 4, single buffered']
    #allocation9 [shape = 's32[1]{0}', space=sflag, size = 0x4, scoped, tag = 'scoped memory for classify_forward.1']
    #allocation10 [shape = 'u8[1536]{0}', space=vmem, size = 0x800, scoped, tag = 'input window, operand 5, single buffered']
    #allocation11 [shape = 'u8[98304]{0}', space=vmem, size = 0x18000, scoped, tag = 'input window, operand 6, single buffered']
    #allocation12 [shape = 's32[1]{0}', space=sflag, size = 0x4, scoped, tag = 'scoped memory for classify_forward.1']
    #allocation13 [shape = 'u8[512]{0}', space=vmem, size = 0x400, scoped, tag = 'input window, operand 7, single buffered']
    #allocation14 [shape = 'u8[32768]{0}', space=vmem, size = 0x8000, scoped, tag = 'input window, operand 8, single buffered']
    #allocation15 [shape = 's32[1]{0}', space=sflag, size = 0x4, scoped, tag = 'scoped memory for classify_forward.1']
    #allocation16 [shape = 'u8[512]{0}', space=vmem, size = 0x400, scoped, tag = 'input window, operand 9, single buffered']
    #allocation17 [shape = 'u8[32768]{0}', space=vmem, size = 0x8000, scoped, tag = 'input window, operand 10, single buffered']
    #allocation18 [shape = 's32[1]{0}', space=sflag, size = 0x4, scoped, tag = 'scoped memory for classify_forward.1']
    #allocation19 [shape = 'u8[512]{0}', space=vmem, size = 0x400, scoped, tag = 'input window, operand 11, single buffered']
    %17 = vsyncpa [#allocation4], 0
    %s18 = scalar_lea.sflag [#allocation4], 1
    %19 = vsyncpa %s18, 0
    %20 = vsyncpa [#allocation6], 0
    %21 = vsyncpa [#allocation9], 0
    %22 = vsyncpa [#allocation12], 0
    %23 = vsyncpa [#allocation15], 0
    %24 = vsyncpa [#allocation18], 0
    loop: start=0, step=1, limit=5
    $region2: #{classify_forward.1} parent=1 // loop_pre_header
      _
    $region3: #{classify_forward.1} parent=1 // loop_header
      %s26 = sphi 0, %s30
      %p27 = scmp.ge.s32.totalorder %s26, 5
      %s36 = sphi 0, %s38
      %s39 = sphi 0, %s36
      %s40 = sphi 0, %s39
      %s56 = sphi 0, %s40
      %s62 = sphi 0, %s64
      %s65 = sphi 0, %s62
      %s66 = sphi 0, %s65
      %s82 = sphi 0, %s66
      %s86 = sphi 0, %s86
      %s88 = sphi 0, %s86
      %s89 = sphi 0, %s88
      %s103 = sphi 0, %s89
      %s107 = sphi 0, %s107
      %s109 = sphi 0, %s107
      %s110 = sphi 0, %s109
      %s124 = sphi 0, %s110
      %s128 = sphi 0, %s128
      %s130 = sphi 0, %s128
      %s131 = sphi 0, %s130
      %s145 = sphi 0, %s131
      %s149 = sphi 0, %s149
      %s151 = sphi 0, %s149
      %s152 = sphi 0, %s151
      %s166 = sphi 0, %s152
      %s170 = sphi 0, %s170
      %s172 = sphi 0, %s170
      %s173 = sphi 0, %s172
      %s187 = sphi 0, %s173
      %s191 = sphi 0, %s191
      %s193 = sphi 0, %s191
      %s194 = sphi 0, %s193
      %s208 = sphi 0, %s194
      %s212 = sphi 0, %s212
      %s214 = sphi 0, %s212
      %s215 = sphi 0, %s214
      %s229 = sphi 0, %s215
      %s233 = sphi 0, %s233
      %s235 = sphi 0, %s233
      %s236 = sphi 0, %s235
      %s250 = sphi 0, %s236
      %s254 = sphi 0, %s254
      %s256 = sphi 0, %s254
      %s257 = sphi 0, %s256
      %s271 = sphi 0, %s257
      %s275 = sphi 0, %s275
      %s277 = sphi 0, %s275
      %s278 = sphi 0, %s277
      %s292 = sphi 0, %s278
      %s296 = sphi 0, %s296
      %s298 = sphi 0, %s296
      %s299 = sphi 0, %s298
      %s313 = sphi 0, %s299
    $region4: #{classify_forward.1} parent=1 // loop_header_branch
      %29 = sbr.rel (%p27) target = $region8
    $region5: #{classify_forward.1} parent=1 // loop_body
      %s31 = ssub.s32 %s26, 1
      %s32 = ssub.s32 %s26, 2
      %s33 = sadd.s32 %s26, 1
      %s34 = ssub.s32 %s26, %s33
      %p35 = scmp.eq.s32.totalorder %s34, 0
      %s37 = sadd.s32 %s36, 1
      %s38 = scalar_select %p35, %s36, %s37
      %p41 = pneg %p35
      %p42 = scmp.eq.s32.totalorder %s26, 2
      %p43 = por %p41, %p42
      %p44 = scmp.ne.s32.totalorder %s36, %s39
      %p45 = scmp.eq.s32.totalorder %s26, 0
      %p46 = por %p44, %p45
      %p47 = scmp.ne.s32.totalorder %s36, %s39
      %p48 = scmp.eq.s32.totalorder %s31, 2
      %p49 = por %p47, %p48
      %p50 = scmp.ne.s32.totalorder %s39, %s40
      %p51 = scmp.eq.s32.totalorder %s31, 0
      %p52 = por %p50, %p51
      %p53 = scmp.ne.s32.totalorder %s39, %s40
      %p54 = scmp.eq.s32.totalorder %s32, 2
      %p55 = por %p53, %p54
      %p57 = scmp.ne.s32.totalorder %s40, %s56
      %p58 = scmp.eq.s32.totalorder %s32, 0
      %p59 = por %p57, %p58
      %s60 = ssub.s32 %s26, %s33
      %p61 = scmp.eq.s32.totalorder %s60, 0
      %s63 = sadd.s32 %s62, 1
      %s64 = scalar_select %p61, %s62, %s63
      %p67 = pneg %p61
      %p68 = scmp.eq.s32.totalorder %s26, 2
      %p69 = por %p67, %p68
      %p70 = scmp.ne.s32.totalorder %s62, %s65
      %p71 = scmp.eq.s32.totalorder %s26, 0
      %p72 = por %p70, %p71
      %p73 = scmp.ne.s32.totalorder %s62, %s65
      %p74 = scmp.eq.s32.totalorder %s31, 2
      %p75 = por %p73, %p74
      %p76 = scmp.ne.s32.totalorder %s65, %s66
      %p77 = scmp.eq.s32.totalorder %s31, 0
      %p78 = por %p76, %p77
      %p79 = scmp.ne.s32.totalorder %s65, %s66
      %p80 = scmp.eq.s32.totalorder %s32, 2
      %p81 = por %p79, %p80
      %p83 = scmp.ne.s32.totalorder %s66, %s82
      %p84 = scmp.eq.s32.totalorder %s32, 0
      %p85 = por %p83, %p84
      %s87 = sadd.s32 %s86, 1
      %p90 = scmp.eq.s32.totalorder %s26, 2
      %p91 = scmp.ne.s32.totalorder %s86, %s88
      %p92 = scmp.eq.s32.totalorder %s26, 0
      %p93 = por %p91, %p92
      %p94 = scmp.ne.s32.totalorder %s86, %s88
      %p95 = scmp.eq.s32.totalorder %s31, 2
      %p96 = por %p94, %p95
      %p97 = scmp.ne.s32.totalorder %s88, %s89
      %p98 = scmp.eq.s32.totalorder %s31, 0
      %p99 = por %p97, %p98
      %p100 = scmp.ne.s32.totalorder %s88, %s89
      %p101 = scmp.eq.s32.totalorder %s32, 2
      %p102 = por %p100, %p101
      %p104 = scmp.ne.s32.totalorder %s89, %s103
      %p105 = scmp.eq.s32.totalorder %s32, 0
      %p106 = por %p104, %p105
      %s108 = sadd.s32 %s107, 1
      %p111 = scmp.eq.s32.totalorder %s26, 2
      %p112 = scmp.ne.s32.totalorder %s107, %s109
      %p113 = scmp.eq.s32.totalorder %s26, 0
      %p114 = por %p112, %p113
      %p115 = scmp.ne.s32.totalorder %s107, %s109
      %p116 = scmp.eq.s32.totalorder %s31, 2
      %p117 = por %p115, %p116
      %p118 = scmp.ne.s32.totalorder %s109, %s110
      %p119 = scmp.eq.s32.totalorder %s31, 0
      %p120 = por %p118, %p119
      %p121 = scmp.ne.s32.totalorder %s109, %s110
      %p122 = scmp.eq.s32.totalorder %s32, 2
      %p123 = por %p121, %p122
      %p125 = scmp.ne.s32.totalorder %s110, %s124
      %p126 = scmp.eq.s32.totalorder %s32, 0
      %p127 = por %p125, %p126
      %s129 = sadd.s32 %s128, 1
      %p132 = scmp.eq.s32.totalorder %s26, 2
      %p133 = scmp.ne.s32.totalorder %s128, %s130
      %p134 = scmp.eq.s32.totalorder %s26, 0
      %p135 = por %p133, %p134
      %p136 = scmp.ne.s32.totalorder %s128, %s130
      %p137 = scmp.eq.s32.totalorder %s31, 2
      %p138 = por %p136, %p137
      %p139 = scmp.ne.s32.totalorder %s130, %s131
      %p140 = scmp.eq.s32.totalorder %s31, 0
      %p141 = por %p139, %p140
      %p142 = scmp.ne.s32.totalorder %s130, %s131
      %p143 = scmp.eq.s32.totalorder %s32, 2
      %p144 = por %p142, %p143
      %p146 = scmp.ne.s32.totalorder %s131, %s145
      %p147 = scmp.eq.s32.totalorder %s32, 0
      %p148 = por %p146, %p147
      %s150 = sadd.s32 %s149, 1
      %p153 = scmp.eq.s32.totalorder %s26, 2
      %p154 = scmp.ne.s32.totalorder %s149, %s151
      %p155 = scmp.eq.s32.totalorder %s26, 0
      %p156 = por %p154, %p155
      %p157 = scmp.ne.s32.totalorder %s149, %s151
      %p158 = scmp.eq.s32.totalorder %s31, 2
      %p159 = por %p157, %p158
      %p160 = scmp.ne.s32.totalorder %s151, %s152
      %p161 = scmp.eq.s32.totalorder %s31, 0
      %p162 = por %p160, %p161
      %p163 = scmp.ne.s32.totalorder %s151, %s152
      %p164 = scmp.eq.s32.totalorder %s32, 2
      %p165 = por %p163, %p164
      %p167 = scmp.ne.s32.totalorder %s152, %s166
      %p168 = scmp.eq.s32.totalorder %s32, 0
      %p169 = por %p167, %p168
      %s171 = sadd.s32 %s170, 1
      %p174 = scmp.eq.s32.totalorder %s26, 2
      %p175 = scmp.ne.s32.totalorder %s170, %s172
      %p176 = scmp.eq.s32.totalorder %s26, 0
      %p177 = por %p175, %p176
      %p178 = scmp.ne.s32.totalorder %s170, %s172
      %p179 = scmp.eq.s32.totalorder %s31, 2
      %p180 = por %p178, %p179
      %p181 = scmp.ne.s32.totalorder %s172, %s173
      %p182 = scmp.eq.s32.totalorder %s31, 0
      %p183 = por %p181, %p182
      %p184 = scmp.ne.s32.totalorder %s172, %s173
      %p185 = scmp.eq.s32.totalorder %s32, 2
      %p186 = por %p184, %p185
      %p188 = scmp.ne.s32.totalorder %s173, %s187
      %p189 = scmp.eq.s32.totalorder %s32, 0
      %p190 = por %p188, %p189
      %s192 = sadd.s32 %s191, 1
      %p195 = scmp.eq.s32.totalorder %s26, 2
      %p196 = scmp.ne.s32.totalorder %s191, %s193
      %p197 = scmp.eq.s32.totalorder %s26, 0
      %p198 = por %p196, %p197
      %p199 = scmp.ne.s32.totalorder %s191, %s193
      %p200 = scmp.eq.s32.totalorder %s31, 2
      %p201 = por %p199, %p200
      %p202 = scmp.ne.s32.totalorder %s193, %s194
      %p203 = scmp.eq.s32.totalorder %s31, 0
      %p204 = por %p202, %p203
      %p205 = scmp.ne.s32.totalorder %s193, %s194
      %p206 = scmp.eq.s32.totalorder %s32, 2
      %p207 = por %p205, %p206
      %p209 = scmp.ne.s32.totalorder %s194, %s208
      %p210 = scmp.eq.s32.totalorder %s32, 0
      %p211 = por %p209, %p210
      %s213 = sadd.s32 %s212, 1
      %p216 = scmp.eq.s32.totalorder %s26, 2
      %p217 = scmp.ne.s32.totalorder %s212, %s214
      %p218 = scmp.eq.s32.totalorder %s26, 0
      %p219 = por %p217, %p218
      %p220 = scmp.ne.s32.totalorder %s212, %s214
      %p221 = scmp.eq.s32.totalorder %s31, 2
      %p222 = por %p220, %p221
      %p223 = scmp.ne.s32.totalorder %s214, %s215
      %p224 = scmp.eq.s32.totalorder %s31, 0
      %p225 = por %p223, %p224
      %p226 = scmp.ne.s32.totalorder %s214, %s215
      %p227 = scmp.eq.s32.totalorder %s32, 2
      %p228 = por %p226, %p227
      %p230 = scmp.ne.s32.totalorder %s215, %s229
      %p231 = scmp.eq.s32.totalorder %s32, 0
      %p232 = por %p230, %p231
      %s234 = sadd.s32 %s233, 1
      %p237 = scmp.eq.s32.totalorder %s26, 2
      %p238 = scmp.ne.s32.totalorder %s233, %s235
      %p239 = scmp.eq.s32.totalorder %s26, 0
      %p240 = por %p238, %p239
      %p241 = scmp.ne.s32.totalorder %s233, %s235
      %p242 = scmp.eq.s32.totalorder %s31, 2
      %p243 = por %p241, %p242
      %p244 = scmp.ne.s32.totalorder %s235, %s236
      %p245 = scmp.eq.s32.totalorder %s31, 0
      %p246 = por %p244, %p245
      %p247 = scmp.ne.s32.totalorder %s235, %s236
      %p248 = scmp.eq.s32.totalorder %s32, 2
      %p249 = por %p247, %p248
      %p251 = scmp.ne.s32.totalorder %s236, %s250
      %p252 = scmp.eq.s32.totalorder %s32, 0
      %p253 = por %p251, %p252
      %s255 = sadd.s32 %s254, 1
      %p258 = scmp.eq.s32.totalorder %s26, 2
      %p259 = scmp.ne.s32.totalorder %s254, %s256
      %p260 = scmp.eq.s32.totalorder %s26, 0
      %p261 = por %p259, %p260
      %p262 = scmp.ne.s32.totalorder %s254, %s256
      %p263 = scmp.eq.s32.totalorder %s31, 2
      %p264 = por %p262, %p263
      %p265 = scmp.ne.s32.totalorder %s256, %s257
      %p266 = scmp.eq.s32.totalorder %s31, 0
      %p267 = por %p265, %p266
      %p268 = scmp.ne.s32.totalorder %s256, %s257
      %p269 = scmp.eq.s32.totalorder %s32, 2
      %p270 = por %p268, %p269
      %p272 = scmp.ne.s32.totalorder %s257, %s271
      %p273 = scmp.eq.s32.totalorder %s32, 0
      %p274 = por %p272, %p273
      %s276 = sadd.s32 %s275, 1
      %p279 = scmp.eq.s32.totalorder %s26, 2
      %p280 = scmp.ne.s32.totalorder %s275, %s277
      %p281 = scmp.eq.s32.totalorder %s26, 0
      %p282 = por %p280, %p281
      %p283 = scmp.ne.s32.totalorder %s275, %s277
      %p284 = scmp.eq.s32.totalorder %s31, 2
      %p285 = por %p283, %p284
      %p286 = scmp.ne.s32.totalorder %s277, %s278
      %p287 = scmp.eq.s32.totalorder %s31, 0
      %p288 = por %p286, %p287
      %p289 = scmp.ne.s32.totalorder %s277, %s278
      %p290 = scmp.eq.s32.totalorder %s32, 2
      %p291 = por %p289, %p290
      %p293 = scmp.ne.s32.totalorder %s278, %s292
      %p294 = scmp.eq.s32.totalorder %s32, 0
      %p295 = por %p293, %p294
      %s297 = sadd.s32 %s296, 1
      %p300 = scmp.eq.s32.totalorder %s26, 2
      %p301 = scmp.ne.s32.totalorder %s296, %s298
      %p302 = scmp.eq.s32.totalorder %s26, 0
      %p303 = por %p301, %p302
      %p304 = scmp.ne.s32.totalorder %s296, %s298
      %p305 = scmp.eq.s32.totalorder %s31, 2
      %p306 = por %p304, %p305
      %p307 = scmp.ne.s32.totalorder %s298, %s299
      %p308 = scmp.eq.s32.totalorder %s31, 0
      %p309 = por %p307, %p308
      %p310 = scmp.ne.s32.totalorder %s298, %s299
      %p311 = scmp.eq.s32.totalorder %s32, 2
      %p312 = por %p310, %p311
      %p314 = scmp.ne.s32.totalorder %s299, %s313
      %p315 = scmp.eq.s32.totalorder %s32, 0
      %p316 = por %p314, %p315
      %p317 = scmp.le.s32.totalorder 1, %s26
      %p318 = scmp.lt.s32.totalorder %s26, 4
      %p319 = pnand %p317, %p318
      %p320 = pneg %p319
      // Predicated region
      $region9: #{classify_forward.1} parent=5 // pred_check
        _
      $region10: #{classify_forward.1} parent=5 // pred_check_branch
        %322 = sbr.rel (%p319) target = $region12
      $region11: #{classify_forward.1} parent=5 // pred_region
        %s323 = ssub.s32 %s26, 1
        // Predicated region
        $region13: #{classify_forward.1} parent=11 // pred_check
          %p324 = pneg %p99
        $region14: #{classify_forward.1} parent=11 // pred_check_branch
          %326 = sbr.rel (%p324) target = $region16
        $region15: #{classify_forward.1} parent=11 // pred_region
          %s328 = ssub.s32 240, 240
          %329 = vsyncadd [#allocation6], %s328
          %s331 = sshll.u32 [#allocation5], 4
          %s332 = int_to_ptr.vmem [resolvable:$true] %s331
          %334 = dma.hbm_to_vmem [thread:$0]  %s2, 240, %s332, [#allocation6]
        $region16: #{classify_forward.1} parent=11 // pred_fallthru
          _
        // Predicated region
        $region17: #{classify_forward.1} parent=11 // pred_check
          %p335 = pneg %p120
        $region18: #{classify_forward.1} parent=11 // pred_check_branch
          %337 = sbr.rel (%p335) target = $region20
        $region19: #{classify_forward.1} parent=11 // pred_region
          %s339 = ssub.s32 240, 240
          %340 = vsyncadd [#allocation6], %s339
          %s342 = sshll.u32 [#allocation7], 4
          %s343 = int_to_ptr.vmem [resolvable:$true] %s342
          %345 = dma.hbm_to_vmem [thread:$0]  %s3, 240, %s343, [#allocation6]
        $region20: #{classify_forward.1} parent=11 // pred_fallthru
          _
        // Predicated region
        $region21: #{classify_forward.1} parent=11 // pred_check
          %p346 = pneg %p141
        $region22: #{classify_forward.1} parent=11 // pred_check_branch
          %348 = sbr.rel (%p346) target = $region24
        $region23: #{classify_forward.1} parent=11 // pred_region
          %s350 = ssub.s32 46080, 46080
          %351 = vsyncadd [#allocation9], %s350
          %s352 = sshll.u32 [#allocation8], 4
          %s353 = int_to_ptr.vmem [resolvable:$true] %s352
          %358 = dma.hbm_to_vmem [thread:$0]  %s4, 46080, %s353, [#allocation9], 192, 192, 12
        $region24: #{classify_forward.1} parent=11 // pred_fallthru
          _
        // Predicated region
        $region25: #{classify_forward.1} parent=11 // pred_check
          %p359 = pneg %p162
        $region26: #{classify_forward.1} parent=11 // pred_check_branch
          %361 = sbr.rel (%p359) target = $region28
        $region27: #{classify_forward.1} parent=11 // pred_region
          %s363 = ssub.s32 48, 48
          %364 = vsyncadd [#allocation9], %s363
          %s366 = sshll.u32 [#allocation10], 4
          %s367 = int_to_ptr.vmem [resolvable:$true] %s366
          %369 = dma.hbm_to_vmem [thread:$0]  %s5, 48, %s367, [#allocation9]
        $region28: #{classify_forward.1} parent=11 // pred_fallthru
          _
        // Predicated region
        $region29: #{classify_forward.1} parent=11 // pred_check
          %p370 = pneg %p183
        $region30: #{classify_forward.1} parent=11 // pred_check_branch
          %372 = sbr.rel (%p370) target = $region32
        $region31: #{classify_forward.1} parent=11 // pred_region
          %s374 = ssub.s32 3072, 3072
          %375 = vsyncadd [#allocation12], %s374
          %s376 = sshll.u32 [#allocation11], 4
          %s377 = int_to_ptr.vmem [resolvable:$true] %s376
          %382 = dma.hbm_to_vmem [thread:$0]  %s6, 3072, %s377, [#allocation12], 64, 64, 4
        $region32: #{classify_forward.1} parent=11 // pred_fallthru
          _
        // Predicated region
        $region33: #{classify_forward.1} parent=11 // pred_check
          %p383 = pneg %p204
        $region34: #{classify_forward.1} parent=11 // pred_check_branch
          %385 = sbr.rel (%p383) target = $region36
        $region35: #{classify_forward.1} parent=11 // pred_region
          %s387 = ssub.s32 16, 16
          %388 = vsyncadd [#allocation12], %s387
          %s390 = sshll.u32 [#allocation13], 4
          %s391 = int_to_ptr.vmem [resolvable:$true] %s390
          %393 = dma.hbm_to_vmem [thread:$0]  %s7, 16, %s391, [#allocation12]
        $region36: #{classify_forward.1} parent=11 // pred_fallthru
          _
        // Predicated region
        $region37: #{classify_forward.1} parent=11 // pred_check
          %p394 = pneg %p225
        $region38: #{classify_forward.1} parent=11 // pred_check_branch
          %396 = sbr.rel (%p394) target = $region40
        $region39: #{classify_forward.1} parent=11 // pred_region
          %s398 = ssub.s32 1024, 1024
          %399 = vsyncadd [#allocation15], %s398
          %s400 = sshll.u32 [#allocation14], 4
          %s401 = int_to_ptr.vmem [resolvable:$true] %s400
          %406 = dma.hbm_to_vmem [thread:$0]  %s8, 1024, %s401, [#allocation15], 64, 64, 4
        $region40: #{classify_forward.1} parent=11 // pred_fallthru
          _
        // Predicated region
        $region41: #{classify_forward.1} parent=11 // pred_check
          %p407 = pneg %p246
        $region42: #{classify_forward.1} parent=11 // pred_check_branch
          %409 = sbr.rel (%p407) target = $region44
        $region43: #{classify_forward.1} parent=11 // pred_region
          %s411 = ssub.s32 16, 16
          %412 = vsyncadd [#allocation15], %s411
          %s414 = sshll.u32 [#allocation16], 4
          %s415 = int_to_ptr.vmem [resolvable:$true] %s414
          %417 = dma.hbm_to_vmem [thread:$0]  %s9, 16, %s415, [#allocation15]
        $region44: #{classify_forward.1} parent=11 // pred_fallthru
          _
        // Predicated region
        $region45: #{classify_forward.1} parent=11 // pred_check
          %p418 = pneg %p267
        $region46: #{classify_forward.1} parent=11 // pred_check_branch
          %420 = sbr.rel (%p418) target = $region48
        $region47: #{classify_forward.1} parent=11 // pred_region
          %s422 = ssub.s32 1024, 1024
          %423 = vsyncadd [#allocation18], %s422
          %s424 = sshll.u32 [#allocation17], 4
          %s425 = int_to_ptr.vmem [resolvable:$true] %s424
          %430 = dma.hbm_to_vmem [thread:$0]  %s10, 1024, %s425, [#allocation18], 64, 64, 4
        $region48: #{classify_forward.1} parent=11 // pred_fallthru
          _
        // Predicated region
        $region49: #{classify_forward.1} parent=11 // pred_check
          %p431 = pneg %p288
        $region50: #{classify_forward.1} parent=11 // pred_check_branch
          %433 = sbr.rel (%p431) target = $region52
        $region51: #{classify_forward.1} parent=11 // pred_region
          %s435 = ssub.s32 16, 16
          %436 = vsyncadd [#allocation18], %s435
          %s438 = sshll.u32 [#allocation19], 4
          %s439 = int_to_ptr.vmem [resolvable:$true] %s438
          %441 = dma.hbm_to_vmem [thread:$0]  %s11, 16, %s439, [#allocation18]
        $region52: #{classify_forward.1} parent=11 // pred_fallthru
          _
      $region12: #{classify_forward.1} parent=5 // pred_fallthru
        _
      %p442 = scmp.lt.s32.totalorder %s26, 3
      // Predicated region
      $region53: #{classify_forward.1} parent=5 // pred_check
        %p443 = pneg %p442
      $region54: #{classify_forward.1} parent=5 // pred_check_branch
        %445 = sbr.rel (%p443) target = $region56
      $region55: #{classify_forward.1} parent=5 // pred_region
        // Predicated region
        $region57: #{classify_forward.1} parent=55 // pred_check
          %p446 = pneg %p46
        $region58: #{classify_forward.1} parent=55 // pred_check_branch
          %448 = sbr.rel (%p446) target = $region60
        $region59: #{classify_forward.1} parent=55 // pred_region
          %s449 = smul.u32 10, %s26
          %p450 = scmp.lt.s32.totalorder %s449, 29
          %s451 = scalar_select %p450, %s449, 29
          %s452 = smul.addr %s451, 4
          %s453 = scalar_lea.vmem %s0, %s452
          %s454 = smul.u32 10, %s26
        $region60: #{classify_forward.1} parent=55 // pred_fallthru
          _
        // Predicated region
        $region61: #{classify_forward.1} parent=55 // pred_check
          %p455 = pneg %p72
        $region62: #{classify_forward.1} parent=55 // pred_check_branch
          %457 = sbr.rel (%p455) target = $region64
        $region63: #{classify_forward.1} parent=55 // pred_region
          %s458 = sand.u32 %s62, 1
          %s459 = scalar_lea.sflag [#allocation4], %s458
          %s460 = sand.u32 %s62, 1
          %s461 = smul.addr %s460, 4800
          %s462 = scalar_lea.vmem [#allocation3], %s461
          %s463 = smul.u32 40, %s26
          %s465 = ssub.s32 76800, 76800
          %466 = vsyncadd %s459, %s465
          %s467 = smul.addr %s463, 15
          %s468 = smul.addr %s467, 128
          %s469 = scalar_lea.hbm %s1, %s468
          %s470 = sshll.u32 %s462, 4
          %s471 = int_to_ptr.vmem [resolvable:$true] %s470
          %476 = dma.hbm_to_vmem [thread:$0]  %s469, 76800, %s471, %s459, 1920, 1920, 120
        $region64: #{classify_forward.1} parent=55 // pred_fallthru
          _
      $region56: #{classify_forward.1} parent=5 // pred_fallthru
        _
      %p477 = scmp.le.s32.totalorder 1, %s26
      %p478 = scmp.lt.s32.totalorder %s26, 4
      %p479 = pnand %p477, %p478
      %p480 = pneg %p479
      // Predicated region
      $region65: #{classify_forward.1} parent=5 // pred_check
        _
      $region66: #{classify_forward.1} parent=5 // pred_check_branch
        %482 = sbr.rel (%p479) target = $region68
      $region67: #{classify_forward.1} parent=5 // pred_region
        %s483 = ssub.s32 %s26, 1
        %s484 = sand.u32 %s65, 1
        %s485 = scalar_lea.sflag [#allocation4], %s484
        %s486 = sand.u32 %s65, 1
        %s487 = smul.addr %s486, 4800
        %s488 = scalar_lea.vmem [#allocation3], %s487
        // Predicated region
        $region69: #{classify_forward.1} parent=67 // pred_check
          %p489 = pneg %p78
        $region70: #{classify_forward.1} parent=67 // pred_check_branch
          %491 = sbr.rel (%p489) target = $region72
        $region71: #{classify_forward.1} parent=67 // pred_region
          %492 = dma.done %s485, 76800
        $region72: #{classify_forward.1} parent=67 // pred_fallthru
          _
        // Predicated region
        $region73: #{classify_forward.1} parent=67 // pred_check
          %p493 = pneg %p99
        $region74: #{classify_forward.1} parent=67 // pred_check_branch
          %495 = sbr.rel (%p493) target = $region76
        $region75: #{classify_forward.1} parent=67 // pred_region
          %496 = dma.done [#allocation6], 240
        $region76: #{classify_forward.1} parent=67 // pred_fallthru
          _
        // Predicated region
        $region77: #{classify_forward.1} parent=67 // pred_check
          %p497 = pneg %p120
        $region78: #{classify_forward.1} parent=67 // pred_check_branch
          %499 = sbr.rel (%p497) target = $region80
        $region79: #{classify_forward.1} parent=67 // pred_region
          %500 = dma.done [#allocation6], 240
        $region80: #{classify_forward.1} parent=67 // pred_fallthru
          _
        // Predicated region
        $region81: #{classify_forward.1} parent=67 // pred_check
          %p501 = pneg %p141
        $region82: #{classify_forward.1} parent=67 // pred_check_branch
          %503 = sbr.rel (%p501) target = $region84
        $region83: #{classify_forward.1} parent=67 // pred_region
          %504 = dma.done [#allocation9], 46080
        $region84: #{classify_forward.1} parent=67 // pred_fallthru
          _
        // Predicated region
        $region85: #{classify_forward.1} parent=67 // pred_check
          %p505 = pneg %p162
        $region86: #{classify_forward.1} parent=67 // pred_check_branch
          %507 = sbr.rel (%p505) target = $region88
        $region87: #{classify_forward.1} parent=67 // pred_region
          %508 = dma.done [#allocation9], 48
        $region88: #{classify_forward.1} parent=67 // pred_fallthru
          _
        // Predicated region
        $region89: #{classify_forward.1} parent=67 // pred_check
          %p509 = pneg %p183
        $region90: #{classify_forward.1} parent=67 // pred_check_branch
          %511 = sbr.rel (%p509) target = $region92
        $region91: #{classify_forward.1} parent=67 // pred_region
          %512 = dma.done [#allocation12], 3072
        $region92: #{classify_forward.1} parent=67 // pred_fallthru
          _
        // Predicated region
        $region93: #{classify_forward.1} parent=67 // pred_check
          %p513 = pneg %p204
        $region94: #{classify_forward.1} parent=67 // pred_check_branch
          %515 = sbr.rel (%p513) target = $region96
        $region95: #{classify_forward.1} parent=67 // pred_region
          %516 = dma.done [#allocation12], 16
        $region96: #{classify_forward.1} parent=67 // pred_fallthru
          _
        // Predicated region
        $region97: #{classify_forward.1} parent=67 // pred_check
          %p517 = pneg %p225
        $region98: #{classify_forward.1} parent=67 // pred_check_branch
          %519 = sbr.rel (%p517) target = $region100
        $region99: #{classify_forward.1} parent=67 // pred_region
          %520 = dma.done [#allocation15], 1024
        $region100: #{classify_forward.1} parent=67 // pred_fallthru
          _
        // Predicated region
        $region101: #{classify_forward.1} parent=67 // pred_check
          %p521 = pneg %p246
        $region102: #{classify_forward.1} parent=67 // pred_check_branch
          %523 = sbr.rel (%p521) target = $region104
        $region103: #{classify_forward.1} parent=67 // pred_region
          %524 = dma.done [#allocation15], 16
        $region104: #{classify_forward.1} parent=67 // pred_fallthru
          _
        // Predicated region
        $region105: #{classify_forward.1} parent=67 // pred_check
          %p525 = pneg %p267
        $region106: #{classify_forward.1} parent=67 // pred_check_branch
          %527 = sbr.rel (%p525) target = $region108
        $region107: #{classify_forward.1} parent=67 // pred_region
          %528 = dma.done [#allocation18], 1024
        $region108: #{classify_forward.1} parent=67 // pred_fallthru
          _
        // Predicated region
        $region109: #{classify_forward.1} parent=67 // pred_check
          %p529 = pneg %p288
        $region110: #{classify_forward.1} parent=67 // pred_check_branch
          %531 = sbr.rel (%p529) target = $region112
        $region111: #{classify_forward.1} parent=67 // pred_region
          %532 = dma.done [#allocation18], 16
        $region112: #{classify_forward.1} parent=67 // pred_fallthru
          _
        %s533 = smul.u32 10, %s31
        %p534 = scmp.lt.s32.totalorder %s533, 29
        %s535 = scalar_select %p534, %s533, 29
        %s536 = smul.addr %s535, 4
        %s537 = scalar_lea.vmem %s0, %s536
        %p538 = pneg %p52
        %p539 = pneg %p49
        %s540 = sand.u32 %s65, 1
        %s541 = scalar_lea.sflag [#allocation4], %s540
        %s542 = sand.u32 %s65, 1
        %s543 = smul.addr %s542, 4800
        %s544 = scalar_lea.vmem [#allocation3], %s543
        %p545 = pneg %p78
        %p546 = pneg %p75
        %p547 = pneg %p99
        %p548 = pneg %p96
        %p549 = pneg %p120
        %p550 = pneg %p117
        %p551 = pneg %p141
        %p552 = pneg %p138
        %p553 = pneg %p162
        %p554 = pneg %p159
        %p555 = pneg %p183
        %p556 = pneg %p180
        %p557 = pneg %p204
        %p558 = pneg %p201
        %p559 = pneg %p225
        %p560 = pneg %p222
        %p561 = pneg %p246
        %p562 = pneg %p243
        %p563 = pneg %p267
        %p564 = pneg %p264
        %p565 = pneg %p288
        %p566 = pneg %p285
        %p567 = pneg %p309
        %p568 = pneg %p306
        %s569 = smul.u32 10, %s31
        %p570 = scmp.lt.s32.totalorder %s569, 29
        %s571 = scalar_select %p570, %s569, 29
        %s572 = smul.addr %s571, 4
        %s573 = scalar_lea.vmem %s0, %s572
        %s574 = smul.u32 10, %s31
        %s575 = smul.u32 40, %s31
        %p577 = scmp.eq.s32.totalorder %s31, 0
        // Predicated region
        $region113: #{classify_forward.1} parent=67 // pred_check
          %p578 = pneg %p577
        $region114: #{classify_forward.1} parent=67 // pred_check_branch
          %580 = sbr.rel (%p578) target = $region116
        $region115: #{classify_forward.1} parent=67 // pred_region
          %581 = vst [vmem:[#allocation2] sm:$0xff] 0.0
          %582 = vst [vmem:[#allocation2 + $0x8] sm:$0xff] 0.0
          %583 = vst [vmem:[#allocation2 + $0x10] sm:$0xff] 0.0
          %584 = vst [vmem:[#allocation2 + $0x18] sm:$0xff] 0.0
          %585 = vst [vmem:[#allocation2 + $0x20] sm:$0xff] 0.0
          %586 = vst [vmem:[#allocation2 + $0x28] sm:$0xff] 0.0
          %587 = vst [vmem:[#allocation2 + $0x30] sm:$0xff] 0.0
          %588 = vst [vmem:[#allocation2 + $0x38] sm:$0xff] 0.0
          %589 = vst [vmem:[#allocation2 + $0x40] sm:$0xff] 0.0
          %590 = vst [vmem:[#allocation2 + $0x48] sm:$0xff] 0.0
          %591 = vst [vmem:[#allocation2 + $0x50] sm:$0xff] 0.0
          %592 = vst [vmem:[#allocation2 + $0x58] sm:$0xff] 0.0
          %593 = vst [vmem:[#allocation2 + $0x60] sm:$0xff] 0.0
          %594 = vst [vmem:[#allocation2 + $0x68] sm:$0xff] 0.0
          %595 = vst [vmem:[#allocation2 + $0x70] sm:$0xff] 0.0
        $region116: #{classify_forward.1} parent=67 // pred_fallthru
          _
        %v596 = vld [vmem:[#allocation2] sm:$0xff]
        %v597 = vld [vmem:[#allocation2 + $0x8] sm:$0xff]
        %v598 = vld [vmem:[#allocation2 + $0x10] sm:$0xff]
        %v599 = vld [vmem:[#allocation2 + $0x18] sm:$0xff]
        %v600 = vld [vmem:[#allocation2 + $0x20] sm:$0xff]
        %v601 = vld [vmem:[#allocation2 + $0x28] sm:$0xff]
        %v602 = vld [vmem:[#allocation2 + $0x30] sm:$0xff]
        %v603 = vld [vmem:[#allocation2 + $0x38] sm:$0xff]
        %v604 = vld [vmem:[#allocation2 + $0x40] sm:$0xff]
        %v605 = vld [vmem:[#allocation2 + $0x48] sm:$0xff]
        %v606 = vld [vmem:[#allocation2 + $0x50] sm:$0xff]
        %v607 = vld [vmem:[#allocation2 + $0x58] sm:$0xff]
        %v608 = vld [vmem:[#allocation2 + $0x60] sm:$0xff]
        %v609 = vld [vmem:[#allocation2 + $0x68] sm:$0xff]
        %v610 = vld [vmem:[#allocation2 + $0x70] sm:$0xff]
        %v611 = vld [vmem:[%s573] sm:$0xff]
        %v612 = vld [vmem:[%s573 + $0x8] sm:$0xff]
        %v613 = vld [vmem:[%s573 + $0x10] sm:$0xff]
        %v614 = vld [vmem:[%s573 + $0x18] sm:$0xff]
        %v615 = vld [vmem:[%s573 + $0x20] sm:$0xff]
        %v616 = vld [vmem:[%s488] sm:$0xff]
        %v617 = vld [vmem:[%s488 + $0x8] sm:$0xff]
        %v618 = vld [vmem:[%s488 + $0x10] sm:$0xff]
        %v619 = vld [vmem:[%s488 + $0x18] sm:$0xff]
        %v620 = vld [vmem:[%s488 + $0x20] sm:$0xff]
        %v621 = vld [vmem:[%s488 + $0x28] sm:$0xff]
        %v622 = vld [vmem:[%s488 + $0x30] sm:$0xff]
        %v623 = vld [vmem:[%s488 + $0x38] sm:$0xff]
        %v624 = vld [vmem:[%s488 + $0x40] sm:$0xff]
        %v625 = vld [vmem:[%s488 + $0x48] sm:$0xff]
        %v626 = vld [vmem:[%s488 + $0x50] sm:$0xff]
        %v627 = vld [vmem:[%s488 + $0x58] sm:$0xff]
        %v628 = vld [vmem:[%s488 + $0x60] sm:$0xff]
        %v629 = vld [vmem:[%s488 + $0x68] sm:$0xff]
        %v630 = vld [vmem:[%s488 + $0x70] sm:$0xff]
        %v631 = vld [vmem:[%s488 + $0x78] sm:$0xff]
        %v632 = vld [vmem:[%s488 + $0x80] sm:$0xff]
        %v633 = vld [vmem:[%s488 + $0x88] sm:$0xff]
        %v634 = vld [vmem:[%s488 + $0x90] sm:$0xff]
        %v635 = vld [vmem:[%s488 + $0x98] sm:$0xff]
        %v636 = vld [vmem:[%s488 + $0xa0] sm:$0xff]
        %v637 = vld [vmem:[%s488 + $0xa8] sm:$0xff]
        %v638 = vld [vmem:[%s488 + $0xb0] sm:$0xff]
        %v639 = vld [vmem:[%s488 + $0xb8] sm:$0xff]
        %v640 = vld [vmem:[%s488 + $0xc0] sm:$0xff]
        %v641 = vld [vmem:[%s488 + $0xc8] sm:$0xff]
        %v642 = vld [vmem:[%s488 + $0xd0] sm:$0xff]
        %v643 = vld [vmem:[%s488 + $0xd8] sm:$0xff]
        %v644 = vld [vmem:[%s488 + $0xe0] sm:$0xff]
        %v645 = vld [vmem:[%s488 + $0xe8] sm:$0xff]
        %v646 = vld [vmem:[%s488 + $0xf0] sm:$0xff]
        %v647 = vld [vmem:[%s488 + $0xf8] sm:$0xff]
        %v648 = vld [vmem:[%s488 + $0x100] sm:$0xff]
        %v649 = vld [vmem:[%s488 + $0x108] sm:$0xff]
        %v650 = vld [vmem:[%s488 + $0x110] sm:$0xff]
        %v651 = vld [vmem:[%s488 + $0x118] sm:$0xff]
        %v652 = vld [vmem:[%s488 + $0x120] sm:$0xff]
        %v653 = vld [vmem:[%s488 + $0x128] sm:$0xff]
        %v654 = vld [vmem:[%s488 + $0x130] sm:$0xff]
        %v655 = vld [vmem:[%s488 + $0x138] sm:$0xff]
        %v656 = vld [vmem:[%s488 + $0x140] sm:$0xff]
        %v657 = vld [vmem:[%s488 + $0x148] sm:$0xff]
        %v658 = vld [vmem:[%s488 + $0x150] sm:$0xff]
        %v659 = vld [vmem:[%s488 + $0x158] sm:$0xff]
        %v660 = vld [vmem:[%s488 + $0x160] sm:$0xff]
        %v661 = vld [vmem:[%s488 + $0x168] sm:$0xff]
        %v662 = vld [vmem:[%s488 + $0x170] sm:$0xff]
        %v663 = vld [vmem:[%s488 + $0x178] sm:$0xff]
        %v664 = vld [vmem:[%s488 + $0x180] sm:$0xff]
        %v665 = vld [vmem:[%s488 + $0x188] sm:$0xff]
        %v666 = vld [vmem:[%s488 + $0x190] sm:$0xff]
        %v667 = vld [vmem:[%s488 + $0x198] sm:$0xff]
        %v668 = vld [vmem:[%s488 + $0x1a0] sm:$0xff]
        %v669 = vld [vmem:[%s488 + $0x1a8] sm:$0xff]
        %v670 = vld [vmem:[%s488 + $0x1b0] sm:$0xff]
        %v671 = vld [vmem:[%s488 + $0x1b8] sm:$0xff]
        %v672 = vld [vmem:[%s488 + $0x1c0] sm:$0xff]
        %v673 = vld [vmem:[%s488 + $0x1c8] sm:$0xff]
        %v674 = vld [vmem:[%s488 + $0x1d0] sm:$0xff]
        %v675 = vld [vmem:[%s488 + $0x1d8] sm:$0xff]
        %v676 = vld [vmem:[%s488 + $0x1e0] sm:$0xff]
        %v677 = vld [vmem:[%s488 + $0x1e8] sm:$0xff]
        %v678 = vld [vmem:[%s488 + $0x1f0] sm:$0xff]
        %v679 = vld [vmem:[%s488 + $0x1f8] sm:$0xff]
        %v680 = vld [vmem:[%s488 + $0x200] sm:$0xff]
        %v681 = vld [vmem:[%s488 + $0x208] sm:$0xff]
        %v682 = vld [vmem:[%s488 + $0x210] sm:$0xff]
        %v683 = vld [vmem:[%s488 + $0x218] sm:$0xff]
        %v684 = vld [vmem:[%s488 + $0x220] sm:$0xff]
        %v685 = vld [vmem:[%s488 + $0x228] sm:$0xff]
        %v686 = vld [vmem:[%s488 + $0x230] sm:$0xff]
        %v687 = vld [vmem:[%s488 + $0x238] sm:$0xff]
        %v688 = vld [vmem:[%s488 + $0x240] sm:$0xff]
        %v689 = vld [vmem:[%s488 + $0x248] sm:$0xff]
        %v690 = vld [vmem:[%s488 + $0x250] sm:$0xff]
        %v691 = vld [vmem:[%s488 + $0x258] sm:$0xff]
        %v692 = vld [vmem:[%s488 + $0x260] sm:$0xff]
        %v693 = vld [vmem:[%s488 + $0x268] sm:$0xff]
        %v694 = vld [vmem:[%s488 + $0x270] sm:$0xff]
        %v695 = vld [vmem:[%s488 + $0x278] sm:$0xff]
        %v696 = vld [vmem:[%s488 + $0x280] sm:$0xff]
        %v697 = vld [vmem:[%s488 + $0x288] sm:$0xff]
        %v698 = vld [vmem:[%s488 + $0x290] sm:$0xff]
        %v699 = vld [vmem:[%s488 + $0x298] sm:$0xff]
        %v700 = vld [vmem:[%s488 + $0x2a0] sm:$0xff]
        %v701 = vld [vmem:[%s488 + $0x2a8] sm:$0xff]
        %v702 = vld [vmem:[%s488 + $0x2b0] sm:$0xff]
        %v703 = vld [vmem:[%s488 + $0x2b8] sm:$0xff]
        %v704 = vld [vmem:[%s488 + $0x2c0] sm:$0xff]
        %v705 = vld [vmem:[%s488 + $0x2c8] sm:$0xff]
        %v706 = vld [vmem:[%s488 + $0x2d0] sm:$0xff]
        %v707 = vld [vmem:[%s488 + $0x2d8] sm:$0xff]
        %v708 = vld [vmem:[%s488 + $0x2e0] sm:$0xff]
        %v709 = vld [vmem:[%s488 + $0x2e8] sm:$0xff]
        %v710 = vld [vmem:[%s488 + $0x2f0] sm:$0xff]
        %v711 = vld [vmem:[%s488 + $0x2f8] sm:$0xff]
        %v712 = vld [vmem:[%s488 + $0x300] sm:$0xff]
        %v713 = vld [vmem:[%s488 + $0x308] sm:$0xff]
        %v714 = vld [vmem:[%s488 + $0x310] sm:$0xff]
        %v715 = vld [vmem:[%s488 + $0x318] sm:$0xff]
        %v716 = vld [vmem:[%s488 + $0x320] sm:$0xff]
        %v717 = vld [vmem:[%s488 + $0x328] sm:$0xff]
        %v718 = vld [vmem:[%s488 + $0x330] sm:$0xff]
        %v719 = vld [vmem:[%s488 + $0x338] sm:$0xff]
        %v720 = vld [vmem:[%s488 + $0x340] sm:$0xff]
        %v721 = vld [vmem:[%s488 + $0x348] sm:$0xff]
        %v722 = vld [vmem:[%s488 + $0x350] sm:$0xff]
        %v723 = vld [vmem:[%s488 + $0x358] sm:$0xff]
        %v724 = vld [vmem:[%s488 + $0x360] sm:$0xff]
        %v725 = vld [vmem:[%s488 + $0x368] sm:$0xff]
        %v726 = vld [vmem:[%s488 + $0x370] sm:$0xff]
        %v727 = vld [vmem:[%s488 + $0x378] sm:$0xff]
        %v728 = vld [vmem:[%s488 + $0x380] sm:$0xff]
        %v729 = vld [vmem:[%s488 + $0x388] sm:$0xff]
        %v730 = vld [vmem:[%s488 + $0x390] sm:$0xff]
        %v731 = vld [vmem:[%s488 + $0x398] sm:$0xff]
        %v732 = vld [vmem:[%s488 + $0x3a0] sm:$0xff]
        %v733 = vld [vmem:[%s488 + $0x3a8] sm:$0xff]
        %v734 = vld [vmem:[%s488 + $0x3b0] sm:$0xff]
        %v735 = vld [vmem:[%s488 + $0x3b8] sm:$0xff]
        %v736 = vld [vmem:[%s488 + $0x3c0] sm:$0xff]
        %v737 = vld [vmem:[%s488 + $0x3c8] sm:$0xff]
        %v738 = vld [vmem:[%s488 + $0x3d0] sm:$0xff]
        %v739 = vld [vmem:[%s488 + $0x3d8] sm:$0xff]
        %v740 = vld [vmem:[%s488 + $0x3e0] sm:$0xff]
        %v741 = vld [vmem:[%s488 + $0x3e8] sm:$0xff]
        %v742 = vld [vmem:[%s488 + $0x3f0] sm:$0xff]
        %v743 = vld [vmem:[%s488 + $0x3f8] sm:$0xff]
        %v744 = vld [vmem:[%s488 + $0x400] sm:$0xff]
        %v745 = vld [vmem:[%s488 + $0x408] sm:$0xff]
        %v746 = vld [vmem:[%s488 + $0x410] sm:$0xff]
        %v747 = vld [vmem:[%s488 + $0x418] sm:$0xff]
        %v748 = vld [vmem:[%s488 + $0x420] sm:$0xff]
        %v749 = vld [vmem:[%s488 + $0x428] sm:$0xff]
        %v750 = vld [vmem:[%s488 + $0x430] sm:$0xff]
        %v751 = vld [vmem:[%s488 + $0x438] sm:$0xff]
        %v752 = vld [vmem:[%s488 + $0x440] sm:$0xff]
        %v753 = vld [vmem:[%s488 + $0x448] sm:$0xff]
        %v754 = vld [vmem:[%s488 + $0x450] sm:$0xff]
        %v755 = vld [vmem:[%s488 + $0x458] sm:$0xff]
        %v756 = vld [vmem:[%s488 + $0x460] sm:$0xff]
        %v757 = vld [vmem:[%s488 + $0x468] sm:$0xff]
        %v758 = vld [vmem:[%s488 + $0x470] sm:$0xff]
        %v759 = vld [vmem:[%s488 + $0x478] sm:$0xff]
        %v760 = vld [vmem:[%s488 + $0x480] sm:$0xff]
        %v761 = vld [vmem:[%s488 + $0x488] sm:$0xff]
        %v762 = vld [vmem:[%s488 + $0x490] sm:$0xff]
        %v763 = vld [vmem:[%s488 + $0x498] sm:$0xff]
        %v764 = vld [vmem:[%s488 + $0x4a0] sm:$0xff]
        %v765 = vld [vmem:[%s488 + $0x4a8] sm:$0xff]
        %v766 = vld [vmem:[%s488 + $0x4b0] sm:$0xff]
        %v767 = vld [vmem:[%s488 + $0x4b8] sm:$0xff]
        %v768 = vld [vmem:[%s488 + $0x4c0] sm:$0xff]
        %v769 = vld [vmem:[%s488 + $0x4c8] sm:$0xff]
        %v770 = vld [vmem:[%s488 + $0x4d0] sm:$0xff]
        %v771 = vld [vmem:[%s488 + $0x4d8] sm:$0xff]
        %v772 = vld [vmem:[%s488 + $0x4e0] sm:$0xff]
        %v773 = vld [vmem:[%s488 + $0x4e8] sm:$0xff]
        %v774 = vld [vmem:[%s488 + $0x4f0] sm:$0xff]
        %v775 = vld [vmem:[%s488 + $0x4f8] sm:$0xff]
        %v776 = vld [vmem:[%s488 + $0x500] sm:$0xff]
        %v777 = vld [vmem:[%s488 + $0x508] sm:$0xff]
        %v778 = vld [vmem:[%s488 + $0x510] sm:$0xff]
        %v779 = vld [vmem:[%s488 + $0x518] sm:$0xff]
        %v780 = vld [vmem:[%s488 + $0x520] sm:$0xff]
        %v781 = vld [vmem:[%s488 + $0x528] sm:$0xff]
        %v782 = vld [vmem:[%s488 + $0x530] sm:$0xff]
        %v783 = vld [vmem:[%s488 + $0x538] sm:$0xff]
        %v784 = vld [vmem:[%s488 + $0x540] sm:$0xff]
        %v785 = vld [vmem:[%s488 + $0x548] sm:$0xff]
        %v786 = vld [vmem:[%s488 + $0x550] sm:$0xff]
        %v787 = vld [vmem:[%s488 + $0x558] sm:$0xff]
        %v788 = vld [vmem:[%s488 + $0x560] sm:$0xff]
        %v789 = vld [vmem:[%s488 + $0x568] sm:$0xff]
        %v790 = vld [vmem:[%s488 + $0x570] sm:$0xff]
        %v791 = vld [vmem:[%s488 + $0x578] sm:$0xff]
        %v792 = vld [vmem:[%s488 + $0x580] sm:$0xff]
        %v793 = vld [vmem:[%s488 + $0x588] sm:$0xff]
        %v794 = vld [vmem:[%s488 + $0x590] sm:$0xff]
        %v795 = vld [vmem:[%s488 + $0x598] sm:$0xff]
        %v796 = vld [vmem:[%s488 + $0x5a0] sm:$0xff]
        %v797 = vld [vmem:[%s488 + $0x5a8] sm:$0xff]
        %v798 = vld [vmem:[%s488 + $0x5b0] sm:$0xff]
        %v799 = vld [vmem:[%s488 + $0x5b8] sm:$0xff]
        %v800 = vld [vmem:[%s488 + $0x5c0] sm:$0xff]
        %v801 = vld [vmem:[%s488 + $0x5c8] sm:$0xff]
        %v802 = vld [vmem:[%s488 + $0x5d0] sm:$0xff]
        %v803 = vld [vmem:[%s488 + $0x5d8] sm:$0xff]
        %v804 = vld [vmem:[%s488 + $0x5e0] sm:$0xff]
        %v805 = vld [vmem:[%s488 + $0x5e8] sm:$0xff]
        %v806 = vld [vmem:[%s488 + $0x5f0] sm:$0xff]
        %v807 = vld [vmem:[%s488 + $0x5f8] sm:$0xff]
        %v808 = vld [vmem:[%s488 + $0x600] sm:$0xff]
        %v809 = vld [vmem:[%s488 + $0x608] sm:$0xff]
        %v810 = vld [vmem:[%s488 + $0x610] sm:$0xff]
        %v811 = vld [vmem:[%s488 + $0x618] sm:$0xff]
        %v812 = vld [vmem:[%s488 + $0x620] sm:$0xff]
        %v813 = vld [vmem:[%s488 + $0x628] sm:$0xff]
        %v814 = vld [vmem:[%s488 + $0x630] sm:$0xff]
        %v815 = vld [vmem:[%s488 + $0x638] sm:$0xff]
        %v816 = vld [vmem:[%s488 + $0x640] sm:$0xff]
        %v817 = vld [vmem:[%s488 + $0x648] sm:$0xff]
        %v818 = vld [vmem:[%s488 + $0x650] sm:$0xff]
        %v819 = vld [vmem:[%s488 + $0x658] sm:$0xff]
        %v820 = vld [vmem:[%s488 + $0x660] sm:$0xff]
        %v821 = vld [vmem:[%s488 + $0x668] sm:$0xff]
        %v822 = vld [vmem:[%s488 + $0x670] sm:$0xff]
        %v823 = vld [vmem:[%s488 + $0x678] sm:$0xff]
        %v824 = vld [vmem:[%s488 + $0x680] sm:$0xff]
        %v825 = vld [vmem:[%s488 + $0x688] sm:$0xff]
        %v826 = vld [vmem:[%s488 + $0x690] sm:$0xff]
        %v827 = vld [vmem:[%s488 + $0x698] sm:$0xff]
        %v828 = vld [vmem:[%s488 + $0x6a0] sm:$0xff]
        %v829 = vld [vmem:[%s488 + $0x6a8] sm:$0xff]
        %v830 = vld [vmem:[%s488 + $0x6b0] sm:$0xff]
        %v831 = vld [vmem:[%s488 + $0x6b8] sm:$0xff]
        %v832 = vld [vmem:[%s488 + $0x6c0] sm:$0xff]
        %v833 = vld [vmem:[%s488 + $0x6c8] sm:$0xff]
        %v834 = vld [vmem:[%s488 + $0x6d0] sm:$0xff]
        %v835 = vld [vmem:[%s488 + $0x6d8] sm:$0xff]
        %v836 = vld [vmem:[%s488 + $0x6e0] sm:$0xff]
        %v837 = vld [vmem:[%s488 + $0x6e8] sm:$0xff]
        %v838 = vld [vmem:[%s488 + $0x6f0] sm:$0xff]
        %v839 = vld [vmem:[%s488 + $0x6f8] sm:$0xff]
        %v840 = vld [vmem:[%s488 + $0x700] sm:$0xff]
        %v841 = vld [vmem:[%s488 + $0x708] sm:$0xff]
        %v842 = vld [vmem:[%s488 + $0x710] sm:$0xff]
        %v843 = vld [vmem:[%s488 + $0x718] sm:$0xff]
        %v844 = vld [vmem:[%s488 + $0x720] sm:$0xff]
        %v845 = vld [vmem:[%s488 + $0x728] sm:$0xff]
        %v846 = vld [vmem:[%s488 + $0x730] sm:$0xff]
        %v847 = vld [vmem:[%s488 + $0x738] sm:$0xff]
        %v848 = vld [vmem:[%s488 + $0x740] sm:$0xff]
        %v849 = vld [vmem:[%s488 + $0x748] sm:$0xff]
        %v850 = vld [vmem:[%s488 + $0x750] sm:$0xff]
        %v851 = vld [vmem:[%s488 + $0x758] sm:$0xff]
        %v852 = vld [vmem:[%s488 + $0x760] sm:$0xff]
        %v853 = vld [vmem:[%s488 + $0x768] sm:$0xff]
        %v854 = vld [vmem:[%s488 + $0x770] sm:$0xff]
        %v855 = vld [vmem:[%s488 + $0x778] sm:$0xff]
        %v856 = vld [vmem:[%s488 + $0x780] sm:$0xff]
        %v857 = vld [vmem:[%s488 + $0x788] sm:$0xff]
        %v858 = vld [vmem:[%s488 + $0x790] sm:$0xff]
        %v859 = vld [vmem:[%s488 + $0x798] sm:$0xff]
        %v860 = vld [vmem:[%s488 + $0x7a0] sm:$0xff]
        %v861 = vld [vmem:[%s488 + $0x7a8] sm:$0xff]
        %v862 = vld [vmem:[%s488 + $0x7b0] sm:$0xff]
        %v863 = vld [vmem:[%s488 + $0x7b8] sm:$0xff]
        %v864 = vld [vmem:[%s488 + $0x7c0] sm:$0xff]
        %v865 = vld [vmem:[%s488 + $0x7c8] sm:$0xff]
        %v866 = vld [vmem:[%s488 + $0x7d0] sm:$0xff]
        %v867 = vld [vmem:[%s488 + $0x7d8] sm:$0xff]
        %v868 = vld [vmem:[%s488 + $0x7e0] sm:$0xff]
        %v869 = vld [vmem:[%s488 + $0x7e8] sm:$0xff]
        %v870 = vld [vmem:[%s488 + $0x7f0] sm:$0xff]
        %v871 = vld [vmem:[%s488 + $0x7f8] sm:$0xff]
        %v872 = vld [vmem:[%s488 + $0x800] sm:$0xff]
        %v873 = vld [vmem:[%s488 + $0x808] sm:$0xff]
        %v874 = vld [vmem:[%s488 + $0x810] sm:$0xff]
        %v875 = vld [vmem:[%s488 + $0x818] sm:$0xff]
        %v876 = vld [vmem:[%s488 + $0x820] sm:$0xff]
        %v877 = vld [vmem:[%s488 + $0x828] sm:$0xff]
        %v878 = vld [vmem:[%s488 + $0x830] sm:$0xff]
        %v879 = vld [vmem:[%s488 + $0x838] sm:$0xff]
        %v880 = vld [vmem:[%s488 + $0x840] sm:$0xff]
        %v881 = vld [vmem:[%s488 + $0x848] sm:$0xff]
        %v882 = vld [vmem:[%s488 + $0x850] sm:$0xff]
        %v883 = vld [vmem:[%s488 + $0x858] sm:$0xff]
        %v884 = vld [vmem:[%s488 + $0x860] sm:$0xff]
        %v885 = vld [vmem:[%s488 + $0x868] sm:$0xff]
        %v886 = vld [vmem:[%s488 + $0x870] sm:$0xff]
        %v887 = vld [vmem:[%s488 + $0x878] sm:$0xff]
        %v888 = vld [vmem:[%s488 + $0x880] sm:$0xff]
        %v889 = vld [vmem:[%s488 + $0x888] sm:$0xff]
        %v890 = vld [vmem:[%s488 + $0x890] sm:$0xff]
        %v891 = vld [vmem:[%s488 + $0x898] sm:$0xff]
        %v892 = vld [vmem:[%s488 + $0x8a0] sm:$0xff]
        %v893 = vld [vmem:[%s488 + $0x8a8] sm:$0xff]
        %v894 = vld [vmem:[%s488 + $0x8b0] sm:$0xff]
        %v895 = vld [vmem:[%s488 + $0x8b8] sm:$0xff]
        %v896 = vld [vmem:[%s488 + $0x8c0] sm:$0xff]
        %v897 = vld [vmem:[%s488 + $0x8c8] sm:$0xff]
        %v898 = vld [vmem:[%s488 + $0x8d0] sm:$0xff]
        %v899 = vld [vmem:[%s488 + $0x8d8] sm:$0xff]
        %v900 = vld [vmem:[%s488 + $0x8e0] sm:$0xff]
        %v901 = vld [vmem:[%s488 + $0x8e8] sm:$0xff]
        %v902 = vld [vmem:[%s488 + $0x8f0] sm:$0xff]
        %v903 = vld [vmem:[%s488 + $0x8f8] sm:$0xff]
        %v904 = vld [vmem:[%s488 + $0x900] sm:$0xff]
        %v905 = vld [vmem:[%s488 + $0x908] sm:$0xff]
        %v906 = vld [vmem:[%s488 + $0x910] sm:$0xff]
        %v907 = vld [vmem:[%s488 + $0x918] sm:$0xff]
        %v908 = vld [vmem:[%s488 + $0x920] sm:$0xff]
        %v909 = vld [vmem:[%s488 + $0x928] sm:$0xff]
        %v910 = vld [vmem:[%s488 + $0x930] sm:$0xff]
        %v911 = vld [vmem:[%s488 + $0x938] sm:$0xff]
        %v912 = vld [vmem:[%s488 + $0x940] sm:$0xff]
        %v913 = vld [vmem:[%s488 + $0x948] sm:$0xff]
        %v914 = vld [vmem:[%s488 + $0x950] sm:$0xff]
        %v915 = vld [vmem:[%s488 + $0x958] sm:$0xff]
        %v916 = vld [vmem:[%s488 + $0x960] sm:$0xff]
        %v917 = vld [vmem:[%s488 + $0x968] sm:$0xff]
        %v918 = vld [vmem:[%s488 + $0x970] sm:$0xff]
        %v919 = vld [vmem:[%s488 + $0x978] sm:$0xff]
        %v920 = vld [vmem:[%s488 + $0x980] sm:$0xff]
        %v921 = vld [vmem:[%s488 + $0x988] sm:$0xff]
        %v922 = vld [vmem:[%s488 + $0x990] sm:$0xff]
        %v923 = vld [vmem:[%s488 + $0x998] sm:$0xff]
        %v924 = vld [vmem:[%s488 + $0x9a0] sm:$0xff]
        %v925 = vld [vmem:[%s488 + $0x9a8] sm:$0xff]
        %v926 = vld [vmem:[%s488 + $0x9b0] sm:$0xff]
        %v927 = vld [vmem:[%s488 + $0x9b8] sm:$0xff]
        %v928 = vld [vmem:[%s488 + $0x9c0] sm:$0xff]
        %v929 = vld [vmem:[%s488 + $0x9c8] sm:$0xff]
        %v930 = vld [vmem:[%s488 + $0x9d0] sm:$0xff]
        %v931 = vld [vmem:[%s488 + $0x9d8] sm:$0xff]
        %v932 = vld [vmem:[%s488 + $0x9e0] sm:$0xff]
        %v933 = vld [vmem:[%s488 + $0x9e8] sm:$0xff]
        %v934 = vld [vmem:[%s488 + $0x9f0] sm:$0xff]
        %v935 = vld [vmem:[%s488 + $0x9f8] sm:$0xff]
        %v936 = vld [vmem:[%s488 + $0xa00] sm:$0xff]
        %v937 = vld [vmem:[%s488 + $0xa08] sm:$0xff]
        %v938 = vld [vmem:[%s488 + $0xa10] sm:$0xff]
        %v939 = vld [vmem:[%s488 + $0xa18] sm:$0xff]
        %v940 = vld [vmem:[%s488 + $0xa20] sm:$0xff]
        %v941 = vld [vmem:[%s488 + $0xa28] sm:$0xff]
        %v942 = vld [vmem:[%s488 + $0xa30] sm:$0xff]
        %v943 = vld [vmem:[%s488 + $0xa38] sm:$0xff]
        %v944 = vld [vmem:[%s488 + $0xa40] sm:$0xff]
        %v945 = vld [vmem:[%s488 + $0xa48] sm:$0xff]
        %v946 = vld [vmem:[%s488 + $0xa50] sm:$0xff]
        %v947 = vld [vmem:[%s488 + $0xa58] sm:$0xff]
        %v948 = vld [vmem:[%s488 + $0xa60] sm:$0xff]
        %v949 = vld [vmem:[%s488 + $0xa68] sm:$0xff]
        %v950 = vld [vmem:[%s488 + $0xa70] sm:$0xff]
        %v951 = vld [vmem:[%s488 + $0xa78] sm:$0xff]
        %v952 = vld [vmem:[%s488 + $0xa80] sm:$0xff]
        %v953 = vld [vmem:[%s488 + $0xa88] sm:$0xff]
        %v954 = vld [vmem:[%s488 + $0xa90] sm:$0xff]
        %v955 = vld [vmem:[%s488 + $0xa98] sm:$0xff]
        %v956 = vld [vmem:[%s488 + $0xaa0] sm:$0xff]
        %v957 = vld [vmem:[%s488 + $0xaa8] sm:$0xff]
        %v958 = vld [vmem:[%s488 + $0xab0] sm:$0xff]
        %v959 = vld [vmem:[%s488 + $0xab8] sm:$0xff]
        %v960 = vld [vmem:[%s488 + $0xac0] sm:$0xff]
        %v961 = vld [vmem:[%s488 + $0xac8] sm:$0xff]
        %v962 = vld [vmem:[%s488 + $0xad0] sm:$0xff]
        %v963 = vld [vmem:[%s488 + $0xad8] sm:$0xff]
        %v964 = vld [vmem:[%s488 + $0xae0] sm:$0xff]
        %v965 = vld [vmem:[%s488 + $0xae8] sm:$0xff]
        %v966 = vld [vmem:[%s488 + $0xaf0] sm:$0xff]
        %v967 = vld [vmem:[%s488 + $0xaf8] sm:$0xff]
        %v968 = vld [vmem:[%s488 + $0xb00] sm:$0xff]
        %v969 = vld [vmem:[%s488 + $0xb08] sm:$0xff]
        %v970 = vld [vmem:[%s488 + $0xb10] sm:$0xff]
        %v971 = vld [vmem:[%s488 + $0xb18] sm:$0xff]
        %v972 = vld [vmem:[%s488 + $0xb20] sm:$0xff]
        %v973 = vld [vmem:[%s488 + $0xb28] sm:$0xff]
        %v974 = vld [vmem:[%s488 + $0xb30] sm:$0xff]
        %v975 = vld [vmem:[%s488 + $0xb38] sm:$0xff]
        %v976 = vld [vmem:[%s488 + $0xb40] sm:$0xff]
        %v977 = vld [vmem:[%s488 + $0xb48] sm:$0xff]
        %v978 = vld [vmem:[%s488 + $0xb50] sm:$0xff]
        %v979 = vld [vmem:[%s488 + $0xb58] sm:$0xff]
        %v980 = vld [vmem:[%s488 + $0xb60] sm:$0xff]
        %v981 = vld [vmem:[%s488 + $0xb68] sm:$0xff]
        %v982 = vld [vmem:[%s488 + $0xb70] sm:$0xff]
        %v983 = vld [vmem:[%s488 + $0xb78] sm:$0xff]
        %v984 = vld [vmem:[%s488 + $0xb80] sm:$0xff]
        %v985 = vld [vmem:[%s488 + $0xb88] sm:$0xff]
        %v986 = vld [vmem:[%s488 + $0xb90] sm:$0xff]
        %v987 = vld [vmem:[%s488 + $0xb98] sm:$0xff]
        %v988 = vld [vmem:[%s488 + $0xba0] sm:$0xff]
        %v989 = vld [vmem:[%s488 + $0xba8] sm:$0xff]
        %v990 = vld [vmem:[%s488 + $0xbb0] sm:$0xff]
        %v991 = vld [vmem:[%s488 + $0xbb8] sm:$0xff]
        %v992 = vld [vmem:[%s488 + $0xbc0] sm:$0xff]
        %v993 = vld [vmem:[%s488 + $0xbc8] sm:$0xff]
        %v994 = vld [vmem:[%s488 + $0xbd0] sm:$0xff]
        %v995 = vld [vmem:[%s488 + $0xbd8] sm:$0xff]
        %v996 = vld [vmem:[%s488 + $0xbe0] sm:$0xff]
        %v997 = vld [vmem:[%s488 + $0xbe8] sm:$0xff]
        %v998 = vld [vmem:[%s488 + $0xbf0] sm:$0xff]
        %v999 = vld [vmem:[%s488 + $0xbf8] sm:$0xff]
        %v1000 = vld [vmem:[%s488 + $0xc00] sm:$0xff]
        %v1001 = vld [vmem:[%s488 + $0xc08] sm:$0xff]
        %v1002 = vld [vmem:[%s488 + $0xc10] sm:$0xff]
        %v1003 = vld [vmem:[%s488 + $0xc18] sm:$0xff]
        %v1004 = vld [vmem:[%s488 + $0xc20] sm:$0xff]
        %v1005 = vld [vmem:[%s488 + $0xc28] sm:$0xff]
        %v1006 = vld [vmem:[%s488 + $0xc30] sm:$0xff]
        %v1007 = vld [vmem:[%s488 + $0xc38] sm:$0xff]
        %v1008 = vld [vmem:[%s488 + $0xc40] sm:$0xff]
        %v1009 = vld [vmem:[%s488 + $0xc48] sm:$0xff]
        %v1010 = vld [vmem:[%s488 + $0xc50] sm:$0xff]
        %v1011 = vld [vmem:[%s488 + $0xc58] sm:$0xff]
        %v1012 = vld [vmem:[%s488 + $0xc60] sm:$0xff]
        %v1013 = vld [vmem:[%s488 + $0xc68] sm:$0xff]
        %v1014 = vld [vmem:[%s488 + $0xc70] sm:$0xff]
        %v1015 = vld [vmem:[%s488 + $0xc78] sm:$0xff]
        %v1016 = vld [vmem:[%s488 + $0xc80] sm:$0xff]
        %v1017 = vld [vmem:[%s488 + $0xc88] sm:$0xff]
        %v1018 = vld [vmem:[%s488 + $0xc90] sm:$0xff]
        %v1019 = vld [vmem:[%s488 + $0xc98] sm:$0xff]
        %v1020 = vld [vmem:[%s488 + $0xca0] sm:$0xff]
        %v1021 = vld [vmem:[%s488 + $0xca8] sm:$0xff]
        %v1022 = vld [vmem:[%s488 + $0xcb0] sm:$0xff]
        %v1023 = vld [vmem:[%s488 + $0xcb8] sm:$0xff]
        %v1024 = vld [vmem:[%s488 + $0xcc0] sm:$0xff]
        %v1025 = vld [vmem:[%s488 + $0xcc8] sm:$0xff]
        %v1026 = vld [vmem:[%s488 + $0xcd0] sm:$0xff]
        %v1027 = vld [vmem:[%s488 + $0xcd8] sm:$0xff]
        %v1028 = vld [vmem:[%s488 + $0xce0] sm:$0xff]
        %v1029 = vld [vmem:[%s488 + $0xce8] sm:$0xff]
        %v1030 = vld [vmem:[%s488 + $0xcf0] sm:$0xff]
        %v1031 = vld [vmem:[%s488 + $0xcf8] sm:$0xff]
        %v1032 = vld [vmem:[%s488 + $0xd00] sm:$0xff]
        %v1033 = vld [vmem:[%s488 + $0xd08] sm:$0xff]
        %v1034 = vld [vmem:[%s488 + $0xd10] sm:$0xff]
        %v1035 = vld [vmem:[%s488 + $0xd18] sm:$0xff]
        %v1036 = vld [vmem:[%s488 + $0xd20] sm:$0xff]
        %v1037 = vld [vmem:[%s488 + $0xd28] sm:$0xff]
        %v1038 = vld [vmem:[%s488 + $0xd30] sm:$0xff]
        %v1039 = vld [vmem:[%s488 + $0xd38] sm:$0xff]
        %v1040 = vld [vmem:[%s488 + $0xd40] sm:$0xff]
        %v1041 = vld [vmem:[%s488 + $0xd48] sm:$0xff]
        %v1042 = vld [vmem:[%s488 + $0xd50] sm:$0xff]
        %v1043 = vld [vmem:[%s488 + $0xd58] sm:$0xff]
        %v1044 = vld [vmem:[%s488 + $0xd60] sm:$0xff]
        %v1045 = vld [vmem:[%s488 + $0xd68] sm:$0xff]
        %v1046 = vld [vmem:[%s488 + $0xd70] sm:$0xff]
        %v1047 = vld [vmem:[%s488 + $0xd78] sm:$0xff]
        %v1048 = vld [vmem:[%s488 + $0xd80] sm:$0xff]
        %v1049 = vld [vmem:[%s488 + $0xd88] sm:$0xff]
        %v1050 = vld [vmem:[%s488 + $0xd90] sm:$0xff]
        %v1051 = vld [vmem:[%s488 + $0xd98] sm:$0xff]
        %v1052 = vld [vmem:[%s488 + $0xda0] sm:$0xff]
        %v1053 = vld [vmem:[%s488 + $0xda8] sm:$0xff]
        %v1054 = vld [vmem:[%s488 + $0xdb0] sm:$0xff]
        %v1055 = vld [vmem:[%s488 + $0xdb8] sm:$0xff]
        %v1056 = vld [vmem:[%s488 + $0xdc0] sm:$0xff]
        %v1057 = vld [vmem:[%s488 + $0xdc8] sm:$0xff]
        %v1058 = vld [vmem:[%s488 + $0xdd0] sm:$0xff]
        %v1059 = vld [vmem:[%s488 + $0xdd8] sm:$0xff]
        %v1060 = vld [vmem:[%s488 + $0xde0] sm:$0xff]
        %v1061 = vld [vmem:[%s488 + $0xde8] sm:$0xff]
        %v1062 = vld [vmem:[%s488 + $0xdf0] sm:$0xff]
        %v1063 = vld [vmem:[%s488 + $0xdf8] sm:$0xff]
        %v1064 = vld [vmem:[%s488 + $0xe00] sm:$0xff]
        %v1065 = vld [vmem:[%s488 + $0xe08] sm:$0xff]
        %v1066 = vld [vmem:[%s488 + $0xe10] sm:$0xff]
        %v1067 = vld [vmem:[%s488 + $0xe18] sm:$0xff]
        %v1068 = vld [vmem:[%s488 + $0xe20] sm:$0xff]
        %v1069 = vld [vmem:[%s488 + $0xe28] sm:$0xff]
        %v1070 = vld [vmem:[%s488 + $0xe30] sm:$0xff]
        %v1071 = vld [vmem:[%s488 + $0xe38] sm:$0xff]
        %v1072 = vld [vmem:[%s488 + $0xe40] sm:$0xff]
        %v1073 = vld [vmem:[%s488 + $0xe48] sm:$0xff]
        %v1074 = vld [vmem:[%s488 + $0xe50] sm:$0xff]
        %v1075 = vld [vmem:[%s488 + $0xe58] sm:$0xff]
        %v1076 = vld [vmem:[%s488 + $0xe60] sm:$0xff]
        %v1077 = vld [vmem:[%s488 + $0xe68] sm:$0xff]
        %v1078 = vld [vmem:[%s488 + $0xe70] sm:$0xff]
        %v1079 = vld [vmem:[%s488 + $0xe78] sm:$0xff]
        %v1080 = vld [vmem:[%s488 + $0xe80] sm:$0xff]
        %v1081 = vld [vmem:[%s488 + $0xe88] sm:$0xff]
        %v1082 = vld [vmem:[%s488 + $0xe90] sm:$0xff]
        %v1083 = vld [vmem:[%s488 + $0xe98] sm:$0xff]
        %v1084 = vld [vmem:[%s488 + $0xea0] sm:$0xff]
        %v1085 = vld [vmem:[%s488 + $0xea8] sm:$0xff]
        %v1086 = vld [vmem:[%s488 + $0xeb0] sm:$0xff]
        %v1087 = vld [vmem:[%s488 + $0xeb8] sm:$0xff]
        %v1088 = vld [vmem:[%s488 + $0xec0] sm:$0xff]
        %v1089 = vld [vmem:[%s488 + $0xec8] sm:$0xff]
        %v1090 = vld [vmem:[%s488 + $0xed0] sm:$0xff]
        %v1091 = vld [vmem:[%s488 + $0xed8] sm:$0xff]
        %v1092 = vld [vmem:[%s488 + $0xee0] sm:$0xff]
        %v1093 = vld [vmem:[%s488 + $0xee8] sm:$0xff]
        %v1094 = vld [vmem:[%s488 + $0xef0] sm:$0xff]
        %v1095 = vld [vmem:[%s488 + $0xef8] sm:$0xff]
        %v1096 = vld [vmem:[%s488 + $0xf00] sm:$0xff]
        %v1097 = vld [vmem:[%s488 + $0xf08] sm:$0xff]
        %v1098 = vld [vmem:[%s488 + $0xf10] sm:$0xff]
        %v1099 = vld [vmem:[%s488 + $0xf18] sm:$0xff]
        %v1100 = vld [vmem:[%s488 + $0xf20] sm:$0xff]
        %v1101 = vld [vmem:[%s488 + $0xf28] sm:$0xff]
        %v1102 = vld [vmem:[%s488 + $0xf30] sm:$0xff]
        %v1103 = vld [vmem:[%s488 + $0xf38] sm:$0xff]
        %v1104 = vld [vmem:[%s488 + $0xf40] sm:$0xff]
        %v1105 = vld [vmem:[%s488 + $0xf48] sm:$0xff]
        %v1106 = vld [vmem:[%s488 + $0xf50] sm:$0xff]
        %v1107 = vld [vmem:[%s488 + $0xf58] sm:$0xff]
        %v1108 = vld [vmem:[%s488 + $0xf60] sm:$0xff]
        %v1109 = vld [vmem:[%s488 + $0xf68] sm:$0xff]
        %v1110 = vld [vmem:[%s488 + $0xf70] sm:$0xff]
        %v1111 = vld [vmem:[%s488 + $0xf78] sm:$0xff]
        %v1112 = vld [vmem:[%s488 + $0xf80] sm:$0xff]
        %v1113 = vld [vmem:[%s488 + $0xf88] sm:$0xff]
        %v1114 = vld [vmem:[%s488 + $0xf90] sm:$0xff]
        %v1115 = vld [vmem:[%s488 + $0xf98] sm:$0xff]
        %v1116 = vld [vmem:[%s488 + $0xfa0] sm:$0xff]
        %v1117 = vld [vmem:[%s488 + $0xfa8] sm:$0xff]
        %v1118 = vld [vmem:[%s488 + $0xfb0] sm:$0xff]
        %v1119 = vld [vmem:[%s488 + $0xfb8] sm:$0xff]
        %v1120 = vld [vmem:[%s488 + $0xfc0] sm:$0xff]
        %v1121 = vld [vmem:[%s488 + $0xfc8] sm:$0xff]
        %v1122 = vld [vmem:[%s488 + $0xfd0] sm:$0xff]
        %v1123 = vld [vmem:[%s488 + $0xfd8] sm:$0xff]
        %v1124 = vld [vmem:[%s488 + $0xfe0] sm:$0xff]
        %v1125 = vld [vmem:[%s488 + $0xfe8] sm:$0xff]
        %v1126 = vld [vmem:[%s488 + $0xff0] sm:$0xff]
        %v1127 = vld [vmem:[%s488 + $0xff8] sm:$0xff]
        %v1128 = vld [vmem:[%s488 + $0x1000] sm:$0xff]
        %v1129 = vld [vmem:[%s488 + $0x1008] sm:$0xff]
        %v1130 = vld [vmem:[%s488 + $0x1010] sm:$0xff]
        %v1131 = vld [vmem:[%s488 + $0x1018] sm:$0xff]
        %v1132 = vld [vmem:[%s488 + $0x1020] sm:$0xff]
        %v1133 = vld [vmem:[%s488 + $0x1028] sm:$0xff]
        %v1134 = vld [vmem:[%s488 + $0x1030] sm:$0xff]
        %v1135 = vld [vmem:[%s488 + $0x1038] sm:$0xff]
        %v1136 = vld [vmem:[%s488 + $0x1040] sm:$0xff]
        %v1137 = vld [vmem:[%s488 + $0x1048] sm:$0xff]
        %v1138 = vld [vmem:[%s488 + $0x1050] sm:$0xff]
        %v1139 = vld [vmem:[%s488 + $0x1058] sm:$0xff]
        %v1140 = vld [vmem:[%s488 + $0x1060] sm:$0xff]
        %v1141 = vld [vmem:[%s488 + $0x1068] sm:$0xff]
        %v1142 = vld [vmem:[%s488 + $0x1070] sm:$0xff]
        %v1143 = vld [vmem:[%s488 + $0x1078] sm:$0xff]
        %v1144 = vld [vmem:[%s488 + $0x1080] sm:$0xff]
        %v1145 = vld [vmem:[%s488 + $0x1088] sm:$0xff]
        %v1146 = vld [vmem:[%s488 + $0x1090] sm:$0xff]
        %v1147 = vld [vmem:[%s488 + $0x1098] sm:$0xff]
        %v1148 = vld [vmem:[%s488 + $0x10a0] sm:$0xff]
        %v1149 = vld [vmem:[%s488 + $0x10a8] sm:$0xff]
        %v1150 = vld [vmem:[%s488 + $0x10b0] sm:$0xff]
        %v1151 = vld [vmem:[%s488 + $0x10b8] sm:$0xff]
        %v1152 = vld [vmem:[%s488 + $0x10c0] sm:$0xff]
        %v1153 = vld [vmem:[%s488 + $0x10c8] sm:$0xff]
        %v1154 = vld [vmem:[%s488 + $0x10d0] sm:$0xff]
        %v1155 = vld [vmem:[%s488 + $0x10d8] sm:$0xff]
        %v1156 = vld [vmem:[%s488 + $0x10e0] sm:$0xff]
        %v1157 = vld [vmem:[%s488 + $0x10e8] sm:$0xff]
        %v1158 = vld [vmem:[%s488 + $0x10f0] sm:$0xff]
        %v1159 = vld [vmem:[%s488 + $0x10f8] sm:$0xff]
        %v1160 = vld [vmem:[%s488 + $0x1100] sm:$0xff]
        %v1161 = vld [vmem:[%s488 + $0x1108] sm:$0xff]
        %v1162 = vld [vmem:[%s488 + $0x1110] sm:$0xff]
        %v1163 = vld [vmem:[%s488 + $0x1118] sm:$0xff]
        %v1164 = vld [vmem:[%s488 + $0x1120] sm:$0xff]
        %v1165 = vld [vmem:[%s488 + $0x1128] sm:$0xff]
        %v1166 = vld [vmem:[%s488 + $0x1130] sm:$0xff]
        %v1167 = vld [vmem:[%s488 + $0x1138] sm:$0xff]
        %v1168 = vld [vmem:[%s488 + $0x1140] sm:$0xff]
        %v1169 = vld [vmem:[%s488 + $0x1148] sm:$0xff]
        %v1170 = vld [vmem:[%s488 + $0x1150] sm:$0xff]
        %v1171 = vld [vmem:[%s488 + $0x1158] sm:$0xff]
        %v1172 = vld [vmem:[%s488 + $0x1160] sm:$0xff]
        %v1173 = vld [vmem:[%s488 + $0x1168] sm:$0xff]
        %v1174 = vld [vmem:[%s488 + $0x1170] sm:$0xff]
        %v1175 = vld [vmem:[%s488 + $0x1178] sm:$0xff]
        %v1176 = vld [vmem:[%s488 + $0x1180] sm:$0xff]
        %v1177 = vld [vmem:[%s488 + $0x1188] sm:$0xff]
        %v1178 = vld [vmem:[%s488 + $0x1190] sm:$0xff]
        %v1179 = vld [vmem:[%s488 + $0x1198] sm:$0xff]
        %v1180 = vld [vmem:[%s488 + $0x11a0] sm:$0xff]
        %v1181 = vld [vmem:[%s488 + $0x11a8] sm:$0xff]
        %v1182 = vld [vmem:[%s488 + $0x11b0] sm:$0xff]
        %v1183 = vld [vmem:[%s488 + $0x11b8] sm:$0xff]
        %v1184 = vld [vmem:[%s488 + $0x11c0] sm:$0xff]
        %v1185 = vld [vmem:[%s488 + $0x11c8] sm:$0xff]
        %v1186 = vld [vmem:[%s488 + $0x11d0] sm:$0xff]
        %v1187 = vld [vmem:[%s488 + $0x11d8] sm:$0xff]
        %v1188 = vld [vmem:[%s488 + $0x11e0] sm:$0xff]
        %v1189 = vld [vmem:[%s488 + $0x11e8] sm:$0xff]
        %v1190 = vld [vmem:[%s488 + $0x11f0] sm:$0xff]
        %v1191 = vld [vmem:[%s488 + $0x11f8] sm:$0xff]
        %v1192 = vld [vmem:[%s488 + $0x1200] sm:$0xff]
        %v1193 = vld [vmem:[%s488 + $0x1208] sm:$0xff]
        %v1194 = vld [vmem:[%s488 + $0x1210] sm:$0xff]
        %v1195 = vld [vmem:[%s488 + $0x1218] sm:$0xff]
        %v1196 = vld [vmem:[%s488 + $0x1220] sm:$0xff]
        %v1197 = vld [vmem:[%s488 + $0x1228] sm:$0xff]
        %v1198 = vld [vmem:[%s488 + $0x1230] sm:$0xff]
        %v1199 = vld [vmem:[%s488 + $0x1238] sm:$0xff]
        %v1200 = vld [vmem:[%s488 + $0x1240] sm:$0xff]
        %v1201 = vld [vmem:[%s488 + $0x1248] sm:$0xff]
        %v1202 = vld [vmem:[%s488 + $0x1250] sm:$0xff]
        %v1203 = vld [vmem:[%s488 + $0x1258] sm:$0xff]
        %v1204 = vld [vmem:[%s488 + $0x1260] sm:$0xff]
        %v1205 = vld [vmem:[%s488 + $0x1268] sm:$0xff]
        %v1206 = vld [vmem:[%s488 + $0x1270] sm:$0xff]
        %v1207 = vld [vmem:[%s488 + $0x1278] sm:$0xff]
        %v1208 = vld [vmem:[%s488 + $0x1280] sm:$0xff]
        %v1209 = vld [vmem:[%s488 + $0x1288] sm:$0xff]
        %v1210 = vld [vmem:[%s488 + $0x1290] sm:$0xff]
        %v1211 = vld [vmem:[%s488 + $0x1298] sm:$0xff]
        %v1212 = vld [vmem:[%s488 + $0x12a0] sm:$0xff]
        %v1213 = vld [vmem:[%s488 + $0x12a8] sm:$0xff]
        %v1214 = vld [vmem:[%s488 + $0x12b0] sm:$0xff]
        %v1215 = vld [vmem:[%s488 + $0x12b8] sm:$0xff]
        %v1216 = vunpack.c.l.s8.bf16 %v616
        %v1217 = vunpack.c.l.s8.bf16 %v617
        %v1218 = vunpack.c.l.s8.bf16 %v618
        %v1219 = vunpack.c.l.s8.bf16 %v619
        %v1220 = vunpack.c.l.s8.bf16 %v620
        %v1221 = vunpack.c.l.s8.bf16 %v621
        %v1222 = vunpack.c.l.s8.bf16 %v622
        %v1223 = vunpack.c.l.s8.bf16 %v623
        %v1224 = vunpack.c.l.s8.bf16 %v624
        %v1225 = vunpack.c.l.s8.bf16 %v625
        %v1226 = vunpack.c.l.s8.bf16 %v626
        %v1227 = vunpack.c.l.s8.bf16 %v627
        %v1228 = vunpack.c.l.s8.bf16 %v628
        %v1229 = vunpack.c.l.s8.bf16 %v629
        %v1230 = vunpack.c.l.s8.bf16 %v630
        %v1231 = vunpack.c.h.s8.bf16 %v616
        %v1232 = vunpack.c.h.s8.bf16 %v617
        %v1233 = vunpack.c.h.s8.bf16 %v618
        %v1234 = vunpack.c.h.s8.bf16 %v619
        %v1235 = vunpack.c.h.s8.bf16 %v620
        %v1236 = vunpack.c.h.s8.bf16 %v621
        %v1237 = vunpack.c.h.s8.bf16 %v622
        %v1238 = vunpack.c.h.s8.bf16 %v623
        %v1239 = vunpack.c.h.s8.bf16 %v624
        %v1240 = vunpack.c.h.s8.bf16 %v625
        %v1241 = vunpack.c.h.s8.bf16 %v626
        %v1242 = vunpack.c.h.s8.bf16 %v627
        %v1243 = vunpack.c.h.s8.bf16 %v628
        %v1244 = vunpack.c.h.s8.bf16 %v629
        %v1245 = vunpack.c.h.s8.bf16 %v630
        %v1246 = vunpack.c.l.s8.bf16 %v631
        %v1247 = vunpack.c.l.s8.bf16 %v632
        %v1248 = vunpack.c.l.s8.bf16 %v633
        %v1249 = vunpack.c.l.s8.bf16 %v634
        %v1250 = vunpack.c.l.s8.bf16 %v635
        %v1251 = vunpack.c.l.s8.bf16 %v636
        %v1252 = vunpack.c.l.s8.bf16 %v637
        %v1253 = vunpack.c.l.s8.bf16 %v638
        %v1254 = vunpack.c.l.s8.bf16 %v639
        %v1255 = vunpack.c.l.s8.bf16 %v640
        %v1256 = vunpack.c.l.s8.bf16 %v641
        %v1257 = vunpack.c.l.s8.bf16 %v642
        %v1258 = vunpack.c.l.s8.bf16 %v643
        %v1259 = vunpack.c.l.s8.bf16 %v644
        %v1260 = vunpack.c.l.s8.bf16 %v645
        %v1261 = vunpack.c.h.s8.bf16 %v631
        %v1262 = vunpack.c.h.s8.bf16 %v632
        %v1263 = vunpack.c.h.s8.bf16 %v633
        %v1264 = vunpack.c.h.s8.bf16 %v634
        %v1265 = vunpack.c.h.s8.bf16 %v635
        %v1266 = vunpack.c.h.s8.bf16 %v636
        %v1267 = vunpack.c.h.s8.bf16 %v637
        %v1268 = vunpack.c.h.s8.bf16 %v638
        %v1269 = vunpack.c.h.s8.bf16 %v639
        %v1270 = vunpack.c.h.s8.bf16 %v640
        %v1271 = vunpack.c.h.s8.bf16 %v641
        %v1272 = vunpack.c.h.s8.bf16 %v642
        %v1273 = vunpack.c.h.s8.bf16 %v643
        %v1274 = vunpack.c.h.s8.bf16 %v644
        %v1275 = vunpack.c.h.s8.bf16 %v645
        %v1276 = vunpack.c.l.s8.bf16 %v646
        %v1277 = vunpack.c.l.s8.bf16 %v647
        %v1278 = vunpack.c.l.s8.bf16 %v648
        %v1279 = vunpack.c.l.s8.bf16 %v649
        %v1280 = vunpack.c.l.s8.bf16 %v650
        %v1281 = vunpack.c.l.s8.bf16 %v651
        %v1282 = vunpack.c.l.s8.bf16 %v652
        %v1283 = vunpack.c.l.s8.bf16 %v653
        %v1284 = vunpack.c.l.s8.bf16 %v654
        %v1285 = vunpack.c.l.s8.bf16 %v655
        %v1286 = vunpack.c.l.s8.bf16 %v656
        %v1287 = vunpack.c.l.s8.bf16 %v657
        %v1288 = vunpack.c.l.s8.bf16 %v658
        %v1289 = vunpack.c.l.s8.bf16 %v659
        %v1290 = vunpack.c.l.s8.bf16 %v660
        %v1291 = vunpack.c.h.s8.bf16 %v646
        %v1292 = vunpack.c.h.s8.bf16 %v647
        %v1293 = vunpack.c.h.s8.bf16 %v648
        %v1294 = vunpack.c.h.s8.bf16 %v649
        %v1295 = vunpack.c.h.s8.bf16 %v650
        %v1296 = vunpack.c.h.s8.bf16 %v651
        %v1297 = vunpack.c.h.s8.bf16 %v652
        %v1298 = vunpack.c.h.s8.bf16 %v653
        %v1299 = vunpack.c.h.s8.bf16 %v654
        %v1300 = vunpack.c.h.s8.bf16 %v655
        %v1301 = vunpack.c.h.s8.bf16 %v656
        %v1302 = vunpack.c.h.s8.bf16 %v657
        %v1303 = vunpack.c.h.s8.bf16 %v658
        %v1304 = vunpack.c.h.s8.bf16 %v659
        %v1305 = vunpack.c.h.s8.bf16 %v660
        %v1306 = vunpack.c.l.s8.bf16 %v661
        %v1307 = vunpack.c.l.s8.bf16 %v662
        %v1308 = vunpack.c.l.s8.bf16 %v663
        %v1309 = vunpack.c.l.s8.bf16 %v664
        %v1310 = vunpack.c.l.s8.bf16 %v665
        %v1311 = vunpack.c.l.s8.bf16 %v666
        %v1312 = vunpack.c.l.s8.bf16 %v667
        %v1313 = vunpack.c.l.s8.bf16 %v668
        %v1314 = vunpack.c.l.s8.bf16 %v669
        %v1315 = vunpack.c.l.s8.bf16 %v670
        %v1316 = vunpack.c.l.s8.bf16 %v671
        %v1317 = vunpack.c.l.s8.bf16 %v672
        %v1318 = vunpack.c.l.s8.bf16 %v673
        %v1319 = vunpack.c.l.s8.bf16 %v674
        %v1320 = vunpack.c.l.s8.bf16 %v675
        %v1321 = vunpack.c.h.s8.bf16 %v661
        %v1322 = vunpack.c.h.s8.bf16 %v662
        %v1323 = vunpack.c.h.s8.bf16 %v663
        %v1324 = vunpack.c.h.s8.bf16 %v664
        %v1325 = vunpack.c.h.s8.bf16 %v665
        %v1326 = vunpack.c.h.s8.bf16 %v666
        %v1327 = vunpack.c.h.s8.bf16 %v667
        %v1328 = vunpack.c.h.s8.bf16 %v668
        %v1329 = vunpack.c.h.s8.bf16 %v669
        %v1330 = vunpack.c.h.s8.bf16 %v670
        %v1331 = vunpack.c.h.s8.bf16 %v671
        %v1332 = vunpack.c.h.s8.bf16 %v672
        %v1333 = vunpack.c.h.s8.bf16 %v673
        %v1334 = vunpack.c.h.s8.bf16 %v674
        %v1335 = vunpack.c.h.s8.bf16 %v675
        %v1336 = vunpack.c.l.s8.bf16 %v676
        %v1337 = vunpack.c.l.s8.bf16 %v677
        %v1338 = vunpack.c.l.s8.bf16 %v678
        %v1339 = vunpack.c.l.s8.bf16 %v679
        %v1340 = vunpack.c.l.s8.bf16 %v680
        %v1341 = vunpack.c.l.s8.bf16 %v681
        %v1342 = vunpack.c.l.s8.bf16 %v682
        %v1343 = vunpack.c.l.s8.bf16 %v683
        %v1344 = vunpack.c.l.s8.bf16 %v684
        %v1345 = vunpack.c.l.s8.bf16 %v685
        %v1346 = vunpack.c.l.s8.bf16 %v686
        %v1347 = vunpack.c.l.s8.bf16 %v687
        %v1348 = vunpack.c.l.s8.bf16 %v688
        %v1349 = vunpack.c.l.s8.bf16 %v689
        %v1350 = vunpack.c.l.s8.bf16 %v690
        %v1351 = vunpack.c.h.s8.bf16 %v676
        %v1352 = vunpack.c.h.s8.bf16 %v677
        %v1353 = vunpack.c.h.s8.bf16 %v678
        %v1354 = vunpack.c.h.s8.bf16 %v679
        %v1355 = vunpack.c.h.s8.bf16 %v680
        %v1356 = vunpack.c.h.s8.bf16 %v681
        %v1357 = vunpack.c.h.s8.bf16 %v682
        %v1358 = vunpack.c.h.s8.bf16 %v683
        %v1359 = vunpack.c.h.s8.bf16 %v684
        %v1360 = vunpack.c.h.s8.bf16 %v685
        %v1361 = vunpack.c.h.s8.bf16 %v686
        %v1362 = vunpack.c.h.s8.bf16 %v687
        %v1363 = vunpack.c.h.s8.bf16 %v688
        %v1364 = vunpack.c.h.s8.bf16 %v689
        %v1365 = vunpack.c.h.s8.bf16 %v690
        %v1366 = vunpack.c.l.s8.bf16 %v691
        %v1367 = vunpack.c.l.s8.bf16 %v692
        %v1368 = vunpack.c.l.s8.bf16 %v693
        %v1369 = vunpack.c.l.s8.bf16 %v694
        %v1370 = vunpack.c.l.s8.bf16 %v695
        %v1371 = vunpack.c.l.s8.bf16 %v696
        %v1372 = vunpack.c.l.s8.bf16 %v697
        %v1373 = vunpack.c.l.s8.bf16 %v698
        %v1374 = vunpack.c.l.s8.bf16 %v699
        %v1375 = vunpack.c.l.s8.bf16 %v700
        %v1376 = vunpack.c.l.s8.bf16 %v701
        %v1377 = vunpack.c.l.s8.bf16 %v702
        %v1378 = vunpack.c.l.s8.bf16 %v703
        %v1379 = vunpack.c.l.s8.bf16 %v704
        %v1380 = vunpack.c.l.s8.bf16 %v705
        %v1381 = vunpack.c.h.s8.bf16 %v691
        %v1382 = vunpack.c.h.s8.bf16 %v692
        %v1383 = vunpack.c.h.s8.bf16 %v693
        %v1384 = vunpack.c.h.s8.bf16 %v694
        %v1385 = vunpack.c.h.s8.bf16 %v695
        %v1386 = vunpack.c.h.s8.bf16 %v696
        %v1387 = vunpack.c.h.s8.bf16 %v697
        %v1388 = vunpack.c.h.s8.bf16 %v698
        %v1389 = vunpack.c.h.s8.bf16 %v699
        %v1390 = vunpack.c.h.s8.bf16 %v700
        %v1391 = vunpack.c.h.s8.bf16 %v701
        %v1392 = vunpack.c.h.s8.bf16 %v702
        %v1393 = vunpack.c.h.s8.bf16 %v703
        %v1394 = vunpack.c.h.s8.bf16 %v704
        %v1395 = vunpack.c.h.s8.bf16 %v705
        %v1396 = vunpack.c.l.s8.bf16 %v706
        %v1397 = vunpack.c.l.s8.bf16 %v707
        %v1398 = vunpack.c.l.s8.bf16 %v708
        %v1399 = vunpack.c.l.s8.bf16 %v709
        %v1400 = vunpack.c.l.s8.bf16 %v710
        %v1401 = vunpack.c.l.s8.bf16 %v711
        %v1402 = vunpack.c.l.s8.bf16 %v712
        %v1403 = vunpack.c.l.s8.bf16 %v713
        %v1404 = vunpack.c.l.s8.bf16 %v714
        %v1405 = vunpack.c.l.s8.bf16 %v715
        %v1406 = vunpack.c.l.s8.bf16 %v716
        %v1407 = vunpack.c.l.s8.bf16 %v717
        %v1408 = vunpack.c.l.s8.bf16 %v718
        %v1409 = vunpack.c.l.s8.bf16 %v719
        %v1410 = vunpack.c.l.s8.bf16 %v720
        %v1411 = vunpack.c.h.s8.bf16 %v706
        %v1412 = vunpack.c.h.s8.bf16 %v707
        %v1413 = vunpack.c.h.s8.bf16 %v708
        %v1414 = vunpack.c.h.s8.bf16 %v709
        %v1415 = vunpack.c.h.s8.bf16 %v710
        %v1416 = vunpack.c.h.s8.bf16 %v711
        %v1417 = vunpack.c.h.s8.bf16 %v712
        %v1418 = vunpack.c.h.s8.bf16 %v713
        %v1419 = vunpack.c.h.s8.bf16 %v714
        %v1420 = vunpack.c.h.s8.bf16 %v715
        %v1421 = vunpack.c.h.s8.bf16 %v716
        %v1422 = vunpack.c.h.s8.bf16 %v717
        %v1423 = vunpack.c.h.s8.bf16 %v718
        %v1424 = vunpack.c.h.s8.bf16 %v719
        %v1425 = vunpack.c.h.s8.bf16 %v720
        %v1426 = vunpack.c.l.s8.bf16 %v721
        %v1427 = vunpack.c.l.s8.bf16 %v722
        %v1428 = vunpack.c.l.s8.bf16 %v723
        %v1429 = vunpack.c.l.s8.bf16 %v724
        %v1430 = vunpack.c.l.s8.bf16 %v725
        %v1431 = vunpack.c.l.s8.bf16 %v726
        %v1432 = vunpack.c.l.s8.bf16 %v727
        %v1433 = vunpack.c.l.s8.bf16 %v728
        %v1434 = vunpack.c.l.s8.bf16 %v729
        %v1435 = vunpack.c.l.s8.bf16 %v730
        %v1436 = vunpack.c.l.s8.bf16 %v731
        %v1437 = vunpack.c.l.s8.bf16 %v732
        %v1438 = vunpack.c.l.s8.bf16 %v733
        %v1439 = vunpack.c.l.s8.bf16 %v734
        %v1440 = vunpack.c.l.s8.bf16 %v735
        %v1441 = vunpack.c.h.s8.bf16 %v721
        %v1442 = vunpack.c.h.s8.bf16 %v722
        %v1443 = vunpack.c.h.s8.bf16 %v723
        %v1444 = vunpack.c.h.s8.bf16 %v724
        %v1445 = vunpack.c.h.s8.bf16 %v725
        %v1446 = vunpack.c.h.s8.bf16 %v726
        %v1447 = vunpack.c.h.s8.bf16 %v727
        %v1448 = vunpack.c.h.s8.bf16 %v728
        %v1449 = vunpack.c.h.s8.bf16 %v729
        %v1450 = vunpack.c.h.s8.bf16 %v730
        %v1451 = vunpack.c.h.s8.bf16 %v731
        %v1452 = vunpack.c.h.s8.bf16 %v732
        %v1453 = vunpack.c.h.s8.bf16 %v733
        %v1454 = vunpack.c.h.s8.bf16 %v734
        %v1455 = vunpack.c.h.s8.bf16 %v735
        %v1456 = vunpack.c.l.s8.bf16 %v736
        %v1457 = vunpack.c.l.s8.bf16 %v737
        %v1458 = vunpack.c.l.s8.bf16 %v738
        %v1459 = vunpack.c.l.s8.bf16 %v739
        %v1460 = vunpack.c.l.s8.bf16 %v740
        %v1461 = vunpack.c.l.s8.bf16 %v741
        %v1462 = vunpack.c.l.s8.bf16 %v742
        %v1463 = vunpack.c.l.s8.bf16 %v743
        %v1464 = vunpack.c.l.s8.bf16 %v744
        %v1465 = vunpack.c.l.s8.bf16 %v745
        %v1466 = vunpack.c.l.s8.bf16 %v746
        %v1467 = vunpack.c.l.s8.bf16 %v747
        %v1468 = vunpack.c.l.s8.bf16 %v748
        %v1469 = vunpack.c.l.s8.bf16 %v749
        %v1470 = vunpack.c.l.s8.bf16 %v750
        %v1471 = vunpack.c.h.s8.bf16 %v736
        %v1472 = vunpack.c.h.s8.bf16 %v737
        %v1473 = vunpack.c.h.s8.bf16 %v738
        %v1474 = vunpack.c.h.s8.bf16 %v739
        %v1475 = vunpack.c.h.s8.bf16 %v740
        %v1476 = vunpack.c.h.s8.bf16 %v741
        %v1477 = vunpack.c.h.s8.bf16 %v742
        %v1478 = vunpack.c.h.s8.bf16 %v743
        %v1479 = vunpack.c.h.s8.bf16 %v744
        %v1480 = vunpack.c.h.s8.bf16 %v745
        %v1481 = vunpack.c.h.s8.bf16 %v746
        %v1482 = vunpack.c.h.s8.bf16 %v747
        %v1483 = vunpack.c.h.s8.bf16 %v748
        %v1484 = vunpack.c.h.s8.bf16 %v749
        %v1485 = vunpack.c.h.s8.bf16 %v750
        %v1486 = vunpack.c.l.s8.bf16 %v751
        %v1487 = vunpack.c.l.s8.bf16 %v752
        %v1488 = vunpack.c.l.s8.bf16 %v753
        %v1489 = vunpack.c.l.s8.bf16 %v754
        %v1490 = vunpack.c.l.s8.bf16 %v755
        %v1491 = vunpack.c.l.s8.bf16 %v756
        %v1492 = vunpack.c.l.s8.bf16 %v757
        %v1493 = vunpack.c.l.s8.bf16 %v758
        %v1494 = vunpack.c.l.s8.bf16 %v759
        %v1495 = vunpack.c.l.s8.bf16 %v760
        %v1496 = vunpack.c.l.s8.bf16 %v761
        %v1497 = vunpack.c.l.s8.bf16 %v762
        %v1498 = vunpack.c.l.s8.bf16 %v763
        %v1499 = vunpack.c.l.s8.bf16 %v764
        %v1500 = vunpack.c.l.s8.bf16 %v765
        %v1501 = vunpack.c.h.s8.bf16 %v751
        %v1502 = vunpack.c.h.s8.bf16 %v752
        %v1503 = vunpack.c.h.s8.bf16 %v753
        %v1504 = vunpack.c.h.s8.bf16 %v754
        %v1505 = vunpack.c.h.s8.bf16 %v755
        %v1506 = vunpack.c.h.s8.bf16 %v756
        %v1507 = vunpack.c.h.s8.bf16 %v757
        %v1508 = vunpack.c.h.s8.bf16 %v758
        %v1509 = vunpack.c.h.s8.bf16 %v759
        %v1510 = vunpack.c.h.s8.bf16 %v760
        %v1511 = vunpack.c.h.s8.bf16 %v761
        %v1512 = vunpack.c.h.s8.bf16 %v762
        %v1513 = vunpack.c.h.s8.bf16 %v763
        %v1514 = vunpack.c.h.s8.bf16 %v764
        %v1515 = vunpack.c.h.s8.bf16 %v765
        %v1516 = vunpack.c.l.s8.bf16 %v766
        %v1517 = vunpack.c.l.s8.bf16 %v767
        %v1518 = vunpack.c.l.s8.bf16 %v768
        %v1519 = vunpack.c.l.s8.bf16 %v769
        %v1520 = vunpack.c.l.s8.bf16 %v770
        %v1521 = vunpack.c.l.s8.bf16 %v771
        %v1522 = vunpack.c.l.s8.bf16 %v772
        %v1523 = vunpack.c.l.s8.bf16 %v773
        %v1524 = vunpack.c.l.s8.bf16 %v774
        %v1525 = vunpack.c.l.s8.bf16 %v775
        %v1526 = vunpack.c.l.s8.bf16 %v776
        %v1527 = vunpack.c.l.s8.bf16 %v777
        %v1528 = vunpack.c.l.s8.bf16 %v778
        %v1529 = vunpack.c.l.s8.bf16 %v779
        %v1530 = vunpack.c.l.s8.bf16 %v780
        %v1531 = vunpack.c.h.s8.bf16 %v766
        %v1532 = vunpack.c.h.s8.bf16 %v767
        %v1533 = vunpack.c.h.s8.bf16 %v768
        %v1534 = vunpack.c.h.s8.bf16 %v769
        %v1535 = vunpack.c.h.s8.bf16 %v770
        %v1536 = vunpack.c.h.s8.bf16 %v771
        %v1537 = vunpack.c.h.s8.bf16 %v772
        %v1538 = vunpack.c.h.s8.bf16 %v773
        %v1539 = vunpack.c.h.s8.bf16 %v774
        %v1540 = vunpack.c.h.s8.bf16 %v775
        %v1541 = vunpack.c.h.s8.bf16 %v776
        %v1542 = vunpack.c.h.s8.bf16 %v777
        %v1543 = vunpack.c.h.s8.bf16 %v778
        %v1544 = vunpack.c.h.s8.bf16 %v779
        %v1545 = vunpack.c.h.s8.bf16 %v780
        %v1546 = vunpack.c.l.s8.bf16 %v781
        %v1547 = vunpack.c.l.s8.bf16 %v782
        %v1548 = vunpack.c.l.s8.bf16 %v783
        %v1549 = vunpack.c.l.s8.bf16 %v784
        %v1550 = vunpack.c.l.s8.bf16 %v785
        %v1551 = vunpack.c.l.s8.bf16 %v786
        %v1552 = vunpack.c.l.s8.bf16 %v787
        %v1553 = vunpack.c.l.s8.bf16 %v788
        %v1554 = vunpack.c.l.s8.bf16 %v789
        %v1555 = vunpack.c.l.s8.bf16 %v790
        %v1556 = vunpack.c.l.s8.bf16 %v791
        %v1557 = vunpack.c.l.s8.bf16 %v792
        %v1558 = vunpack.c.l.s8.bf16 %v793
        %v1559 = vunpack.c.l.s8.bf16 %v794
        %v1560 = vunpack.c.l.s8.bf16 %v795
        %v1561 = vunpack.c.h.s8.bf16 %v781
        %v1562 = vunpack.c.h.s8.bf16 %v782
        %v1563 = vunpack.c.h.s8.bf16 %v783
        %v1564 = vunpack.c.h.s8.bf16 %v784
        %v1565 = vunpack.c.h.s8.bf16 %v785
        %v1566 = vunpack.c.h.s8.bf16 %v786
        %v1567 = vunpack.c.h.s8.bf16 %v787
        %v1568 = vunpack.c.h.s8.bf16 %v788
        %v1569 = vunpack.c.h.s8.bf16 %v789
        %v1570 = vunpack.c.h.s8.bf16 %v790
        %v1571 = vunpack.c.h.s8.bf16 %v791
        %v1572 = vunpack.c.h.s8.bf16 %v792
        %v1573 = vunpack.c.h.s8.bf16 %v793
        %v1574 = vunpack.c.h.s8.bf16 %v794
        %v1575 = vunpack.c.h.s8.bf16 %v795
        %v1576 = vunpack.c.l.s8.bf16 %v796
        %v1577 = vunpack.c.l.s8.bf16 %v797
        %v1578 = vunpack.c.l.s8.bf16 %v798
        %v1579 = vunpack.c.l.s8.bf16 %v799
        %v1580 = vunpack.c.l.s8.bf16 %v800
        %v1581 = vunpack.c.l.s8.bf16 %v801
        %v1582 = vunpack.c.l.s8.bf16 %v802
        %v1583 = vunpack.c.l.s8.bf16 %v803
        %v1584 = vunpack.c.l.s8.bf16 %v804
        %v1585 = vunpack.c.l.s8.bf16 %v805
        %v1586 = vunpack.c.l.s8.bf16 %v806
        %v1587 = vunpack.c.l.s8.bf16 %v807
        %v1588 = vunpack.c.l.s8.bf16 %v808
        %v1589 = vunpack.c.l.s8.bf16 %v809
        %v1590 = vunpack.c.l.s8.bf16 %v810
        %v1591 = vunpack.c.h.s8.bf16 %v796
        %v1592 = vunpack.c.h.s8.bf16 %v797
        %v1593 = vunpack.c.h.s8.bf16 %v798
        %v1594 = vunpack.c.h.s8.bf16 %v799
        %v1595 = vunpack.c.h.s8.bf16 %v800
        %v1596 = vunpack.c.h.s8.bf16 %v801
        %v1597 = vunpack.c.h.s8.bf16 %v802
        %v1598 = vunpack.c.h.s8.bf16 %v803
        %v1599 = vunpack.c.h.s8.bf16 %v804
        %v1600 = vunpack.c.h.s8.bf16 %v805
        %v1601 = vunpack.c.h.s8.bf16 %v806
        %v1602 = vunpack.c.h.s8.bf16 %v807
        %v1603 = vunpack.c.h.s8.bf16 %v808
        %v1604 = vunpack.c.h.s8.bf16 %v809
        %v1605 = vunpack.c.h.s8.bf16 %v810
        %v1606 = vunpack.c.l.s8.bf16 %v811
        %v1607 = vunpack.c.l.s8.bf16 %v812
        %v1608 = vunpack.c.l.s8.bf16 %v813
        %v1609 = vunpack.c.l.s8.bf16 %v814
        %v1610 = vunpack.c.l.s8.bf16 %v815
        %v1611 = vunpack.c.l.s8.bf16 %v816
        %v1612 = vunpack.c.l.s8.bf16 %v817
        %v1613 = vunpack.c.l.s8.bf16 %v818
        %v1614 = vunpack.c.l.s8.bf16 %v819
        %v1615 = vunpack.c.l.s8.bf16 %v820
        %v1616 = vunpack.c.l.s8.bf16 %v821
        %v1617 = vunpack.c.l.s8.bf16 %v822
        %v1618 = vunpack.c.l.s8.bf16 %v823
        %v1619 = vunpack.c.l.s8.bf16 %v824
        %v1620 = vunpack.c.l.s8.bf16 %v825
        %v1621 = vunpack.c.h.s8.bf16 %v811
        %v1622 = vunpack.c.h.s8.bf16 %v812
        %v1623 = vunpack.c.h.s8.bf16 %v813
        %v1624 = vunpack.c.h.s8.bf16 %v814
        %v1625 = vunpack.c.h.s8.bf16 %v815
        %v1626 = vunpack.c.h.s8.bf16 %v816
        %v1627 = vunpack.c.h.s8.bf16 %v817
        %v1628 = vunpack.c.h.s8.bf16 %v818
        %v1629 = vunpack.c.h.s8.bf16 %v819
        %v1630 = vunpack.c.h.s8.bf16 %v820
        %v1631 = vunpack.c.h.s8.bf16 %v821
        %v1632 = vunpack.c.h.s8.bf16 %v822
        %v1633 = vunpack.c.h.s8.bf16 %v823
        %v1634 = vunpack.c.h.s8.bf16 %v824
        %v1635 = vunpack.c.h.s8.bf16 %v825
        %v1636 = vunpack.c.l.s8.bf16 %v826
        %v1637 = vunpack.c.l.s8.bf16 %v827
        %v1638 = vunpack.c.l.s8.bf16 %v828
        %v1639 = vunpack.c.l.s8.bf16 %v829
        %v1640 = vunpack.c.l.s8.bf16 %v830
        %v1641 = vunpack.c.l.s8.bf16 %v831
        %v1642 = vunpack.c.l.s8.bf16 %v832
        %v1643 = vunpack.c.l.s8.bf16 %v833
        %v1644 = vunpack.c.l.s8.bf16 %v834
        %v1645 = vunpack.c.l.s8.bf16 %v835
        %v1646 = vunpack.c.l.s8.bf16 %v836
        %v1647 = vunpack.c.l.s8.bf16 %v837
        %v1648 = vunpack.c.l.s8.bf16 %v838
        %v1649 = vunpack.c.l.s8.bf16 %v839
        %v1650 = vunpack.c.l.s8.bf16 %v840
        %v1651 = vunpack.c.h.s8.bf16 %v826
        %v1652 = vunpack.c.h.s8.bf16 %v827
        %v1653 = vunpack.c.h.s8.bf16 %v828
        %v1654 = vunpack.c.h.s8.bf16 %v829
        %v1655 = vunpack.c.h.s8.bf16 %v830
        %v1656 = vunpack.c.h.s8.bf16 %v831
        %v1657 = vunpack.c.h.s8.bf16 %v832
        %v1658 = vunpack.c.h.s8.bf16 %v833
        %v1659 = vunpack.c.h.s8.bf16 %v834
        %v1660 = vunpack.c.h.s8.bf16 %v835
        %v1661 = vunpack.c.h.s8.bf16 %v836
        %v1662 = vunpack.c.h.s8.bf16 %v837
        %v1663 = vunpack.c.h.s8.bf16 %v838
        %v1664 = vunpack.c.h.s8.bf16 %v839
        %v1665 = vunpack.c.h.s8.bf16 %v840
        %v1666 = vunpack.c.l.s8.bf16 %v841
        %v1667 = vunpack.c.l.s8.bf16 %v842
        %v1668 = vunpack.c.l.s8.bf16 %v843
        %v1669 = vunpack.c.l.s8.bf16 %v844
        %v1670 = vunpack.c.l.s8.bf16 %v845
        %v1671 = vunpack.c.l.s8.bf16 %v846
        %v1672 = vunpack.c.l.s8.bf16 %v847
        %v1673 = vunpack.c.l.s8.bf16 %v848
        %v1674 = vunpack.c.l.s8.bf16 %v849
        %v1675 = vunpack.c.l.s8.bf16 %v850
        %v1676 = vunpack.c.l.s8.bf16 %v851
        %v1677 = vunpack.c.l.s8.bf16 %v852
        %v1678 = vunpack.c.l.s8.bf16 %v853
        %v1679 = vunpack.c.l.s8.bf16 %v854
        %v1680 = vunpack.c.l.s8.bf16 %v855
        %v1681 = vunpack.c.h.s8.bf16 %v841
        %v1682 = vunpack.c.h.s8.bf16 %v842
        %v1683 = vunpack.c.h.s8.bf16 %v843
        %v1684 = vunpack.c.h.s8.bf16 %v844
        %v1685 = vunpack.c.h.s8.bf16 %v845
        %v1686 = vunpack.c.h.s8.bf16 %v846
        %v1687 = vunpack.c.h.s8.bf16 %v847
        %v1688 = vunpack.c.h.s8.bf16 %v848
        %v1689 = vunpack.c.h.s8.bf16 %v849
        %v1690 = vunpack.c.h.s8.bf16 %v850
        %v1691 = vunpack.c.h.s8.bf16 %v851
        %v1692 = vunpack.c.h.s8.bf16 %v852
        %v1693 = vunpack.c.h.s8.bf16 %v853
        %v1694 = vunpack.c.h.s8.bf16 %v854
        %v1695 = vunpack.c.h.s8.bf16 %v855
        %v1696 = vunpack.c.l.s8.bf16 %v856
        %v1697 = vunpack.c.l.s8.bf16 %v857
        %v1698 = vunpack.c.l.s8.bf16 %v858
        %v1699 = vunpack.c.l.s8.bf16 %v859
        %v1700 = vunpack.c.l.s8.bf16 %v860
        %v1701 = vunpack.c.l.s8.bf16 %v861
        %v1702 = vunpack.c.l.s8.bf16 %v862
        %v1703 = vunpack.c.l.s8.bf16 %v863
        %v1704 = vunpack.c.l.s8.bf16 %v864
        %v1705 = vunpack.c.l.s8.bf16 %v865
        %v1706 = vunpack.c.l.s8.bf16 %v866
        %v1707 = vunpack.c.l.s8.bf16 %v867
        %v1708 = vunpack.c.l.s8.bf16 %v868
        %v1709 = vunpack.c.l.s8.bf16 %v869
        %v1710 = vunpack.c.l.s8.bf16 %v870
        %v1711 = vunpack.c.h.s8.bf16 %v856
        %v1712 = vunpack.c.h.s8.bf16 %v857
        %v1713 = vunpack.c.h.s8.bf16 %v858
        %v1714 = vunpack.c.h.s8.bf16 %v859
        %v1715 = vunpack.c.h.s8.bf16 %v860
        %v1716 = vunpack.c.h.s8.bf16 %v861
        %v1717 = vunpack.c.h.s8.bf16 %v862
        %v1718 = vunpack.c.h.s8.bf16 %v863
        %v1719 = vunpack.c.h.s8.bf16 %v864
        %v1720 = vunpack.c.h.s8.bf16 %v865
        %v1721 = vunpack.c.h.s8.bf16 %v866
        %v1722 = vunpack.c.h.s8.bf16 %v867
        %v1723 = vunpack.c.h.s8.bf16 %v868
        %v1724 = vunpack.c.h.s8.bf16 %v869
        %v1725 = vunpack.c.h.s8.bf16 %v870
        %v1726 = vunpack.c.l.s8.bf16 %v871
        %v1727 = vunpack.c.l.s8.bf16 %v872
        %v1728 = vunpack.c.l.s8.bf16 %v873
        %v1729 = vunpack.c.l.s8.bf16 %v874
        %v1730 = vunpack.c.l.s8.bf16 %v875
        %v1731 = vunpack.c.l.s8.bf16 %v876
        %v1732 = vunpack.c.l.s8.bf16 %v877
        %v1733 = vunpack.c.l.s8.bf16 %v878
        %v1734 = vunpack.c.l.s8.bf16 %v879
        %v1735 = vunpack.c.l.s8.bf16 %v880
        %v1736 = vunpack.c.l.s8.bf16 %v881
        %v1737 = vunpack.c.l.s8.bf16 %v882
        %v1738 = vunpack.c.l.s8.bf16 %v883
        %v1739 = vunpack.c.l.s8.bf16 %v884
        %v1740 = vunpack.c.l.s8.bf16 %v885
        %v1741 = vunpack.c.h.s8.bf16 %v871
        %v1742 = vunpack.c.h.s8.bf16 %v872
        %v1743 = vunpack.c.h.s8.bf16 %v873
        %v1744 = vunpack.c.h.s8.bf16 %v874
        %v1745 = vunpack.c.h.s8.bf16 %v875
        %v1746 = vunpack.c.h.s8.bf16 %v876
        %v1747 = vunpack.c.h.s8.bf16 %v877
        %v1748 = vunpack.c.h.s8.bf16 %v878
        %v1749 = vunpack.c.h.s8.bf16 %v879
        %v1750 = vunpack.c.h.s8.bf16 %v880
        %v1751 = vunpack.c.h.s8.bf16 %v881
        %v1752 = vunpack.c.h.s8.bf16 %v882
        %v1753 = vunpack.c.h.s8.bf16 %v883
        %v1754 = vunpack.c.h.s8.bf16 %v884
        %v1755 = vunpack.c.h.s8.bf16 %v885
        %v1756 = vunpack.c.l.s8.bf16 %v886
        %v1757 = vunpack.c.l.s8.bf16 %v887
        %v1758 = vunpack.c.l.s8.bf16 %v888
        %v1759 = vunpack.c.l.s8.bf16 %v889
        %v1760 = vunpack.c.l.s8.bf16 %v890
        %v1761 = vunpack.c.l.s8.bf16 %v891
        %v1762 = vunpack.c.l.s8.bf16 %v892
        %v1763 = vunpack.c.l.s8.bf16 %v893
        %v1764 = vunpack.c.l.s8.bf16 %v894
        %v1765 = vunpack.c.l.s8.bf16 %v895
        %v1766 = vunpack.c.l.s8.bf16 %v896
        %v1767 = vunpack.c.l.s8.bf16 %v897
        %v1768 = vunpack.c.l.s8.bf16 %v898
        %v1769 = vunpack.c.l.s8.bf16 %v899
        %v1770 = vunpack.c.l.s8.bf16 %v900
        %v1771 = vunpack.c.h.s8.bf16 %v886
        %v1772 = vunpack.c.h.s8.bf16 %v887
        %v1773 = vunpack.c.h.s8.bf16 %v888
        %v1774 = vunpack.c.h.s8.bf16 %v889
        %v1775 = vunpack.c.h.s8.bf16 %v890
        %v1776 = vunpack.c.h.s8.bf16 %v891
        %v1777 = vunpack.c.h.s8.bf16 %v892
        %v1778 = vunpack.c.h.s8.bf16 %v893
        %v1779 = vunpack.c.h.s8.bf16 %v894
        %v1780 = vunpack.c.h.s8.bf16 %v895
        %v1781 = vunpack.c.h.s8.bf16 %v896
        %v1782 = vunpack.c.h.s8.bf16 %v897
        %v1783 = vunpack.c.h.s8.bf16 %v898
        %v1784 = vunpack.c.h.s8.bf16 %v899
        %v1785 = vunpack.c.h.s8.bf16 %v900
        %v1786 = vunpack.c.l.s8.bf16 %v901
        %v1787 = vunpack.c.l.s8.bf16 %v902
        %v1788 = vunpack.c.l.s8.bf16 %v903
        %v1789 = vunpack.c.l.s8.bf16 %v904
        %v1790 = vunpack.c.l.s8.bf16 %v905
        %v1791 = vunpack.c.l.s8.bf16 %v906
        %v1792 = vunpack.c.l.s8.bf16 %v907
        %v1793 = vunpack.c.l.s8.bf16 %v908
        %v1794 = vunpack.c.l.s8.bf16 %v909
        %v1795 = vunpack.c.l.s8.bf16 %v910
        %v1796 = vunpack.c.l.s8.bf16 %v911
        %v1797 = vunpack.c.l.s8.bf16 %v912
        %v1798 = vunpack.c.l.s8.bf16 %v913
        %v1799 = vunpack.c.l.s8.bf16 %v914
        %v1800 = vunpack.c.l.s8.bf16 %v915
        %v1801 = vunpack.c.h.s8.bf16 %v901
        %v1802 = vunpack.c.h.s8.bf16 %v902
        %v1803 = vunpack.c.h.s8.bf16 %v903
        %v1804 = vunpack.c.h.s8.bf16 %v904
        %v1805 = vunpack.c.h.s8.bf16 %v905
        %v1806 = vunpack.c.h.s8.bf16 %v906
        %v1807 = vunpack.c.h.s8.bf16 %v907
        %v1808 = vunpack.c.h.s8.bf16 %v908
        %v1809 = vunpack.c.h.s8.bf16 %v909
        %v1810 = vunpack.c.h.s8.bf16 %v910
        %v1811 = vunpack.c.h.s8.bf16 %v911
        %v1812 = vunpack.c.h.s8.bf16 %v912
        %v1813 = vunpack.c.h.s8.bf16 %v913
        %v1814 = vunpack.c.h.s8.bf16 %v914
        %v1815 = vunpack.c.h.s8.bf16 %v915
        %v1816 = vunpack.c.l.s8.bf16 %v916
        %v1817 = vunpack.c.l.s8.bf16 %v917
        %v1818 = vunpack.c.l.s8.bf16 %v918
        %v1819 = vunpack.c.l.s8.bf16 %v919
        %v1820 = vunpack.c.l.s8.bf16 %v920
        %v1821 = vunpack.c.l.s8.bf16 %v921
        %v1822 = vunpack.c.l.s8.bf16 %v922
        %v1823 = vunpack.c.l.s8.bf16 %v923
        %v1824 = vunpack.c.l.s8.bf16 %v924
        %v1825 = vunpack.c.l.s8.bf16 %v925
        %v1826 = vunpack.c.l.s8.bf16 %v926
        %v1827 = vunpack.c.l.s8.bf16 %v927
        %v1828 = vunpack.c.l.s8.bf16 %v928
        %v1829 = vunpack.c.l.s8.bf16 %v929
        %v1830 = vunpack.c.l.s8.bf16 %v930
        %v1831 = vunpack.c.h.s8.bf16 %v916
        %v1832 = vunpack.c.h.s8.bf16 %v917
        %v1833 = vunpack.c.h.s8.bf16 %v918
        %v1834 = vunpack.c.h.s8.bf16 %v919
        %v1835 = vunpack.c.h.s8.bf16 %v920
        %v1836 = vunpack.c.h.s8.bf16 %v921
        %v1837 = vunpack.c.h.s8.bf16 %v922
        %v1838 = vunpack.c.h.s8.bf16 %v923
        %v1839 = vunpack.c.h.s8.bf16 %v924
        %v1840 = vunpack.c.h.s8.bf16 %v925
        %v1841 = vunpack.c.h.s8.bf16 %v926
        %v1842 = vunpack.c.h.s8.bf16 %v927
        %v1843 = vunpack.c.h.s8.bf16 %v928
        %v1844 = vunpack.c.h.s8.bf16 %v929
        %v1845 = vunpack.c.h.s8.bf16 %v930
        %v1846 = vunpack.c.l.s8.bf16 %v931
        %v1847 = vunpack.c.l.s8.bf16 %v932
        %v1848 = vunpack.c.l.s8.bf16 %v933
        %v1849 = vunpack.c.l.s8.bf16 %v934
        %v1850 = vunpack.c.l.s8.bf16 %v935
        %v1851 = vunpack.c.l.s8.bf16 %v936
        %v1852 = vunpack.c.l.s8.bf16 %v937
        %v1853 = vunpack.c.l.s8.bf16 %v938
        %v1854 = vunpack.c.l.s8.bf16 %v939
        %v1855 = vunpack.c.l.s8.bf16 %v940
        %v1856 = vunpack.c.l.s8.bf16 %v941
        %v1857 = vunpack.c.l.s8.bf16 %v942
        %v1858 = vunpack.c.l.s8.bf16 %v943
        %v1859 = vunpack.c.l.s8.bf16 %v944
        %v1860 = vunpack.c.l.s8.bf16 %v945
        %v1861 = vunpack.c.h.s8.bf16 %v931
        %v1862 = vunpack.c.h.s8.bf16 %v932
        %v1863 = vunpack.c.h.s8.bf16 %v933
        %v1864 = vunpack.c.h.s8.bf16 %v934
        %v1865 = vunpack.c.h.s8.bf16 %v935
        %v1866 = vunpack.c.h.s8.bf16 %v936
        %v1867 = vunpack.c.h.s8.bf16 %v937
        %v1868 = vunpack.c.h.s8.bf16 %v938
        %v1869 = vunpack.c.h.s8.bf16 %v939
        %v1870 = vunpack.c.h.s8.bf16 %v940
        %v1871 = vunpack.c.h.s8.bf16 %v941
        %v1872 = vunpack.c.h.s8.bf16 %v942
        %v1873 = vunpack.c.h.s8.bf16 %v943
        %v1874 = vunpack.c.h.s8.bf16 %v944
        %v1875 = vunpack.c.h.s8.bf16 %v945
        %v1876 = vunpack.c.l.s8.bf16 %v946
        %v1877 = vunpack.c.l.s8.bf16 %v947
        %v1878 = vunpack.c.l.s8.bf16 %v948
        %v1879 = vunpack.c.l.s8.bf16 %v949
        %v1880 = vunpack.c.l.s8.bf16 %v950
        %v1881 = vunpack.c.l.s8.bf16 %v951
        %v1882 = vunpack.c.l.s8.bf16 %v952
        %v1883 = vunpack.c.l.s8.bf16 %v953
        %v1884 = vunpack.c.l.s8.bf16 %v954
        %v1885 = vunpack.c.l.s8.bf16 %v955
        %v1886 = vunpack.c.l.s8.bf16 %v956
        %v1887 = vunpack.c.l.s8.bf16 %v957
        %v1888 = vunpack.c.l.s8.bf16 %v958
        %v1889 = vunpack.c.l.s8.bf16 %v959
        %v1890 = vunpack.c.l.s8.bf16 %v960
        %v1891 = vunpack.c.h.s8.bf16 %v946
        %v1892 = vunpack.c.h.s8.bf16 %v947
        %v1893 = vunpack.c.h.s8.bf16 %v948
        %v1894 = vunpack.c.h.s8.bf16 %v949
        %v1895 = vunpack.c.h.s8.bf16 %v950
        %v1896 = vunpack.c.h.s8.bf16 %v951
        %v1897 = vunpack.c.h.s8.bf16 %v952
        %v1898 = vunpack.c.h.s8.bf16 %v953
        %v1899 = vunpack.c.h.s8.bf16 %v954
        %v1900 = vunpack.c.h.s8.bf16 %v955
        %v1901 = vunpack.c.h.s8.bf16 %v956
        %v1902 = vunpack.c.h.s8.bf16 %v957
        %v1903 = vunpack.c.h.s8.bf16 %v958
        %v1904 = vunpack.c.h.s8.bf16 %v959
        %v1905 = vunpack.c.h.s8.bf16 %v960
        %v1906 = vunpack.c.l.s8.bf16 %v961
        %v1907 = vunpack.c.l.s8.bf16 %v962
        %v1908 = vunpack.c.l.s8.bf16 %v963
        %v1909 = vunpack.c.l.s8.bf16 %v964
        %v1910 = vunpack.c.l.s8.bf16 %v965
        %v1911 = vunpack.c.l.s8.bf16 %v966
        %v1912 = vunpack.c.l.s8.bf16 %v967
        %v1913 = vunpack.c.l.s8.bf16 %v968
        %v1914 = vunpack.c.l.s8.bf16 %v969
        %v1915 = vunpack.c.l.s8.bf16 %v970
        %v1916 = vunpack.c.l.s8.bf16 %v971
        %v1917 = vunpack.c.l.s8.bf16 %v972
        %v1918 = vunpack.c.l.s8.bf16 %v973
        %v1919 = vunpack.c.l.s8.bf16 %v974
        %v1920 = vunpack.c.l.s8.bf16 %v975
        %v1921 = vunpack.c.h.s8.bf16 %v961
        %v1922 = vunpack.c.h.s8.bf16 %v962
        %v1923 = vunpack.c.h.s8.bf16 %v963
        %v1924 = vunpack.c.h.s8.bf16 %v964
        %v1925 = vunpack.c.h.s8.bf16 %v965
        %v1926 = vunpack.c.h.s8.bf16 %v966
        %v1927 = vunpack.c.h.s8.bf16 %v967
        %v1928 = vunpack.c.h.s8.bf16 %v968
        %v1929 = vunpack.c.h.s8.bf16 %v969
        %v1930 = vunpack.c.h.s8.bf16 %v970
        %v1931 = vunpack.c.h.s8.bf16 %v971
        %v1932 = vunpack.c.h.s8.bf16 %v972
        %v1933 = vunpack.c.h.s8.bf16 %v973
        %v1934 = vunpack.c.h.s8.bf16 %v974
        %v1935 = vunpack.c.h.s8.bf16 %v975
        %v1936 = vunpack.c.l.s8.bf16 %v976
        %v1937 = vunpack.c.l.s8.bf16 %v977
        %v1938 = vunpack.c.l.s8.bf16 %v978
        %v1939 = vunpack.c.l.s8.bf16 %v979
        %v1940 = vunpack.c.l.s8.bf16 %v980
        %v1941 = vunpack.c.l.s8.bf16 %v981
        %v1942 = vunpack.c.l.s8.bf16 %v982
        %v1943 = vunpack.c.l.s8.bf16 %v983
        %v1944 = vunpack.c.l.s8.bf16 %v984
        %v1945 = vunpack.c.l.s8.bf16 %v985
        %v1946 = vunpack.c.l.s8.bf16 %v986
        %v1947 = vunpack.c.l.s8.bf16 %v987
        %v1948 = vunpack.c.l.s8.bf16 %v988
        %v1949 = vunpack.c.l.s8.bf16 %v989
        %v1950 = vunpack.c.l.s8.bf16 %v990
        %v1951 = vunpack.c.h.s8.bf16 %v976
        %v1952 = vunpack.c.h.s8.bf16 %v977
        %v1953 = vunpack.c.h.s8.bf16 %v978
        %v1954 = vunpack.c.h.s8.bf16 %v979
        %v1955 = vunpack.c.h.s8.bf16 %v980
        %v1956 = vunpack.c.h.s8.bf16 %v981
        %v1957 = vunpack.c.h.s8.bf16 %v982
        %v1958 = vunpack.c.h.s8.bf16 %v983
        %v1959 = vunpack.c.h.s8.bf16 %v984
        %v1960 = vunpack.c.h.s8.bf16 %v985
        %v1961 = vunpack.c.h.s8.bf16 %v986
        %v1962 = vunpack.c.h.s8.bf16 %v987
        %v1963 = vunpack.c.h.s8.bf16 %v988
        %v1964 = vunpack.c.h.s8.bf16 %v989
        %v1965 = vunpack.c.h.s8.bf16 %v990
        %v1966 = vunpack.c.l.s8.bf16 %v991
        %v1967 = vunpack.c.l.s8.bf16 %v992
        %v1968 = vunpack.c.l.s8.bf16 %v993
        %v1969 = vunpack.c.l.s8.bf16 %v994
        %v1970 = vunpack.c.l.s8.bf16 %v995
        %v1971 = vunpack.c.l.s8.bf16 %v996
        %v1972 = vunpack.c.l.s8.bf16 %v997
        %v1973 = vunpack.c.l.s8.bf16 %v998
        %v1974 = vunpack.c.l.s8.bf16 %v999
        %v1975 = vunpack.c.l.s8.bf16 %v1000
        %v1976 = vunpack.c.l.s8.bf16 %v1001
        %v1977 = vunpack.c.l.s8.bf16 %v1002
        %v1978 = vunpack.c.l.s8.bf16 %v1003
        %v1979 = vunpack.c.l.s8.bf16 %v1004
        %v1980 = vunpack.c.l.s8.bf16 %v1005
        %v1981 = vunpack.c.h.s8.bf16 %v991
        %v1982 = vunpack.c.h.s8.bf16 %v992
        %v1983 = vunpack.c.h.s8.bf16 %v993
        %v1984 = vunpack.c.h.s8.bf16 %v994
        %v1985 = vunpack.c.h.s8.bf16 %v995
        %v1986 = vunpack.c.h.s8.bf16 %v996
        %v1987 = vunpack.c.h.s8.bf16 %v997
        %v1988 = vunpack.c.h.s8.bf16 %v998
        %v1989 = vunpack.c.h.s8.bf16 %v999
        %v1990 = vunpack.c.h.s8.bf16 %v1000
        %v1991 = vunpack.c.h.s8.bf16 %v1001
        %v1992 = vunpack.c.h.s8.bf16 %v1002
        %v1993 = vunpack.c.h.s8.bf16 %v1003
        %v1994 = vunpack.c.h.s8.bf16 %v1004
        %v1995 = vunpack.c.h.s8.bf16 %v1005
        %v1996 = vunpack.c.l.s8.bf16 %v1006
        %v1997 = vunpack.c.l.s8.bf16 %v1007
        %v1998 = vunpack.c.l.s8.bf16 %v1008
        %v1999 = vunpack.c.l.s8.bf16 %v1009
        %v2000 = vunpack.c.l.s8.bf16 %v1010
        %v2001 = vunpack.c.l.s8.bf16 %v1011
        %v2002 = vunpack.c.l.s8.bf16 %v1012
        %v2003 = vunpack.c.l.s8.bf16 %v1013
        %v2004 = vunpack.c.l.s8.bf16 %v1014
        %v2005 = vunpack.c.l.s8.bf16 %v1015
        %v2006 = vunpack.c.l.s8.bf16 %v1016
        %v2007 = vunpack.c.l.s8.bf16 %v1017
        %v2008 = vunpack.c.l.s8.bf16 %v1018
        %v2009 = vunpack.c.l.s8.bf16 %v1019
        %v2010 = vunpack.c.l.s8.bf16 %v1020
        %v2011 = vunpack.c.h.s8.bf16 %v1006
        %v2012 = vunpack.c.h.s8.bf16 %v1007
        %v2013 = vunpack.c.h.s8.bf16 %v1008
        %v2014 = vunpack.c.h.s8.bf16 %v1009
        %v2015 = vunpack.c.h.s8.bf16 %v1010
        %v2016 = vunpack.c.h.s8.bf16 %v1011
        %v2017 = vunpack.c.h.s8.bf16 %v1012
        %v2018 = vunpack.c.h.s8.bf16 %v1013
        %v2019 = vunpack.c.h.s8.bf16 %v1014
        %v2020 = vunpack.c.h.s8.bf16 %v1015
        %v2021 = vunpack.c.h.s8.bf16 %v1016
        %v2022 = vunpack.c.h.s8.bf16 %v1017
        %v2023 = vunpack.c.h.s8.bf16 %v1018
        %v2024 = vunpack.c.h.s8.bf16 %v1019
        %v2025 = vunpack.c.h.s8.bf16 %v1020
        %v2026 = vunpack.c.l.s8.bf16 %v1021
        %v2027 = vunpack.c.l.s8.bf16 %v1022
        %v2028 = vunpack.c.l.s8.bf16 %v1023
        %v2029 = vunpack.c.l.s8.bf16 %v1024
        %v2030 = vunpack.c.l.s8.bf16 %v1025
        %v2031 = vunpack.c.l.s8.bf16 %v1026
        %v2032 = vunpack.c.l.s8.bf16 %v1027
        %v2033 = vunpack.c.l.s8.bf16 %v1028
        %v2034 = vunpack.c.l.s8.bf16 %v1029
        %v2035 = vunpack.c.l.s8.bf16 %v1030
        %v2036 = vunpack.c.l.s8.bf16 %v1031
        %v2037 = vunpack.c.l.s8.bf16 %v1032
        %v2038 = vunpack.c.l.s8.bf16 %v1033
        %v2039 = vunpack.c.l.s8.bf16 %v1034
        %v2040 = vunpack.c.l.s8.bf16 %v1035
        %v2041 = vunpack.c.h.s8.bf16 %v1021
        %v2042 = vunpack.c.h.s8.bf16 %v1022
        %v2043 = vunpack.c.h.s8.bf16 %v1023
        %v2044 = vunpack.c.h.s8.bf16 %v1024
        %v2045 = vunpack.c.h.s8.bf16 %v1025
        %v2046 = vunpack.c.h.s8.bf16 %v1026
        %v2047 = vunpack.c.h.s8.bf16 %v1027
        %v2048 = vunpack.c.h.s8.bf16 %v1028
        %v2049 = vunpack.c.h.s8.bf16 %v1029
        %v2050 = vunpack.c.h.s8.bf16 %v1030
        %v2051 = vunpack.c.h.s8.bf16 %v1031
        %v2052 = vunpack.c.h.s8.bf16 %v1032
        %v2053 = vunpack.c.h.s8.bf16 %v1033
        %v2054 = vunpack.c.h.s8.bf16 %v1034
        %v2055 = vunpack.c.h.s8.bf16 %v1035
        %v2056 = vunpack.c.l.s8.bf16 %v1036
        %v2057 = vunpack.c.l.s8.bf16 %v1037
        %v2058 = vunpack.c.l.s8.bf16 %v1038
        %v2059 = vunpack.c.l.s8.bf16 %v1039
        %v2060 = vunpack.c.l.s8.bf16 %v1040
        %v2061 = vunpack.c.l.s8.bf16 %v1041
        %v2062 = vunpack.c.l.s8.bf16 %v1042
        %v2063 = vunpack.c.l.s8.bf16 %v1043
        %v2064 = vunpack.c.l.s8.bf16 %v1044
        %v2065 = vunpack.c.l.s8.bf16 %v1045
        %v2066 = vunpack.c.l.s8.bf16 %v1046
        %v2067 = vunpack.c.l.s8.bf16 %v1047
        %v2068 = vunpack.c.l.s8.bf16 %v1048
        %v2069 = vunpack.c.l.s8.bf16 %v1049
        %v2070 = vunpack.c.l.s8.bf16 %v1050
        %v2071 = vunpack.c.h.s8.bf16 %v1036
        %v2072 = vunpack.c.h.s8.bf16 %v1037
        %v2073 = vunpack.c.h.s8.bf16 %v1038
        %v2074 = vunpack.c.h.s8.bf16 %v1039
        %v2075 = vunpack.c.h.s8.bf16 %v1040
        %v2076 = vunpack.c.h.s8.bf16 %v1041
        %v2077 = vunpack.c.h.s8.bf16 %v1042
        %v2078 = vunpack.c.h.s8.bf16 %v1043
        %v2079 = vunpack.c.h.s8.bf16 %v1044
        %v2080 = vunpack.c.h.s8.bf16 %v1045
        %v2081 = vunpack.c.h.s8.bf16 %v1046
        %v2082 = vunpack.c.h.s8.bf16 %v1047
        %v2083 = vunpack.c.h.s8.bf16 %v1048
        %v2084 = vunpack.c.h.s8.bf16 %v1049
        %v2085 = vunpack.c.h.s8.bf16 %v1050
        %v2086 = vunpack.c.l.s8.bf16 %v1051
        %v2087 = vunpack.c.l.s8.bf16 %v1052
        %v2088 = vunpack.c.l.s8.bf16 %v1053
        %v2089 = vunpack.c.l.s8.bf16 %v1054
        %v2090 = vunpack.c.l.s8.bf16 %v1055
        %v2091 = vunpack.c.l.s8.bf16 %v1056
        %v2092 = vunpack.c.l.s8.bf16 %v1057
        %v2093 = vunpack.c.l.s8.bf16 %v1058
        %v2094 = vunpack.c.l.s8.bf16 %v1059
        %v2095 = vunpack.c.l.s8.bf16 %v1060
        %v2096 = vunpack.c.l.s8.bf16 %v1061
        %v2097 = vunpack.c.l.s8.bf16 %v1062
        %v2098 = vunpack.c.l.s8.bf16 %v1063
        %v2099 = vunpack.c.l.s8.bf16 %v1064
        %v2100 = vunpack.c.l.s8.bf16 %v1065
        %v2101 = vunpack.c.h.s8.bf16 %v1051
        %v2102 = vunpack.c.h.s8.bf16 %v1052
        %v2103 = vunpack.c.h.s8.bf16 %v1053
        %v2104 = vunpack.c.h.s8.bf16 %v1054
        %v2105 = vunpack.c.h.s8.bf16 %v1055
        %v2106 = vunpack.c.h.s8.bf16 %v1056
        %v2107 = vunpack.c.h.s8.bf16 %v1057
        %v2108 = vunpack.c.h.s8.bf16 %v1058
        %v2109 = vunpack.c.h.s8.bf16 %v1059
        %v2110 = vunpack.c.h.s8.bf16 %v1060
        %v2111 = vunpack.c.h.s8.bf16 %v1061
        %v2112 = vunpack.c.h.s8.bf16 %v1062
        %v2113 = vunpack.c.h.s8.bf16 %v1063
        %v2114 = vunpack.c.h.s8.bf16 %v1064
        %v2115 = vunpack.c.h.s8.bf16 %v1065
        %v2116 = vunpack.c.l.s8.bf16 %v1066
        %v2117 = vunpack.c.l.s8.bf16 %v1067
        %v2118 = vunpack.c.l.s8.bf16 %v1068
        %v2119 = vunpack.c.l.s8.bf16 %v1069
        %v2120 = vunpack.c.l.s8.bf16 %v1070
        %v2121 = vunpack.c.l.s8.bf16 %v1071
        %v2122 = vunpack.c.l.s8.bf16 %v1072
        %v2123 = vunpack.c.l.s8.bf16 %v1073
        %v2124 = vunpack.c.l.s8.bf16 %v1074
        %v2125 = vunpack.c.l.s8.bf16 %v1075
        %v2126 = vunpack.c.l.s8.bf16 %v1076
        %v2127 = vunpack.c.l.s8.bf16 %v1077
        %v2128 = vunpack.c.l.s8.bf16 %v1078
        %v2129 = vunpack.c.l.s8.bf16 %v1079
        %v2130 = vunpack.c.l.s8.bf16 %v1080
        %v2131 = vunpack.c.h.s8.bf16 %v1066
        %v2132 = vunpack.c.h.s8.bf16 %v1067
        %v2133 = vunpack.c.h.s8.bf16 %v1068
        %v2134 = vunpack.c.h.s8.bf16 %v1069
        %v2135 = vunpack.c.h.s8.bf16 %v1070
        %v2136 = vunpack.c.h.s8.bf16 %v1071
        %v2137 = vunpack.c.h.s8.bf16 %v1072
        %v2138 = vunpack.c.h.s8.bf16 %v1073
        %v2139 = vunpack.c.h.s8.bf16 %v1074
        %v2140 = vunpack.c.h.s8.bf16 %v1075
        %v2141 = vunpack.c.h.s8.bf16 %v1076
        %v2142 = vunpack.c.h.s8.bf16 %v1077
        %v2143 = vunpack.c.h.s8.bf16 %v1078
        %v2144 = vunpack.c.h.s8.bf16 %v1079
        %v2145 = vunpack.c.h.s8.bf16 %v1080
        %v2146 = vunpack.c.l.s8.bf16 %v1081
        %v2147 = vunpack.c.l.s8.bf16 %v1082
        %v2148 = vunpack.c.l.s8.bf16 %v1083
        %v2149 = vunpack.c.l.s8.bf16 %v1084
        %v2150 = vunpack.c.l.s8.bf16 %v1085
        %v2151 = vunpack.c.l.s8.bf16 %v1086
        %v2152 = vunpack.c.l.s8.bf16 %v1087
        %v2153 = vunpack.c.l.s8.bf16 %v1088
        %v2154 = vunpack.c.l.s8.bf16 %v1089
        %v2155 = vunpack.c.l.s8.bf16 %v1090
        %v2156 = vunpack.c.l.s8.bf16 %v1091
        %v2157 = vunpack.c.l.s8.bf16 %v1092
        %v2158 = vunpack.c.l.s8.bf16 %v1093
        %v2159 = vunpack.c.l.s8.bf16 %v1094
        %v2160 = vunpack.c.l.s8.bf16 %v1095
        %v2161 = vunpack.c.h.s8.bf16 %v1081
        %v2162 = vunpack.c.h.s8.bf16 %v1082
        %v2163 = vunpack.c.h.s8.bf16 %v1083
        %v2164 = vunpack.c.h.s8.bf16 %v1084
        %v2165 = vunpack.c.h.s8.bf16 %v1085
        %v2166 = vunpack.c.h.s8.bf16 %v1086
        %v2167 = vunpack.c.h.s8.bf16 %v1087
        %v2168 = vunpack.c.h.s8.bf16 %v1088
        %v2169 = vunpack.c.h.s8.bf16 %v1089
        %v2170 = vunpack.c.h.s8.bf16 %v1090
        %v2171 = vunpack.c.h.s8.bf16 %v1091
        %v2172 = vunpack.c.h.s8.bf16 %v1092
        %v2173 = vunpack.c.h.s8.bf16 %v1093
        %v2174 = vunpack.c.h.s8.bf16 %v1094
        %v2175 = vunpack.c.h.s8.bf16 %v1095
        %v2176 = vunpack.c.l.s8.bf16 %v1096
        %v2177 = vunpack.c.l.s8.bf16 %v1097
        %v2178 = vunpack.c.l.s8.bf16 %v1098
        %v2179 = vunpack.c.l.s8.bf16 %v1099
        %v2180 = vunpack.c.l.s8.bf16 %v1100
        %v2181 = vunpack.c.l.s8.bf16 %v1101
        %v2182 = vunpack.c.l.s8.bf16 %v1102
        %v2183 = vunpack.c.l.s8.bf16 %v1103
        %v2184 = vunpack.c.l.s8.bf16 %v1104
        %v2185 = vunpack.c.l.s8.bf16 %v1105
        %v2186 = vunpack.c.l.s8.bf16 %v1106
        %v2187 = vunpack.c.l.s8.bf16 %v1107
        %v2188 = vunpack.c.l.s8.bf16 %v1108
        %v2189 = vunpack.c.l.s8.bf16 %v1109
        %v2190 = vunpack.c.l.s8.bf16 %v1110
        %v2191 = vunpack.c.h.s8.bf16 %v1096
        %v2192 = vunpack.c.h.s8.bf16 %v1097
        %v2193 = vunpack.c.h.s8.bf16 %v1098
        %v2194 = vunpack.c.h.s8.bf16 %v1099
        %v2195 = vunpack.c.h.s8.bf16 %v1100
        %v2196 = vunpack.c.h.s8.bf16 %v1101
        %v2197 = vunpack.c.h.s8.bf16 %v1102
        %v2198 = vunpack.c.h.s8.bf16 %v1103
        %v2199 = vunpack.c.h.s8.bf16 %v1104
        %v2200 = vunpack.c.h.s8.bf16 %v1105
        %v2201 = vunpack.c.h.s8.bf16 %v1106
        %v2202 = vunpack.c.h.s8.bf16 %v1107
        %v2203 = vunpack.c.h.s8.bf16 %v1108
        %v2204 = vunpack.c.h.s8.bf16 %v1109
        %v2205 = vunpack.c.h.s8.bf16 %v1110
        %v2206 = vunpack.c.l.s8.bf16 %v1111
        %v2207 = vunpack.c.l.s8.bf16 %v1112
        %v2208 = vunpack.c.l.s8.bf16 %v1113
        %v2209 = vunpack.c.l.s8.bf16 %v1114
        %v2210 = vunpack.c.l.s8.bf16 %v1115
        %v2211 = vunpack.c.l.s8.bf16 %v1116
        %v2212 = vunpack.c.l.s8.bf16 %v1117
        %v2213 = vunpack.c.l.s8.bf16 %v1118
        %v2214 = vunpack.c.l.s8.bf16 %v1119
        %v2215 = vunpack.c.l.s8.bf16 %v1120
        %v2216 = vunpack.c.l.s8.bf16 %v1121
        %v2217 = vunpack.c.l.s8.bf16 %v1122
        %v2218 = vunpack.c.l.s8.bf16 %v1123
        %v2219 = vunpack.c.l.s8.bf16 %v1124
        %v2220 = vunpack.c.l.s8.bf16 %v1125
        %v2221 = vunpack.c.h.s8.bf16 %v1111
        %v2222 = vunpack.c.h.s8.bf16 %v1112
        %v2223 = vunpack.c.h.s8.bf16 %v1113
        %v2224 = vunpack.c.h.s8.bf16 %v1114
        %v2225 = vunpack.c.h.s8.bf16 %v1115
        %v2226 = vunpack.c.h.s8.bf16 %v1116
        %v2227 = vunpack.c.h.s8.bf16 %v1117
        %v2228 = vunpack.c.h.s8.bf16 %v1118
        %v2229 = vunpack.c.h.s8.bf16 %v1119
        %v2230 = vunpack.c.h.s8.bf16 %v1120
        %v2231 = vunpack.c.h.s8.bf16 %v1121
        %v2232 = vunpack.c.h.s8.bf16 %v1122
        %v2233 = vunpack.c.h.s8.bf16 %v1123
        %v2234 = vunpack.c.h.s8.bf16 %v1124
        %v2235 = vunpack.c.h.s8.bf16 %v1125
        %v2236 = vunpack.c.l.s8.bf16 %v1126
        %v2237 = vunpack.c.l.s8.bf16 %v1127
        %v2238 = vunpack.c.l.s8.bf16 %v1128
        %v2239 = vunpack.c.l.s8.bf16 %v1129
        %v2240 = vunpack.c.l.s8.bf16 %v1130
        %v2241 = vunpack.c.l.s8.bf16 %v1131
        %v2242 = vunpack.c.l.s8.bf16 %v1132
        %v2243 = vunpack.c.l.s8.bf16 %v1133
        %v2244 = vunpack.c.l.s8.bf16 %v1134
        %v2245 = vunpack.c.l.s8.bf16 %v1135
        %v2246 = vunpack.c.l.s8.bf16 %v1136
        %v2247 = vunpack.c.l.s8.bf16 %v1137
        %v2248 = vunpack.c.l.s8.bf16 %v1138
        %v2249 = vunpack.c.l.s8.bf16 %v1139
        %v2250 = vunpack.c.l.s8.bf16 %v1140
        %v2251 = vunpack.c.h.s8.bf16 %v1126
        %v2252 = vunpack.c.h.s8.bf16 %v1127
        %v2253 = vunpack.c.h.s8.bf16 %v1128
        %v2254 = vunpack.c.h.s8.bf16 %v1129
        %v2255 = vunpack.c.h.s8.bf16 %v1130
        %v2256 = vunpack.c.h.s8.bf16 %v1131
        %v2257 = vunpack.c.h.s8.bf16 %v1132
        %v2258 = vunpack.c.h.s8.bf16 %v1133
        %v2259 = vunpack.c.h.s8.bf16 %v1134
        %v2260 = vunpack.c.h.s8.bf16 %v1135
        %v2261 = vunpack.c.h.s8.bf16 %v1136
        %v2262 = vunpack.c.h.s8.bf16 %v1137
        %v2263 = vunpack.c.h.s8.bf16 %v1138
        %v2264 = vunpack.c.h.s8.bf16 %v1139
        %v2265 = vunpack.c.h.s8.bf16 %v1140
        %v2266 = vunpack.c.l.s8.bf16 %v1141
        %v2267 = vunpack.c.l.s8.bf16 %v1142
        %v2268 = vunpack.c.l.s8.bf16 %v1143
        %v2269 = vunpack.c.l.s8.bf16 %v1144
        %v2270 = vunpack.c.l.s8.bf16 %v1145
        %v2271 = vunpack.c.l.s8.bf16 %v1146
        %v2272 = vunpack.c.l.s8.bf16 %v1147
        %v2273 = vunpack.c.l.s8.bf16 %v1148
        %v2274 = vunpack.c.l.s8.bf16 %v1149
        %v2275 = vunpack.c.l.s8.bf16 %v1150
        %v2276 = vunpack.c.l.s8.bf16 %v1151
        %v2277 = vunpack.c.l.s8.bf16 %v1152
        %v2278 = vunpack.c.l.s8.bf16 %v1153
        %v2279 = vunpack.c.l.s8.bf16 %v1154
        %v2280 = vunpack.c.l.s8.bf16 %v1155
        %v2281 = vunpack.c.h.s8.bf16 %v1141
        %v2282 = vunpack.c.h.s8.bf16 %v1142
        %v2283 = vunpack.c.h.s8.bf16 %v1143
        %v2284 = vunpack.c.h.s8.bf16 %v1144
        %v2285 = vunpack.c.h.s8.bf16 %v1145
        %v2286 = vunpack.c.h.s8.bf16 %v1146
        %v2287 = vunpack.c.h.s8.bf16 %v1147
        %v2288 = vunpack.c.h.s8.bf16 %v1148
        %v2289 = vunpack.c.h.s8.bf16 %v1149
        %v2290 = vunpack.c.h.s8.bf16 %v1150
        %v2291 = vunpack.c.h.s8.bf16 %v1151
        %v2292 = vunpack.c.h.s8.bf16 %v1152
        %v2293 = vunpack.c.h.s8.bf16 %v1153
        %v2294 = vunpack.c.h.s8.bf16 %v1154
        %v2295 = vunpack.c.h.s8.bf16 %v1155
        %v2296 = vunpack.c.l.s8.bf16 %v1156
        %v2297 = vunpack.c.l.s8.bf16 %v1157
        %v2298 = vunpack.c.l.s8.bf16 %v1158
        %v2299 = vunpack.c.l.s8.bf16 %v1159
        %v2300 = vunpack.c.l.s8.bf16 %v1160
        %v2301 = vunpack.c.l.s8.bf16 %v1161
        %v2302 = vunpack.c.l.s8.bf16 %v1162
        %v2303 = vunpack.c.l.s8.bf16 %v1163
        %v2304 = vunpack.c.l.s8.bf16 %v1164
        %v2305 = vunpack.c.l.s8.bf16 %v1165
        %v2306 = vunpack.c.l.s8.bf16 %v1166
        %v2307 = vunpack.c.l.s8.bf16 %v1167
        %v2308 = vunpack.c.l.s8.bf16 %v1168
        %v2309 = vunpack.c.l.s8.bf16 %v1169
        %v2310 = vunpack.c.l.s8.bf16 %v1170
        %v2311 = vunpack.c.h.s8.bf16 %v1156
        %v2312 = vunpack.c.h.s8.bf16 %v1157
        %v2313 = vunpack.c.h.s8.bf16 %v1158
        %v2314 = vunpack.c.h.s8.bf16 %v1159
        %v2315 = vunpack.c.h.s8.bf16 %v1160
        %v2316 = vunpack.c.h.s8.bf16 %v1161
        %v2317 = vunpack.c.h.s8.bf16 %v1162
        %v2318 = vunpack.c.h.s8.bf16 %v1163
        %v2319 = vunpack.c.h.s8.bf16 %v1164
        %v2320 = vunpack.c.h.s8.bf16 %v1165
        %v2321 = vunpack.c.h.s8.bf16 %v1166
        %v2322 = vunpack.c.h.s8.bf16 %v1167
        %v2323 = vunpack.c.h.s8.bf16 %v1168
        %v2324 = vunpack.c.h.s8.bf16 %v1169
        %v2325 = vunpack.c.h.s8.bf16 %v1170
        %v2326 = vunpack.c.l.s8.bf16 %v1171
        %v2327 = vunpack.c.l.s8.bf16 %v1172
        %v2328 = vunpack.c.l.s8.bf16 %v1173
        %v2329 = vunpack.c.l.s8.bf16 %v1174
        %v2330 = vunpack.c.l.s8.bf16 %v1175
        %v2331 = vunpack.c.l.s8.bf16 %v1176
        %v2332 = vunpack.c.l.s8.bf16 %v1177
        %v2333 = vunpack.c.l.s8.bf16 %v1178
        %v2334 = vunpack.c.l.s8.bf16 %v1179
        %v2335 = vunpack.c.l.s8.bf16 %v1180
        %v2336 = vunpack.c.l.s8.bf16 %v1181
        %v2337 = vunpack.c.l.s8.bf16 %v1182
        %v2338 = vunpack.c.l.s8.bf16 %v1183
        %v2339 = vunpack.c.l.s8.bf16 %v1184
        %v2340 = vunpack.c.l.s8.bf16 %v1185
        %v2341 = vunpack.c.h.s8.bf16 %v1171
        %v2342 = vunpack.c.h.s8.bf16 %v1172
        %v2343 = vunpack.c.h.s8.bf16 %v1173
        %v2344 = vunpack.c.h.s8.bf16 %v1174
        %v2345 = vunpack.c.h.s8.bf16 %v1175
        %v2346 = vunpack.c.h.s8.bf16 %v1176
        %v2347 = vunpack.c.h.s8.bf16 %v1177
        %v2348 = vunpack.c.h.s8.bf16 %v1178
        %v2349 = vunpack.c.h.s8.bf16 %v1179
        %v2350 = vunpack.c.h.s8.bf16 %v1180
        %v2351 = vunpack.c.h.s8.bf16 %v1181
        %v2352 = vunpack.c.h.s8.bf16 %v1182
        %v2353 = vunpack.c.h.s8.bf16 %v1183
        %v2354 = vunpack.c.h.s8.bf16 %v1184
        %v2355 = vunpack.c.h.s8.bf16 %v1185
        %v2356 = vunpack.c.l.s8.bf16 %v1186
        %v2357 = vunpack.c.l.s8.bf16 %v1187
        %v2358 = vunpack.c.l.s8.bf16 %v1188
        %v2359 = vunpack.c.l.s8.bf16 %v1189
        %v2360 = vunpack.c.l.s8.bf16 %v1190
        %v2361 = vunpack.c.l.s8.bf16 %v1191
        %v2362 = vunpack.c.l.s8.bf16 %v1192
        %v2363 = vunpack.c.l.s8.bf16 %v1193
        %v2364 = vunpack.c.l.s8.bf16 %v1194
        %v2365 = vunpack.c.l.s8.bf16 %v1195
        %v2366 = vunpack.c.l.s8.bf16 %v1196
        %v2367 = vunpack.c.l.s8.bf16 %v1197
        %v2368 = vunpack.c.l.s8.bf16 %v1198
        %v2369 = vunpack.c.l.s8.bf16 %v1199
        %v2370 = vunpack.c.l.s8.bf16 %v1200
        %v2371 = vunpack.c.h.s8.bf16 %v1186
        %v2372 = vunpack.c.h.s8.bf16 %v1187
        %v2373 = vunpack.c.h.s8.bf16 %v1188
        %v2374 = vunpack.c.h.s8.bf16 %v1189
        %v2375 = vunpack.c.h.s8.bf16 %v1190
        %v2376 = vunpack.c.h.s8.bf16 %v1191
        %v2377 = vunpack.c.h.s8.bf16 %v1192
        %v2378 = vunpack.c.h.s8.bf16 %v1193
        %v2379 = vunpack.c.h.s8.bf16 %v1194
        %v2380 = vunpack.c.h.s8.bf16 %v1195
        %v2381 = vunpack.c.h.s8.bf16 %v1196
        %v2382 = vunpack.c.h.s8.bf16 %v1197
        %v2383 = vunpack.c.h.s8.bf16 %v1198
        %v2384 = vunpack.c.h.s8.bf16 %v1199
        %v2385 = vunpack.c.h.s8.bf16 %v1200
        %v2386 = vunpack.c.l.s8.bf16 %v1201
        %v2387 = vunpack.c.l.s8.bf16 %v1202
        %v2388 = vunpack.c.l.s8.bf16 %v1203
        %v2389 = vunpack.c.l.s8.bf16 %v1204
        %v2390 = vunpack.c.l.s8.bf16 %v1205
        %v2391 = vunpack.c.l.s8.bf16 %v1206
        %v2392 = vunpack.c.l.s8.bf16 %v1207
        %v2393 = vunpack.c.l.s8.bf16 %v1208
        %v2394 = vunpack.c.l.s8.bf16 %v1209
        %v2395 = vunpack.c.l.s8.bf16 %v1210
        %v2396 = vunpack.c.l.s8.bf16 %v1211
        %v2397 = vunpack.c.l.s8.bf16 %v1212
        %v2398 = vunpack.c.l.s8.bf16 %v1213
        %v2399 = vunpack.c.l.s8.bf16 %v1214
        %v2400 = vunpack.c.l.s8.bf16 %v1215
        %v2401 = vunpack.c.h.s8.bf16 %v1201
        %v2402 = vunpack.c.h.s8.bf16 %v1202
        %v2403 = vunpack.c.h.s8.bf16 %v1203
        %v2404 = vunpack.c.h.s8.bf16 %v1204
        %v2405 = vunpack.c.h.s8.bf16 %v1205
        %v2406 = vunpack.c.h.s8.bf16 %v1206
        %v2407 = vunpack.c.h.s8.bf16 %v1207
        %v2408 = vunpack.c.h.s8.bf16 %v1208
        %v2409 = vunpack.c.h.s8.bf16 %v1209
        %v2410 = vunpack.c.h.s8.bf16 %v1210
        %v2411 = vunpack.c.h.s8.bf16 %v1211
        %v2412 = vunpack.c.h.s8.bf16 %v1212
        %v2413 = vunpack.c.h.s8.bf16 %v1213
        %v2414 = vunpack.c.h.s8.bf16 %v1214
        %v2415 = vunpack.c.h.s8.bf16 %v1215
        %v2421 = vunpack.c.l.b16 %v611
        %v2422 = vunpack.c.h.b16 %v611
        %v2423 = vunpack.c.l.b16 %v612
        %v2424 = vunpack.c.h.b16 %v612
        %v2425 = vunpack.c.l.b16 %v613
        %v2426 = vunpack.c.h.b16 %v613
        %v2427 = vunpack.c.l.b16 %v614
        %v2428 = vunpack.c.h.b16 %v614
        %v2429 = vunpack.c.l.b16 %v615
        %v2430 = vunpack.c.h.b16 %v615
        %v2431 = vpack.c.b16 %v2421, %v2421
        %v2432 = vpack.c.b16 %v2422, %v2422
        %v2433 = vpack.c.b16 %v2423, %v2423
        %v2434 = vpack.c.b16 %v2424, %v2424
        %v2435 = vpack.c.b16 %v2425, %v2425
        %v2436 = vpack.c.b16 %v2426, %v2426
        %v2437 = vpack.c.b16 %v2427, %v2427
        %v2438 = vpack.c.b16 %v2428, %v2428
        %v2439 = vpack.c.b16 %v2429, %v2429
        %v2440 = vpack.c.b16 %v2430, %v2430
        %2451 = vmatprep.subr.bf16.mxu0 %v1322
        %2452 = vmatpush1.bf16.msra.mxu0 %v1321
        %2453 = vmatprep.subr.bf16.mxu0 %v1307
        %2454 = vmatpush1.bf16.msra.mxu0 %v1306
        %2455 = vmatprep.subr.bf16.mxu0 %v1292
        %2456 = vmatpush1.bf16.msra.mxu0 %v1291
        %2457 = vmatprep.subr.bf16.mxu0 %v1277
        %2458 = vmatpush1.bf16.msra.mxu0 %v1276
        %2459 = vmatprep.subr.bf16.mxu0 %v1262
        %2460 = vmatpush1.bf16.msra.mxu0 %v1261
        %2461 = vmatprep.subr.bf16.mxu0 %v1247
        %2462 = vmatpush1.bf16.msra.mxu0 %v1246
        %2463 = vmatprep.subr.bf16.mxu0 %v1232
        %2464 = vmatpush1.bf16.msra.mxu0 %v1231
        %2465 = vmatprep.subr.bf16.mxu0 %v1217
        %2466 = vmatpush1.bf16.msra.mxu0 %v1216
        %2467 = vmatprep.subr.bf16.mxu0 %v1442
        %2468 = vmatpush2.bf16.msra.mxu0 %v1441
        %2469 = vmatprep.subr.bf16.mxu0 %v1427
        %2470 = vmatpush2.bf16.msra.mxu0 %v1426
        %2471 = vmatprep.subr.bf16.mxu0 %v1412
        %2472 = vmatpush2.bf16.msra.mxu0 %v1411
        %2473 = vmatprep.subr.bf16.mxu0 %v1397
        %2474 = vmatpush2.bf16.msra.mxu0 %v1396
        %2475 = vmatprep.subr.bf16.mxu0 %v1382
        %2476 = vmatpush2.bf16.msra.mxu0 %v1381
        %2477 = vmatprep.subr.bf16.mxu0 %v1367
        %2478 = vmatpush2.bf16.msra.mxu0 %v1366
        %2479 = vmatprep.subr.bf16.mxu0 %v1352
        %2480 = vmatpush2.bf16.msra.mxu0 %v1351
        %2481 = vmatprep.subr.bf16.mxu0 %v1337
        %2482 = vmatpush2.bf16.msra.mxu0 %v1336
        %2483 = vmatprep.mubr.bf16.mxu0 %v2432
        %2484 = vmatmul.mubr.bf16.gmra.mxu0 %v2431
        %v2485 = vpop.f32.mrf.mxu0
        %v2486 = vadd.f32 0.0, %v2485
        %v2487 = vpop.f32.mrf.mxu0
        %v2488 = vadd.f32 0.0, %v2487
        %v2489 = vpop.f32.mrf.mxu0
        %v2490 = vpop.f32.mrf.mxu0
        %2491 = vdwg.mxu0
        %2492 = vmatprep.subr.bf16.mxu0 %v1562
        %2493 = vmatpush1.bf16.msra.mxu0 %v1561
        %2494 = vmatprep.subr.bf16.mxu0 %v1547
        %2495 = vmatpush1.bf16.msra.mxu0 %v1546
        %2496 = vmatprep.subr.bf16.mxu0 %v1532
        %2497 = vmatpush1.bf16.msra.mxu0 %v1531
        %2498 = vmatprep.subr.bf16.mxu0 %v1517
        %2499 = vmatpush1.bf16.msra.mxu0 %v1516
        %2500 = vmatprep.subr.bf16.mxu0 %v1502
        %2501 = vmatpush1.bf16.msra.mxu0 %v1501
        %2502 = vmatprep.subr.bf16.mxu0 %v1487
        %2503 = vmatpush1.bf16.msra.mxu0 %v1486
        %2504 = vmatprep.subr.bf16.mxu0 %v1472
        %2505 = vmatpush1.bf16.msra.mxu0 %v1471
        %2506 = vmatprep.subr.bf16.mxu0 %v1457
        %2507 = vmatpush1.bf16.msra.mxu0 %v1456
        %2508 = vmatprep.subr.bf16.mxu0 %v1682
        %2509 = vmatpush2.bf16.msra.mxu0 %v1681
        %2510 = vmatprep.subr.bf16.mxu0 %v1667
        %2511 = vmatpush2.bf16.msra.mxu0 %v1666
        %2512 = vmatprep.subr.bf16.mxu0 %v1652
        %2513 = vmatpush2.bf16.msra.mxu0 %v1651
        %2514 = vmatprep.subr.bf16.mxu0 %v1637
        %2515 = vmatpush2.bf16.msra.mxu0 %v1636
        %2516 = vmatprep.subr.bf16.mxu0 %v1622
        %2517 = vmatpush2.bf16.msra.mxu0 %v1621
        %2518 = vmatprep.subr.bf16.mxu0 %v1607
        %2519 = vmatpush2.bf16.msra.mxu0 %v1606
        %2520 = vmatprep.subr.bf16.mxu0 %v1592
        %2521 = vmatpush2.bf16.msra.mxu0 %v1591
        %2522 = vmatprep.subr.bf16.mxu0 %v1577
        %2523 = vmatpush2.bf16.msra.mxu0 %v1576
        %2524 = vmatprep.mubr.bf16.mxu0 %v2434
        %2525 = vmatmul.mubr.bf16.gmra.mxu0 %v2433
        %v2526 = vpop.f32.mrf.mxu0
        %v2527 = vadd.f32 %v2486, %v2526
        %v2528 = vpop.f32.mrf.mxu0
        %v2529 = vadd.f32 %v2488, %v2528
        %v2530 = vpop.f32.mrf.mxu0
        %v2531 = vpop.f32.mrf.mxu0
        %2532 = vdwg.mxu0
        %2533 = vmatprep.subr.bf16.mxu0 %v1802
        %2534 = vmatpush1.bf16.msra.mxu0 %v1801
        %2535 = vmatprep.subr.bf16.mxu0 %v1787
        %2536 = vmatpush1.bf16.msra.mxu0 %v1786
        %2537 = vmatprep.subr.bf16.mxu0 %v1772
        %2538 = vmatpush1.bf16.msra.mxu0 %v1771
        %2539 = vmatprep.subr.bf16.mxu0 %v1757
        %2540 = vmatpush1.bf16.msra.mxu0 %v1756
        %2541 = vmatprep.subr.bf16.mxu0 %v1742
        %2542 = vmatpush1.bf16.msra.mxu0 %v1741
        %2543 = vmatprep.subr.bf16.mxu0 %v1727
        %2544 = vmatpush1.bf16.msra.mxu0 %v1726
        %2545 = vmatprep.subr.bf16.mxu0 %v1712
        %2546 = vmatpush1.bf16.msra.mxu0 %v1711
        %2547 = vmatprep.subr.bf16.mxu0 %v1697
        %2548 = vmatpush1.bf16.msra.mxu0 %v1696
        %2549 = vmatprep.subr.bf16.mxu0 %v1922
        %2550 = vmatpush2.bf16.msra.mxu0 %v1921
        %2551 = vmatprep.subr.bf16.mxu0 %v1907
        %2552 = vmatpush2.bf16.msra.mxu0 %v1906
        %2553 = vmatprep.subr.bf16.mxu0 %v1892
        %2554 = vmatpush2.bf16.msra.mxu0 %v1891
        %2555 = vmatprep.subr.bf16.mxu0 %v1877
        %2556 = vmatpush2.bf16.msra.mxu0 %v1876
        %2557 = vmatprep.subr.bf16.mxu0 %v1862
        %2558 = vmatpush2.bf16.msra.mxu0 %v1861
        %2559 = vmatprep.subr.bf16.mxu0 %v1847
        %2560 = vmatpush2.bf16.msra.mxu0 %v1846
        %2561 = vmatprep.subr.bf16.mxu0 %v1832
        %2562 = vmatpush2.bf16.msra.mxu0 %v1831
        %2563 = vmatprep.subr.bf16.mxu0 %v1817
        %2564 = vmatpush2.bf16.msra.mxu0 %v1816
        %2565 = vmatprep.mubr.bf16.mxu0 %v2436
        %2566 = vmatmul.mubr.bf16.gmra.mxu0 %v2435
        %v2567 = vpop.f32.mrf.mxu0
        %v2568 = vadd.f32 %v2527, %v2567
        %v2569 = vpop.f32.mrf.mxu0
        %v2570 = vadd.f32 %v2529, %v2569
        %v2571 = vpop.f32.mrf.mxu0
        %v2572 = vpop.f32.mrf.mxu0
        %2573 = vdwg.mxu0
        %2574 = vmatprep.subr.bf16.mxu0 %v2042
        %2575 = vmatpush1.bf16.msra.mxu0 %v2041
        %2576 = vmatprep.subr.bf16.mxu0 %v2027
        %2577 = vmatpush1.bf16.msra.mxu0 %v2026
        %2578 = vmatprep.subr.bf16.mxu0 %v2012
        %2579 = vmatpush1.bf16.msra.mxu0 %v2011
        %2580 = vmatprep.subr.bf16.mxu0 %v1997
        %2581 = vmatpush1.bf16.msra.mxu0 %v1996
        %2582 = vmatprep.subr.bf16.mxu0 %v1982
        %2583 = vmatpush1.bf16.msra.mxu0 %v1981
        %2584 = vmatprep.subr.bf16.mxu0 %v1967
        %2585 = vmatpush1.bf16.msra.mxu0 %v1966
        %2586 = vmatprep.subr.bf16.mxu0 %v1952
        %2587 = vmatpush1.bf16.msra.mxu0 %v1951
        %2588 = vmatprep.subr.bf16.mxu0 %v1937
        %2589 = vmatpush1.bf16.msra.mxu0 %v1936
        %2590 = vmatprep.subr.bf16.mxu0 %v2162
        %2591 = vmatpush2.bf16.msra.mxu0 %v2161
        %2592 = vmatprep.subr.bf16.mxu0 %v2147
        %2593 = vmatpush2.bf16.msra.mxu0 %v2146
        %2594 = vmatprep.subr.bf16.mxu0 %v2132
        %2595 = vmatpush2.bf16.msra.mxu0 %v2131
        %2596 = vmatprep.subr.bf16.mxu0 %v2117
        %2597 = vmatpush2.bf16.msra.mxu0 %v2116
        %2598 = vmatprep.subr.bf16.mxu0 %v2102
        %2599 = vmatpush2.bf16.msra.mxu0 %v2101
        %2600 = vmatprep.subr.bf16.mxu0 %v2087
        %2601 = vmatpush2.bf16.msra.mxu0 %v2086
        %2602 = vmatprep.subr.bf16.mxu0 %v2072
        %2603 = vmatpush2.bf16.msra.mxu0 %v2071
        %2604 = vmatprep.subr.bf16.mxu0 %v2057
        %2605 = vmatpush2.bf16.msra.mxu0 %v2056
        %2606 = vmatprep.mubr.bf16.mxu0 %v2438
        %2607 = vmatmul.mubr.bf16.gmra.mxu0 %v2437
        %v2608 = vpop.f32.mrf.mxu0
        %v2609 = vadd.f32 %v2568, %v2608
        %v2610 = vpop.f32.mrf.mxu0
        %v2611 = vadd.f32 %v2570, %v2610
        %v2612 = vpop.f32.mrf.mxu0
        %v2613 = vpop.f32.mrf.mxu0
        %2614 = vdwg.mxu0
        %2615 = vmatprep.subr.bf16.mxu0 %v2282
        %2616 = vmatpush1.bf16.msra.mxu0 %v2281
        %2617 = vmatprep.subr.bf16.mxu0 %v2267
        %2618 = vmatpush1.bf16.msra.mxu0 %v2266
        %2619 = vmatprep.subr.bf16.mxu0 %v2252
        %2620 = vmatpush1.bf16.msra.mxu0 %v2251
        %2621 = vmatprep.subr.bf16.mxu0 %v2237
        %2622 = vmatpush1.bf16.msra.mxu0 %v2236
        %2623 = vmatprep.subr.bf16.mxu0 %v2222
        %2624 = vmatpush1.bf16.msra.mxu0 %v2221
        %2625 = vmatprep.subr.bf16.mxu0 %v2207
        %2626 = vmatpush1.bf16.msra.mxu0 %v2206
        %2627 = vmatprep.subr.bf16.mxu0 %v2192
        %2628 = vmatpush1.bf16.msra.mxu0 %v2191
        %2629 = vmatprep.subr.bf16.mxu0 %v2177
        %2630 = vmatpush1.bf16.msra.mxu0 %v2176
        %2631 = vmatprep.subr.bf16.mxu0 %v2402
        %2632 = vmatpush2.bf16.msra.mxu0 %v2401
        %2633 = vmatprep.subr.bf16.mxu0 %v2387
        %2634 = vmatpush2.bf16.msra.mxu0 %v2386
        %2635 = vmatprep.subr.bf16.mxu0 %v2372
        %2636 = vmatpush2.bf16.msra.mxu0 %v2371
        %2637 = vmatprep.subr.bf16.mxu0 %v2357
        %2638 = vmatpush2.bf16.msra.mxu0 %v2356
        %2639 = vmatprep.subr.bf16.mxu0 %v2342
        %2640 = vmatpush2.bf16.msra.mxu0 %v2341
        %2641 = vmatprep.subr.bf16.mxu0 %v2327
        %2642 = vmatpush2.bf16.msra.mxu0 %v2326
        %2643 = vmatprep.subr.bf16.mxu0 %v2312
        %2644 = vmatpush2.bf16.msra.mxu0 %v2311
        %2645 = vmatprep.subr.bf16.mxu0 %v2297
        %2646 = vmatpush2.bf16.msra.mxu0 %v2296
        %2647 = vmatprep.mubr.bf16.mxu0 %v2440
        %2648 = vmatmul.mubr.bf16.gmra.mxu0 %v2439
        %v2649 = vpop.f32.mrf.mxu0
        %v2650 = vadd.f32 %v2609, %v2649
        %v2651 = vpop.f32.mrf.mxu0
        %v2652 = vadd.f32 %v2611, %v2651
        %v2653 = vpop.f32.mrf.mxu0
        %v2654 = vpop.f32.mrf.mxu0
        %2655 = vdwg.mxu0
        %2656 = vmatprep.subr.bf16.mxu0 %v1324
        %2657 = vmatpush1.bf16.msra.mxu0 %v1323
        %2658 = vmatprep.subr.bf16.mxu0 %v1309
        %2659 = vmatpush1.bf16.msra.mxu0 %v1308
        %2660 = vmatprep.subr.bf16.mxu0 %v1294
        %2661 = vmatpush1.bf16.msra.mxu0 %v1293
        %2662 = vmatprep.subr.bf16.mxu0 %v1279
        %2663 = vmatpush1.bf16.msra.mxu0 %v1278
        %2664 = vmatprep.subr.bf16.mxu0 %v1264
        %2665 = vmatpush1.bf16.msra.mxu0 %v1263
        %2666 = vmatprep.subr.bf16.mxu0 %v1249
        %2667 = vmatpush1.bf16.msra.mxu0 %v1248
        %2668 = vmatprep.subr.bf16.mxu0 %v1234
        %2669 = vmatpush1.bf16.msra.mxu0 %v1233
        %2670 = vmatprep.subr.bf16.mxu0 %v1219
        %2671 = vmatpush1.bf16.msra.mxu0 %v1218
        %2672 = vmatprep.subr.bf16.mxu0 %v1444
        %2673 = vmatpush2.bf16.msra.mxu0 %v1443
        %2674 = vmatprep.subr.bf16.mxu0 %v1429
        %2675 = vmatpush2.bf16.msra.mxu0 %v1428
        %2676 = vmatprep.subr.bf16.mxu0 %v1414
        %2677 = vmatpush2.bf16.msra.mxu0 %v1413
        %2678 = vmatprep.subr.bf16.mxu0 %v1399
        %2679 = vmatpush2.bf16.msra.mxu0 %v1398
        %2680 = vmatprep.subr.bf16.mxu0 %v1384
        %2681 = vmatpush2.bf16.msra.mxu0 %v1383
        %2682 = vmatprep.subr.bf16.mxu0 %v1369
        %2683 = vmatpush2.bf16.msra.mxu0 %v1368
        %2684 = vmatprep.subr.bf16.mxu0 %v1354
        %2685 = vmatpush2.bf16.msra.mxu0 %v1353
        %2686 = vmatprep.subr.bf16.mxu0 %v1339
        %2687 = vmatpush2.bf16.msra.mxu0 %v1338
        %2688 = vmatprep.mubr.bf16.mxu0 %v2432
        %2689 = vmatmul.mubr.bf16.gmra.mxu0 %v2431
        %v2690 = vpop.f32.mrf.mxu0
        %v2691 = vadd.f32 0.0, %v2690
        %v2692 = vpop.f32.mrf.mxu0
        %v2693 = vadd.f32 0.0, %v2692
        %v2694 = vpop.f32.mrf.mxu0
        %v2695 = vpop.f32.mrf.mxu0
        %2696 = vdwg.mxu0
        %2697 = vmatprep.subr.bf16.mxu0 %v1564
        %2698 = vmatpush1.bf16.msra.mxu0 %v1563
        %2699 = vmatprep.subr.bf16.mxu0 %v1549
        %2700 = vmatpush1.bf16.msra.mxu0 %v1548
        %2701 = vmatprep.subr.bf16.mxu0 %v1534
        %2702 = vmatpush1.bf16.msra.mxu0 %v1533
        %2703 = vmatprep.subr.bf16.mxu0 %v1519
        %2704 = vmatpush1.bf16.msra.mxu0 %v1518
        %2705 = vmatprep.subr.bf16.mxu0 %v1504
        %2706 = vmatpush1.bf16.msra.mxu0 %v1503
        %2707 = vmatprep.subr.bf16.mxu0 %v1489
        %2708 = vmatpush1.bf16.msra.mxu0 %v1488
        %2709 = vmatprep.subr.bf16.mxu0 %v1474
        %2710 = vmatpush1.bf16.msra.mxu0 %v1473
        %2711 = vmatprep.subr.bf16.mxu0 %v1459
        %2712 = vmatpush1.bf16.msra.mxu0 %v1458
        %2713 = vmatprep.subr.bf16.mxu0 %v1684
        %2714 = vmatpush2.bf16.msra.mxu0 %v1683
        %2715 = vmatprep.subr.bf16.mxu0 %v1669
        %2716 = vmatpush2.bf16.msra.mxu0 %v1668
        %2717 = vmatprep.subr.bf16.mxu0 %v1654
        %2718 = vmatpush2.bf16.msra.mxu0 %v1653
        %2719 = vmatprep.subr.bf16.mxu0 %v1639
        %2720 = vmatpush2.bf16.msra.mxu0 %v1638
        %2721 = vmatprep.subr.bf16.mxu0 %v1624
        %2722 = vmatpush2.bf16.msra.mxu0 %v1623
        %2723 = vmatprep.subr.bf16.mxu0 %v1609
        %2724 = vmatpush2.bf16.msra.mxu0 %v1608
        %2725 = vmatprep.subr.bf16.mxu0 %v1594
        %2726 = vmatpush2.bf16.msra.mxu0 %v1593
        %2727 = vmatprep.subr.bf16.mxu0 %v1579
        %2728 = vmatpush2.bf16.msra.mxu0 %v1578
        %2729 = vmatprep.mubr.bf16.mxu0 %v2434
        %2730 = vmatmul.mubr.bf16.gmra.mxu0 %v2433
        %v2731 = vpop.f32.mrf.mxu0
        %v2732 = vadd.f32 %v2691, %v2731
        %v2733 = vpop.f32.mrf.mxu0
        %v2734 = vadd.f32 %v2693, %v2733
        %v2735 = vpop.f32.mrf.mxu0
        %v2736 = vpop.f32.mrf.mxu0
        %2737 = vdwg.mxu0
        %2738 = vmatprep.subr.bf16.mxu0 %v1804
        %2739 = vmatpush1.bf16.msra.mxu0 %v1803
        %2740 = vmatprep.subr.bf16.mxu0 %v1789
        %2741 = vmatpush1.bf16.msra.mxu0 %v1788
        %2742 = vmatprep.subr.bf16.mxu0 %v1774
        %2743 = vmatpush1.bf16.msra.mxu0 %v1773
        %2744 = vmatprep.subr.bf16.mxu0 %v1759
        %2745 = vmatpush1.bf16.msra.mxu0 %v1758
        %2746 = vmatprep.subr.bf16.mxu0 %v1744
        %2747 = vmatpush1.bf16.msra.mxu0 %v1743
        %2748 = vmatprep.subr.bf16.mxu0 %v1729
        %2749 = vmatpush1.bf16.msra.mxu0 %v1728
        %2750 = vmatprep.subr.bf16.mxu0 %v1714
        %2751 = vmatpush1.bf16.msra.mxu0 %v1713
        %2752 = vmatprep.subr.bf16.mxu0 %v1699
        %2753 = vmatpush1.bf16.msra.mxu0 %v1698
        %2754 = vmatprep.subr.bf16.mxu0 %v1924
        %2755 = vmatpush2.bf16.msra.mxu0 %v1923
        %2756 = vmatprep.subr.bf16.mxu0 %v1909
        %2757 = vmatpush2.bf16.msra.mxu0 %v1908
        %2758 = vmatprep.subr.bf16.mxu0 %v1894
        %2759 = vmatpush2.bf16.msra.mxu0 %v1893
        %2760 = vmatprep.subr.bf16.mxu0 %v1879
        %2761 = vmatpush2.bf16.msra.mxu0 %v1878
        %2762 = vmatprep.subr.bf16.mxu0 %v1864
        %2763 = vmatpush2.bf16.msra.mxu0 %v1863
        %2764 = vmatprep.subr.bf16.mxu0 %v1849
        %2765 = vmatpush2.bf16.msra.mxu0 %v1848
        %2766 = vmatprep.subr.bf16.mxu0 %v1834
        %2767 = vmatpush2.bf16.msra.mxu0 %v1833
        %2768 = vmatprep.subr.bf16.mxu0 %v1819
        %2769 = vmatpush2.bf16.msra.mxu0 %v1818
        %2770 = vmatprep.mubr.bf16.mxu0 %v2436
        %2771 = vmatmul.mubr.bf16.gmra.mxu0 %v2435
        %v2772 = vpop.f32.mrf.mxu0
        %v2773 = vadd.f32 %v2732, %v2772
        %v2774 = vpop.f32.mrf.mxu0
        %v2775 = vadd.f32 %v2734, %v2774
        %v2776 = vpop.f32.mrf.mxu0
        %v2777 = vpop.f32.mrf.mxu0
        %2778 = vdwg.mxu0
        %2779 = vmatprep.subr.bf16.mxu0 %v2044
        %2780 = vmatpush1.bf16.msra.mxu0 %v2043
        %2781 = vmatprep.subr.bf16.mxu0 %v2029
        %2782 = vmatpush1.bf16.msra.mxu0 %v2028
        %2783 = vmatprep.subr.bf16.mxu0 %v2014
        %2784 = vmatpush1.bf16.msra.mxu0 %v2013
        %2785 = vmatprep.subr.bf16.mxu0 %v1999
        %2786 = vmatpush1.bf16.msra.mxu0 %v1998
        %2787 = vmatprep.subr.bf16.mxu0 %v1984
        %2788 = vmatpush1.bf16.msra.mxu0 %v1983
        %2789 = vmatprep.subr.bf16.mxu0 %v1969
        %2790 = vmatpush1.bf16.msra.mxu0 %v1968
        %2791 = vmatprep.subr.bf16.mxu0 %v1954
        %2792 = vmatpush1.bf16.msra.mxu0 %v1953
        %2793 = vmatprep.subr.bf16.mxu0 %v1939
        %2794 = vmatpush1.bf16.msra.mxu0 %v1938
        %2795 = vmatprep.subr.bf16.mxu0 %v2164
        %2796 = vmatpush2.bf16.msra.mxu0 %v2163
        %2797 = vmatprep.subr.bf16.mxu0 %v2149
        %2798 = vmatpush2.bf16.msra.mxu0 %v2148
        %2799 = vmatprep.subr.bf16.mxu0 %v2134
        %2800 = vmatpush2.bf16.msra.mxu0 %v2133
        %2801 = vmatprep.subr.bf16.mxu0 %v2119
        %2802 = vmatpush2.bf16.msra.mxu0 %v2118
        %2803 = vmatprep.subr.bf16.mxu0 %v2104
        %2804 = vmatpush2.bf16.msra.mxu0 %v2103
        %2805 = vmatprep.subr.bf16.mxu0 %v2089
        %2806 = vmatpush2.bf16.msra.mxu0 %v2088
        %2807 = vmatprep.subr.bf16.mxu0 %v2074
        %2808 = vmatpush2.bf16.msra.mxu0 %v2073
        %2809 = vmatprep.subr.bf16.mxu0 %v2059
        %2810 = vmatpush2.bf16.msra.mxu0 %v2058
        %2811 = vmatprep.mubr.bf16.mxu0 %v2438
        %2812 = vmatmul.mubr.bf16.gmra.mxu0 %v2437
        %v2813 = vpop.f32.mrf.mxu0
        %v2814 = vadd.f32 %v2773, %v2813
        %v2815 = vpop.f32.mrf.mxu0
        %v2816 = vadd.f32 %v2775, %v2815
        %v2817 = vpop.f32.mrf.mxu0
        %v2818 = vpop.f32.mrf.mxu0
        %2819 = vdwg.mxu0
        %2820 = vmatprep.subr.bf16.mxu0 %v2284
        %2821 = vmatpush1.bf16.msra.mxu0 %v2283
        %2822 = vmatprep.subr.bf16.mxu0 %v2269
        %2823 = vmatpush1.bf16.msra.mxu0 %v2268
        %2824 = vmatprep.subr.bf16.mxu0 %v2254
        %2825 = vmatpush1.bf16.msra.mxu0 %v2253
        %2826 = vmatprep.subr.bf16.mxu0 %v2239
        %2827 = vmatpush1.bf16.msra.mxu0 %v2238
        %2828 = vmatprep.subr.bf16.mxu0 %v2224
        %2829 = vmatpush1.bf16.msra.mxu0 %v2223
        %2830 = vmatprep.subr.bf16.mxu0 %v2209
        %2831 = vmatpush1.bf16.msra.mxu0 %v2208
        %2832 = vmatprep.subr.bf16.mxu0 %v2194
        %2833 = vmatpush1.bf16.msra.mxu0 %v2193
        %2834 = vmatprep.subr.bf16.mxu0 %v2179
        %2835 = vmatpush1.bf16.msra.mxu0 %v2178
        %2836 = vmatprep.subr.bf16.mxu0 %v2404
        %2837 = vmatpush2.bf16.msra.mxu0 %v2403
        %2838 = vmatprep.subr.bf16.mxu0 %v2389
        %2839 = vmatpush2.bf16.msra.mxu0 %v2388
        %2840 = vmatprep.subr.bf16.mxu0 %v2374
        %2841 = vmatpush2.bf16.msra.mxu0 %v2373
        %2842 = vmatprep.subr.bf16.mxu0 %v2359
        %2843 = vmatpush2.bf16.msra.mxu0 %v2358
        %2844 = vmatprep.subr.bf16.mxu0 %v2344
        %2845 = vmatpush2.bf16.msra.mxu0 %v2343
        %2846 = vmatprep.subr.bf16.mxu0 %v2329
        %2847 = vmatpush2.bf16.msra.mxu0 %v2328
        %2848 = vmatprep.subr.bf16.mxu0 %v2314
        %2849 = vmatpush2.bf16.msra.mxu0 %v2313
        %2850 = vmatprep.subr.bf16.mxu0 %v2299
        %2851 = vmatpush2.bf16.msra.mxu0 %v2298
        %2852 = vmatprep.mubr.bf16.mxu0 %v2440
        %2853 = vmatmul.mubr.bf16.gmra.mxu0 %v2439
        %v2854 = vpop.f32.mrf.mxu0
        %v2855 = vadd.f32 %v2814, %v2854
        %v2856 = vpop.f32.mrf.mxu0
        %v2857 = vadd.f32 %v2816, %v2856
        %v2858 = vpop.f32.mrf.mxu0
        %v2859 = vpop.f32.mrf.mxu0
        %2860 = vdwg.mxu0
        %2861 = vmatprep.subr.bf16.mxu0 %v1326
        %2862 = vmatpush1.bf16.msra.mxu0 %v1325
        %2863 = vmatprep.subr.bf16.mxu0 %v1311
        %2864 = vmatpush1.bf16.msra.mxu0 %v1310
        %2865 = vmatprep.subr.bf16.mxu0 %v1296
        %2866 = vmatpush1.bf16.msra.mxu0 %v1295
        %2867 = vmatprep.subr.bf16.mxu0 %v1281
        %2868 = vmatpush1.bf16.msra.mxu0 %v1280
        %2869 = vmatprep.subr.bf16.mxu0 %v1266
        %2870 = vmatpush1.bf16.msra.mxu0 %v1265
        %2871 = vmatprep.subr.bf16.mxu0 %v1251
        %2872 = vmatpush1.bf16.msra.mxu0 %v1250
        %2873 = vmatprep.subr.bf16.mxu0 %v1236
        %2874 = vmatpush1.bf16.msra.mxu0 %v1235
        %2875 = vmatprep.subr.bf16.mxu0 %v1221
        %2876 = vmatpush1.bf16.msra.mxu0 %v1220
        %2877 = vmatprep.subr.bf16.mxu0 %v1446
        %2878 = vmatpush2.bf16.msra.mxu0 %v1445
        %2879 = vmatprep.subr.bf16.mxu0 %v1431
        %2880 = vmatpush2.bf16.msra.mxu0 %v1430
        %2881 = vmatprep.subr.bf16.mxu0 %v1416
        %2882 = vmatpush2.bf16.msra.mxu0 %v1415
        %2883 = vmatprep.subr.bf16.mxu0 %v1401
        %2884 = vmatpush2.bf16.msra.mxu0 %v1400
        %2885 = vmatprep.subr.bf16.mxu0 %v1386
        %2886 = vmatpush2.bf16.msra.mxu0 %v1385
        %2887 = vmatprep.subr.bf16.mxu0 %v1371
        %2888 = vmatpush2.bf16.msra.mxu0 %v1370
        %2889 = vmatprep.subr.bf16.mxu0 %v1356
        %2890 = vmatpush2.bf16.msra.mxu0 %v1355
        %2891 = vmatprep.subr.bf16.mxu0 %v1341
        %2892 = vmatpush2.bf16.msra.mxu0 %v1340
        %2893 = vmatprep.mubr.bf16.mxu0 %v2432
        %2894 = vmatmul.mubr.bf16.gmra.mxu0 %v2431
        %v2895 = vpop.f32.mrf.mxu0
        %v2896 = vadd.f32 0.0, %v2895
        %v2897 = vpop.f32.mrf.mxu0
        %v2898 = vadd.f32 0.0, %v2897
        %v2899 = vpop.f32.mrf.mxu0
        %v2900 = vpop.f32.mrf.mxu0
        %2901 = vdwg.mxu0
        %2902 = vmatprep.subr.bf16.mxu0 %v1566
        %2903 = vmatpush1.bf16.msra.mxu0 %v1565
        %2904 = vmatprep.subr.bf16.mxu0 %v1551
        %2905 = vmatpush1.bf16.msra.mxu0 %v1550
        %2906 = vmatprep.subr.bf16.mxu0 %v1536
        %2907 = vmatpush1.bf16.msra.mxu0 %v1535
        %2908 = vmatprep.subr.bf16.mxu0 %v1521
        %2909 = vmatpush1.bf16.msra.mxu0 %v1520
        %2910 = vmatprep.subr.bf16.mxu0 %v1506
        %2911 = vmatpush1.bf16.msra.mxu0 %v1505
        %2912 = vmatprep.subr.bf16.mxu0 %v1491
        %2913 = vmatpush1.bf16.msra.mxu0 %v1490
        %2914 = vmatprep.subr.bf16.mxu0 %v1476
        %2915 = vmatpush1.bf16.msra.mxu0 %v1475
        %2916 = vmatprep.subr.bf16.mxu0 %v1461
        %2917 = vmatpush1.bf16.msra.mxu0 %v1460
        %2918 = vmatprep.subr.bf16.mxu0 %v1686
        %2919 = vmatpush2.bf16.msra.mxu0 %v1685
        %2920 = vmatprep.subr.bf16.mxu0 %v1671
        %2921 = vmatpush2.bf16.msra.mxu0 %v1670
        %2922 = vmatprep.subr.bf16.mxu0 %v1656
        %2923 = vmatpush2.bf16.msra.mxu0 %v1655
        %2924 = vmatprep.subr.bf16.mxu0 %v1641
        %2925 = vmatpush2.bf16.msra.mxu0 %v1640
        %2926 = vmatprep.subr.bf16.mxu0 %v1626
        %2927 = vmatpush2.bf16.msra.mxu0 %v1625
        %2928 = vmatprep.subr.bf16.mxu0 %v1611
        %2929 = vmatpush2.bf16.msra.mxu0 %v1610
        %2930 = vmatprep.subr.bf16.mxu0 %v1596
        %2931 = vmatpush2.bf16.msra.mxu0 %v1595
        %2932 = vmatprep.subr.bf16.mxu0 %v1581
        %2933 = vmatpush2.bf16.msra.mxu0 %v1580
        %2934 = vmatprep.mubr.bf16.mxu0 %v2434
        %2935 = vmatmul.mubr.bf16.gmra.mxu0 %v2433
        %v2936 = vpop.f32.mrf.mxu0
        %v2937 = vadd.f32 %v2896, %v2936
        %v2938 = vpop.f32.mrf.mxu0
        %v2939 = vadd.f32 %v2898, %v2938
        %v2940 = vpop.f32.mrf.mxu0
        %v2941 = vpop.f32.mrf.mxu0
        %2942 = vdwg.mxu0
        %2943 = vmatprep.subr.bf16.mxu0 %v1806
        %2944 = vmatpush1.bf16.msra.mxu0 %v1805
        %2945 = vmatprep.subr.bf16.mxu0 %v1791
        %2946 = vmatpush1.bf16.msra.mxu0 %v1790
        %2947 = vmatprep.subr.bf16.mxu0 %v1776
        %2948 = vmatpush1.bf16.msra.mxu0 %v1775
        %2949 = vmatprep.subr.bf16.mxu0 %v1761
        %2950 = vmatpush1.bf16.msra.mxu0 %v1760
        %2951 = vmatprep.subr.bf16.mxu0 %v1746
        %2952 = vmatpush1.bf16.msra.mxu0 %v1745
        %2953 = vmatprep.subr.bf16.mxu0 %v1731
        %2954 = vmatpush1.bf16.msra.mxu0 %v1730
        %2955 = vmatprep.subr.bf16.mxu0 %v1716
        %2956 = vmatpush1.bf16.msra.mxu0 %v1715
        %2957 = vmatprep.subr.bf16.mxu0 %v1701
        %2958 = vmatpush1.bf16.msra.mxu0 %v1700
        %2959 = vmatprep.subr.bf16.mxu0 %v1926
        %2960 = vmatpush2.bf16.msra.mxu0 %v1925
        %2961 = vmatprep.subr.bf16.mxu0 %v1911
        %2962 = vmatpush2.bf16.msra.mxu0 %v1910
        %2963 = vmatprep.subr.bf16.mxu0 %v1896
        %2964 = vmatpush2.bf16.msra.mxu0 %v1895
        %2965 = vmatprep.subr.bf16.mxu0 %v1881
        %2966 = vmatpush2.bf16.msra.mxu0 %v1880
        %2967 = vmatprep.subr.bf16.mxu0 %v1866
        %2968 = vmatpush2.bf16.msra.mxu0 %v1865
        %2969 = vmatprep.subr.bf16.mxu0 %v1851
        %2970 = vmatpush2.bf16.msra.mxu0 %v1850
        %2971 = vmatprep.subr.bf16.mxu0 %v1836
        %2972 = vmatpush2.bf16.msra.mxu0 %v1835
        %2973 = vmatprep.subr.bf16.mxu0 %v1821
        %2974 = vmatpush2.bf16.msra.mxu0 %v1820
        %2975 = vmatprep.mubr.bf16.mxu0 %v2436
        %2976 = vmatmul.mubr.bf16.gmra.mxu0 %v2435
        %v2977 = vpop.f32.mrf.mxu0
        %v2978 = vadd.f32 %v2937, %v2977
        %v2979 = vpop.f32.mrf.mxu0
        %v2980 = vadd.f32 %v2939, %v2979
        %v2981 = vpop.f32.mrf.mxu0
        %v2982 = vpop.f32.mrf.mxu0
        %2983 = vdwg.mxu0
        %2984 = vmatprep.subr.bf16.mxu0 %v2046
        %2985 = vmatpush1.bf16.msra.mxu0 %v2045
        %2986 = vmatprep.subr.bf16.mxu0 %v2031
        %2987 = vmatpush1.bf16.msra.mxu0 %v2030
        %2988 = vmatprep.subr.bf16.mxu0 %v2016
        %2989 = vmatpush1.bf16.msra.mxu0 %v2015
        %2990 = vmatprep.subr.bf16.mxu0 %v2001
        %2991 = vmatpush1.bf16.msra.mxu0 %v2000
        %2992 = vmatprep.subr.bf16.mxu0 %v1986
        %2993 = vmatpush1.bf16.msra.mxu0 %v1985
        %2994 = vmatprep.subr.bf16.mxu0 %v1971
        %2995 = vmatpush1.bf16.msra.mxu0 %v1970
        %2996 = vmatprep.subr.bf16.mxu0 %v1956
        %2997 = vmatpush1.bf16.msra.mxu0 %v1955
        %2998 = vmatprep.subr.bf16.mxu0 %v1941
        %2999 = vmatpush1.bf16.msra.mxu0 %v1940
        %3000 = vmatprep.subr.bf16.mxu0 %v2166
        %3001 = vmatpush2.bf16.msra.mxu0 %v2165
        %3002 = vmatprep.subr.bf16.mxu0 %v2151
        %3003 = vmatpush2.bf16.msra.mxu0 %v2150
        %3004 = vmatprep.subr.bf16.mxu0 %v2136
        %3005 = vmatpush2.bf16.msra.mxu0 %v2135
        %3006 = vmatprep.subr.bf16.mxu0 %v2121
        %3007 = vmatpush2.bf16.msra.mxu0 %v2120
        %3008 = vmatprep.subr.bf16.mxu0 %v2106
        %3009 = vmatpush2.bf16.msra.mxu0 %v2105
        %3010 = vmatprep.subr.bf16.mxu0 %v2091
        %3011 = vmatpush2.bf16.msra.mxu0 %v2090
        %3012 = vmatprep.subr.bf16.mxu0 %v2076
        %3013 = vmatpush2.bf16.msra.mxu0 %v2075
        %3014 = vmatprep.subr.bf16.mxu0 %v2061
        %3015 = vmatpush2.bf16.msra.mxu0 %v2060
        %3016 = vmatprep.mubr.bf16.mxu0 %v2438
        %3017 = vmatmul.mubr.bf16.gmra.mxu0 %v2437
        %v3018 = vpop.f32.mrf.mxu0
        %v3019 = vadd.f32 %v2978, %v3018
        %v3020 = vpop.f32.mrf.mxu0
        %v3021 = vadd.f32 %v2980, %v3020
        %v3022 = vpop.f32.mrf.mxu0
        %v3023 = vpop.f32.mrf.mxu0
        %3024 = vdwg.mxu0
        %3025 = vmatprep.subr.bf16.mxu0 %v2286
        %3026 = vmatpush1.bf16.msra.mxu0 %v2285
        %3027 = vmatprep.subr.bf16.mxu0 %v2271
        %3028 = vmatpush1.bf16.msra.mxu0 %v2270
        %3029 = vmatprep.subr.bf16.mxu0 %v2256
        %3030 = vmatpush1.bf16.msra.mxu0 %v2255
        %3031 = vmatprep.subr.bf16.mxu0 %v2241
        %3032 = vmatpush1.bf16.msra.mxu0 %v2240
        %3033 = vmatprep.subr.bf16.mxu0 %v2226
        %3034 = vmatpush1.bf16.msra.mxu0 %v2225
        %3035 = vmatprep.subr.bf16.mxu0 %v2211
        %3036 = vmatpush1.bf16.msra.mxu0 %v2210
        %3037 = vmatprep.subr.bf16.mxu0 %v2196
        %3038 = vmatpush1.bf16.msra.mxu0 %v2195
        %3039 = vmatprep.subr.bf16.mxu0 %v2181
        %3040 = vmatpush1.bf16.msra.mxu0 %v2180
        %3041 = vmatprep.subr.bf16.mxu0 %v2406
        %3042 = vmatpush2.bf16.msra.mxu0 %v2405
        %3043 = vmatprep.subr.bf16.mxu0 %v2391
        %3044 = vmatpush2.bf16.msra.mxu0 %v2390
        %3045 = vmatprep.subr.bf16.mxu0 %v2376
        %3046 = vmatpush2.bf16.msra.mxu0 %v2375
        %3047 = vmatprep.subr.bf16.mxu0 %v2361
        %3048 = vmatpush2.bf16.msra.mxu0 %v2360
        %3049 = vmatprep.subr.bf16.mxu0 %v2346
        %3050 = vmatpush2.bf16.msra.mxu0 %v2345
        %3051 = vmatprep.subr.bf16.mxu0 %v2331
        %3052 = vmatpush2.bf16.msra.mxu0 %v2330
        %3053 = vmatprep.subr.bf16.mxu0 %v2316
        %3054 = vmatpush2.bf16.msra.mxu0 %v2315
        %3055 = vmatprep.subr.bf16.mxu0 %v2301
        %3056 = vmatpush2.bf16.msra.mxu0 %v2300
        %3057 = vmatprep.mubr.bf16.mxu0 %v2440
        %3058 = vmatmul.mubr.bf16.gmra.mxu0 %v2439
        %v3059 = vpop.f32.mrf.mxu0
        %v3060 = vadd.f32 %v3019, %v3059
        %v3061 = vpop.f32.mrf.mxu0
        %v3062 = vadd.f32 %v3021, %v3061
        %v3063 = vpop.f32.mrf.mxu0
        %v3064 = vpop.f32.mrf.mxu0
        %3065 = vdwg.mxu0
        %3066 = vmatprep.subr.bf16.mxu0 %v1328
        %3067 = vmatpush1.bf16.msra.mxu0 %v1327
        %3068 = vmatprep.subr.bf16.mxu0 %v1313
        %3069 = vmatpush1.bf16.msra.mxu0 %v1312
        %3070 = vmatprep.subr.bf16.mxu0 %v1298
        %3071 = vmatpush1.bf16.msra.mxu0 %v1297
        %3072 = vmatprep.subr.bf16.mxu0 %v1283
        %3073 = vmatpush1.bf16.msra.mxu0 %v1282
        %3074 = vmatprep.subr.bf16.mxu0 %v1268
        %3075 = vmatpush1.bf16.msra.mxu0 %v1267
        %3076 = vmatprep.subr.bf16.mxu0 %v1253
        %3077 = vmatpush1.bf16.msra.mxu0 %v1252
        %3078 = vmatprep.subr.bf16.mxu0 %v1238
        %3079 = vmatpush1.bf16.msra.mxu0 %v1237
        %3080 = vmatprep.subr.bf16.mxu0 %v1223
        %3081 = vmatpush1.bf16.msra.mxu0 %v1222
        %3082 = vmatprep.subr.bf16.mxu0 %v1448
        %3083 = vmatpush2.bf16.msra.mxu0 %v1447
        %3084 = vmatprep.subr.bf16.mxu0 %v1433
        %3085 = vmatpush2.bf16.msra.mxu0 %v1432
        %3086 = vmatprep.subr.bf16.mxu0 %v1418
        %3087 = vmatpush2.bf16.msra.mxu0 %v1417
        %3088 = vmatprep.subr.bf16.mxu0 %v1403
        %3089 = vmatpush2.bf16.msra.mxu0 %v1402
        %3090 = vmatprep.subr.bf16.mxu0 %v1388
        %3091 = vmatpush2.bf16.msra.mxu0 %v1387
        %3092 = vmatprep.subr.bf16.mxu0 %v1373
        %3093 = vmatpush2.bf16.msra.mxu0 %v1372
        %3094 = vmatprep.subr.bf16.mxu0 %v1358
        %3095 = vmatpush2.bf16.msra.mxu0 %v1357
        %3096 = vmatprep.subr.bf16.mxu0 %v1343
        %3097 = vmatpush2.bf16.msra.mxu0 %v1342
        %3098 = vmatprep.mubr.bf16.mxu0 %v2432
        %3099 = vmatmul.mubr.bf16.gmra.mxu0 %v2431
        %v3100 = vpop.f32.mrf.mxu0
        %v3101 = vadd.f32 0.0, %v3100
        %v3102 = vpop.f32.mrf.mxu0
        %v3103 = vadd.f32 0.0, %v3102
        %v3104 = vpop.f32.mrf.mxu0
        %v3105 = vpop.f32.mrf.mxu0
        %3106 = vdwg.mxu0
        %3107 = vmatprep.subr.bf16.mxu0 %v1568
        %3108 = vmatpush1.bf16.msra.mxu0 %v1567
        %3109 = vmatprep.subr.bf16.mxu0 %v1553
        %3110 = vmatpush1.bf16.msra.mxu0 %v1552
        %3111 = vmatprep.subr.bf16.mxu0 %v1538
        %3112 = vmatpush1.bf16.msra.mxu0 %v1537
        %3113 = vmatprep.subr.bf16.mxu0 %v1523
        %3114 = vmatpush1.bf16.msra.mxu0 %v1522
        %3115 = vmatprep.subr.bf16.mxu0 %v1508
        %3116 = vmatpush1.bf16.msra.mxu0 %v1507
        %3117 = vmatprep.subr.bf16.mxu0 %v1493
        %3118 = vmatpush1.bf16.msra.mxu0 %v1492
        %3119 = vmatprep.subr.bf16.mxu0 %v1478
        %3120 = vmatpush1.bf16.msra.mxu0 %v1477
        %3121 = vmatprep.subr.bf16.mxu0 %v1463
        %3122 = vmatpush1.bf16.msra.mxu0 %v1462
        %3123 = vmatprep.subr.bf16.mxu0 %v1688
        %3124 = vmatpush2.bf16.msra.mxu0 %v1687
        %3125 = vmatprep.subr.bf16.mxu0 %v1673
        %3126 = vmatpush2.bf16.msra.mxu0 %v1672
        %3127 = vmatprep.subr.bf16.mxu0 %v1658
        %3128 = vmatpush2.bf16.msra.mxu0 %v1657
        %3129 = vmatprep.subr.bf16.mxu0 %v1643
        %3130 = vmatpush2.bf16.msra.mxu0 %v1642
        %3131 = vmatprep.subr.bf16.mxu0 %v1628
        %3132 = vmatpush2.bf16.msra.mxu0 %v1627
        %3133 = vmatprep.subr.bf16.mxu0 %v1613
        %3134 = vmatpush2.bf16.msra.mxu0 %v1612
        %3135 = vmatprep.subr.bf16.mxu0 %v1598
        %3136 = vmatpush2.bf16.msra.mxu0 %v1597
        %3137 = vmatprep.subr.bf16.mxu0 %v1583
        %3138 = vmatpush2.bf16.msra.mxu0 %v1582
        %3139 = vmatprep.mubr.bf16.mxu0 %v2434
        %3140 = vmatmul.mubr.bf16.gmra.mxu0 %v2433
        %v3141 = vpop.f32.mrf.mxu0
        %v3142 = vadd.f32 %v3101, %v3141
        %v3143 = vpop.f32.mrf.mxu0
        %v3144 = vadd.f32 %v3103, %v3143
        %v3145 = vpop.f32.mrf.mxu0
        %v3146 = vpop.f32.mrf.mxu0
        %3147 = vdwg.mxu0
        %3148 = vmatprep.subr.bf16.mxu0 %v1808
        %3149 = vmatpush1.bf16.msra.mxu0 %v1807
        %3150 = vmatprep.subr.bf16.mxu0 %v1793
        %3151 = vmatpush1.bf16.msra.mxu0 %v1792
        %3152 = vmatprep.subr.bf16.mxu0 %v1778
        %3153 = vmatpush1.bf16.msra.mxu0 %v1777
        %3154 = vmatprep.subr.bf16.mxu0 %v1763
        %3155 = vmatpush1.bf16.msra.mxu0 %v1762
        %3156 = vmatprep.subr.bf16.mxu0 %v1748
        %3157 = vmatpush1.bf16.msra.mxu0 %v1747
        %3158 = vmatprep.subr.bf16.mxu0 %v1733
        %3159 = vmatpush1.bf16.msra.mxu0 %v1732
        %3160 = vmatprep.subr.bf16.mxu0 %v1718
        %3161 = vmatpush1.bf16.msra.mxu0 %v1717
        %3162 = vmatprep.subr.bf16.mxu0 %v1703
        %3163 = vmatpush1.bf16.msra.mxu0 %v1702
        %3164 = vmatprep.subr.bf16.mxu0 %v1928
        %3165 = vmatpush2.bf16.msra.mxu0 %v1927
        %3166 = vmatprep.subr.bf16.mxu0 %v1913
        %3167 = vmatpush2.bf16.msra.mxu0 %v1912
        %3168 = vmatprep.subr.bf16.mxu0 %v1898
        %3169 = vmatpush2.bf16.msra.mxu0 %v1897
        %3170 = vmatprep.subr.bf16.mxu0 %v1883
        %3171 = vmatpush2.bf16.msra.mxu0 %v1882
        %3172 = vmatprep.subr.bf16.mxu0 %v1868
        %3173 = vmatpush2.bf16.msra.mxu0 %v1867
        %3174 = vmatprep.subr.bf16.mxu0 %v1853
        %3175 = vmatpush2.bf16.msra.mxu0 %v1852
        %3176 = vmatprep.subr.bf16.mxu0 %v1838
        %3177 = vmatpush2.bf16.msra.mxu0 %v1837
        %3178 = vmatprep.subr.bf16.mxu0 %v1823
        %3179 = vmatpush2.bf16.msra.mxu0 %v1822
        %3180 = vmatprep.mubr.bf16.mxu0 %v2436
        %3181 = vmatmul.mubr.bf16.gmra.mxu0 %v2435
        %v3182 = vpop.f32.mrf.mxu0
        %v3183 = vadd.f32 %v3142, %v3182
        %v3184 = vpop.f32.mrf.mxu0
        %v3185 = vadd.f32 %v3144, %v3184
        %v3186 = vpop.f32.mrf.mxu0
        %v3187 = vpop.f32.mrf.mxu0
        %3188 = vdwg.mxu0
        %3189 = vmatprep.subr.bf16.mxu0 %v2048
        %3190 = vmatpush1.bf16.msra.mxu0 %v2047
        %3191 = vmatprep.subr.bf16.mxu0 %v2033
        %3192 = vmatpush1.bf16.msra.mxu0 %v2032
        %3193 = vmatprep.subr.bf16.mxu0 %v2018
        %3194 = vmatpush1.bf16.msra.mxu0 %v2017
        %3195 = vmatprep.subr.bf16.mxu0 %v2003
        %3196 = vmatpush1.bf16.msra.mxu0 %v2002
        %3197 = vmatprep.subr.bf16.mxu0 %v1988
        %3198 = vmatpush1.bf16.msra.mxu0 %v1987
        %3199 = vmatprep.subr.bf16.mxu0 %v1973
        %3200 = vmatpush1.bf16.msra.mxu0 %v1972
        %3201 = vmatprep.subr.bf16.mxu0 %v1958
        %3202 = vmatpush1.bf16.msra.mxu0 %v1957
        %3203 = vmatprep.subr.bf16.mxu0 %v1943
        %3204 = vmatpush1.bf16.msra.mxu0 %v1942
        %3205 = vmatprep.subr.bf16.mxu0 %v2168
        %3206 = vmatpush2.bf16.msra.mxu0 %v2167
        %3207 = vmatprep.subr.bf16.mxu0 %v2153
        %3208 = vmatpush2.bf16.msra.mxu0 %v2152
        %3209 = vmatprep.subr.bf16.mxu0 %v2138
        %3210 = vmatpush2.bf16.msra.mxu0 %v2137
        %3211 = vmatprep.subr.bf16.mxu0 %v2123
        %3212 = vmatpush2.bf16.msra.mxu0 %v2122
        %3213 = vmatprep.subr.bf16.mxu0 %v2108
        %3214 = vmatpush2.bf16.msra.mxu0 %v2107
        %3215 = vmatprep.subr.bf16.mxu0 %v2093
        %3216 = vmatpush2.bf16.msra.mxu0 %v2092
        %3217 = vmatprep.subr.bf16.mxu0 %v2078
        %3218 = vmatpush2.bf16.msra.mxu0 %v2077
        %3219 = vmatprep.subr.bf16.mxu0 %v2063
        %3220 = vmatpush2.bf16.msra.mxu0 %v2062
        %3221 = vmatprep.mubr.bf16.mxu0 %v2438
        %3222 = vmatmul.mubr.bf16.gmra.mxu0 %v2437
        %v3223 = vpop.f32.mrf.mxu0
        %v3224 = vadd.f32 %v3183, %v3223
        %v3225 = vpop.f32.mrf.mxu0
        %v3226 = vadd.f32 %v3185, %v3225
        %v3227 = vpop.f32.mrf.mxu0
        %v3228 = vpop.f32.mrf.mxu0
        %3229 = vdwg.mxu0
        %3230 = vmatprep.subr.bf16.mxu0 %v2288
        %3231 = vmatpush1.bf16.msra.mxu0 %v2287
        %3232 = vmatprep.subr.bf16.mxu0 %v2273
        %3233 = vmatpush1.bf16.msra.mxu0 %v2272
        %3234 = vmatprep.subr.bf16.mxu0 %v2258
        %3235 = vmatpush1.bf16.msra.mxu0 %v2257
        %3236 = vmatprep.subr.bf16.mxu0 %v2243
        %3237 = vmatpush1.bf16.msra.mxu0 %v2242
        %3238 = vmatprep.subr.bf16.mxu0 %v2228
        %3239 = vmatpush1.bf16.msra.mxu0 %v2227
        %3240 = vmatprep.subr.bf16.mxu0 %v2213
        %3241 = vmatpush1.bf16.msra.mxu0 %v2212
        %3242 = vmatprep.subr.bf16.mxu0 %v2198
        %3243 = vmatpush1.bf16.msra.mxu0 %v2197
        %3244 = vmatprep.subr.bf16.mxu0 %v2183
        %3245 = vmatpush1.bf16.msra.mxu0 %v2182
        %3246 = vmatprep.subr.bf16.mxu0 %v2408
        %3247 = vmatpush2.bf16.msra.mxu0 %v2407
        %3248 = vmatprep.subr.bf16.mxu0 %v2393
        %3249 = vmatpush2.bf16.msra.mxu0 %v2392
        %3250 = vmatprep.subr.bf16.mxu0 %v2378
        %3251 = vmatpush2.bf16.msra.mxu0 %v2377
        %3252 = vmatprep.subr.bf16.mxu0 %v2363
        %3253 = vmatpush2.bf16.msra.mxu0 %v2362
        %3254 = vmatprep.subr.bf16.mxu0 %v2348
        %3255 = vmatpush2.bf16.msra.mxu0 %v2347
        %3256 = vmatprep.subr.bf16.mxu0 %v2333
        %3257 = vmatpush2.bf16.msra.mxu0 %v2332
        %3258 = vmatprep.subr.bf16.mxu0 %v2318
        %3259 = vmatpush2.bf16.msra.mxu0 %v2317
        %3260 = vmatprep.subr.bf16.mxu0 %v2303
        %3261 = vmatpush2.bf16.msra.mxu0 %v2302
        %3262 = vmatprep.mubr.bf16.mxu0 %v2440
        %3263 = vmatmul.mubr.bf16.gmra.mxu0 %v2439
        %v3264 = vpop.f32.mrf.mxu0
        %v3265 = vadd.f32 %v3224, %v3264
        %v3266 = vpop.f32.mrf.mxu0
        %v3267 = vadd.f32 %v3226, %v3266
        %v3268 = vpop.f32.mrf.mxu0
        %v3269 = vpop.f32.mrf.mxu0
        %3270 = vdwg.mxu0
        %3271 = vmatprep.subr.bf16.mxu0 %v1330
        %3272 = vmatpush1.bf16.msra.mxu0 %v1329
        %3273 = vmatprep.subr.bf16.mxu0 %v1315
        %3274 = vmatpush1.bf16.msra.mxu0 %v1314
        %3275 = vmatprep.subr.bf16.mxu0 %v1300
        %3276 = vmatpush1.bf16.msra.mxu0 %v1299
        %3277 = vmatprep.subr.bf16.mxu0 %v1285
        %3278 = vmatpush1.bf16.msra.mxu0 %v1284
        %3279 = vmatprep.subr.bf16.mxu0 %v1270
        %3280 = vmatpush1.bf16.msra.mxu0 %v1269
        %3281 = vmatprep.subr.bf16.mxu0 %v1255
        %3282 = vmatpush1.bf16.msra.mxu0 %v1254
        %3283 = vmatprep.subr.bf16.mxu0 %v1240
        %3284 = vmatpush1.bf16.msra.mxu0 %v1239
        %3285 = vmatprep.subr.bf16.mxu0 %v1225
        %3286 = vmatpush1.bf16.msra.mxu0 %v1224
        %3287 = vmatprep.subr.bf16.mxu0 %v1450
        %3288 = vmatpush2.bf16.msra.mxu0 %v1449
        %3289 = vmatprep.subr.bf16.mxu0 %v1435
        %3290 = vmatpush2.bf16.msra.mxu0 %v1434
        %3291 = vmatprep.subr.bf16.mxu0 %v1420
        %3292 = vmatpush2.bf16.msra.mxu0 %v1419
        %3293 = vmatprep.subr.bf16.mxu0 %v1405
        %3294 = vmatpush2.bf16.msra.mxu0 %v1404
        %3295 = vmatprep.subr.bf16.mxu0 %v1390
        %3296 = vmatpush2.bf16.msra.mxu0 %v1389
        %3297 = vmatprep.subr.bf16.mxu0 %v1375
        %3298 = vmatpush2.bf16.msra.mxu0 %v1374
        %3299 = vmatprep.subr.bf16.mxu0 %v1360
        %3300 = vmatpush2.bf16.msra.mxu0 %v1359
        %3301 = vmatprep.subr.bf16.mxu0 %v1345
        %3302 = vmatpush2.bf16.msra.mxu0 %v1344
        %3303 = vmatprep.mubr.bf16.mxu0 %v2432
        %3304 = vmatmul.mubr.bf16.gmra.mxu0 %v2431
        %v3305 = vpop.f32.mrf.mxu0
        %v3306 = vadd.f32 0.0, %v3305
        %v3307 = vpop.f32.mrf.mxu0
        %v3308 = vadd.f32 0.0, %v3307
        %v3309 = vpop.f32.mrf.mxu0
        %v3310 = vpop.f32.mrf.mxu0
        %3311 = vdwg.mxu0
        %3312 = vmatprep.subr.bf16.mxu0 %v1570
        %3313 = vmatpush1.bf16.msra.mxu0 %v1569
        %3314 = vmatprep.subr.bf16.mxu0 %v1555
        %3315 = vmatpush1.bf16.msra.mxu0 %v1554
        %3316 = vmatprep.subr.bf16.mxu0 %v1540
        %3317 = vmatpush1.bf16.msra.mxu0 %v1539
        %3318 = vmatprep.subr.bf16.mxu0 %v1525
        %3319 = vmatpush1.bf16.msra.mxu0 %v1524
        %3320 = vmatprep.subr.bf16.mxu0 %v1510
        %3321 = vmatpush1.bf16.msra.mxu0 %v1509
        %3322 = vmatprep.subr.bf16.mxu0 %v1495
        %3323 = vmatpush1.bf16.msra.mxu0 %v1494
        %3324 = vmatprep.subr.bf16.mxu0 %v1480
        %3325 = vmatpush1.bf16.msra.mxu0 %v1479
        %3326 = vmatprep.subr.bf16.mxu0 %v1465
        %3327 = vmatpush1.bf16.msra.mxu0 %v1464
        %3328 = vmatprep.subr.bf16.mxu0 %v1690
        %3329 = vmatpush2.bf16.msra.mxu0 %v1689
        %3330 = vmatprep.subr.bf16.mxu0 %v1675
        %3331 = vmatpush2.bf16.msra.mxu0 %v1674
        %3332 = vmatprep.subr.bf16.mxu0 %v1660
        %3333 = vmatpush2.bf16.msra.mxu0 %v1659
        %3334 = vmatprep.subr.bf16.mxu0 %v1645
        %3335 = vmatpush2.bf16.msra.mxu0 %v1644
        %3336 = vmatprep.subr.bf16.mxu0 %v1630
        %3337 = vmatpush2.bf16.msra.mxu0 %v1629
        %3338 = vmatprep.subr.bf16.mxu0 %v1615
        %3339 = vmatpush2.bf16.msra.mxu0 %v1614
        %3340 = vmatprep.subr.bf16.mxu0 %v1600
        %3341 = vmatpush2.bf16.msra.mxu0 %v1599
        %3342 = vmatprep.subr.bf16.mxu0 %v1585
        %3343 = vmatpush2.bf16.msra.mxu0 %v1584
        %3344 = vmatprep.mubr.bf16.mxu0 %v2434
        %3345 = vmatmul.mubr.bf16.gmra.mxu0 %v2433
        %v3346 = vpop.f32.mrf.mxu0
        %v3347 = vadd.f32 %v3306, %v3346
        %v3348 = vpop.f32.mrf.mxu0
        %v3349 = vadd.f32 %v3308, %v3348
        %v3350 = vpop.f32.mrf.mxu0
        %v3351 = vpop.f32.mrf.mxu0
        %3352 = vdwg.mxu0
        %3353 = vmatprep.subr.bf16.mxu0 %v1810
        %3354 = vmatpush1.bf16.msra.mxu0 %v1809
        %3355 = vmatprep.subr.bf16.mxu0 %v1795
        %3356 = vmatpush1.bf16.msra.mxu0 %v1794
        %3357 = vmatprep.subr.bf16.mxu0 %v1780
        %3358 = vmatpush1.bf16.msra.mxu0 %v1779
        %3359 = vmatprep.subr.bf16.mxu0 %v1765
        %3360 = vmatpush1.bf16.msra.mxu0 %v1764
        %3361 = vmatprep.subr.bf16.mxu0 %v1750
        %3362 = vmatpush1.bf16.msra.mxu0 %v1749
        %3363 = vmatprep.subr.bf16.mxu0 %v1735
        %3364 = vmatpush1.bf16.msra.mxu0 %v1734
        %3365 = vmatprep.subr.bf16.mxu0 %v1720
        %3366 = vmatpush1.bf16.msra.mxu0 %v1719
        %3367 = vmatprep.subr.bf16.mxu0 %v1705
        %3368 = vmatpush1.bf16.msra.mxu0 %v1704
        %3369 = vmatprep.subr.bf16.mxu0 %v1930
        %3370 = vmatpush2.bf16.msra.mxu0 %v1929
        %3371 = vmatprep.subr.bf16.mxu0 %v1915
        %3372 = vmatpush2.bf16.msra.mxu0 %v1914
        %3373 = vmatprep.subr.bf16.mxu0 %v1900
        %3374 = vmatpush2.bf16.msra.mxu0 %v1899
        %3375 = vmatprep.subr.bf16.mxu0 %v1885
        %3376 = vmatpush2.bf16.msra.mxu0 %v1884
        %3377 = vmatprep.subr.bf16.mxu0 %v1870
        %3378 = vmatpush2.bf16.msra.mxu0 %v1869
        %3379 = vmatprep.subr.bf16.mxu0 %v1855
        %3380 = vmatpush2.bf16.msra.mxu0 %v1854
        %3381 = vmatprep.subr.bf16.mxu0 %v1840
        %3382 = vmatpush2.bf16.msra.mxu0 %v1839
        %3383 = vmatprep.subr.bf16.mxu0 %v1825
        %3384 = vmatpush2.bf16.msra.mxu0 %v1824
        %3385 = vmatprep.mubr.bf16.mxu0 %v2436
        %3386 = vmatmul.mubr.bf16.gmra.mxu0 %v2435
        %v3387 = vpop.f32.mrf.mxu0
        %v3388 = vadd.f32 %v3347, %v3387
        %v3389 = vpop.f32.mrf.mxu0
        %v3390 = vadd.f32 %v3349, %v3389
        %v3391 = vpop.f32.mrf.mxu0
        %v3392 = vpop.f32.mrf.mxu0
        %3393 = vdwg.mxu0
        %3394 = vmatprep.subr.bf16.mxu0 %v2050
        %3395 = vmatpush1.bf16.msra.mxu0 %v2049
        %3396 = vmatprep.subr.bf16.mxu0 %v2035
        %3397 = vmatpush1.bf16.msra.mxu0 %v2034
        %3398 = vmatprep.subr.bf16.mxu0 %v2020
        %3399 = vmatpush1.bf16.msra.mxu0 %v2019
        %3400 = vmatprep.subr.bf16.mxu0 %v2005
        %3401 = vmatpush1.bf16.msra.mxu0 %v2004
        %3402 = vmatprep.subr.bf16.mxu0 %v1990
        %3403 = vmatpush1.bf16.msra.mxu0 %v1989
        %3404 = vmatprep.subr.bf16.mxu0 %v1975
        %3405 = vmatpush1.bf16.msra.mxu0 %v1974
        %3406 = vmatprep.subr.bf16.mxu0 %v1960
        %3407 = vmatpush1.bf16.msra.mxu0 %v1959
        %3408 = vmatprep.subr.bf16.mxu0 %v1945
        %3409 = vmatpush1.bf16.msra.mxu0 %v1944
        %3410 = vmatprep.subr.bf16.mxu0 %v2170
        %3411 = vmatpush2.bf16.msra.mxu0 %v2169
        %3412 = vmatprep.subr.bf16.mxu0 %v2155
        %3413 = vmatpush2.bf16.msra.mxu0 %v2154
        %3414 = vmatprep.subr.bf16.mxu0 %v2140
        %3415 = vmatpush2.bf16.msra.mxu0 %v2139
        %3416 = vmatprep.subr.bf16.mxu0 %v2125
        %3417 = vmatpush2.bf16.msra.mxu0 %v2124
        %3418 = vmatprep.subr.bf16.mxu0 %v2110
        %3419 = vmatpush2.bf16.msra.mxu0 %v2109
        %3420 = vmatprep.subr.bf16.mxu0 %v2095
        %3421 = vmatpush2.bf16.msra.mxu0 %v2094
        %3422 = vmatprep.subr.bf16.mxu0 %v2080
        %3423 = vmatpush2.bf16.msra.mxu0 %v2079
        %3424 = vmatprep.subr.bf16.mxu0 %v2065
        %3425 = vmatpush2.bf16.msra.mxu0 %v2064
        %3426 = vmatprep.mubr.bf16.mxu0 %v2438
        %3427 = vmatmul.mubr.bf16.gmra.mxu0 %v2437
        %v3428 = vpop.f32.mrf.mxu0
        %v3429 = vadd.f32 %v3388, %v3428
        %v3430 = vpop.f32.mrf.mxu0
        %v3431 = vadd.f32 %v3390, %v3430
        %v3432 = vpop.f32.mrf.mxu0
        %v3433 = vpop.f32.mrf.mxu0
        %3434 = vdwg.mxu0
        %3435 = vmatprep.subr.bf16.mxu0 %v2290
        %3436 = vmatpush1.bf16.msra.mxu0 %v2289
        %3437 = vmatprep.subr.bf16.mxu0 %v2275
        %3438 = vmatpush1.bf16.msra.mxu0 %v2274
        %3439 = vmatprep.subr.bf16.mxu0 %v2260
        %3440 = vmatpush1.bf16.msra.mxu0 %v2259
        %3441 = vmatprep.subr.bf16.mxu0 %v2245
        %3442 = vmatpush1.bf16.msra.mxu0 %v2244
        %3443 = vmatprep.subr.bf16.mxu0 %v2230
        %3444 = vmatpush1.bf16.msra.mxu0 %v2229
        %3445 = vmatprep.subr.bf16.mxu0 %v2215
        %3446 = vmatpush1.bf16.msra.mxu0 %v2214
        %3447 = vmatprep.subr.bf16.mxu0 %v2200
        %3448 = vmatpush1.bf16.msra.mxu0 %v2199
        %3449 = vmatprep.subr.bf16.mxu0 %v2185
        %3450 = vmatpush1.bf16.msra.mxu0 %v2184
        %3451 = vmatprep.subr.bf16.mxu0 %v2410
        %3452 = vmatpush2.bf16.msra.mxu0 %v2409
        %3453 = vmatprep.subr.bf16.mxu0 %v2395
        %3454 = vmatpush2.bf16.msra.mxu0 %v2394
        %3455 = vmatprep.subr.bf16.mxu0 %v2380
        %3456 = vmatpush2.bf16.msra.mxu0 %v2379
        %3457 = vmatprep.subr.bf16.mxu0 %v2365
        %3458 = vmatpush2.bf16.msra.mxu0 %v2364
        %3459 = vmatprep.subr.bf16.mxu0 %v2350
        %3460 = vmatpush2.bf16.msra.mxu0 %v2349
        %3461 = vmatprep.subr.bf16.mxu0 %v2335
        %3462 = vmatpush2.bf16.msra.mxu0 %v2334
        %3463 = vmatprep.subr.bf16.mxu0 %v2320
        %3464 = vmatpush2.bf16.msra.mxu0 %v2319
        %3465 = vmatprep.subr.bf16.mxu0 %v2305
        %3466 = vmatpush2.bf16.msra.mxu0 %v2304
        %3467 = vmatprep.mubr.bf16.mxu0 %v2440
        %3468 = vmatmul.mubr.bf16.gmra.mxu0 %v2439
        %v3469 = vpop.f32.mrf.mxu0
        %v3470 = vadd.f32 %v3429, %v3469
        %v3471 = vpop.f32.mrf.mxu0
        %v3472 = vadd.f32 %v3431, %v3471
        %v3473 = vpop.f32.mrf.mxu0
        %v3474 = vpop.f32.mrf.mxu0
        %3475 = vdwg.mxu0
        %3476 = vmatprep.subr.bf16.mxu0 %v1332
        %3477 = vmatpush1.bf16.msra.mxu0 %v1331
        %3478 = vmatprep.subr.bf16.mxu0 %v1317
        %3479 = vmatpush1.bf16.msra.mxu0 %v1316
        %3480 = vmatprep.subr.bf16.mxu0 %v1302
        %3481 = vmatpush1.bf16.msra.mxu0 %v1301
        %3482 = vmatprep.subr.bf16.mxu0 %v1287
        %3483 = vmatpush1.bf16.msra.mxu0 %v1286
        %3484 = vmatprep.subr.bf16.mxu0 %v1272
        %3485 = vmatpush1.bf16.msra.mxu0 %v1271
        %3486 = vmatprep.subr.bf16.mxu0 %v1257
        %3487 = vmatpush1.bf16.msra.mxu0 %v1256
        %3488 = vmatprep.subr.bf16.mxu0 %v1242
        %3489 = vmatpush1.bf16.msra.mxu0 %v1241
        %3490 = vmatprep.subr.bf16.mxu0 %v1227
        %3491 = vmatpush1.bf16.msra.mxu0 %v1226
        %3492 = vmatprep.subr.bf16.mxu0 %v1452
        %3493 = vmatpush2.bf16.msra.mxu0 %v1451
        %3494 = vmatprep.subr.bf16.mxu0 %v1437
        %3495 = vmatpush2.bf16.msra.mxu0 %v1436
        %3496 = vmatprep.subr.bf16.mxu0 %v1422
        %3497 = vmatpush2.bf16.msra.mxu0 %v1421
        %3498 = vmatprep.subr.bf16.mxu0 %v1407
        %3499 = vmatpush2.bf16.msra.mxu0 %v1406
        %3500 = vmatprep.subr.bf16.mxu0 %v1392
        %3501 = vmatpush2.bf16.msra.mxu0 %v1391
        %3502 = vmatprep.subr.bf16.mxu0 %v1377
        %3503 = vmatpush2.bf16.msra.mxu0 %v1376
        %3504 = vmatprep.subr.bf16.mxu0 %v1362
        %3505 = vmatpush2.bf16.msra.mxu0 %v1361
        %3506 = vmatprep.subr.bf16.mxu0 %v1347
        %3507 = vmatpush2.bf16.msra.mxu0 %v1346
        %3508 = vmatprep.mubr.bf16.mxu0 %v2432
        %3509 = vmatmul.mubr.bf16.gmra.mxu0 %v2431
        %v3510 = vpop.f32.mrf.mxu0
        %v3511 = vadd.f32 0.0, %v3510
        %v3512 = vpop.f32.mrf.mxu0
        %v3513 = vadd.f32 0.0, %v3512
        %v3514 = vpop.f32.mrf.mxu0
        %v3515 = vpop.f32.mrf.mxu0
        %3516 = vdwg.mxu0
        %3517 = vmatprep.subr.bf16.mxu0 %v1572
        %3518 = vmatpush1.bf16.msra.mxu0 %v1571
        %3519 = vmatprep.subr.bf16.mxu0 %v1557
        %3520 = vmatpush1.bf16.msra.mxu0 %v1556
        %3521 = vmatprep.subr.bf16.mxu0 %v1542
        %3522 = vmatpush1.bf16.msra.mxu0 %v1541
        %3523 = vmatprep.subr.bf16.mxu0 %v1527
        %3524 = vmatpush1.bf16.msra.mxu0 %v1526
        %3525 = vmatprep.subr.bf16.mxu0 %v1512
        %3526 = vmatpush1.bf16.msra.mxu0 %v1511
        %3527 = vmatprep.subr.bf16.mxu0 %v1497
        %3528 = vmatpush1.bf16.msra.mxu0 %v1496
        %3529 = vmatprep.subr.bf16.mxu0 %v1482
        %3530 = vmatpush1.bf16.msra.mxu0 %v1481
        %3531 = vmatprep.subr.bf16.mxu0 %v1467
        %3532 = vmatpush1.bf16.msra.mxu0 %v1466
        %3533 = vmatprep.subr.bf16.mxu0 %v1692
        %3534 = vmatpush2.bf16.msra.mxu0 %v1691
        %3535 = vmatprep.subr.bf16.mxu0 %v1677
        %3536 = vmatpush2.bf16.msra.mxu0 %v1676
        %3537 = vmatprep.subr.bf16.mxu0 %v1662
        %3538 = vmatpush2.bf16.msra.mxu0 %v1661
        %3539 = vmatprep.subr.bf16.mxu0 %v1647
        %3540 = vmatpush2.bf16.msra.mxu0 %v1646
        %3541 = vmatprep.subr.bf16.mxu0 %v1632
        %3542 = vmatpush2.bf16.msra.mxu0 %v1631
        %3543 = vmatprep.subr.bf16.mxu0 %v1617
        %3544 = vmatpush2.bf16.msra.mxu0 %v1616
        %3545 = vmatprep.subr.bf16.mxu0 %v1602
        %3546 = vmatpush2.bf16.msra.mxu0 %v1601
        %3547 = vmatprep.subr.bf16.mxu0 %v1587
        %3548 = vmatpush2.bf16.msra.mxu0 %v1586
        %3549 = vmatprep.mubr.bf16.mxu0 %v2434
        %3550 = vmatmul.mubr.bf16.gmra.mxu0 %v2433
        %v3551 = vpop.f32.mrf.mxu0
        %v3552 = vadd.f32 %v3511, %v3551
        %v3553 = vpop.f32.mrf.mxu0
        %v3554 = vadd.f32 %v3513, %v3553
        %v3555 = vpop.f32.mrf.mxu0
        %v3556 = vpop.f32.mrf.mxu0
        %3557 = vdwg.mxu0
        %3558 = vmatprep.subr.bf16.mxu0 %v1812
        %3559 = vmatpush1.bf16.msra.mxu0 %v1811
        %3560 = vmatprep.subr.bf16.mxu0 %v1797
        %3561 = vmatpush1.bf16.msra.mxu0 %v1796
        %3562 = vmatprep.subr.bf16.mxu0 %v1782
        %3563 = vmatpush1.bf16.msra.mxu0 %v1781
        %3564 = vmatprep.subr.bf16.mxu0 %v1767
        %3565 = vmatpush1.bf16.msra.mxu0 %v1766
        %3566 = vmatprep.subr.bf16.mxu0 %v1752
        %3567 = vmatpush1.bf16.msra.mxu0 %v1751
        %3568 = vmatprep.subr.bf16.mxu0 %v1737
        %3569 = vmatpush1.bf16.msra.mxu0 %v1736
        %3570 = vmatprep.subr.bf16.mxu0 %v1722
        %3571 = vmatpush1.bf16.msra.mxu0 %v1721
        %3572 = vmatprep.subr.bf16.mxu0 %v1707
        %3573 = vmatpush1.bf16.msra.mxu0 %v1706
        %3574 = vmatprep.subr.bf16.mxu0 %v1932
        %3575 = vmatpush2.bf16.msra.mxu0 %v1931
        %3576 = vmatprep.subr.bf16.mxu0 %v1917
        %3577 = vmatpush2.bf16.msra.mxu0 %v1916
        %3578 = vmatprep.subr.bf16.mxu0 %v1902
        %3579 = vmatpush2.bf16.msra.mxu0 %v1901
        %3580 = vmatprep.subr.bf16.mxu0 %v1887
        %3581 = vmatpush2.bf16.msra.mxu0 %v1886
        %3582 = vmatprep.subr.bf16.mxu0 %v1872
        %3583 = vmatpush2.bf16.msra.mxu0 %v1871
        %3584 = vmatprep.subr.bf16.mxu0 %v1857
        %3585 = vmatpush2.bf16.msra.mxu0 %v1856
        %3586 = vmatprep.subr.bf16.mxu0 %v1842
        %3587 = vmatpush2.bf16.msra.mxu0 %v1841
        %3588 = vmatprep.subr.bf16.mxu0 %v1827
        %3589 = vmatpush2.bf16.msra.mxu0 %v1826
        %3590 = vmatprep.mubr.bf16.mxu0 %v2436
        %3591 = vmatmul.mubr.bf16.gmra.mxu0 %v2435
        %v3592 = vpop.f32.mrf.mxu0
        %v3593 = vadd.f32 %v3552, %v3592
        %v3594 = vpop.f32.mrf.mxu0
        %v3595 = vadd.f32 %v3554, %v3594
        %v3596 = vpop.f32.mrf.mxu0
        %v3597 = vpop.f32.mrf.mxu0
        %3598 = vdwg.mxu0
        %3599 = vmatprep.subr.bf16.mxu0 %v2052
        %3600 = vmatpush1.bf16.msra.mxu0 %v2051
        %3601 = vmatprep.subr.bf16.mxu0 %v2037
        %3602 = vmatpush1.bf16.msra.mxu0 %v2036
        %3603 = vmatprep.subr.bf16.mxu0 %v2022
        %3604 = vmatpush1.bf16.msra.mxu0 %v2021
        %3605 = vmatprep.subr.bf16.mxu0 %v2007
        %3606 = vmatpush1.bf16.msra.mxu0 %v2006
        %3607 = vmatprep.subr.bf16.mxu0 %v1992
        %3608 = vmatpush1.bf16.msra.mxu0 %v1991
        %3609 = vmatprep.subr.bf16.mxu0 %v1977
        %3610 = vmatpush1.bf16.msra.mxu0 %v1976
        %3611 = vmatprep.subr.bf16.mxu0 %v1962
        %3612 = vmatpush1.bf16.msra.mxu0 %v1961
        %3613 = vmatprep.subr.bf16.mxu0 %v1947
        %3614 = vmatpush1.bf16.msra.mxu0 %v1946
        %3615 = vmatprep.subr.bf16.mxu0 %v2172
        %3616 = vmatpush2.bf16.msra.mxu0 %v2171
        %3617 = vmatprep.subr.bf16.mxu0 %v2157
        %3618 = vmatpush2.bf16.msra.mxu0 %v2156
        %3619 = vmatprep.subr.bf16.mxu0 %v2142
        %3620 = vmatpush2.bf16.msra.mxu0 %v2141
        %3621 = vmatprep.subr.bf16.mxu0 %v2127
        %3622 = vmatpush2.bf16.msra.mxu0 %v2126
        %3623 = vmatprep.subr.bf16.mxu0 %v2112
        %3624 = vmatpush2.bf16.msra.mxu0 %v2111
        %3625 = vmatprep.subr.bf16.mxu0 %v2097
        %3626 = vmatpush2.bf16.msra.mxu0 %v2096
        %3627 = vmatprep.subr.bf16.mxu0 %v2082
        %3628 = vmatpush2.bf16.msra.mxu0 %v2081
        %3629 = vmatprep.subr.bf16.mxu0 %v2067
        %3630 = vmatpush2.bf16.msra.mxu0 %v2066
        %3631 = vmatprep.mubr.bf16.mxu0 %v2438
        %3632 = vmatmul.mubr.bf16.gmra.mxu0 %v2437
        %v3633 = vpop.f32.mrf.mxu0
        %v3634 = vadd.f32 %v3593, %v3633
        %v3635 = vpop.f32.mrf.mxu0
        %v3636 = vadd.f32 %v3595, %v3635
        %v3637 = vpop.f32.mrf.mxu0
        %v3638 = vpop.f32.mrf.mxu0
        %3639 = vdwg.mxu0
        %3640 = vmatprep.subr.bf16.mxu0 %v2292
        %3641 = vmatpush1.bf16.msra.mxu0 %v2291
        %3642 = vmatprep.subr.bf16.mxu0 %v2277
        %3643 = vmatpush1.bf16.msra.mxu0 %v2276
        %3644 = vmatprep.subr.bf16.mxu0 %v2262
        %3645 = vmatpush1.bf16.msra.mxu0 %v2261
        %3646 = vmatprep.subr.bf16.mxu0 %v2247
        %3647 = vmatpush1.bf16.msra.mxu0 %v2246
        %3648 = vmatprep.subr.bf16.mxu0 %v2232
        %3649 = vmatpush1.bf16.msra.mxu0 %v2231
        %3650 = vmatprep.subr.bf16.mxu0 %v2217
        %3651 = vmatpush1.bf16.msra.mxu0 %v2216
        %3652 = vmatprep.subr.bf16.mxu0 %v2202
        %3653 = vmatpush1.bf16.msra.mxu0 %v2201
        %3654 = vmatprep.subr.bf16.mxu0 %v2187
        %3655 = vmatpush1.bf16.msra.mxu0 %v2186
        %3656 = vmatprep.subr.bf16.mxu0 %v2412
        %3657 = vmatpush2.bf16.msra.mxu0 %v2411
        %3658 = vmatprep.subr.bf16.mxu0 %v2397
        %3659 = vmatpush2.bf16.msra.mxu0 %v2396
        %3660 = vmatprep.subr.bf16.mxu0 %v2382
        %3661 = vmatpush2.bf16.msra.mxu0 %v2381
        %3662 = vmatprep.subr.bf16.mxu0 %v2367
        %3663 = vmatpush2.bf16.msra.mxu0 %v2366
        %3664 = vmatprep.subr.bf16.mxu0 %v2352
        %3665 = vmatpush2.bf16.msra.mxu0 %v2351
        %3666 = vmatprep.subr.bf16.mxu0 %v2337
        %3667 = vmatpush2.bf16.msra.mxu0 %v2336
        %3668 = vmatprep.subr.bf16.mxu0 %v2322
        %3669 = vmatpush2.bf16.msra.mxu0 %v2321
        %3670 = vmatprep.subr.bf16.mxu0 %v2307
        %3671 = vmatpush2.bf16.msra.mxu0 %v2306
        %3672 = vmatprep.mubr.bf16.mxu0 %v2440
        %3673 = vmatmul.mubr.bf16.gmra.mxu0 %v2439
        %v3674 = vpop.f32.mrf.mxu0
        %v3675 = vadd.f32 %v3634, %v3674
        %v3676 = vpop.f32.mrf.mxu0
        %v3677 = vadd.f32 %v3636, %v3676
        %v3678 = vpop.f32.mrf.mxu0
        %v3679 = vpop.f32.mrf.mxu0
        %3680 = vdwg.mxu0
        %3681 = vmatprep.subr.bf16.mxu0 %v1334
        %3682 = vmatpush1.bf16.msra.mxu0 %v1333
        %3683 = vmatprep.subr.bf16.mxu0 %v1319
        %3684 = vmatpush1.bf16.msra.mxu0 %v1318
        %3685 = vmatprep.subr.bf16.mxu0 %v1304
        %3686 = vmatpush1.bf16.msra.mxu0 %v1303
        %3687 = vmatprep.subr.bf16.mxu0 %v1289
        %3688 = vmatpush1.bf16.msra.mxu0 %v1288
        %3689 = vmatprep.subr.bf16.mxu0 %v1274
        %3690 = vmatpush1.bf16.msra.mxu0 %v1273
        %3691 = vmatprep.subr.bf16.mxu0 %v1259
        %3692 = vmatpush1.bf16.msra.mxu0 %v1258
        %3693 = vmatprep.subr.bf16.mxu0 %v1244
        %3694 = vmatpush1.bf16.msra.mxu0 %v1243
        %3695 = vmatprep.subr.bf16.mxu0 %v1229
        %3696 = vmatpush1.bf16.msra.mxu0 %v1228
        %3697 = vmatprep.subr.bf16.mxu0 %v1454
        %3698 = vmatpush2.bf16.msra.mxu0 %v1453
        %3699 = vmatprep.subr.bf16.mxu0 %v1439
        %3700 = vmatpush2.bf16.msra.mxu0 %v1438
        %3701 = vmatprep.subr.bf16.mxu0 %v1424
        %3702 = vmatpush2.bf16.msra.mxu0 %v1423
        %3703 = vmatprep.subr.bf16.mxu0 %v1409
        %3704 = vmatpush2.bf16.msra.mxu0 %v1408
        %3705 = vmatprep.subr.bf16.mxu0 %v1394
        %3706 = vmatpush2.bf16.msra.mxu0 %v1393
        %3707 = vmatprep.subr.bf16.mxu0 %v1379
        %3708 = vmatpush2.bf16.msra.mxu0 %v1378
        %3709 = vmatprep.subr.bf16.mxu0 %v1364
        %3710 = vmatpush2.bf16.msra.mxu0 %v1363
        %3711 = vmatprep.subr.bf16.mxu0 %v1349
        %3712 = vmatpush2.bf16.msra.mxu0 %v1348
        %3713 = vmatprep.mubr.bf16.mxu0 %v2432
        %3714 = vmatmul.mubr.bf16.gmra.mxu0 %v2431
        %v3715 = vpop.f32.mrf.mxu0
        %v3716 = vadd.f32 0.0, %v3715
        %v3717 = vpop.f32.mrf.mxu0
        %v3718 = vadd.f32 0.0, %v3717
        %v3719 = vpop.f32.mrf.mxu0
        %v3720 = vpop.f32.mrf.mxu0
        %3721 = vdwg.mxu0
        %3722 = vmatprep.subr.bf16.mxu0 %v1574
        %3723 = vmatpush1.bf16.msra.mxu0 %v1573
        %3724 = vmatprep.subr.bf16.mxu0 %v1559
        %3725 = vmatpush1.bf16.msra.mxu0 %v1558
        %3726 = vmatprep.subr.bf16.mxu0 %v1544
        %3727 = vmatpush1.bf16.msra.mxu0 %v1543
        %3728 = vmatprep.subr.bf16.mxu0 %v1529
        %3729 = vmatpush1.bf16.msra.mxu0 %v1528
        %3730 = vmatprep.subr.bf16.mxu0 %v1514
        %3731 = vmatpush1.bf16.msra.mxu0 %v1513
        %3732 = vmatprep.subr.bf16.mxu0 %v1499
        %3733 = vmatpush1.bf16.msra.mxu0 %v1498
        %3734 = vmatprep.subr.bf16.mxu0 %v1484
        %3735 = vmatpush1.bf16.msra.mxu0 %v1483
        %3736 = vmatprep.subr.bf16.mxu0 %v1469
        %3737 = vmatpush1.bf16.msra.mxu0 %v1468
        %3738 = vmatprep.subr.bf16.mxu0 %v1694
        %3739 = vmatpush2.bf16.msra.mxu0 %v1693
        %3740 = vmatprep.subr.bf16.mxu0 %v1679
        %3741 = vmatpush2.bf16.msra.mxu0 %v1678
        %3742 = vmatprep.subr.bf16.mxu0 %v1664
        %3743 = vmatpush2.bf16.msra.mxu0 %v1663
        %3744 = vmatprep.subr.bf16.mxu0 %v1649
        %3745 = vmatpush2.bf16.msra.mxu0 %v1648
        %3746 = vmatprep.subr.bf16.mxu0 %v1634
        %3747 = vmatpush2.bf16.msra.mxu0 %v1633
        %3748 = vmatprep.subr.bf16.mxu0 %v1619
        %3749 = vmatpush2.bf16.msra.mxu0 %v1618
        %3750 = vmatprep.subr.bf16.mxu0 %v1604
        %3751 = vmatpush2.bf16.msra.mxu0 %v1603
        %3752 = vmatprep.subr.bf16.mxu0 %v1589
        %3753 = vmatpush2.bf16.msra.mxu0 %v1588
        %3754 = vmatprep.mubr.bf16.mxu0 %v2434
        %3755 = vmatmul.mubr.bf16.gmra.mxu0 %v2433
        %v3756 = vpop.f32.mrf.mxu0
        %v3757 = vadd.f32 %v3716, %v3756
        %v3758 = vpop.f32.mrf.mxu0
        %v3759 = vadd.f32 %v3718, %v3758
        %v3760 = vpop.f32.mrf.mxu0
        %v3761 = vpop.f32.mrf.mxu0
        %3762 = vdwg.mxu0
        %3763 = vmatprep.subr.bf16.mxu0 %v1814
        %3764 = vmatpush1.bf16.msra.mxu0 %v1813
        %3765 = vmatprep.subr.bf16.mxu0 %v1799
        %3766 = vmatpush1.bf16.msra.mxu0 %v1798
        %3767 = vmatprep.subr.bf16.mxu0 %v1784
        %3768 = vmatpush1.bf16.msra.mxu0 %v1783
        %3769 = vmatprep.subr.bf16.mxu0 %v1769
        %3770 = vmatpush1.bf16.msra.mxu0 %v1768
        %3771 = vmatprep.subr.bf16.mxu0 %v1754
        %3772 = vmatpush1.bf16.msra.mxu0 %v1753
        %3773 = vmatprep.subr.bf16.mxu0 %v1739
        %3774 = vmatpush1.bf16.msra.mxu0 %v1738
        %3775 = vmatprep.subr.bf16.mxu0 %v1724
        %3776 = vmatpush1.bf16.msra.mxu0 %v1723
        %3777 = vmatprep.subr.bf16.mxu0 %v1709
        %3778 = vmatpush1.bf16.msra.mxu0 %v1708
        %3779 = vmatprep.subr.bf16.mxu0 %v1934
        %3780 = vmatpush2.bf16.msra.mxu0 %v1933
        %3781 = vmatprep.subr.bf16.mxu0 %v1919
        %3782 = vmatpush2.bf16.msra.mxu0 %v1918
        %3783 = vmatprep.subr.bf16.mxu0 %v1904
        %3784 = vmatpush2.bf16.msra.mxu0 %v1903
        %3785 = vmatprep.subr.bf16.mxu0 %v1889
        %3786 = vmatpush2.bf16.msra.mxu0 %v1888
        %3787 = vmatprep.subr.bf16.mxu0 %v1874
        %3788 = vmatpush2.bf16.msra.mxu0 %v1873
        %3789 = vmatprep.subr.bf16.mxu0 %v1859
        %3790 = vmatpush2.bf16.msra.mxu0 %v1858
        %3791 = vmatprep.subr.bf16.mxu0 %v1844
        %3792 = vmatpush2.bf16.msra.mxu0 %v1843
        %3793 = vmatprep.subr.bf16.mxu0 %v1829
        %3794 = vmatpush2.bf16.msra.mxu0 %v1828
        %3795 = vmatprep.mubr.bf16.mxu0 %v2436
        %3796 = vmatmul.mubr.bf16.gmra.mxu0 %v2435
        %v3797 = vpop.f32.mrf.mxu0
        %v3798 = vadd.f32 %v3757, %v3797
        %v3799 = vpop.f32.mrf.mxu0
        %v3800 = vadd.f32 %v3759, %v3799
        %v3801 = vpop.f32.mrf.mxu0
        %v3802 = vpop.f32.mrf.mxu0
        %3803 = vdwg.mxu0
        %3804 = vmatprep.subr.bf16.mxu0 %v2054
        %3805 = vmatpush1.bf16.msra.mxu0 %v2053
        %3806 = vmatprep.subr.bf16.mxu0 %v2039
        %3807 = vmatpush1.bf16.msra.mxu0 %v2038
        %3808 = vmatprep.subr.bf16.mxu0 %v2024
        %3809 = vmatpush1.bf16.msra.mxu0 %v2023
        %3810 = vmatprep.subr.bf16.mxu0 %v2009
        %3811 = vmatpush1.bf16.msra.mxu0 %v2008
        %3812 = vmatprep.subr.bf16.mxu0 %v1994
        %3813 = vmatpush1.bf16.msra.mxu0 %v1993
        %3814 = vmatprep.subr.bf16.mxu0 %v1979
        %3815 = vmatpush1.bf16.msra.mxu0 %v1978
        %3816 = vmatprep.subr.bf16.mxu0 %v1964
        %3817 = vmatpush1.bf16.msra.mxu0 %v1963
        %3818 = vmatprep.subr.bf16.mxu0 %v1949
        %3819 = vmatpush1.bf16.msra.mxu0 %v1948
        %3820 = vmatprep.subr.bf16.mxu0 %v2174
        %3821 = vmatpush2.bf16.msra.mxu0 %v2173
        %3822 = vmatprep.subr.bf16.mxu0 %v2159
        %3823 = vmatpush2.bf16.msra.mxu0 %v2158
        %3824 = vmatprep.subr.bf16.mxu0 %v2144
        %3825 = vmatpush2.bf16.msra.mxu0 %v2143
        %3826 = vmatprep.subr.bf16.mxu0 %v2129
        %3827 = vmatpush2.bf16.msra.mxu0 %v2128
        %3828 = vmatprep.subr.bf16.mxu0 %v2114
        %3829 = vmatpush2.bf16.msra.mxu0 %v2113
        %3830 = vmatprep.subr.bf16.mxu0 %v2099
        %3831 = vmatpush2.bf16.msra.mxu0 %v2098
        %3832 = vmatprep.subr.bf16.mxu0 %v2084
        %3833 = vmatpush2.bf16.msra.mxu0 %v2083
        %3834 = vmatprep.subr.bf16.mxu0 %v2069
        %3835 = vmatpush2.bf16.msra.mxu0 %v2068
        %3836 = vmatprep.mubr.bf16.mxu0 %v2438
        %3837 = vmatmul.mubr.bf16.gmra.mxu0 %v2437
        %v3838 = vpop.f32.mrf.mxu0
        %v3839 = vadd.f32 %v3798, %v3838
        %v3840 = vpop.f32.mrf.mxu0
        %v3841 = vadd.f32 %v3800, %v3840
        %v3842 = vpop.f32.mrf.mxu0
        %v3843 = vpop.f32.mrf.mxu0
        %3844 = vdwg.mxu0
        %3845 = vmatprep.subr.bf16.mxu0 %v2294
        %3846 = vmatpush1.bf16.msra.mxu0 %v2293
        %3847 = vmatprep.subr.bf16.mxu0 %v2279
        %3848 = vmatpush1.bf16.msra.mxu0 %v2278
        %3849 = vmatprep.subr.bf16.mxu0 %v2264
        %3850 = vmatpush1.bf16.msra.mxu0 %v2263
        %3851 = vmatprep.subr.bf16.mxu0 %v2249
        %3852 = vmatpush1.bf16.msra.mxu0 %v2248
        %3853 = vmatprep.subr.bf16.mxu0 %v2234
        %3854 = vmatpush1.bf16.msra.mxu0 %v2233
        %3855 = vmatprep.subr.bf16.mxu0 %v2219
        %3856 = vmatpush1.bf16.msra.mxu0 %v2218
        %3857 = vmatprep.subr.bf16.mxu0 %v2204
        %3858 = vmatpush1.bf16.msra.mxu0 %v2203
        %3859 = vmatprep.subr.bf16.mxu0 %v2189
        %3860 = vmatpush1.bf16.msra.mxu0 %v2188
        %3861 = vmatprep.subr.bf16.mxu0 %v2414
        %3862 = vmatpush2.bf16.msra.mxu0 %v2413
        %3863 = vmatprep.subr.bf16.mxu0 %v2399
        %3864 = vmatpush2.bf16.msra.mxu0 %v2398
        %3865 = vmatprep.subr.bf16.mxu0 %v2384
        %3866 = vmatpush2.bf16.msra.mxu0 %v2383
        %3867 = vmatprep.subr.bf16.mxu0 %v2369
        %3868 = vmatpush2.bf16.msra.mxu0 %v2368
        %3869 = vmatprep.subr.bf16.mxu0 %v2354
        %3870 = vmatpush2.bf16.msra.mxu0 %v2353
        %3871 = vmatprep.subr.bf16.mxu0 %v2339
        %3872 = vmatpush2.bf16.msra.mxu0 %v2338
        %3873 = vmatprep.subr.bf16.mxu0 %v2324
        %3874 = vmatpush2.bf16.msra.mxu0 %v2323
        %3875 = vmatprep.subr.bf16.mxu0 %v2309
        %3876 = vmatpush2.bf16.msra.mxu0 %v2308
        %3877 = vmatprep.mubr.bf16.mxu0 %v2440
        %3878 = vmatmul.mubr.bf16.gmra.mxu0 %v2439
        %v3879 = vpop.f32.mrf.mxu0
        %v3880 = vadd.f32 %v3839, %v3879
        %v3881 = vpop.f32.mrf.mxu0
        %v3882 = vadd.f32 %v3841, %v3881
        %v3883 = vpop.f32.mrf.mxu0
        %v3884 = vpop.f32.mrf.mxu0
        %3885 = vdwg.mxu0
        %3886 = vmatprep.subr.bf16.mxu0 0
        %3887 = vmatpush1.bf16.msra.mxu0 %v1335
        %3888 = vmatprep.subr.bf16.mxu0 0
        %3889 = vmatpush1.bf16.msra.mxu0 %v1320
        %3890 = vmatprep.subr.bf16.mxu0 0
        %3891 = vmatpush1.bf16.msra.mxu0 %v1305
        %3892 = vmatprep.subr.bf16.mxu0 0
        %3893 = vmatpush1.bf16.msra.mxu0 %v1290
        %3894 = vmatprep.subr.bf16.mxu0 0
        %3895 = vmatpush1.bf16.msra.mxu0 %v1275
        %3896 = vmatprep.subr.bf16.mxu0 0
        %3897 = vmatpush1.bf16.msra.mxu0 %v1260
        %3898 = vmatprep.subr.bf16.mxu0 0
        %3899 = vmatpush1.bf16.msra.mxu0 %v1245
        %3900 = vmatprep.subr.bf16.mxu0 0
        %3901 = vmatpush1.bf16.msra.mxu0 %v1230
        %3902 = vmatprep.subr.bf16.mxu0 0
        %3903 = vmatpush2.bf16.msra.mxu0 %v1455
        %3904 = vmatprep.subr.bf16.mxu0 0
        %3905 = vmatpush2.bf16.msra.mxu0 %v1440
        %3906 = vmatprep.subr.bf16.mxu0 0
        %3907 = vmatpush2.bf16.msra.mxu0 %v1425
        %3908 = vmatprep.subr.bf16.mxu0 0
        %3909 = vmatpush2.bf16.msra.mxu0 %v1410
        %3910 = vmatprep.subr.bf16.mxu0 0
        %3911 = vmatpush2.bf16.msra.mxu0 %v1395
        %3912 = vmatprep.subr.bf16.mxu0 0
        %3913 = vmatpush2.bf16.msra.mxu0 %v1380
        %3914 = vmatprep.subr.bf16.mxu0 0
        %3915 = vmatpush2.bf16.msra.mxu0 %v1365
        %3916 = vmatprep.subr.bf16.mxu0 0
        %3917 = vmatpush2.bf16.msra.mxu0 %v1350
        %3918 = vmatprep.mubr.bf16.mxu0 %v2432
        %3919 = vmatmul.mubr.bf16.gmra.mxu0 %v2431
        %v3920 = vpop.f32.mrf.mxu0
        %v3921 = vadd.f32 0.0, %v3920
        %v3922 = vpop.f32.mrf.mxu0
        %v3923 = vpop.f32.mrf.mxu0
        %v3924 = vpop.f32.mrf.mxu0
        %3925 = vdwg.mxu0
        %3926 = vmatprep.subr.bf16.mxu0 0
        %3927 = vmatpush1.bf16.msra.mxu0 %v1575
        %3928 = vmatprep.subr.bf16.mxu0 0
        %3929 = vmatpush1.bf16.msra.mxu0 %v1560
        %3930 = vmatprep.subr.bf16.mxu0 0
        %3931 = vmatpush1.bf16.msra.mxu0 %v1545
        %3932 = vmatprep.subr.bf16.mxu0 0
        %3933 = vmatpush1.bf16.msra.mxu0 %v1530
        %3934 = vmatprep.subr.bf16.mxu0 0
        %3935 = vmatpush1.bf16.msra.mxu0 %v1515
        %3936 = vmatprep.subr.bf16.mxu0 0
        %3937 = vmatpush1.bf16.msra.mxu0 %v1500
        %3938 = vmatprep.subr.bf16.mxu0 0
        %3939 = vmatpush1.bf16.msra.mxu0 %v1485
        %3940 = vmatprep.subr.bf16.mxu0 0
        %3941 = vmatpush1.bf16.msra.mxu0 %v1470
        %3942 = vmatprep.subr.bf16.mxu0 0
        %3943 = vmatpush2.bf16.msra.mxu0 %v1695
        %3944 = vmatprep.subr.bf16.mxu0 0
        %3945 = vmatpush2.bf16.msra.mxu0 %v1680
        %3946 = vmatprep.subr.bf16.mxu0 0
        %3947 = vmatpush2.bf16.msra.mxu0 %v1665
        %3948 = vmatprep.subr.bf16.mxu0 0
        %3949 = vmatpush2.bf16.msra.mxu0 %v1650
        %3950 = vmatprep.subr.bf16.mxu0 0
        %3951 = vmatpush2.bf16.msra.mxu0 %v1635
        %3952 = vmatprep.subr.bf16.mxu0 0
        %3953 = vmatpush2.bf16.msra.mxu0 %v1620
        %3954 = vmatprep.subr.bf16.mxu0 0
        %3955 = vmatpush2.bf16.msra.mxu0 %v1605
        %3956 = vmatprep.subr.bf16.mxu0 0
        %3957 = vmatpush2.bf16.msra.mxu0 %v1590
        %3958 = vmatprep.mubr.bf16.mxu0 %v2434
        %3959 = vmatmul.mubr.bf16.gmra.mxu0 %v2433
        %v3960 = vpop.f32.mrf.mxu0
        %v3961 = vadd.f32 %v3921, %v3960
        %v3962 = vpop.f32.mrf.mxu0
        %v3963 = vpop.f32.mrf.mxu0
        %v3964 = vpop.f32.mrf.mxu0
        %3965 = vdwg.mxu0
        %3966 = vmatprep.subr.bf16.mxu0 0
        %3967 = vmatpush1.bf16.msra.mxu0 %v1815
        %3968 = vmatprep.subr.bf16.mxu0 0
        %3969 = vmatpush1.bf16.msra.mxu0 %v1800
        %3970 = vmatprep.subr.bf16.mxu0 0
        %3971 = vmatpush1.bf16.msra.mxu0 %v1785
        %3972 = vmatprep.subr.bf16.mxu0 0
        %3973 = vmatpush1.bf16.msra.mxu0 %v1770
        %3974 = vmatprep.subr.bf16.mxu0 0
        %3975 = vmatpush1.bf16.msra.mxu0 %v1755
        %3976 = vmatprep.subr.bf16.mxu0 0
        %3977 = vmatpush1.bf16.msra.mxu0 %v1740
        %3978 = vmatprep.subr.bf16.mxu0 0
        %3979 = vmatpush1.bf16.msra.mxu0 %v1725
        %3980 = vmatprep.subr.bf16.mxu0 0
        %3981 = vmatpush1.bf16.msra.mxu0 %v1710
        %3982 = vmatprep.subr.bf16.mxu0 0
        %3983 = vmatpush2.bf16.msra.mxu0 %v1935
        %3984 = vmatprep.subr.bf16.mxu0 0
        %3985 = vmatpush2.bf16.msra.mxu0 %v1920
        %3986 = vmatprep.subr.bf16.mxu0 0
        %3987 = vmatpush2.bf16.msra.mxu0 %v1905
        %3988 = vmatprep.subr.bf16.mxu0 0
        %3989 = vmatpush2.bf16.msra.mxu0 %v1890
        %3990 = vmatprep.subr.bf16.mxu0 0
        %3991 = vmatpush2.bf16.msra.mxu0 %v1875
        %3992 = vmatprep.subr.bf16.mxu0 0
        %3993 = vmatpush2.bf16.msra.mxu0 %v1860
        %3994 = vmatprep.subr.bf16.mxu0 0
        %3995 = vmatpush2.bf16.msra.mxu0 %v1845
        %3996 = vmatprep.subr.bf16.mxu0 0
        %3997 = vmatpush2.bf16.msra.mxu0 %v1830
        %3998 = vmatprep.mubr.bf16.mxu0 %v2436
        %3999 = vmatmul.mubr.bf16.gmra.mxu0 %v2435
        %v4000 = vpop.f32.mrf.mxu0
        %v4001 = vadd.f32 %v3961, %v4000
        %v4002 = vpop.f32.mrf.mxu0
        %v4003 = vpop.f32.mrf.mxu0
        %v4004 = vpop.f32.mrf.mxu0
        %4005 = vdwg.mxu0
        %4006 = vmatprep.subr.bf16.mxu0 0
        %4007 = vmatpush1.bf16.msra.mxu0 %v2055
        %4008 = vmatprep.subr.bf16.mxu0 0
        %4009 = vmatpush1.bf16.msra.mxu0 %v2040
        %4010 = vmatprep.subr.bf16.mxu0 0
        %4011 = vmatpush1.bf16.msra.mxu0 %v2025
        %4012 = vmatprep.subr.bf16.mxu0 0
        %4013 = vmatpush1.bf16.msra.mxu0 %v2010
        %4014 = vmatprep.subr.bf16.mxu0 0
        %4015 = vmatpush1.bf16.msra.mxu0 %v1995
        %4016 = vmatprep.subr.bf16.mxu0 0
        %4017 = vmatpush1.bf16.msra.mxu0 %v1980
        %4018 = vmatprep.subr.bf16.mxu0 0
        %4019 = vmatpush1.bf16.msra.mxu0 %v1965
        %4020 = vmatprep.subr.bf16.mxu0 0
        %4021 = vmatpush1.bf16.msra.mxu0 %v1950
        %4022 = vmatprep.subr.bf16.mxu0 0
        %4023 = vmatpush2.bf16.msra.mxu0 %v2175
        %4024 = vmatprep.subr.bf16.mxu0 0
        %4025 = vmatpush2.bf16.msra.mxu0 %v2160
        %4026 = vmatprep.subr.bf16.mxu0 0
        %4027 = vmatpush2.bf16.msra.mxu0 %v2145
        %4028 = vmatprep.subr.bf16.mxu0 0
        %4029 = vmatpush2.bf16.msra.mxu0 %v2130
        %4030 = vmatprep.subr.bf16.mxu0 0
        %4031 = vmatpush2.bf16.msra.mxu0 %v2115
        %4032 = vmatprep.subr.bf16.mxu0 0
        %4033 = vmatpush2.bf16.msra.mxu0 %v2100
        %4034 = vmatprep.subr.bf16.mxu0 0
        %4035 = vmatpush2.bf16.msra.mxu0 %v2085
        %4036 = vmatprep.subr.bf16.mxu0 0
        %4037 = vmatpush2.bf16.msra.mxu0 %v2070
        %4038 = vmatprep.mubr.bf16.mxu0 %v2438
        %4039 = vmatmul.mubr.bf16.gmra.mxu0 %v2437
        %v4040 = vpop.f32.mrf.mxu0
        %v4041 = vadd.f32 %v4001, %v4040
        %v4042 = vpop.f32.mrf.mxu0
        %v4043 = vpop.f32.mrf.mxu0
        %v4044 = vpop.f32.mrf.mxu0
        %4045 = vdwg.mxu0
        %4046 = vmatprep.subr.bf16.mxu0 0
        %4047 = vmatpush1.bf16.msra.mxu0 %v2295
        %4048 = vmatprep.subr.bf16.mxu0 0
        %4049 = vmatpush1.bf16.msra.mxu0 %v2280
        %4050 = vmatprep.subr.bf16.mxu0 0
        %4051 = vmatpush1.bf16.msra.mxu0 %v2265
        %4052 = vmatprep.subr.bf16.mxu0 0
        %4053 = vmatpush1.bf16.msra.mxu0 %v2250
        %4054 = vmatprep.subr.bf16.mxu0 0
        %4055 = vmatpush1.bf16.msra.mxu0 %v2235
        %4056 = vmatprep.subr.bf16.mxu0 0
        %4057 = vmatpush1.bf16.msra.mxu0 %v2220
        %4058 = vmatprep.subr.bf16.mxu0 0
        %4059 = vmatpush1.bf16.msra.mxu0 %v2205
        %4060 = vmatprep.subr.bf16.mxu0 0
        %4061 = vmatpush1.bf16.msra.mxu0 %v2190
        %4062 = vmatprep.subr.bf16.mxu0 0
        %4063 = vmatpush2.bf16.msra.mxu0 %v2415
        %4064 = vmatprep.subr.bf16.mxu0 0
        %4065 = vmatpush2.bf16.msra.mxu0 %v2400
        %4066 = vmatprep.subr.bf16.mxu0 0
        %4067 = vmatpush2.bf16.msra.mxu0 %v2385
        %4068 = vmatprep.subr.bf16.mxu0 0
        %4069 = vmatpush2.bf16.msra.mxu0 %v2370
        %4070 = vmatprep.subr.bf16.mxu0 0
        %4071 = vmatpush2.bf16.msra.mxu0 %v2355
        %4072 = vmatprep.subr.bf16.mxu0 0
        %4073 = vmatpush2.bf16.msra.mxu0 %v2340
        %4074 = vmatprep.subr.bf16.mxu0 0
        %4075 = vmatpush2.bf16.msra.mxu0 %v2325
        %4076 = vmatprep.subr.bf16.mxu0 0
        %4077 = vmatpush2.bf16.msra.mxu0 %v2310
        %4078 = vmatprep.mubr.bf16.mxu0 %v2440
        %4079 = vmatmul.mubr.bf16.gmra.mxu0 %v2439
        %v4080 = vpop.f32.mrf.mxu0
        %v4081 = vadd.f32 %v4041, %v4080
        %v4082 = vpop.f32.mrf.mxu0
        %v4083 = vpop.f32.mrf.mxu0
        %v4084 = vpop.f32.mrf.mxu0
        %4085 = vdwg.mxu0
        %v4086 = vadd.f32 %v596, %v2650
        %v4087 = vadd.f32 %v597, %v2652
        %v4088 = vadd.f32 %v598, %v2855
        %v4089 = vadd.f32 %v599, %v2857
        %v4090 = vadd.f32 %v600, %v3060
        %v4091 = vadd.f32 %v601, %v3062
        %v4092 = vadd.f32 %v602, %v3265
        %v4093 = vadd.f32 %v603, %v3267
        %v4094 = vadd.f32 %v604, %v3470
        %v4095 = vadd.f32 %v605, %v3472
        %v4096 = vadd.f32 %v606, %v3675
        %v4097 = vadd.f32 %v607, %v3677
        %v4098 = vadd.f32 %v608, %v3880
        %v4099 = vadd.f32 %v609, %v3882
        %v4100 = vadd.f32 %v610, %v4081
        %4101 = vst [vmem:[#allocation2] sm:$0xff] %v4086
        %4102 = vst [vmem:[#allocation2 + $0x8] sm:$0xff] %v4087
        %4103 = vst [vmem:[#allocation2 + $0x10] sm:$0xff] %v4088
        %4104 = vst [vmem:[#allocation2 + $0x18] sm:$0xff] %v4089
        %4105 = vst [vmem:[#allocation2 + $0x20] sm:$0xff] %v4090
        %4106 = vst [vmem:[#allocation2 + $0x28] sm:$0xff] %v4091
        %4107 = vst [vmem:[#allocation2 + $0x30] sm:$0xff] %v4092
        %4108 = vst [vmem:[#allocation2 + $0x38] sm:$0xff] %v4093
        %4109 = vst [vmem:[#allocation2 + $0x40] sm:$0xff] %v4094
        %4110 = vst [vmem:[#allocation2 + $0x48] sm:$0xff] %v4095
        %4111 = vst [vmem:[#allocation2 + $0x50] sm:$0xff] %v4096
        %4112 = vst [vmem:[#allocation2 + $0x58] sm:$0xff] %v4097
        %4113 = vst [vmem:[#allocation2 + $0x60] sm:$0xff] %v4098
        %4114 = vst [vmem:[#allocation2 + $0x68] sm:$0xff] %v4099
        %4115 = vst [vmem:[#allocation2 + $0x70] sm:$0xff] %v4100
        %p4116 = scmp.eq.s32.totalorder %s31, 2
        // Predicated region
        $region117: #{classify_forward.1} parent=67 // pred_check
          %p4117 = pneg %p4116
        $region118: #{classify_forward.1} parent=67 // pred_check_branch
          %4119 = sbr.rel (%p4117) target = $region120
        $region119: #{classify_forward.1} parent=67 // pred_region
          %v4120 = vld [vmem:[#allocation2] sm:$0xff]
          %v4121 = vld [vmem:[#allocation2 + $0x8] sm:$0xff]
          %v4122 = vld [vmem:[#allocation2 + $0x10] sm:$0xff]
          %v4123 = vld [vmem:[#allocation2 + $0x18] sm:$0xff]
          %v4124 = vld [vmem:[#allocation2 + $0x20] sm:$0xff]
          %v4125 = vld [vmem:[#allocation2 + $0x28] sm:$0xff]
          %v4126 = vld [vmem:[#allocation2 + $0x30] sm:$0xff]
          %v4127 = vld [vmem:[#allocation2 + $0x38] sm:$0xff]
          %v4128 = vld [vmem:[#allocation2 + $0x40] sm:$0xff]
          %v4129 = vld [vmem:[#allocation2 + $0x48] sm:$0xff]
          %v4130 = vld [vmem:[#allocation2 + $0x50] sm:$0xff]
          %v4131 = vld [vmem:[#allocation2 + $0x58] sm:$0xff]
          %v4132 = vld [vmem:[#allocation2 + $0x60] sm:$0xff]
          %v4133 = vld [vmem:[#allocation2 + $0x68] sm:$0xff]
          %v4134 = vld [vmem:[#allocation2 + $0x70] sm:$0xff]
          %v4135 = vld [vmem:[#allocation5] sm:$0xff]
          %v4136 = vld [vmem:[#allocation5 + $0x8] sm:$0xff]
          %v4139 = vlaneseq
          %v4140 = vshrl.u32 %v4139, 7
          %v4141 = vsub.s32 0, %v4140
          %v4142 = vrot.slane %v4135, %v4141
          %v4143 = vlaneseq
          %v4144 = vshrl.u32 %v4143, 7
          %v4145 = vsub.s32 1, %v4144
          %v4146 = vrot.slane %v4135, %v4145
          %v4147 = vlaneseq
          %v4148 = vshrl.u32 %v4147, 7
          %v4149 = vsub.s32 2, %v4148
          %v4150 = vrot.slane %v4135, %v4149
          %v4151 = vlaneseq
          %v4152 = vshrl.u32 %v4151, 7
          %v4153 = vsub.s32 3, %v4152
          %v4154 = vrot.slane %v4135, %v4153
          %v4155 = vlaneseq
          %v4156 = vshrl.u32 %v4155, 7
          %v4157 = vsub.s32 4, %v4156
          %v4158 = vrot.slane %v4135, %v4157
          %v4159 = vlaneseq
          %v4160 = vshrl.u32 %v4159, 7
          %v4161 = vsub.s32 5, %v4160
          %v4162 = vrot.slane %v4135, %v4161
          %v4163 = vlaneseq
          %v4164 = vshrl.u32 %v4163, 7
          %v4165 = vsub.s32 6, %v4164
          %v4166 = vrot.slane %v4135, %v4165
          %v4167 = vlaneseq
          %v4168 = vshrl.u32 %v4167, 7
          %v4169 = vsub.s32 7, %v4168
          %v4170 = vrot.slane %v4135, %v4169
          %v4171 = vlaneseq
          %v4172 = vshrl.u32 %v4171, 7
          %v4173 = vsub.s32 0, %v4172
          %v4174 = vrot.slane %v4136, %v4173
          %v4175 = vlaneseq
          %v4176 = vshrl.u32 %v4175, 7
          %v4177 = vsub.s32 1, %v4176
          %v4178 = vrot.slane %v4136, %v4177
          %v4179 = vlaneseq
          %v4180 = vshrl.u32 %v4179, 7
          %v4181 = vsub.s32 2, %v4180
          %v4182 = vrot.slane %v4136, %v4181
          %v4183 = vlaneseq
          %v4184 = vshrl.u32 %v4183, 7
          %v4185 = vsub.s32 3, %v4184
          %v4186 = vrot.slane %v4136, %v4185
          %v4187 = vlaneseq
          %v4188 = vshrl.u32 %v4187, 7
          %v4189 = vsub.s32 4, %v4188
          %v4190 = vrot.slane %v4136, %v4189
          %v4191 = vlaneseq
          %v4192 = vshrl.u32 %v4191, 7
          %v4193 = vsub.s32 5, %v4192
          %v4194 = vrot.slane %v4136, %v4193
          %v4195 = vlaneseq
          %v4196 = vshrl.u32 %v4195, 7
          %v4197 = vsub.s32 6, %v4196
          %v4198 = vrot.slane %v4136, %v4197
          %v4214 = vmul.f32 %v4120, %v4142
          %v4215 = vmul.f32 %v4121, %v4146
          %v4216 = vmul.f32 %v4122, %v4150
          %v4217 = vmul.f32 %v4123, %v4154
          %v4218 = vmul.f32 %v4124, %v4158
          %v4219 = vmul.f32 %v4125, %v4162
          %v4220 = vmul.f32 %v4126, %v4166
          %v4221 = vmul.f32 %v4127, %v4170
          %v4222 = vmul.f32 %v4128, %v4174
          %v4223 = vmul.f32 %v4129, %v4178
          %v4224 = vmul.f32 %v4130, %v4182
          %v4225 = vmul.f32 %v4131, %v4186
          %v4226 = vmul.f32 %v4132, %v4190
          %v4227 = vmul.f32 %v4133, %v4194
          %v4228 = vmul.f32 %v4134, %v4198
          %v4229 = vld [vmem:[#allocation7] sm:$0xff]
          %v4230 = vld [vmem:[#allocation7 + $0x8] sm:$0xff]
          %v4233 = vlaneseq
          %v4234 = vshrl.u32 %v4233, 7
          %v4235 = vsub.s32 0, %v4234
          %v4236 = vrot.slane %v4229, %v4235
          %v4237 = vlaneseq
          %v4238 = vshrl.u32 %v4237, 7
          %v4239 = vsub.s32 1, %v4238
          %v4240 = vrot.slane %v4229, %v4239
          %v4241 = vlaneseq
          %v4242 = vshrl.u32 %v4241, 7
          %v4243 = vsub.s32 2, %v4242
          %v4244 = vrot.slane %v4229, %v4243
          %v4245 = vlaneseq
          %v4246 = vshrl.u32 %v4245, 7
          %v4247 = vsub.s32 3, %v4246
          %v4248 = vrot.slane %v4229, %v4247
          %v4249 = vlaneseq
          %v4250 = vshrl.u32 %v4249, 7
          %v4251 = vsub.s32 4, %v4250
          %v4252 = vrot.slane %v4229, %v4251
          %v4253 = vlaneseq
          %v4254 = vshrl.u32 %v4253, 7
          %v4255 = vsub.s32 5, %v4254
          %v4256 = vrot.slane %v4229, %v4255
          %v4257 = vlaneseq
          %v4258 = vshrl.u32 %v4257, 7
          %v4259 = vsub.s32 6, %v4258
          %v4260 = vrot.slane %v4229, %v4259
          %v4261 = vlaneseq
          %v4262 = vshrl.u32 %v4261, 7
          %v4263 = vsub.s32 7, %v4262
          %v4264 = vrot.slane %v4229, %v4263
          %v4265 = vlaneseq
          %v4266 = vshrl.u32 %v4265, 7
          %v4267 = vsub.s32 0, %v4266
          %v4268 = vrot.slane %v4230, %v4267
          %v4269 = vlaneseq
          %v4270 = vshrl.u32 %v4269, 7
          %v4271 = vsub.s32 1, %v4270
          %v4272 = vrot.slane %v4230, %v4271
          %v4273 = vlaneseq
          %v4274 = vshrl.u32 %v4273, 7
          %v4275 = vsub.s32 2, %v4274
          %v4276 = vrot.slane %v4230, %v4275
          %v4277 = vlaneseq
          %v4278 = vshrl.u32 %v4277, 7
          %v4279 = vsub.s32 3, %v4278
          %v4280 = vrot.slane %v4230, %v4279
          %v4281 = vlaneseq
          %v4282 = vshrl.u32 %v4281, 7
          %v4283 = vsub.s32 4, %v4282
          %v4284 = vrot.slane %v4230, %v4283
          %v4285 = vlaneseq
          %v4286 = vshrl.u32 %v4285, 7
          %v4287 = vsub.s32 5, %v4286
          %v4288 = vrot.slane %v4230, %v4287
          %v4289 = vlaneseq
          %v4290 = vshrl.u32 %v4289, 7
          %v4291 = vsub.s32 6, %v4290
          %v4292 = vrot.slane %v4230, %v4291
          %v4308 = vadd.f32 %v4214, %v4236
          %v4309 = vadd.f32 %v4215, %v4240
          %v4310 = vadd.f32 %v4216, %v4244
          %v4311 = vadd.f32 %v4217, %v4248
          %v4312 = vadd.f32 %v4218, %v4252
          %v4313 = vadd.f32 %v4219, %v4256
          %v4314 = vadd.f32 %v4220, %v4260
          %v4315 = vadd.f32 %v4221, %v4264
          %v4316 = vadd.f32 %v4222, %v4268
          %v4317 = vadd.f32 %v4223, %v4272
          %v4318 = vadd.f32 %v4224, %v4276
          %v4319 = vadd.f32 %v4225, %v4280
          %v4320 = vadd.f32 %v4226, %v4284
          %v4321 = vadd.f32 %v4227, %v4288
          %v4322 = vadd.f32 %v4228, %v4292
          %v4323 = vmax.f32 %v4308, 0.0
          %v4324 = vmax.f32 %v4309, 0.0
          %v4325 = vmax.f32 %v4310, 0.0
          %v4326 = vmax.f32 %v4311, 0.0
          %v4327 = vmax.f32 %v4312, 0.0
          %v4328 = vmax.f32 %v4313, 0.0
          %v4329 = vmax.f32 %v4314, 0.0
          %v4330 = vmax.f32 %v4315, 0.0
          %v4331 = vmax.f32 %v4316, 0.0
          %v4332 = vmax.f32 %v4317, 0.0
          %v4333 = vmax.f32 %v4318, 0.0
          %v4334 = vmax.f32 %v4319, 0.0
          %v4335 = vmax.f32 %v4320, 0.0
          %v4336 = vmax.f32 %v4321, 0.0
          %v4337 = vmax.f32 %v4322, 0.0
          %v4338 = vpack.c.bf16 %v4323, %v4323
          %v4339 = vpack.c.bf16 %v4324, %v4324
          %v4340 = vpack.c.bf16 %v4325, %v4325
          %v4341 = vpack.c.bf16 %v4326, %v4326
          %v4342 = vpack.c.bf16 %v4327, %v4327
          %v4343 = vpack.c.bf16 %v4328, %v4328
          %v4344 = vpack.c.bf16 %v4329, %v4329
          %v4345 = vpack.c.bf16 %v4330, %v4330
          %v4346 = vpack.c.bf16 %v4331, %v4331
          %v4347 = vpack.c.bf16 %v4332, %v4332
          %v4348 = vpack.c.bf16 %v4333, %v4333
          %v4349 = vpack.c.bf16 %v4334, %v4334
          %v4350 = vpack.c.bf16 %v4335, %v4335
          %v4351 = vpack.c.bf16 %v4336, %v4336
          %v4352 = vpack.c.bf16 %v4337, %v4337
          %v4353 = vld [vmem:[#allocation8] sm:$0xff]
          %v4354 = vld [vmem:[#allocation8 + $0x8] sm:$0xf]
          %v4355 = vld [vmem:[#allocation8 + $0xc] sm:$0xff]
          %v4356 = vld [vmem:[#allocation8 + $0x14] sm:$0xf]
          %v4357 = vld [vmem:[#allocation8 + $0x18] sm:$0xff]
          %v4358 = vld [vmem:[#allocation8 + $0x20] sm:$0xf]
          %v4359 = vld [vmem:[#allocation8 + $0x24] sm:$0xff]
          %v4360 = vld [vmem:[#allocation8 + $0x2c] sm:$0xf]
          %v4361 = vld [vmem:[#allocation8 + $0x30] sm:$0xff]
          %v4362 = vld [vmem:[#allocation8 + $0x38] sm:$0xf]
          %v4363 = vld [vmem:[#allocation8 + $0x3c] sm:$0xff]
          %v4364 = vld [vmem:[#allocation8 + $0x44] sm:$0xf]
          %v4365 = vld [vmem:[#allocation8 + $0x48] sm:$0xff]
          %v4366 = vld [vmem:[#allocation8 + $0x50] sm:$0xf]
          %v4367 = vld [vmem:[#allocation8 + $0x54] sm:$0xff]
          %v4368 = vld [vmem:[#allocation8 + $0x5c] sm:$0xf]
          %v4369 = vld [vmem:[#allocation8 + $0x60] sm:$0xff]
          %v4370 = vld [vmem:[#allocation8 + $0x68] sm:$0xf]
          %v4371 = vld [vmem:[#allocation8 + $0x6c] sm:$0xff]
          %v4372 = vld [vmem:[#allocation8 + $0x74] sm:$0xf]
          %v4373 = vld [vmem:[#allocation8 + $0x78] sm:$0xff]
          %v4374 = vld [vmem:[#allocation8 + $0x80] sm:$0xf]
          %v4375 = vld [vmem:[#allocation8 + $0x84] sm:$0xff]
          %v4376 = vld [vmem:[#allocation8 + $0x8c] sm:$0xf]
          %v4377 = vld [vmem:[#allocation8 + $0x90] sm:$0xff]
          %v4378 = vld [vmem:[#allocation8 + $0x98] sm:$0xf]
          %v4379 = vld [vmem:[#allocation8 + $0x9c] sm:$0xff]
          %v4380 = vld [vmem:[#allocation8 + $0xa4] sm:$0xf]
          %v4381 = vld [vmem:[#allocation8 + $0xa8] sm:$0xff]
          %v4382 = vld [vmem:[#allocation8 + $0xb0] sm:$0xf]
          %v4383 = vld [vmem:[#allocation8 + $0xb4] sm:$0xff]
          %v4384 = vld [vmem:[#allocation8 + $0xbc] sm:$0xf]
          %v4385 = vld [vmem:[#allocation8 + $0xc0] sm:$0xff]
          %v4386 = vld [vmem:[#allocation8 + $0xc8] sm:$0xf]
          %v4387 = vld [vmem:[#allocation8 + $0xcc] sm:$0xff]
          %v4388 = vld [vmem:[#allocation8 + $0xd4] sm:$0xf]
          %v4389 = vld [vmem:[#allocation8 + $0xd8] sm:$0xff]
          %v4390 = vld [vmem:[#allocation8 + $0xe0] sm:$0xf]
          %v4391 = vld [vmem:[#allocation8 + $0xe4] sm:$0xff]
          %v4392 = vld [vmem:[#allocation8 + $0xec] sm:$0xf]
          %v4393 = vld [vmem:[#allocation8 + $0xf0] sm:$0xff]
          %v4394 = vld [vmem:[#allocation8 + $0xf8] sm:$0xf]
          %v4395 = vld [vmem:[#allocation8 + $0xfc] sm:$0xff]
          %v4396 = vld [vmem:[#allocation8 + $0x104] sm:$0xf]
          %v4397 = vld [vmem:[#allocation8 + $0x108] sm:$0xff]
          %v4398 = vld [vmem:[#allocation8 + $0x110] sm:$0xf]
          %v4399 = vld [vmem:[#allocation8 + $0x114] sm:$0xff]
          %v4400 = vld [vmem:[#allocation8 + $0x11c] sm:$0xf]
          %v4401 = vld [vmem:[#allocation8 + $0x120] sm:$0xff]
          %v4402 = vld [vmem:[#allocation8 + $0x128] sm:$0xf]
          %v4403 = vld [vmem:[#allocation8 + $0x12c] sm:$0xff]
          %v4404 = vld [vmem:[#allocation8 + $0x134] sm:$0xf]
          %v4405 = vld [vmem:[#allocation8 + $0x138] sm:$0xff]
          %v4406 = vld [vmem:[#allocation8 + $0x140] sm:$0xf]
          %v4407 = vld [vmem:[#allocation8 + $0x144] sm:$0xff]
          %v4408 = vld [vmem:[#allocation8 + $0x14c] sm:$0xf]
          %v4409 = vld [vmem:[#allocation8 + $0x150] sm:$0xff]
          %v4410 = vld [vmem:[#allocation8 + $0x158] sm:$0xf]
          %v4411 = vld [vmem:[#allocation8 + $0x15c] sm:$0xff]
          %v4412 = vld [vmem:[#allocation8 + $0x164] sm:$0xf]
          %v4413 = vld [vmem:[#allocation8 + $0x168] sm:$0xff]
          %v4414 = vld [vmem:[#allocation8 + $0x170] sm:$0xf]
          %v4415 = vld [vmem:[#allocation8 + $0x174] sm:$0xff]
          %v4416 = vld [vmem:[#allocation8 + $0x17c] sm:$0xf]
          %v4417 = vld [vmem:[#allocation8 + $0x180] sm:$0xff]
          %v4418 = vld [vmem:[#allocation8 + $0x188] sm:$0xf]
          %v4419 = vld [vmem:[#allocation8 + $0x18c] sm:$0xff]
          %v4420 = vld [vmem:[#allocation8 + $0x194] sm:$0xf]
          %v4421 = vld [vmem:[#allocation8 + $0x198] sm:$0xff]
          %v4422 = vld [vmem:[#allocation8 + $0x1a0] sm:$0xf]
          %v4423 = vld [vmem:[#allocation8 + $0x1a4] sm:$0xff]
          %v4424 = vld [vmem:[#allocation8 + $0x1ac] sm:$0xf]
          %v4425 = vld [vmem:[#allocation8 + $0x1b0] sm:$0xff]
          %v4426 = vld [vmem:[#allocation8 + $0x1b8] sm:$0xf]
          %v4427 = vld [vmem:[#allocation8 + $0x1bc] sm:$0xff]
          %v4428 = vld [vmem:[#allocation8 + $0x1c4] sm:$0xf]
          %v4429 = vld [vmem:[#allocation8 + $0x1c8] sm:$0xff]
          %v4430 = vld [vmem:[#allocation8 + $0x1d0] sm:$0xf]
          %v4431 = vld [vmem:[#allocation8 + $0x1d4] sm:$0xff]
          %v4432 = vld [vmem:[#allocation8 + $0x1dc] sm:$0xf]
          %v4433 = vld [vmem:[#allocation8 + $0x1e0] sm:$0xff]
          %v4434 = vld [vmem:[#allocation8 + $0x1e8] sm:$0xf]
          %v4435 = vld [vmem:[#allocation8 + $0x1ec] sm:$0xff]
          %v4436 = vld [vmem:[#allocation8 + $0x1f4] sm:$0xf]
          %v4437 = vld [vmem:[#allocation8 + $0x1f8] sm:$0xff]
          %v4438 = vld [vmem:[#allocation8 + $0x200] sm:$0xf]
          %v4439 = vld [vmem:[#allocation8 + $0x204] sm:$0xff]
          %v4440 = vld [vmem:[#allocation8 + $0x20c] sm:$0xf]
          %v4441 = vld [vmem:[#allocation8 + $0x210] sm:$0xff]
          %v4442 = vld [vmem:[#allocation8 + $0x218] sm:$0xf]
          %v4443 = vld [vmem:[#allocation8 + $0x21c] sm:$0xff]
          %v4444 = vld [vmem:[#allocation8 + $0x224] sm:$0xf]
          %v4445 = vld [vmem:[#allocation8 + $0x228] sm:$0xff]
          %v4446 = vld [vmem:[#allocation8 + $0x230] sm:$0xf]
          %v4447 = vld [vmem:[#allocation8 + $0x234] sm:$0xff]
          %v4448 = vld [vmem:[#allocation8 + $0x23c] sm:$0xf]
          %v4449 = vld [vmem:[#allocation8 + $0x240] sm:$0xff]
          %v4450 = vld [vmem:[#allocation8 + $0x248] sm:$0xf]
          %v4451 = vld [vmem:[#allocation8 + $0x24c] sm:$0xff]
          %v4452 = vld [vmem:[#allocation8 + $0x254] sm:$0xf]
          %v4453 = vld [vmem:[#allocation8 + $0x258] sm:$0xff]
          %v4454 = vld [vmem:[#allocation8 + $0x260] sm:$0xf]
          %v4455 = vld [vmem:[#allocation8 + $0x264] sm:$0xff]
          %v4456 = vld [vmem:[#allocation8 + $0x26c] sm:$0xf]
          %v4457 = vld [vmem:[#allocation8 + $0x270] sm:$0xff]
          %v4458 = vld [vmem:[#allocation8 + $0x278] sm:$0xf]
          %v4459 = vld [vmem:[#allocation8 + $0x27c] sm:$0xff]
          %v4460 = vld [vmem:[#allocation8 + $0x284] sm:$0xf]
          %v4461 = vld [vmem:[#allocation8 + $0x288] sm:$0xff]
          %v4462 = vld [vmem:[#allocation8 + $0x290] sm:$0xf]
          %v4463 = vld [vmem:[#allocation8 + $0x294] sm:$0xff]
          %v4464 = vld [vmem:[#allocation8 + $0x29c] sm:$0xf]
          %v4465 = vld [vmem:[#allocation8 + $0x2a0] sm:$0xff]
          %v4466 = vld [vmem:[#allocation8 + $0x2a8] sm:$0xf]
          %v4467 = vld [vmem:[#allocation8 + $0x2ac] sm:$0xff]
          %v4468 = vld [vmem:[#allocation8 + $0x2b4] sm:$0xf]
          %v4469 = vld [vmem:[#allocation8 + $0x2b8] sm:$0xff]
          %v4470 = vld [vmem:[#allocation8 + $0x2c0] sm:$0xf]
          %v4471 = vld [vmem:[#allocation8 + $0x2c4] sm:$0xff]
          %v4472 = vld [vmem:[#allocation8 + $0x2cc] sm:$0xf]
          %v4473 = vld [vmem:[#allocation8 + $0x2d0] sm:$0xff]
          %v4474 = vld [vmem:[#allocation8 + $0x2d8] sm:$0xf]
          %v4475 = vld [vmem:[#allocation8 + $0x2dc] sm:$0xff]
          %v4476 = vld [vmem:[#allocation8 + $0x2e4] sm:$0xf]
          %v4477 = vld [vmem:[#allocation8 + $0x2e8] sm:$0xff]
          %v4478 = vld [vmem:[#allocation8 + $0x2f0] sm:$0xf]
          %v4479 = vld [vmem:[#allocation8 + $0x2f4] sm:$0xff]
          %v4480 = vld [vmem:[#allocation8 + $0x2fc] sm:$0xf]
          %v4481 = vld [vmem:[#allocation8 + $0x300] sm:$0xff]
          %v4482 = vld [vmem:[#allocation8 + $0x308] sm:$0xf]
          %v4483 = vld [vmem:[#allocation8 + $0x30c] sm:$0xff]
          %v4484 = vld [vmem:[#allocation8 + $0x314] sm:$0xf]
          %v4485 = vld [vmem:[#allocation8 + $0x318] sm:$0xff]
          %v4486 = vld [vmem:[#allocation8 + $0x320] sm:$0xf]
          %v4487 = vld [vmem:[#allocation8 + $0x324] sm:$0xff]
          %v4488 = vld [vmem:[#allocation8 + $0x32c] sm:$0xf]
          %v4489 = vld [vmem:[#allocation8 + $0x330] sm:$0xff]
          %v4490 = vld [vmem:[#allocation8 + $0x338] sm:$0xf]
          %v4491 = vld [vmem:[#allocation8 + $0x33c] sm:$0xff]
          %v4492 = vld [vmem:[#allocation8 + $0x344] sm:$0xf]
          %v4493 = vld [vmem:[#allocation8 + $0x348] sm:$0xff]
          %v4494 = vld [vmem:[#allocation8 + $0x350] sm:$0xf]
          %v4495 = vld [vmem:[#allocation8 + $0x354] sm:$0xff]
          %v4496 = vld [vmem:[#allocation8 + $0x35c] sm:$0xf]
          %v4497 = vld [vmem:[#allocation8 + $0x360] sm:$0xff]
          %v4498 = vld [vmem:[#allocation8 + $0x368] sm:$0xf]
          %v4499 = vld [vmem:[#allocation8 + $0x36c] sm:$0xff]
          %v4500 = vld [vmem:[#allocation8 + $0x374] sm:$0xf]
          %v4501 = vld [vmem:[#allocation8 + $0x378] sm:$0xff]
          %v4502 = vld [vmem:[#allocation8 + $0x380] sm:$0xf]
          %v4503 = vld [vmem:[#allocation8 + $0x384] sm:$0xff]
          %v4504 = vld [vmem:[#allocation8 + $0x38c] sm:$0xf]
          %v4505 = vld [vmem:[#allocation8 + $0x390] sm:$0xff]
          %v4506 = vld [vmem:[#allocation8 + $0x398] sm:$0xf]
          %v4507 = vld [vmem:[#allocation8 + $0x39c] sm:$0xff]
          %v4508 = vld [vmem:[#allocation8 + $0x3a4] sm:$0xf]
          %v4509 = vld [vmem:[#allocation8 + $0x3a8] sm:$0xff]
          %v4510 = vld [vmem:[#allocation8 + $0x3b0] sm:$0xf]
          %v4511 = vld [vmem:[#allocation8 + $0x3b4] sm:$0xff]
          %v4512 = vld [vmem:[#allocation8 + $0x3bc] sm:$0xf]
          %v4513 = vld [vmem:[#allocation8 + $0x3c0] sm:$0xff]
          %v4514 = vld [vmem:[#allocation8 + $0x3c8] sm:$0xf]
          %v4515 = vld [vmem:[#allocation8 + $0x3cc] sm:$0xff]
          %v4516 = vld [vmem:[#allocation8 + $0x3d4] sm:$0xf]
          %v4517 = vld [vmem:[#allocation8 + $0x3d8] sm:$0xff]
          %v4518 = vld [vmem:[#allocation8 + $0x3e0] sm:$0xf]
          %v4519 = vld [vmem:[#allocation8 + $0x3e4] sm:$0xff]
          %v4520 = vld [vmem:[#allocation8 + $0x3ec] sm:$0xf]
          %v4521 = vld [vmem:[#allocation8 + $0x3f0] sm:$0xff]
          %v4522 = vld [vmem:[#allocation8 + $0x3f8] sm:$0xf]
          %v4523 = vld [vmem:[#allocation8 + $0x3fc] sm:$0xff]
          %v4524 = vld [vmem:[#allocation8 + $0x404] sm:$0xf]
          %v4525 = vld [vmem:[#allocation8 + $0x408] sm:$0xff]
          %v4526 = vld [vmem:[#allocation8 + $0x410] sm:$0xf]
          %v4527 = vld [vmem:[#allocation8 + $0x414] sm:$0xff]
          %v4528 = vld [vmem:[#allocation8 + $0x41c] sm:$0xf]
          %v4529 = vld [vmem:[#allocation8 + $0x420] sm:$0xff]
          %v4530 = vld [vmem:[#allocation8 + $0x428] sm:$0xf]
          %v4531 = vld [vmem:[#allocation8 + $0x42c] sm:$0xff]
          %v4532 = vld [vmem:[#allocation8 + $0x434] sm:$0xf]
          %v4533 = vld [vmem:[#allocation8 + $0x438] sm:$0xff]
          %v4534 = vld [vmem:[#allocation8 + $0x440] sm:$0xf]
          %v4535 = vld [vmem:[#allocation8 + $0x444] sm:$0xff]
          %v4536 = vld [vmem:[#allocation8 + $0x44c] sm:$0xf]
          %v4537 = vld [vmem:[#allocation8 + $0x450] sm:$0xff]
          %v4538 = vld [vmem:[#allocation8 + $0x458] sm:$0xf]
          %v4539 = vld [vmem:[#allocation8 + $0x45c] sm:$0xff]
          %v4540 = vld [vmem:[#allocation8 + $0x464] sm:$0xf]
          %v4541 = vld [vmem:[#allocation8 + $0x468] sm:$0xff]
          %v4542 = vld [vmem:[#allocation8 + $0x470] sm:$0xf]
          %v4543 = vld [vmem:[#allocation8 + $0x474] sm:$0xff]
          %v4544 = vld [vmem:[#allocation8 + $0x47c] sm:$0xf]
          %v4545 = vld [vmem:[#allocation8 + $0x480] sm:$0xff]
          %v4546 = vld [vmem:[#allocation8 + $0x488] sm:$0xf]
          %v4547 = vld [vmem:[#allocation8 + $0x48c] sm:$0xff]
          %v4548 = vld [vmem:[#allocation8 + $0x494] sm:$0xf]
          %v4549 = vld [vmem:[#allocation8 + $0x498] sm:$0xff]
          %v4550 = vld [vmem:[#allocation8 + $0x4a0] sm:$0xf]
          %v4551 = vld [vmem:[#allocation8 + $0x4a4] sm:$0xff]
          %v4552 = vld [vmem:[#allocation8 + $0x4ac] sm:$0xf]
          %v4553 = vld [vmem:[#allocation8 + $0x4b0] sm:$0xff]
          %v4554 = vld [vmem:[#allocation8 + $0x4b8] sm:$0xf]
          %v4555 = vld [vmem:[#allocation8 + $0x4bc] sm:$0xff]
          %v4556 = vld [vmem:[#allocation8 + $0x4c4] sm:$0xf]
          %v4557 = vld [vmem:[#allocation8 + $0x4c8] sm:$0xff]
          %v4558 = vld [vmem:[#allocation8 + $0x4d0] sm:$0xf]
          %v4559 = vld [vmem:[#allocation8 + $0x4d4] sm:$0xff]
          %v4560 = vld [vmem:[#allocation8 + $0x4dc] sm:$0xf]
          %v4561 = vld [vmem:[#allocation8 + $0x4e0] sm:$0xff]
          %v4562 = vld [vmem:[#allocation8 + $0x4e8] sm:$0xf]
          %v4563 = vld [vmem:[#allocation8 + $0x4ec] sm:$0xff]
          %v4564 = vld [vmem:[#allocation8 + $0x4f4] sm:$0xf]
          %v4565 = vld [vmem:[#allocation8 + $0x4f8] sm:$0xff]
          %v4566 = vld [vmem:[#allocation8 + $0x500] sm:$0xf]
          %v4567 = vld [vmem:[#allocation8 + $0x504] sm:$0xff]
          %v4568 = vld [vmem:[#allocation8 + $0x50c] sm:$0xf]
          %v4569 = vld [vmem:[#allocation8 + $0x510] sm:$0xff]
          %v4570 = vld [vmem:[#allocation8 + $0x518] sm:$0xf]
          %v4571 = vld [vmem:[#allocation8 + $0x51c] sm:$0xff]
          %v4572 = vld [vmem:[#allocation8 + $0x524] sm:$0xf]
          %v4573 = vld [vmem:[#allocation8 + $0x528] sm:$0xff]
          %v4574 = vld [vmem:[#allocation8 + $0x530] sm:$0xf]
          %v4575 = vld [vmem:[#allocation8 + $0x534] sm:$0xff]
          %v4576 = vld [vmem:[#allocation8 + $0x53c] sm:$0xf]
          %v4577 = vld [vmem:[#allocation8 + $0x540] sm:$0xff]
          %v4578 = vld [vmem:[#allocation8 + $0x548] sm:$0xf]
          %v4579 = vld [vmem:[#allocation8 + $0x54c] sm:$0xff]
          %v4580 = vld [vmem:[#allocation8 + $0x554] sm:$0xf]
          %v4581 = vld [vmem:[#allocation8 + $0x558] sm:$0xff]
          %v4582 = vld [vmem:[#allocation8 + $0x560] sm:$0xf]
          %v4583 = vld [vmem:[#allocation8 + $0x564] sm:$0xff]
          %v4584 = vld [vmem:[#allocation8 + $0x56c] sm:$0xf]
          %v4585 = vld [vmem:[#allocation8 + $0x570] sm:$0xff]
          %v4586 = vld [vmem:[#allocation8 + $0x578] sm:$0xf]
          %v4587 = vld [vmem:[#allocation8 + $0x57c] sm:$0xff]
          %v4588 = vld [vmem:[#allocation8 + $0x584] sm:$0xf]
          %v4589 = vld [vmem:[#allocation8 + $0x588] sm:$0xff]
          %v4590 = vld [vmem:[#allocation8 + $0x590] sm:$0xf]
          %v4591 = vld [vmem:[#allocation8 + $0x594] sm:$0xff]
          %v4592 = vld [vmem:[#allocation8 + $0x59c] sm:$0xf]
          %v4593 = vld [vmem:[#allocation8 + $0x5a0] sm:$0xff]
          %v4594 = vld [vmem:[#allocation8 + $0x5a8] sm:$0xf]
          %v4595 = vld [vmem:[#allocation8 + $0x5ac] sm:$0xff]
          %v4596 = vld [vmem:[#allocation8 + $0x5b4] sm:$0xf]
          %v4597 = vld [vmem:[#allocation8 + $0x5b8] sm:$0xff]
          %v4598 = vld [vmem:[#allocation8 + $0x5c0] sm:$0xf]
          %v4599 = vld [vmem:[#allocation8 + $0x5c4] sm:$0xff]
          %v4600 = vld [vmem:[#allocation8 + $0x5cc] sm:$0xf]
          %v4601 = vld [vmem:[#allocation8 + $0x5d0] sm:$0xff]
          %v4602 = vld [vmem:[#allocation8 + $0x5d8] sm:$0xf]
          %v4603 = vld [vmem:[#allocation8 + $0x5dc] sm:$0xff]
          %v4604 = vld [vmem:[#allocation8 + $0x5e4] sm:$0xf]
          %v4605 = vld [vmem:[#allocation8 + $0x5e8] sm:$0xff]
          %v4606 = vld [vmem:[#allocation8 + $0x5f0] sm:$0xf]
          %v4607 = vld [vmem:[#allocation8 + $0x5f4] sm:$0xff]
          %v4608 = vld [vmem:[#allocation8 + $0x5fc] sm:$0xf]
          %v4609 = vld [vmem:[#allocation8 + $0x600] sm:$0xff]
          %v4610 = vld [vmem:[#allocation8 + $0x608] sm:$0xf]
          %v4611 = vld [vmem:[#allocation8 + $0x60c] sm:$0xff]
          %v4612 = vld [vmem:[#allocation8 + $0x614] sm:$0xf]
          %v4613 = vld [vmem:[#allocation8 + $0x618] sm:$0xff]
          %v4614 = vld [vmem:[#allocation8 + $0x620] sm:$0xf]
          %v4615 = vld [vmem:[#allocation8 + $0x624] sm:$0xff]
          %v4616 = vld [vmem:[#allocation8 + $0x62c] sm:$0xf]
          %v4617 = vld [vmem:[#allocation8 + $0x630] sm:$0xff]
          %v4618 = vld [vmem:[#allocation8 + $0x638] sm:$0xf]
          %v4619 = vld [vmem:[#allocation8 + $0x63c] sm:$0xff]
          %v4620 = vld [vmem:[#allocation8 + $0x644] sm:$0xf]
          %v4621 = vld [vmem:[#allocation8 + $0x648] sm:$0xff]
          %v4622 = vld [vmem:[#allocation8 + $0x650] sm:$0xf]
          %v4623 = vld [vmem:[#allocation8 + $0x654] sm:$0xff]
          %v4624 = vld [vmem:[#allocation8 + $0x65c] sm:$0xf]
          %v4625 = vld [vmem:[#allocation8 + $0x660] sm:$0xff]
          %v4626 = vld [vmem:[#allocation8 + $0x668] sm:$0xf]
          %v4627 = vld [vmem:[#allocation8 + $0x66c] sm:$0xff]
          %v4628 = vld [vmem:[#allocation8 + $0x674] sm:$0xf]
          %v4629 = vld [vmem:[#allocation8 + $0x678] sm:$0xff]
          %v4630 = vld [vmem:[#allocation8 + $0x680] sm:$0xf]
          %v4631 = vld [vmem:[#allocation8 + $0x684] sm:$0xff]
          %v4632 = vld [vmem:[#allocation8 + $0x68c] sm:$0xf]
          %v4633 = vld [vmem:[#allocation8 + $0x690] sm:$0xff]
          %v4634 = vld [vmem:[#allocation8 + $0x698] sm:$0xf]
          %v4635 = vld [vmem:[#allocation8 + $0x69c] sm:$0xff]
          %v4636 = vld [vmem:[#allocation8 + $0x6a4] sm:$0xf]
          %v4637 = vld [vmem:[#allocation8 + $0x6a8] sm:$0xff]
          %v4638 = vld [vmem:[#allocation8 + $0x6b0] sm:$0xf]
          %v4639 = vld [vmem:[#allocation8 + $0x6b4] sm:$0xff]
          %v4640 = vld [vmem:[#allocation8 + $0x6bc] sm:$0xf]
          %v4641 = vld [vmem:[#allocation8 + $0x6c0] sm:$0xff]
          %v4642 = vld [vmem:[#allocation8 + $0x6c8] sm:$0xf]
          %v4643 = vld [vmem:[#allocation8 + $0x6cc] sm:$0xff]
          %v4644 = vld [vmem:[#allocation8 + $0x6d4] sm:$0xf]
          %v4645 = vld [vmem:[#allocation8 + $0x6d8] sm:$0xff]
          %v4646 = vld [vmem:[#allocation8 + $0x6e0] sm:$0xf]
          %v4647 = vld [vmem:[#allocation8 + $0x6e4] sm:$0xff]
          %v4648 = vld [vmem:[#allocation8 + $0x6ec] sm:$0xf]
          %v4649 = vld [vmem:[#allocation8 + $0x6f0] sm:$0xff]
          %v4650 = vld [vmem:[#allocation8 + $0x6f8] sm:$0xf]
          %v4651 = vld [vmem:[#allocation8 + $0x6fc] sm:$0xff]
          %v4652 = vld [vmem:[#allocation8 + $0x704] sm:$0xf]
          %v4653 = vld [vmem:[#allocation8 + $0x708] sm:$0xff]
          %v4654 = vld [vmem:[#allocation8 + $0x710] sm:$0xf]
          %v4655 = vld [vmem:[#allocation8 + $0x714] sm:$0xff]
          %v4656 = vld [vmem:[#allocation8 + $0x71c] sm:$0xf]
          %v4657 = vld [vmem:[#allocation8 + $0x720] sm:$0xff]
          %v4658 = vld [vmem:[#allocation8 + $0x728] sm:$0xf]
          %v4659 = vld [vmem:[#allocation8 + $0x72c] sm:$0xff]
          %v4660 = vld [vmem:[#allocation8 + $0x734] sm:$0xf]
          %v4661 = vld [vmem:[#allocation8 + $0x738] sm:$0xff]
          %v4662 = vld [vmem:[#allocation8 + $0x740] sm:$0xf]
          %v4663 = vld [vmem:[#allocation8 + $0x744] sm:$0xff]
          %v4664 = vld [vmem:[#allocation8 + $0x74c] sm:$0xf]
          %v4665 = vld [vmem:[#allocation8 + $0x750] sm:$0xff]
          %v4666 = vld [vmem:[#allocation8 + $0x758] sm:$0xf]
          %v4667 = vld [vmem:[#allocation8 + $0x75c] sm:$0xff]
          %v4668 = vld [vmem:[#allocation8 + $0x764] sm:$0xf]
          %v4669 = vld [vmem:[#allocation8 + $0x768] sm:$0xff]
          %v4670 = vld [vmem:[#allocation8 + $0x770] sm:$0xf]
          %v4671 = vld [vmem:[#allocation8 + $0x774] sm:$0xff]
          %v4672 = vld [vmem:[#allocation8 + $0x77c] sm:$0xf]
          %v4673 = vld [vmem:[#allocation8 + $0x780] sm:$0xff]
          %v4674 = vld [vmem:[#allocation8 + $0x788] sm:$0xf]
          %v4675 = vld [vmem:[#allocation8 + $0x78c] sm:$0xff]
          %v4676 = vld [vmem:[#allocation8 + $0x794] sm:$0xf]
          %v4677 = vld [vmem:[#allocation8 + $0x798] sm:$0xff]
          %v4678 = vld [vmem:[#allocation8 + $0x7a0] sm:$0xf]
          %v4679 = vld [vmem:[#allocation8 + $0x7a4] sm:$0xff]
          %v4680 = vld [vmem:[#allocation8 + $0x7ac] sm:$0xf]
          %v4681 = vld [vmem:[#allocation8 + $0x7b0] sm:$0xff]
          %v4682 = vld [vmem:[#allocation8 + $0x7b8] sm:$0xf]
          %v4683 = vld [vmem:[#allocation8 + $0x7bc] sm:$0xff]
          %v4684 = vld [vmem:[#allocation8 + $0x7c4] sm:$0xf]
          %v4685 = vld [vmem:[#allocation8 + $0x7c8] sm:$0xff]
          %v4686 = vld [vmem:[#allocation8 + $0x7d0] sm:$0xf]
          %v4687 = vld [vmem:[#allocation8 + $0x7d4] sm:$0xff]
          %v4688 = vld [vmem:[#allocation8 + $0x7dc] sm:$0xf]
          %v4689 = vld [vmem:[#allocation8 + $0x7e0] sm:$0xff]
          %v4690 = vld [vmem:[#allocation8 + $0x7e8] sm:$0xf]
          %v4691 = vld [vmem:[#allocation8 + $0x7ec] sm:$0xff]
          %v4692 = vld [vmem:[#allocation8 + $0x7f4] sm:$0xf]
          %v4693 = vld [vmem:[#allocation8 + $0x7f8] sm:$0xff]
          %v4694 = vld [vmem:[#allocation8 + $0x800] sm:$0xf]
          %v4695 = vld [vmem:[#allocation8 + $0x804] sm:$0xff]
          %v4696 = vld [vmem:[#allocation8 + $0x80c] sm:$0xf]
          %v4697 = vld [vmem:[#allocation8 + $0x810] sm:$0xff]
          %v4698 = vld [vmem:[#allocation8 + $0x818] sm:$0xf]
          %v4699 = vld [vmem:[#allocation8 + $0x81c] sm:$0xff]
          %v4700 = vld [vmem:[#allocation8 + $0x824] sm:$0xf]
          %v4701 = vld [vmem:[#allocation8 + $0x828] sm:$0xff]
          %v4702 = vld [vmem:[#allocation8 + $0x830] sm:$0xf]
          %v4703 = vld [vmem:[#allocation8 + $0x834] sm:$0xff]
          %v4704 = vld [vmem:[#allocation8 + $0x83c] sm:$0xf]
          %v4705 = vld [vmem:[#allocation8 + $0x840] sm:$0xff]
          %v4706 = vld [vmem:[#allocation8 + $0x848] sm:$0xf]
          %v4707 = vld [vmem:[#allocation8 + $0x84c] sm:$0xff]
          %v4708 = vld [vmem:[#allocation8 + $0x854] sm:$0xf]
          %v4709 = vld [vmem:[#allocation8 + $0x858] sm:$0xff]
          %v4710 = vld [vmem:[#allocation8 + $0x860] sm:$0xf]
          %v4711 = vld [vmem:[#allocation8 + $0x864] sm:$0xff]
          %v4712 = vld [vmem:[#allocation8 + $0x86c] sm:$0xf]
          %v4713 = vld [vmem:[#allocation8 + $0x870] sm:$0xff]
          %v4714 = vld [vmem:[#allocation8 + $0x878] sm:$0xf]
          %v4715 = vld [vmem:[#allocation8 + $0x87c] sm:$0xff]
          %v4716 = vld [vmem:[#allocation8 + $0x884] sm:$0xf]
          %v4717 = vld [vmem:[#allocation8 + $0x888] sm:$0xff]
          %v4718 = vld [vmem:[#allocation8 + $0x890] sm:$0xf]
          %v4719 = vld [vmem:[#allocation8 + $0x894] sm:$0xff]
          %v4720 = vld [vmem:[#allocation8 + $0x89c] sm:$0xf]
          %v4721 = vld [vmem:[#allocation8 + $0x8a0] sm:$0xff]
          %v4722 = vld [vmem:[#allocation8 + $0x8a8] sm:$0xf]
          %v4723 = vld [vmem:[#allocation8 + $0x8ac] sm:$0xff]
          %v4724 = vld [vmem:[#allocation8 + $0x8b4] sm:$0xf]
          %v4725 = vld [vmem:[#allocation8 + $0x8b8] sm:$0xff]
          %v4726 = vld [vmem:[#allocation8 + $0x8c0] sm:$0xf]
          %v4727 = vld [vmem:[#allocation8 + $0x8c4] sm:$0xff]
          %v4728 = vld [vmem:[#allocation8 + $0x8cc] sm:$0xf]
          %v4729 = vld [vmem:[#allocation8 + $0x8d0] sm:$0xff]
          %v4730 = vld [vmem:[#allocation8 + $0x8d8] sm:$0xf]
          %v4731 = vld [vmem:[#allocation8 + $0x8dc] sm:$0xff]
          %v4732 = vld [vmem:[#allocation8 + $0x8e4] sm:$0xf]
          %v4733 = vld [vmem:[#allocation8 + $0x8e8] sm:$0xff]
          %v4734 = vld [vmem:[#allocation8 + $0x8f0] sm:$0xf]
          %v4735 = vld [vmem:[#allocation8 + $0x8f4] sm:$0xff]
          %v4736 = vld [vmem:[#allocation8 + $0x8fc] sm:$0xf]
          %v4737 = vld [vmem:[#allocation8 + $0x900] sm:$0xff]
          %v4738 = vld [vmem:[#allocation8 + $0x908] sm:$0xf]
          %v4739 = vld [vmem:[#allocation8 + $0x90c] sm:$0xff]
          %v4740 = vld [vmem:[#allocation8 + $0x914] sm:$0xf]
          %v4741 = vld [vmem:[#allocation8 + $0x918] sm:$0xff]
          %v4742 = vld [vmem:[#allocation8 + $0x920] sm:$0xf]
          %v4743 = vld [vmem:[#allocation8 + $0x924] sm:$0xff]
          %v4744 = vld [vmem:[#allocation8 + $0x92c] sm:$0xf]
          %v4745 = vld [vmem:[#allocation8 + $0x930] sm:$0xff]
          %v4746 = vld [vmem:[#allocation8 + $0x938] sm:$0xf]
          %v4747 = vld [vmem:[#allocation8 + $0x93c] sm:$0xff]
          %v4748 = vld [vmem:[#allocation8 + $0x944] sm:$0xf]
          %v4749 = vld [vmem:[#allocation8 + $0x948] sm:$0xff]
          %v4750 = vld [vmem:[#allocation8 + $0x950] sm:$0xf]
          %v4751 = vld [vmem:[#allocation8 + $0x954] sm:$0xff]
          %v4752 = vld [vmem:[#allocation8 + $0x95c] sm:$0xf]
          %v4753 = vld [vmem:[#allocation8 + $0x960] sm:$0xff]
          %v4754 = vld [vmem:[#allocation8 + $0x968] sm:$0xf]
          %v4755 = vld [vmem:[#allocation8 + $0x96c] sm:$0xff]
          %v4756 = vld [vmem:[#allocation8 + $0x974] sm:$0xf]
          %v4757 = vld [vmem:[#allocation8 + $0x978] sm:$0xff]
          %v4758 = vld [vmem:[#allocation8 + $0x980] sm:$0xf]
          %v4759 = vld [vmem:[#allocation8 + $0x984] sm:$0xff]
          %v4760 = vld [vmem:[#allocation8 + $0x98c] sm:$0xf]
          %v4761 = vld [vmem:[#allocation8 + $0x990] sm:$0xff]
          %v4762 = vld [vmem:[#allocation8 + $0x998] sm:$0xf]
          %v4763 = vld [vmem:[#allocation8 + $0x99c] sm:$0xff]
          %v4764 = vld [vmem:[#allocation8 + $0x9a4] sm:$0xf]
          %v4765 = vld [vmem:[#allocation8 + $0x9a8] sm:$0xff]
          %v4766 = vld [vmem:[#allocation8 + $0x9b0] sm:$0xf]
          %v4767 = vld [vmem:[#allocation8 + $0x9b4] sm:$0xff]
          %v4768 = vld [vmem:[#allocation8 + $0x9bc] sm:$0xf]
          %v4769 = vld [vmem:[#allocation8 + $0x9c0] sm:$0xff]
          %v4770 = vld [vmem:[#allocation8 + $0x9c8] sm:$0xf]
          %v4771 = vld [vmem:[#allocation8 + $0x9cc] sm:$0xff]
          %v4772 = vld [vmem:[#allocation8 + $0x9d4] sm:$0xf]
          %v4773 = vld [vmem:[#allocation8 + $0x9d8] sm:$0xff]
          %v4774 = vld [vmem:[#allocation8 + $0x9e0] sm:$0xf]
          %v4775 = vld [vmem:[#allocation8 + $0x9e4] sm:$0xff]
          %v4776 = vld [vmem:[#allocation8 + $0x9ec] sm:$0xf]
          %v4777 = vld [vmem:[#allocation8 + $0x9f0] sm:$0xff]
          %v4778 = vld [vmem:[#allocation8 + $0x9f8] sm:$0xf]
          %v4779 = vld [vmem:[#allocation8 + $0x9fc] sm:$0xff]
          %v4780 = vld [vmem:[#allocation8 + $0xa04] sm:$0xf]
          %v4781 = vld [vmem:[#allocation8 + $0xa08] sm:$0xff]
          %v4782 = vld [vmem:[#allocation8 + $0xa10] sm:$0xf]
          %v4783 = vld [vmem:[#allocation8 + $0xa14] sm:$0xff]
          %v4784 = vld [vmem:[#allocation8 + $0xa1c] sm:$0xf]
          %v4785 = vld [vmem:[#allocation8 + $0xa20] sm:$0xff]
          %v4786 = vld [vmem:[#allocation8 + $0xa28] sm:$0xf]
          %v4787 = vld [vmem:[#allocation8 + $0xa2c] sm:$0xff]
          %v4788 = vld [vmem:[#allocation8 + $0xa34] sm:$0xf]
          %v4789 = vld [vmem:[#allocation8 + $0xa38] sm:$0xff]
          %v4790 = vld [vmem:[#allocation8 + $0xa40] sm:$0xf]
          %v4791 = vld [vmem:[#allocation8 + $0xa44] sm:$0xff]
          %v4792 = vld [vmem:[#allocation8 + $0xa4c] sm:$0xf]
          %v4793 = vld [vmem:[#allocation8 + $0xa50] sm:$0xff]
          %v4794 = vld [vmem:[#allocation8 + $0xa58] sm:$0xf]
          %v4795 = vld [vmem:[#allocation8 + $0xa5c] sm:$0xff]
          %v4796 = vld [vmem:[#allocation8 + $0xa64] sm:$0xf]
          %v4797 = vld [vmem:[#allocation8 + $0xa68] sm:$0xff]
          %v4798 = vld [vmem:[#allocation8 + $0xa70] sm:$0xf]
          %v4799 = vld [vmem:[#allocation8 + $0xa74] sm:$0xff]
          %v4800 = vld [vmem:[#allocation8 + $0xa7c] sm:$0xf]
          %v4801 = vld [vmem:[#allocation8 + $0xa80] sm:$0xff]
          %v4802 = vld [vmem:[#allocation8 + $0xa88] sm:$0xf]
          %v4803 = vld [vmem:[#allocation8 + $0xa8c] sm:$0xff]
          %v4804 = vld [vmem:[#allocation8 + $0xa94] sm:$0xf]
          %v4805 = vld [vmem:[#allocation8 + $0xa98] sm:$0xff]
          %v4806 = vld [vmem:[#allocation8 + $0xaa0] sm:$0xf]
          %v4807 = vld [vmem:[#allocation8 + $0xaa4] sm:$0xff]
          %v4808 = vld [vmem:[#allocation8 + $0xaac] sm:$0xf]
          %v4809 = vld [vmem:[#allocation8 + $0xab0] sm:$0xff]
          %v4810 = vld [vmem:[#allocation8 + $0xab8] sm:$0xf]
          %v4811 = vld [vmem:[#allocation8 + $0xabc] sm:$0xff]
          %v4812 = vld [vmem:[#allocation8 + $0xac4] sm:$0xf]
          %v4813 = vld [vmem:[#allocation8 + $0xac8] sm:$0xff]
          %v4814 = vld [vmem:[#allocation8 + $0xad0] sm:$0xf]
          %v4815 = vld [vmem:[#allocation8 + $0xad4] sm:$0xff]
          %v4816 = vld [vmem:[#allocation8 + $0xadc] sm:$0xf]
          %v4817 = vld [vmem:[#allocation8 + $0xae0] sm:$0xff]
          %v4818 = vld [vmem:[#allocation8 + $0xae8] sm:$0xf]
          %v4819 = vld [vmem:[#allocation8 + $0xaec] sm:$0xff]
          %v4820 = vld [vmem:[#allocation8 + $0xaf4] sm:$0xf]
          %v4821 = vld [vmem:[#allocation8 + $0xaf8] sm:$0xff]
          %v4822 = vld [vmem:[#allocation8 + $0xb00] sm:$0xf]
          %v4823 = vld [vmem:[#allocation8 + $0xb04] sm:$0xff]
          %v4824 = vld [vmem:[#allocation8 + $0xb0c] sm:$0xf]
          %v4825 = vld [vmem:[#allocation8 + $0xb10] sm:$0xff]
          %v4826 = vld [vmem:[#allocation8 + $0xb18] sm:$0xf]
          %v4827 = vld [vmem:[#allocation8 + $0xb1c] sm:$0xff]
          %v4828 = vld [vmem:[#allocation8 + $0xb24] sm:$0xf]
          %v4829 = vld [vmem:[#allocation8 + $0xb28] sm:$0xff]
          %v4830 = vld [vmem:[#allocation8 + $0xb30] sm:$0xf]
          %v4831 = vld [vmem:[#allocation8 + $0xb34] sm:$0xff]
          %v4832 = vld [vmem:[#allocation8 + $0xb3c] sm:$0xf]
          %v4833 = vld [vmem:[#allocation10] sm:$0x7]
          %v4835 = vlaneseq
          %v4836 = vshrl.u32 %v4835, 7
          %v4837 = vsub.s32 0, %v4836
          %v4838 = vrot.slane %v4833, %v4837
          %v4839 = vlaneseq
          %v4840 = vshrl.u32 %v4839, 7
          %v4841 = vsub.s32 1, %v4840
          %v4842 = vrot.slane %v4833, %v4841
          %v4843 = vlaneseq
          %v4844 = vshrl.u32 %v4843, 7
          %v4845 = vsub.s32 2, %v4844
          %v4846 = vrot.slane %v4833, %v4845
          %v5330 = vunpack.c.l.b16 %v4353
          %v5331 = vunpack.c.h.b16 %v4353
          %v5332 = vunpack.c.l.b16 %v4354
          %v5333 = vunpack.c.l.b16 %v4355
          %v5334 = vunpack.c.h.b16 %v4355
          %v5335 = vunpack.c.l.b16 %v4356
          %v5336 = vunpack.c.l.b16 %v4357
          %v5337 = vunpack.c.h.b16 %v4357
          %v5338 = vunpack.c.l.b16 %v4358
          %v5339 = vunpack.c.l.b16 %v4359
          %v5340 = vunpack.c.h.b16 %v4359
          %v5341 = vunpack.c.l.b16 %v4360
          %v5342 = vunpack.c.l.b16 %v4361
          %v5343 = vunpack.c.h.b16 %v4361
          %v5344 = vunpack.c.l.b16 %v4362
          %v5345 = vunpack.c.l.b16 %v4363
          %v5346 = vunpack.c.h.b16 %v4363
          %v5347 = vunpack.c.l.b16 %v4364
          %v5348 = vunpack.c.l.b16 %v4365
          %v5349 = vunpack.c.h.b16 %v4365
          %v5350 = vunpack.c.l.b16 %v4366
          %v5351 = vunpack.c.l.b16 %v4367
          %v5352 = vunpack.c.h.b16 %v4367
          %v5353 = vunpack.c.l.b16 %v4368
          %v5354 = vunpack.c.l.b16 %v4369
          %v5355 = vunpack.c.h.b16 %v4369
          %v5356 = vunpack.c.l.b16 %v4370
          %v5357 = vunpack.c.l.b16 %v4371
          %v5358 = vunpack.c.h.b16 %v4371
          %v5359 = vunpack.c.l.b16 %v4372
          %v5360 = vunpack.c.l.b16 %v4373
          %v5361 = vunpack.c.h.b16 %v4373
          %v5362 = vunpack.c.l.b16 %v4374
          %v5363 = vunpack.c.l.b16 %v4375
          %v5364 = vunpack.c.h.b16 %v4375
          %v5365 = vunpack.c.l.b16 %v4376
          %v5366 = vunpack.c.l.b16 %v4377
          %v5367 = vunpack.c.h.b16 %v4377
          %v5368 = vunpack.c.l.b16 %v4378
          %v5369 = vunpack.c.l.b16 %v4379
          %v5370 = vunpack.c.h.b16 %v4379
          %v5371 = vunpack.c.l.b16 %v4380
          %v5372 = vunpack.c.l.b16 %v4381
          %v5373 = vunpack.c.h.b16 %v4381
          %v5374 = vunpack.c.l.b16 %v4382
          %v5375 = vunpack.c.l.b16 %v4383
          %v5376 = vunpack.c.h.b16 %v4383
          %v5377 = vunpack.c.l.b16 %v4384
          %v5378 = vunpack.c.l.b16 %v4385
          %v5379 = vunpack.c.h.b16 %v4385
          %v5380 = vunpack.c.l.b16 %v4386
          %v5381 = vunpack.c.l.b16 %v4387
          %v5382 = vunpack.c.h.b16 %v4387
          %v5383 = vunpack.c.l.b16 %v4388
          %v5384 = vunpack.c.l.b16 %v4389
          %v5385 = vunpack.c.h.b16 %v4389
          %v5386 = vunpack.c.l.b16 %v4390
          %v5387 = vunpack.c.l.b16 %v4391
          %v5388 = vunpack.c.h.b16 %v4391
          %v5389 = vunpack.c.l.b16 %v4392
          %v5390 = vunpack.c.l.b16 %v4393
          %v5391 = vunpack.c.h.b16 %v4393
          %v5392 = vunpack.c.l.b16 %v4394
          %v5393 = vunpack.c.l.b16 %v4395
          %v5394 = vunpack.c.h.b16 %v4395
          %v5395 = vunpack.c.l.b16 %v4396
          %v5396 = vunpack.c.l.b16 %v4397
          %v5397 = vunpack.c.h.b16 %v4397
          %v5398 = vunpack.c.l.b16 %v4398
          %v5399 = vunpack.c.l.b16 %v4399
          %v5400 = vunpack.c.h.b16 %v4399
          %v5401 = vunpack.c.l.b16 %v4400
          %v5402 = vunpack.c.l.b16 %v4401
          %v5403 = vunpack.c.h.b16 %v4401
          %v5404 = vunpack.c.l.b16 %v4402
          %v5405 = vunpack.c.l.b16 %v4403
          %v5406 = vunpack.c.h.b16 %v4403
          %v5407 = vunpack.c.l.b16 %v4404
          %v5408 = vunpack.c.l.b16 %v4405
          %v5409 = vunpack.c.h.b16 %v4405
          %v5410 = vunpack.c.l.b16 %v4406
          %v5411 = vunpack.c.l.b16 %v4407
          %v5412 = vunpack.c.h.b16 %v4407
          %v5413 = vunpack.c.l.b16 %v4408
          %v5414 = vunpack.c.l.b16 %v4409
          %v5415 = vunpack.c.h.b16 %v4409
          %v5416 = vunpack.c.l.b16 %v4410
          %v5417 = vunpack.c.l.b16 %v4411
          %v5418 = vunpack.c.h.b16 %v4411
          %v5419 = vunpack.c.l.b16 %v4412
          %v5420 = vunpack.c.l.b16 %v4413
          %v5421 = vunpack.c.h.b16 %v4413
          %v5422 = vunpack.c.l.b16 %v4414
          %v5423 = vunpack.c.l.b16 %v4415
          %v5424 = vunpack.c.h.b16 %v4415
          %v5425 = vunpack.c.l.b16 %v4416
          %v5426 = vunpack.c.l.b16 %v4417
          %v5427 = vunpack.c.h.b16 %v4417
          %v5428 = vunpack.c.l.b16 %v4418
          %v5429 = vunpack.c.l.b16 %v4419
          %v5430 = vunpack.c.h.b16 %v4419
          %v5431 = vunpack.c.l.b16 %v4420
          %v5432 = vunpack.c.l.b16 %v4421
          %v5433 = vunpack.c.h.b16 %v4421
          %v5434 = vunpack.c.l.b16 %v4422
          %v5435 = vunpack.c.l.b16 %v4423
          %v5436 = vunpack.c.h.b16 %v4423
          %v5437 = vunpack.c.l.b16 %v4424
          %v5438 = vunpack.c.l.b16 %v4425
          %v5439 = vunpack.c.h.b16 %v4425
          %v5440 = vunpack.c.l.b16 %v4426
          %v5441 = vunpack.c.l.b16 %v4427
          %v5442 = vunpack.c.h.b16 %v4427
          %v5443 = vunpack.c.l.b16 %v4428
          %v5444 = vunpack.c.l.b16 %v4429
          %v5445 = vunpack.c.h.b16 %v4429
          %v5446 = vunpack.c.l.b16 %v4430
          %v5447 = vunpack.c.l.b16 %v4431
          %v5448 = vunpack.c.h.b16 %v4431
          %v5449 = vunpack.c.l.b16 %v4432
          %v5450 = vunpack.c.l.b16 %v4433
          %v5451 = vunpack.c.h.b16 %v4433
          %v5452 = vunpack.c.l.b16 %v4434
          %v5453 = vunpack.c.l.b16 %v4435
          %v5454 = vunpack.c.h.b16 %v4435
          %v5455 = vunpack.c.l.b16 %v4436
          %v5456 = vunpack.c.l.b16 %v4437
          %v5457 = vunpack.c.h.b16 %v4437
          %v5458 = vunpack.c.l.b16 %v4438
          %v5459 = vunpack.c.l.b16 %v4439
          %v5460 = vunpack.c.h.b16 %v4439
          %v5461 = vunpack.c.l.b16 %v4440
          %v5462 = vunpack.c.l.b16 %v4441
          %v5463 = vunpack.c.h.b16 %v4441
          %v5464 = vunpack.c.l.b16 %v4442
          %v5465 = vunpack.c.l.b16 %v4443
          %v5466 = vunpack.c.h.b16 %v4443
          %v5467 = vunpack.c.l.b16 %v4444
          %v5468 = vunpack.c.l.b16 %v4445
          %v5469 = vunpack.c.h.b16 %v4445
          %v5470 = vunpack.c.l.b16 %v4446
          %v5471 = vunpack.c.l.b16 %v4447
          %v5472 = vunpack.c.h.b16 %v4447
          %v5473 = vunpack.c.l.b16 %v4448
          %v5474 = vunpack.c.l.b16 %v4449
          %v5475 = vunpack.c.h.b16 %v4449
          %v5476 = vunpack.c.l.b16 %v4450
          %v5477 = vunpack.c.l.b16 %v4451
          %v5478 = vunpack.c.h.b16 %v4451
          %v5479 = vunpack.c.l.b16 %v4452
          %v5480 = vunpack.c.l.b16 %v4453
          %v5481 = vunpack.c.h.b16 %v4453
          %v5482 = vunpack.c.l.b16 %v4454
          %v5483 = vunpack.c.l.b16 %v4455
          %v5484 = vunpack.c.h.b16 %v4455
          %v5485 = vunpack.c.l.b16 %v4456
          %v5486 = vunpack.c.l.b16 %v4457
          %v5487 = vunpack.c.h.b16 %v4457
          %v5488 = vunpack.c.l.b16 %v4458
          %v5489 = vunpack.c.l.b16 %v4459
          %v5490 = vunpack.c.h.b16 %v4459
          %v5491 = vunpack.c.l.b16 %v4460
          %v5492 = vunpack.c.l.b16 %v4461
          %v5493 = vunpack.c.h.b16 %v4461
          %v5494 = vunpack.c.l.b16 %v4462
          %v5495 = vunpack.c.l.b16 %v4463
          %v5496 = vunpack.c.h.b16 %v4463
          %v5497 = vunpack.c.l.b16 %v4464
          %v5498 = vunpack.c.l.b16 %v4465
          %v5499 = vunpack.c.h.b16 %v4465
          %v5500 = vunpack.c.l.b16 %v4466
          %v5501 = vunpack.c.l.b16 %v4467
          %v5502 = vunpack.c.h.b16 %v4467
          %v5503 = vunpack.c.l.b16 %v4468
          %v5504 = vunpack.c.l.b16 %v4469
          %v5505 = vunpack.c.h.b16 %v4469
          %v5506 = vunpack.c.l.b16 %v4470
          %v5507 = vunpack.c.l.b16 %v4471
          %v5508 = vunpack.c.h.b16 %v4471
          %v5509 = vunpack.c.l.b16 %v4472
          %v5510 = vunpack.c.l.b16 %v4473
          %v5511 = vunpack.c.h.b16 %v4473
          %v5512 = vunpack.c.l.b16 %v4474
          %v5513 = vunpack.c.l.b16 %v4475
          %v5514 = vunpack.c.h.b16 %v4475
          %v5515 = vunpack.c.l.b16 %v4476
          %v5516 = vunpack.c.l.b16 %v4477
          %v5517 = vunpack.c.h.b16 %v4477
          %v5518 = vunpack.c.l.b16 %v4478
          %v5519 = vunpack.c.l.b16 %v4479
          %v5520 = vunpack.c.h.b16 %v4479
          %v5521 = vunpack.c.l.b16 %v4480
          %v5522 = vunpack.c.l.b16 %v4481
          %v5523 = vunpack.c.h.b16 %v4481
          %v5524 = vunpack.c.l.b16 %v4482
          %v5525 = vunpack.c.l.b16 %v4483
          %v5526 = vunpack.c.h.b16 %v4483
          %v5527 = vunpack.c.l.b16 %v4484
          %v5528 = vunpack.c.l.b16 %v4485
          %v5529 = vunpack.c.h.b16 %v4485
          %v5530 = vunpack.c.l.b16 %v4486
          %v5531 = vunpack.c.l.b16 %v4487
          %v5532 = vunpack.c.h.b16 %v4487
          %v5533 = vunpack.c.l.b16 %v4488
          %v5534 = vunpack.c.l.b16 %v4489
          %v5535 = vunpack.c.h.b16 %v4489
          %v5536 = vunpack.c.l.b16 %v4490
          %v5537 = vunpack.c.l.b16 %v4491
          %v5538 = vunpack.c.h.b16 %v4491
          %v5539 = vunpack.c.l.b16 %v4492
          %v5540 = vunpack.c.l.b16 %v4493
          %v5541 = vunpack.c.h.b16 %v4493
          %v5542 = vunpack.c.l.b16 %v4494
          %v5543 = vunpack.c.l.b16 %v4495
          %v5544 = vunpack.c.h.b16 %v4495
          %v5545 = vunpack.c.l.b16 %v4496
          %v5546 = vunpack.c.l.b16 %v4497
          %v5547 = vunpack.c.h.b16 %v4497
          %v5548 = vunpack.c.l.b16 %v4498
          %v5549 = vunpack.c.l.b16 %v4499
          %v5550 = vunpack.c.h.b16 %v4499
          %v5551 = vunpack.c.l.b16 %v4500
          %v5552 = vunpack.c.l.b16 %v4501
          %v5553 = vunpack.c.h.b16 %v4501
          %v5554 = vunpack.c.l.b16 %v4502
          %v5555 = vunpack.c.l.b16 %v4503
          %v5556 = vunpack.c.h.b16 %v4503
          %v5557 = vunpack.c.l.b16 %v4504
          %v5558 = vunpack.c.l.b16 %v4505
          %v5559 = vunpack.c.h.b16 %v4505
          %v5560 = vunpack.c.l.b16 %v4506
          %v5561 = vunpack.c.l.b16 %v4507
          %v5562 = vunpack.c.h.b16 %v4507
          %v5563 = vunpack.c.l.b16 %v4508
          %v5564 = vunpack.c.l.b16 %v4509
          %v5565 = vunpack.c.h.b16 %v4509
          %v5566 = vunpack.c.l.b16 %v4510
          %v5567 = vunpack.c.l.b16 %v4511
          %v5568 = vunpack.c.h.b16 %v4511
          %v5569 = vunpack.c.l.b16 %v4512
          %v5570 = vunpack.c.l.b16 %v4513
          %v5571 = vunpack.c.h.b16 %v4513
          %v5572 = vunpack.c.l.b16 %v4514
          %v5573 = vunpack.c.l.b16 %v4515
          %v5574 = vunpack.c.h.b16 %v4515
          %v5575 = vunpack.c.l.b16 %v4516
          %v5576 = vunpack.c.l.b16 %v4517
          %v5577 = vunpack.c.h.b16 %v4517
          %v5578 = vunpack.c.l.b16 %v4518
          %v5579 = vunpack.c.l.b16 %v4519
          %v5580 = vunpack.c.h.b16 %v4519
          %v5581 = vunpack.c.l.b16 %v4520
          %v5582 = vunpack.c.l.b16 %v4521
          %v5583 = vunpack.c.h.b16 %v4521
          %v5584 = vunpack.c.l.b16 %v4522
          %v5585 = vunpack.c.l.b16 %v4523
          %v5586 = vunpack.c.h.b16 %v4523
          %v5587 = vunpack.c.l.b16 %v4524
          %v5588 = vunpack.c.l.b16 %v4525
          %v5589 = vunpack.c.h.b16 %v4525
          %v5590 = vunpack.c.l.b16 %v4526
          %v5591 = vunpack.c.l.b16 %v4527
          %v5592 = vunpack.c.h.b16 %v4527
          %v5593 = vunpack.c.l.b16 %v4528
          %v5594 = vunpack.c.l.b16 %v4529
          %v5595 = vunpack.c.h.b16 %v4529
          %v5596 = vunpack.c.l.b16 %v4530
          %v5597 = vunpack.c.l.b16 %v4531
          %v5598 = vunpack.c.h.b16 %v4531
          %v5599 = vunpack.c.l.b16 %v4532
          %v5600 = vunpack.c.l.b16 %v4533
          %v5601 = vunpack.c.h.b16 %v4533
          %v5602 = vunpack.c.l.b16 %v4534
          %v5603 = vunpack.c.l.b16 %v4535
          %v5604 = vunpack.c.h.b16 %v4535
          %v5605 = vunpack.c.l.b16 %v4536
          %v5606 = vunpack.c.l.b16 %v4537
          %v5607 = vunpack.c.h.b16 %v4537
          %v5608 = vunpack.c.l.b16 %v4538
          %v5609 = vunpack.c.l.b16 %v4539
          %v5610 = vunpack.c.h.b16 %v4539
          %v5611 = vunpack.c.l.b16 %v4540
          %v5612 = vunpack.c.l.b16 %v4541
          %v5613 = vunpack.c.h.b16 %v4541
          %v5614 = vunpack.c.l.b16 %v4542
          %v5615 = vunpack.c.l.b16 %v4543
          %v5616 = vunpack.c.h.b16 %v4543
          %v5617 = vunpack.c.l.b16 %v4544
          %v5618 = vunpack.c.l.b16 %v4545
          %v5619 = vunpack.c.h.b16 %v4545
          %v5620 = vunpack.c.l.b16 %v4546
          %v5621 = vunpack.c.l.b16 %v4547
          %v5622 = vunpack.c.h.b16 %v4547
          %v5623 = vunpack.c.l.b16 %v4548
          %v5624 = vunpack.c.l.b16 %v4549
          %v5625 = vunpack.c.h.b16 %v4549
          %v5626 = vunpack.c.l.b16 %v4550
          %v5627 = vunpack.c.l.b16 %v4551
          %v5628 = vunpack.c.h.b16 %v4551
          %v5629 = vunpack.c.l.b16 %v4552
          %v5630 = vunpack.c.l.b16 %v4553
          %v5631 = vunpack.c.h.b16 %v4553
          %v5632 = vunpack.c.l.b16 %v4554
          %v5633 = vunpack.c.l.b16 %v4555
          %v5634 = vunpack.c.h.b16 %v4555
          %v5635 = vunpack.c.l.b16 %v4556
          %v5636 = vunpack.c.l.b16 %v4557
          %v5637 = vunpack.c.h.b16 %v4557
          %v5638 = vunpack.c.l.b16 %v4558
          %v5639 = vunpack.c.l.b16 %v4559
          %v5640 = vunpack.c.h.b16 %v4559
          %v5641 = vunpack.c.l.b16 %v4560
          %v5642 = vunpack.c.l.b16 %v4561
          %v5643 = vunpack.c.h.b16 %v4561
          %v5644 = vunpack.c.l.b16 %v4562
          %v5645 = vunpack.c.l.b16 %v4563
          %v5646 = vunpack.c.h.b16 %v4563
          %v5647 = vunpack.c.l.b16 %v4564
          %v5648 = vunpack.c.l.b16 %v4565
          %v5649 = vunpack.c.h.b16 %v4565
          %v5650 = vunpack.c.l.b16 %v4566
          %v5651 = vunpack.c.l.b16 %v4567
          %v5652 = vunpack.c.h.b16 %v4567
          %v5653 = vunpack.c.l.b16 %v4568
          %v5654 = vunpack.c.l.b16 %v4569
          %v5655 = vunpack.c.h.b16 %v4569
          %v5656 = vunpack.c.l.b16 %v4570
          %v5657 = vunpack.c.l.b16 %v4571
          %v5658 = vunpack.c.h.b16 %v4571
          %v5659 = vunpack.c.l.b16 %v4572
          %v5660 = vunpack.c.l.b16 %v4573
          %v5661 = vunpack.c.h.b16 %v4573
          %v5662 = vunpack.c.l.b16 %v4574
          %v5663 = vunpack.c.l.b16 %v4575
          %v5664 = vunpack.c.h.b16 %v4575
          %v5665 = vunpack.c.l.b16 %v4576
          %v5666 = vunpack.c.l.b16 %v4577
          %v5667 = vunpack.c.h.b16 %v4577
          %v5668 = vunpack.c.l.b16 %v4578
          %v5669 = vunpack.c.l.b16 %v4579
          %v5670 = vunpack.c.h.b16 %v4579
          %v5671 = vunpack.c.l.b16 %v4580
          %v5672 = vunpack.c.l.b16 %v4581
          %v5673 = vunpack.c.h.b16 %v4581
          %v5674 = vunpack.c.l.b16 %v4582
          %v5675 = vunpack.c.l.b16 %v4583
          %v5676 = vunpack.c.h.b16 %v4583
          %v5677 = vunpack.c.l.b16 %v4584
          %v5678 = vunpack.c.l.b16 %v4585
          %v5679 = vunpack.c.h.b16 %v4585
          %v5680 = vunpack.c.l.b16 %v4586
          %v5681 = vunpack.c.l.b16 %v4587
          %v5682 = vunpack.c.h.b16 %v4587
          %v5683 = vunpack.c.l.b16 %v4588
          %v5684 = vunpack.c.l.b16 %v4589
          %v5685 = vunpack.c.h.b16 %v4589
          %v5686 = vunpack.c.l.b16 %v4590
          %v5687 = vunpack.c.l.b16 %v4591
          %v5688 = vunpack.c.h.b16 %v4591
          %v5689 = vunpack.c.l.b16 %v4592
          %v5690 = vunpack.c.l.b16 %v4593
          %v5691 = vunpack.c.h.b16 %v4593
          %v5692 = vunpack.c.l.b16 %v4594
          %v5693 = vunpack.c.l.b16 %v4595
          %v5694 = vunpack.c.h.b16 %v4595
          %v5695 = vunpack.c.l.b16 %v4596
          %v5696 = vunpack.c.l.b16 %v4597
          %v5697 = vunpack.c.h.b16 %v4597
          %v5698 = vunpack.c.l.b16 %v4598
          %v5699 = vunpack.c.l.b16 %v4599
          %v5700 = vunpack.c.h.b16 %v4599
          %v5701 = vunpack.c.l.b16 %v4600
          %v5702 = vunpack.c.l.b16 %v4601
          %v5703 = vunpack.c.h.b16 %v4601
          %v5704 = vunpack.c.l.b16 %v4602
          %v5705 = vunpack.c.l.b16 %v4603
          %v5706 = vunpack.c.h.b16 %v4603
          %v5707 = vunpack.c.l.b16 %v4604
          %v5708 = vunpack.c.l.b16 %v4605
          %v5709 = vunpack.c.h.b16 %v4605
          %v5710 = vunpack.c.l.b16 %v4606
          %v5711 = vunpack.c.l.b16 %v4607
          %v5712 = vunpack.c.h.b16 %v4607
          %v5713 = vunpack.c.l.b16 %v4608
          %v5714 = vunpack.c.l.b16 %v4609
          %v5715 = vunpack.c.h.b16 %v4609
          %v5716 = vunpack.c.l.b16 %v4610
          %v5717 = vunpack.c.l.b16 %v4611
          %v5718 = vunpack.c.h.b16 %v4611
          %v5719 = vunpack.c.l.b16 %v4612
          %v5720 = vunpack.c.l.b16 %v4613
          %v5721 = vunpack.c.h.b16 %v4613
          %v5722 = vunpack.c.l.b16 %v4614
          %v5723 = vunpack.c.l.b16 %v4615
          %v5724 = vunpack.c.h.b16 %v4615
          %v5725 = vunpack.c.l.b16 %v4616
          %v5726 = vunpack.c.l.b16 %v4617
          %v5727 = vunpack.c.h.b16 %v4617
          %v5728 = vunpack.c.l.b16 %v4618
          %v5729 = vunpack.c.l.b16 %v4619
          %v5730 = vunpack.c.h.b16 %v4619
          %v5731 = vunpack.c.l.b16 %v4620
          %v5732 = vunpack.c.l.b16 %v4621
          %v5733 = vunpack.c.h.b16 %v4621
          %v5734 = vunpack.c.l.b16 %v4622
          %v5735 = vunpack.c.l.b16 %v4623
          %v5736 = vunpack.c.h.b16 %v4623
          %v5737 = vunpack.c.l.b16 %v4624
          %v5738 = vunpack.c.l.b16 %v4625
          %v5739 = vunpack.c.h.b16 %v4625
          %v5740 = vunpack.c.l.b16 %v4626
          %v5741 = vunpack.c.l.b16 %v4627
          %v5742 = vunpack.c.h.b16 %v4627
          %v5743 = vunpack.c.l.b16 %v4628
          %v5744 = vunpack.c.l.b16 %v4629
          %v5745 = vunpack.c.h.b16 %v4629
          %v5746 = vunpack.c.l.b16 %v4630
          %v5747 = vunpack.c.l.b16 %v4631
          %v5748 = vunpack.c.h.b16 %v4631
          %v5749 = vunpack.c.l.b16 %v4632
          %v5750 = vunpack.c.l.b16 %v4633
          %v5751 = vunpack.c.h.b16 %v4633
          %v5752 = vunpack.c.l.b16 %v4634
          %v5753 = vunpack.c.l.b16 %v4635
          %v5754 = vunpack.c.h.b16 %v4635
          %v5755 = vunpack.c.l.b16 %v4636
          %v5756 = vunpack.c.l.b16 %v4637
          %v5757 = vunpack.c.h.b16 %v4637
          %v5758 = vunpack.c.l.b16 %v4638
          %v5759 = vunpack.c.l.b16 %v4639
          %v5760 = vunpack.c.h.b16 %v4639
          %v5761 = vunpack.c.l.b16 %v4640
          %v5762 = vunpack.c.l.b16 %v4641
          %v5763 = vunpack.c.h.b16 %v4641
          %v5764 = vunpack.c.l.b16 %v4642
          %v5765 = vunpack.c.l.b16 %v4643
          %v5766 = vunpack.c.h.b16 %v4643
          %v5767 = vunpack.c.l.b16 %v4644
          %v5768 = vunpack.c.l.b16 %v4645
          %v5769 = vunpack.c.h.b16 %v4645
          %v5770 = vunpack.c.l.b16 %v4646
          %v5771 = vunpack.c.l.b16 %v4647
          %v5772 = vunpack.c.h.b16 %v4647
          %v5773 = vunpack.c.l.b16 %v4648
          %v5774 = vunpack.c.l.b16 %v4649
          %v5775 = vunpack.c.h.b16 %v4649
          %v5776 = vunpack.c.l.b16 %v4650
          %v5777 = vunpack.c.l.b16 %v4651
          %v5778 = vunpack.c.h.b16 %v4651
          %v5779 = vunpack.c.l.b16 %v4652
          %v5780 = vunpack.c.l.b16 %v4653
          %v5781 = vunpack.c.h.b16 %v4653
          %v5782 = vunpack.c.l.b16 %v4654
          %v5783 = vunpack.c.l.b16 %v4655
          %v5784 = vunpack.c.h.b16 %v4655
          %v5785 = vunpack.c.l.b16 %v4656
          %v5786 = vunpack.c.l.b16 %v4657
          %v5787 = vunpack.c.h.b16 %v4657
          %v5788 = vunpack.c.l.b16 %v4658
          %v5789 = vunpack.c.l.b16 %v4659
          %v5790 = vunpack.c.h.b16 %v4659
          %v5791 = vunpack.c.l.b16 %v4660
          %v5792 = vunpack.c.l.b16 %v4661
          %v5793 = vunpack.c.h.b16 %v4661
          %v5794 = vunpack.c.l.b16 %v4662
          %v5795 = vunpack.c.l.b16 %v4663
          %v5796 = vunpack.c.h.b16 %v4663
          %v5797 = vunpack.c.l.b16 %v4664
          %v5798 = vunpack.c.l.b16 %v4665
          %v5799 = vunpack.c.h.b16 %v4665
          %v5800 = vunpack.c.l.b16 %v4666
          %v5801 = vunpack.c.l.b16 %v4667
          %v5802 = vunpack.c.h.b16 %v4667
          %v5803 = vunpack.c.l.b16 %v4668
          %v5804 = vunpack.c.l.b16 %v4669
          %v5805 = vunpack.c.h.b16 %v4669
          %v5806 = vunpack.c.l.b16 %v4670
          %v5807 = vunpack.c.l.b16 %v4671
          %v5808 = vunpack.c.h.b16 %v4671
          %v5809 = vunpack.c.l.b16 %v4672
          %v5810 = vunpack.c.l.b16 %v4673
          %v5811 = vunpack.c.h.b16 %v4673
          %v5812 = vunpack.c.l.b16 %v4674
          %v5813 = vunpack.c.l.b16 %v4675
          %v5814 = vunpack.c.h.b16 %v4675
          %v5815 = vunpack.c.l.b16 %v4676
          %v5816 = vunpack.c.l.b16 %v4677
          %v5817 = vunpack.c.h.b16 %v4677
          %v5818 = vunpack.c.l.b16 %v4678
          %v5819 = vunpack.c.l.b16 %v4679
          %v5820 = vunpack.c.h.b16 %v4679
          %v5821 = vunpack.c.l.b16 %v4680
          %v5822 = vunpack.c.l.b16 %v4681
          %v5823 = vunpack.c.h.b16 %v4681
          %v5824 = vunpack.c.l.b16 %v4682
          %v5825 = vunpack.c.l.b16 %v4683
          %v5826 = vunpack.c.h.b16 %v4683
          %v5827 = vunpack.c.l.b16 %v4684
          %v5828 = vunpack.c.l.b16 %v4685
          %v5829 = vunpack.c.h.b16 %v4685
          %v5830 = vunpack.c.l.b16 %v4686
          %v5831 = vunpack.c.l.b16 %v4687
          %v5832 = vunpack.c.h.b16 %v4687
          %v5833 = vunpack.c.l.b16 %v4688
          %v5834 = vunpack.c.l.b16 %v4689
          %v5835 = vunpack.c.h.b16 %v4689
          %v5836 = vunpack.c.l.b16 %v4690
          %v5837 = vunpack.c.l.b16 %v4691
          %v5838 = vunpack.c.h.b16 %v4691
          %v5839 = vunpack.c.l.b16 %v4692
          %v5840 = vunpack.c.l.b16 %v4693
          %v5841 = vunpack.c.h.b16 %v4693
          %v5842 = vunpack.c.l.b16 %v4694
          %v5843 = vunpack.c.l.b16 %v4695
          %v5844 = vunpack.c.h.b16 %v4695
          %v5845 = vunpack.c.l.b16 %v4696
          %v5846 = vunpack.c.l.b16 %v4697
          %v5847 = vunpack.c.h.b16 %v4697
          %v5848 = vunpack.c.l.b16 %v4698
          %v5849 = vunpack.c.l.b16 %v4699
          %v5850 = vunpack.c.h.b16 %v4699
          %v5851 = vunpack.c.l.b16 %v4700
          %v5852 = vunpack.c.l.b16 %v4701
          %v5853 = vunpack.c.h.b16 %v4701
          %v5854 = vunpack.c.l.b16 %v4702
          %v5855 = vunpack.c.l.b16 %v4703
          %v5856 = vunpack.c.h.b16 %v4703
          %v5857 = vunpack.c.l.b16 %v4704
          %v5858 = vunpack.c.l.b16 %v4705
          %v5859 = vunpack.c.h.b16 %v4705
          %v5860 = vunpack.c.l.b16 %v4706
          %v5861 = vunpack.c.l.b16 %v4707
          %v5862 = vunpack.c.h.b16 %v4707
          %v5863 = vunpack.c.l.b16 %v4708
          %v5864 = vunpack.c.l.b16 %v4709
          %v5865 = vunpack.c.h.b16 %v4709
          %v5866 = vunpack.c.l.b16 %v4710
          %v5867 = vunpack.c.l.b16 %v4711
          %v5868 = vunpack.c.h.b16 %v4711
          %v5869 = vunpack.c.l.b16 %v4712
          %v5870 = vunpack.c.l.b16 %v4713
          %v5871 = vunpack.c.h.b16 %v4713
          %v5872 = vunpack.c.l.b16 %v4714
          %v5873 = vunpack.c.l.b16 %v4715
          %v5874 = vunpack.c.h.b16 %v4715
          %v5875 = vunpack.c.l.b16 %v4716
          %v5876 = vunpack.c.l.b16 %v4717
          %v5877 = vunpack.c.h.b16 %v4717
          %v5878 = vunpack.c.l.b16 %v4718
          %v5879 = vunpack.c.l.b16 %v4719
          %v5880 = vunpack.c.h.b16 %v4719
          %v5881 = vunpack.c.l.b16 %v4720
          %v5882 = vunpack.c.l.b16 %v4721
          %v5883 = vunpack.c.h.b16 %v4721
          %v5884 = vunpack.c.l.b16 %v4722
          %v5885 = vunpack.c.l.b16 %v4723
          %v5886 = vunpack.c.h.b16 %v4723
          %v5887 = vunpack.c.l.b16 %v4724
          %v5888 = vunpack.c.l.b16 %v4725
          %v5889 = vunpack.c.h.b16 %v4725
          %v5890 = vunpack.c.l.b16 %v4726
          %v5891 = vunpack.c.l.b16 %v4727
          %v5892 = vunpack.c.h.b16 %v4727
          %v5893 = vunpack.c.l.b16 %v4728
          %v5894 = vunpack.c.l.b16 %v4729
          %v5895 = vunpack.c.h.b16 %v4729
          %v5896 = vunpack.c.l.b16 %v4730
          %v5897 = vunpack.c.l.b16 %v4731
          %v5898 = vunpack.c.h.b16 %v4731
          %v5899 = vunpack.c.l.b16 %v4732
          %v5900 = vunpack.c.l.b16 %v4733
          %v5901 = vunpack.c.h.b16 %v4733
          %v5902 = vunpack.c.l.b16 %v4734
          %v5903 = vunpack.c.l.b16 %v4735
          %v5904 = vunpack.c.h.b16 %v4735
          %v5905 = vunpack.c.l.b16 %v4736
          %v5906 = vunpack.c.l.b16 %v4737
          %v5907 = vunpack.c.h.b16 %v4737
          %v5908 = vunpack.c.l.b16 %v4738
          %v5909 = vunpack.c.l.b16 %v4739
          %v5910 = vunpack.c.h.b16 %v4739
          %v5911 = vunpack.c.l.b16 %v4740
          %v5912 = vunpack.c.l.b16 %v4741
          %v5913 = vunpack.c.h.b16 %v4741
          %v5914 = vunpack.c.l.b16 %v4742
          %v5915 = vunpack.c.l.b16 %v4743
          %v5916 = vunpack.c.h.b16 %v4743
          %v5917 = vunpack.c.l.b16 %v4744
          %v5918 = vunpack.c.l.b16 %v4745
          %v5919 = vunpack.c.h.b16 %v4745
          %v5920 = vunpack.c.l.b16 %v4746
          %v5921 = vunpack.c.l.b16 %v4747
          %v5922 = vunpack.c.h.b16 %v4747
          %v5923 = vunpack.c.l.b16 %v4748
          %v5924 = vunpack.c.l.b16 %v4749
          %v5925 = vunpack.c.h.b16 %v4749
          %v5926 = vunpack.c.l.b16 %v4750
          %v5927 = vunpack.c.l.b16 %v4751
          %v5928 = vunpack.c.h.b16 %v4751
          %v5929 = vunpack.c.l.b16 %v4752
          %v5930 = vunpack.c.l.b16 %v4753
          %v5931 = vunpack.c.h.b16 %v4753
          %v5932 = vunpack.c.l.b16 %v4754
          %v5933 = vunpack.c.l.b16 %v4755
          %v5934 = vunpack.c.h.b16 %v4755
          %v5935 = vunpack.c.l.b16 %v4756
          %v5936 = vunpack.c.l.b16 %v4757
          %v5937 = vunpack.c.h.b16 %v4757
          %v5938 = vunpack.c.l.b16 %v4758
          %v5939 = vunpack.c.l.b16 %v4759
          %v5940 = vunpack.c.h.b16 %v4759
          %v5941 = vunpack.c.l.b16 %v4760
          %v5942 = vunpack.c.l.b16 %v4761
          %v5943 = vunpack.c.h.b16 %v4761
          %v5944 = vunpack.c.l.b16 %v4762
          %v5945 = vunpack.c.l.b16 %v4763
          %v5946 = vunpack.c.h.b16 %v4763
          %v5947 = vunpack.c.l.b16 %v4764
          %v5948 = vunpack.c.l.b16 %v4765
          %v5949 = vunpack.c.h.b16 %v4765
          %v5950 = vunpack.c.l.b16 %v4766
          %v5951 = vunpack.c.l.b16 %v4767
          %v5952 = vunpack.c.h.b16 %v4767
          %v5953 = vunpack.c.l.b16 %v4768
          %v5954 = vunpack.c.l.b16 %v4769
          %v5955 = vunpack.c.h.b16 %v4769
          %v5956 = vunpack.c.l.b16 %v4770
          %v5957 = vunpack.c.l.b16 %v4771
          %v5958 = vunpack.c.h.b16 %v4771
          %v5959 = vunpack.c.l.b16 %v4772
          %v5960 = vunpack.c.l.b16 %v4773
          %v5961 = vunpack.c.h.b16 %v4773
          %v5962 = vunpack.c.l.b16 %v4774
          %v5963 = vunpack.c.l.b16 %v4775
          %v5964 = vunpack.c.h.b16 %v4775
          %v5965 = vunpack.c.l.b16 %v4776
          %v5966 = vunpack.c.l.b16 %v4777
          %v5967 = vunpack.c.h.b16 %v4777
          %v5968 = vunpack.c.l.b16 %v4778
          %v5969 = vunpack.c.l.b16 %v4779
          %v5970 = vunpack.c.h.b16 %v4779
          %v5971 = vunpack.c.l.b16 %v4780
          %v5972 = vunpack.c.l.b16 %v4781
          %v5973 = vunpack.c.h.b16 %v4781
          %v5974 = vunpack.c.l.b16 %v4782
          %v5975 = vunpack.c.l.b16 %v4783
          %v5976 = vunpack.c.h.b16 %v4783
          %v5977 = vunpack.c.l.b16 %v4784
          %v5978 = vunpack.c.l.b16 %v4785
          %v5979 = vunpack.c.h.b16 %v4785
          %v5980 = vunpack.c.l.b16 %v4786
          %v5981 = vunpack.c.l.b16 %v4787
          %v5982 = vunpack.c.h.b16 %v4787
          %v5983 = vunpack.c.l.b16 %v4788
          %v5984 = vunpack.c.l.b16 %v4789
          %v5985 = vunpack.c.h.b16 %v4789
          %v5986 = vunpack.c.l.b16 %v4790
          %v5987 = vunpack.c.l.b16 %v4791
          %v5988 = vunpack.c.h.b16 %v4791
          %v5989 = vunpack.c.l.b16 %v4792
          %v5990 = vunpack.c.l.b16 %v4793
          %v5991 = vunpack.c.h.b16 %v4793
          %v5992 = vunpack.c.l.b16 %v4794
          %v5993 = vunpack.c.l.b16 %v4795
          %v5994 = vunpack.c.h.b16 %v4795
          %v5995 = vunpack.c.l.b16 %v4796
          %v5996 = vunpack.c.l.b16 %v4797
          %v5997 = vunpack.c.h.b16 %v4797
          %v5998 = vunpack.c.l.b16 %v4798
          %v5999 = vunpack.c.l.b16 %v4799
          %v6000 = vunpack.c.h.b16 %v4799
          %v6001 = vunpack.c.l.b16 %v4800
          %v6002 = vunpack.c.l.b16 %v4801
          %v6003 = vunpack.c.h.b16 %v4801
          %v6004 = vunpack.c.l.b16 %v4802
          %v6005 = vunpack.c.l.b16 %v4803
          %v6006 = vunpack.c.h.b16 %v4803
          %v6007 = vunpack.c.l.b16 %v4804
          %v6008 = vunpack.c.l.b16 %v4805
          %v6009 = vunpack.c.h.b16 %v4805
          %v6010 = vunpack.c.l.b16 %v4806
          %v6011 = vunpack.c.l.b16 %v4807
          %v6012 = vunpack.c.h.b16 %v4807
          %v6013 = vunpack.c.l.b16 %v4808
          %v6014 = vunpack.c.l.b16 %v4809
          %v6015 = vunpack.c.h.b16 %v4809
          %v6016 = vunpack.c.l.b16 %v4810
          %v6017 = vunpack.c.l.b16 %v4811
          %v6018 = vunpack.c.h.b16 %v4811
          %v6019 = vunpack.c.l.b16 %v4812
          %v6020 = vunpack.c.l.b16 %v4813
          %v6021 = vunpack.c.h.b16 %v4813
          %v6022 = vunpack.c.l.b16 %v4814
          %v6023 = vunpack.c.l.b16 %v4815
          %v6024 = vunpack.c.h.b16 %v4815
          %v6025 = vunpack.c.l.b16 %v4816
          %v6026 = vunpack.c.l.b16 %v4817
          %v6027 = vunpack.c.h.b16 %v4817
          %v6028 = vunpack.c.l.b16 %v4818
          %v6029 = vunpack.c.l.b16 %v4819
          %v6030 = vunpack.c.h.b16 %v4819
          %v6031 = vunpack.c.l.b16 %v4820
          %v6032 = vunpack.c.l.b16 %v4821
          %v6033 = vunpack.c.h.b16 %v4821
          %v6034 = vunpack.c.l.b16 %v4822
          %v6035 = vunpack.c.l.b16 %v4823
          %v6036 = vunpack.c.h.b16 %v4823
          %v6037 = vunpack.c.l.b16 %v4824
          %v6038 = vunpack.c.l.b16 %v4825
          %v6039 = vunpack.c.h.b16 %v4825
          %v6040 = vunpack.c.l.b16 %v4826
          %v6041 = vunpack.c.l.b16 %v4827
          %v6042 = vunpack.c.h.b16 %v4827
          %v6043 = vunpack.c.l.b16 %v4828
          %v6044 = vunpack.c.l.b16 %v4829
          %v6045 = vunpack.c.h.b16 %v4829
          %v6046 = vunpack.c.l.b16 %v4830
          %v6047 = vunpack.c.l.b16 %v4831
          %v6048 = vunpack.c.h.b16 %v4831
          %v6049 = vunpack.c.l.b16 %v4832
          %v6050 = vpack.c.b16 %v5333, %v5330
          %v6051 = vpack.c.b16 %v5334, %v5331
          %v6052 = vpack.c.b16 %v5335, %v5332
          %v6053 = vpack.c.b16 %v5339, %v5336
          %v6054 = vpack.c.b16 %v5340, %v5337
          %v6055 = vpack.c.b16 %v5341, %v5338
          %v6056 = vpack.c.b16 %v5345, %v5342
          %v6057 = vpack.c.b16 %v5346, %v5343
          %v6058 = vpack.c.b16 %v5347, %v5344
          %v6059 = vpack.c.b16 %v5351, %v5348
          %v6060 = vpack.c.b16 %v5352, %v5349
          %v6061 = vpack.c.b16 %v5353, %v5350
          %v6062 = vpack.c.b16 %v5357, %v5354
          %v6063 = vpack.c.b16 %v5358, %v5355
          %v6064 = vpack.c.b16 %v5359, %v5356
          %v6065 = vpack.c.b16 %v5363, %v5360
          %v6066 = vpack.c.b16 %v5364, %v5361
          %v6067 = vpack.c.b16 %v5365, %v5362
          %v6068 = vpack.c.b16 %v5369, %v5366
          %v6069 = vpack.c.b16 %v5370, %v5367
          %v6070 = vpack.c.b16 %v5371, %v5368
          %v6071 = vpack.c.b16 %v5375, %v5372
          %v6072 = vpack.c.b16 %v5376, %v5373
          %v6073 = vpack.c.b16 %v5377, %v5374
          %v6074 = vpack.c.b16 %v5381, %v5378
          %v6075 = vpack.c.b16 %v5382, %v5379
          %v6076 = vpack.c.b16 %v5383, %v5380
          %v6077 = vpack.c.b16 %v5387, %v5384
          %v6078 = vpack.c.b16 %v5388, %v5385
          %v6079 = vpack.c.b16 %v5389, %v5386
          %v6080 = vpack.c.b16 %v5393, %v5390
          %v6081 = vpack.c.b16 %v5394, %v5391
          %v6082 = vpack.c.b16 %v5395, %v5392
          %v6083 = vpack.c.b16 %v5399, %v5396
          %v6084 = vpack.c.b16 %v5400, %v5397
          %v6085 = vpack.c.b16 %v5401, %v5398
          %v6086 = vpack.c.b16 %v5405, %v5402
          %v6087 = vpack.c.b16 %v5406, %v5403
          %v6088 = vpack.c.b16 %v5407, %v5404
          %v6089 = vpack.c.b16 %v5411, %v5408
          %v6090 = vpack.c.b16 %v5412, %v5409
          %v6091 = vpack.c.b16 %v5413, %v5410
          %v6092 = vpack.c.b16 %v5417, %v5414
          %v6093 = vpack.c.b16 %v5418, %v5415
          %v6094 = vpack.c.b16 %v5419, %v5416
          %v6095 = vpack.c.b16 %v5423, %v5420
          %v6096 = vpack.c.b16 %v5424, %v5421
          %v6097 = vpack.c.b16 %v5425, %v5422
          %v6098 = vpack.c.b16 %v5429, %v5426
          %v6099 = vpack.c.b16 %v5430, %v5427
          %v6100 = vpack.c.b16 %v5431, %v5428
          %v6101 = vpack.c.b16 %v5435, %v5432
          %v6102 = vpack.c.b16 %v5436, %v5433
          %v6103 = vpack.c.b16 %v5437, %v5434
          %v6104 = vpack.c.b16 %v5441, %v5438
          %v6105 = vpack.c.b16 %v5442, %v5439
          %v6106 = vpack.c.b16 %v5443, %v5440
          %v6107 = vpack.c.b16 %v5447, %v5444
          %v6108 = vpack.c.b16 %v5448, %v5445
          %v6109 = vpack.c.b16 %v5449, %v5446
          %v6110 = vpack.c.b16 %v5453, %v5450
          %v6111 = vpack.c.b16 %v5454, %v5451
          %v6112 = vpack.c.b16 %v5455, %v5452
          %v6113 = vpack.c.b16 %v5459, %v5456
          %v6114 = vpack.c.b16 %v5460, %v5457
          %v6115 = vpack.c.b16 %v5461, %v5458
          %v6116 = vpack.c.b16 %v5465, %v5462
          %v6117 = vpack.c.b16 %v5466, %v5463
          %v6118 = vpack.c.b16 %v5467, %v5464
          %v6119 = vpack.c.b16 %v5471, %v5468
          %v6120 = vpack.c.b16 %v5472, %v5469
          %v6121 = vpack.c.b16 %v5473, %v5470
          %v6122 = vpack.c.b16 %v5477, %v5474
          %v6123 = vpack.c.b16 %v5478, %v5475
          %v6124 = vpack.c.b16 %v5479, %v5476
          %v6125 = vpack.c.b16 %v5483, %v5480
          %v6126 = vpack.c.b16 %v5484, %v5481
          %v6127 = vpack.c.b16 %v5485, %v5482
          %v6128 = vpack.c.b16 %v5489, %v5486
          %v6129 = vpack.c.b16 %v5490, %v5487
          %v6130 = vpack.c.b16 %v5491, %v5488
          %v6131 = vpack.c.b16 %v5495, %v5492
          %v6132 = vpack.c.b16 %v5496, %v5493
          %v6133 = vpack.c.b16 %v5497, %v5494
          %v6134 = vpack.c.b16 %v5501, %v5498
          %v6135 = vpack.c.b16 %v5502, %v5499
          %v6136 = vpack.c.b16 %v5503, %v5500
          %v6137 = vpack.c.b16 %v5507, %v5504
          %v6138 = vpack.c.b16 %v5508, %v5505
          %v6139 = vpack.c.b16 %v5509, %v5506
          %v6140 = vpack.c.b16 %v5513, %v5510
          %v6141 = vpack.c.b16 %v5514, %v5511
          %v6142 = vpack.c.b16 %v5515, %v5512
          %v6143 = vpack.c.b16 %v5519, %v5516
          %v6144 = vpack.c.b16 %v5520, %v5517
          %v6145 = vpack.c.b16 %v5521, %v5518
          %v6146 = vpack.c.b16 %v5525, %v5522
          %v6147 = vpack.c.b16 %v5526, %v5523
          %v6148 = vpack.c.b16 %v5527, %v5524
          %v6149 = vpack.c.b16 %v5531, %v5528
          %v6150 = vpack.c.b16 %v5532, %v5529
          %v6151 = vpack.c.b16 %v5533, %v5530
          %v6152 = vpack.c.b16 %v5537, %v5534
          %v6153 = vpack.c.b16 %v5538, %v5535
          %v6154 = vpack.c.b16 %v5539, %v5536
          %v6155 = vpack.c.b16 %v5543, %v5540
          %v6156 = vpack.c.b16 %v5544, %v5541
          %v6157 = vpack.c.b16 %v5545, %v5542
          %v6158 = vpack.c.b16 %v5549, %v5546
          %v6159 = vpack.c.b16 %v5550, %v5547
          %v6160 = vpack.c.b16 %v5551, %v5548
          %v6161 = vpack.c.b16 %v5555, %v5552
          %v6162 = vpack.c.b16 %v5556, %v5553
          %v6163 = vpack.c.b16 %v5557, %v5554
          %v6164 = vpack.c.b16 %v5561, %v5558
          %v6165 = vpack.c.b16 %v5562, %v5559
          %v6166 = vpack.c.b16 %v5563, %v5560
          %v6167 = vpack.c.b16 %v5567, %v5564
          %v6168 = vpack.c.b16 %v5568, %v5565
          %v6169 = vpack.c.b16 %v5569, %v5566
          %v6170 = vpack.c.b16 %v5573, %v5570
          %v6171 = vpack.c.b16 %v5574, %v5571
          %v6172 = vpack.c.b16 %v5575, %v5572
          %v6173 = vpack.c.b16 %v5579, %v5576
          %v6174 = vpack.c.b16 %v5580, %v5577
          %v6175 = vpack.c.b16 %v5581, %v5578
          %v6176 = vpack.c.b16 %v5585, %v5582
          %v6177 = vpack.c.b16 %v5586, %v5583
          %v6178 = vpack.c.b16 %v5587, %v5584
          %v6179 = vpack.c.b16 %v5591, %v5588
          %v6180 = vpack.c.b16 %v5592, %v5589
          %v6181 = vpack.c.b16 %v5593, %v5590
          %v6182 = vpack.c.b16 %v5597, %v5594
          %v6183 = vpack.c.b16 %v5598, %v5595
          %v6184 = vpack.c.b16 %v5599, %v5596
          %v6185 = vpack.c.b16 %v5603, %v5600
          %v6186 = vpack.c.b16 %v5604, %v5601
          %v6187 = vpack.c.b16 %v5605, %v5602
          %v6188 = vpack.c.b16 %v5609, %v5606
          %v6189 = vpack.c.b16 %v5610, %v5607
          %v6190 = vpack.c.b16 %v5611, %v5608
          %v6191 = vpack.c.b16 %v5615, %v5612
          %v6192 = vpack.c.b16 %v5616, %v5613
          %v6193 = vpack.c.b16 %v5617, %v5614
          %v6194 = vpack.c.b16 %v5621, %v5618
          %v6195 = vpack.c.b16 %v5622, %v5619
          %v6196 = vpack.c.b16 %v5623, %v5620
          %v6197 = vpack.c.b16 %v5627, %v5624
          %v6198 = vpack.c.b16 %v5628, %v5625
          %v6199 = vpack.c.b16 %v5629, %v5626
          %v6200 = vpack.c.b16 %v5633, %v5630
          %v6201 = vpack.c.b16 %v5634, %v5631
          %v6202 = vpack.c.b16 %v5635, %v5632
          %v6203 = vpack.c.b16 %v5639, %v5636
          %v6204 = vpack.c.b16 %v5640, %v5637
          %v6205 = vpack.c.b16 %v5641, %v5638
          %v6206 = vpack.c.b16 %v5645, %v5642
          %v6207 = vpack.c.b16 %v5646, %v5643
          %v6208 = vpack.c.b16 %v5647, %v5644
          %v6209 = vpack.c.b16 %v5651, %v5648
          %v6210 = vpack.c.b16 %v5652, %v5649
          %v6211 = vpack.c.b16 %v5653, %v5650
          %v6212 = vpack.c.b16 %v5657, %v5654
          %v6213 = vpack.c.b16 %v5658, %v5655
          %v6214 = vpack.c.b16 %v5659, %v5656
          %v6215 = vpack.c.b16 %v5663, %v5660
          %v6216 = vpack.c.b16 %v5664, %v5661
          %v6217 = vpack.c.b16 %v5665, %v5662
          %v6218 = vpack.c.b16 %v5669, %v5666
          %v6219 = vpack.c.b16 %v5670, %v5667
          %v6220 = vpack.c.b16 %v5671, %v5668
          %v6221 = vpack.c.b16 %v5675, %v5672
          %v6222 = vpack.c.b16 %v5676, %v5673
          %v6223 = vpack.c.b16 %v5677, %v5674
          %v6224 = vpack.c.b16 %v5681, %v5678
          %v6225 = vpack.c.b16 %v5682, %v5679
          %v6226 = vpack.c.b16 %v5683, %v5680
          %v6227 = vpack.c.b16 %v5687, %v5684
          %v6228 = vpack.c.b16 %v5688, %v5685
          %v6229 = vpack.c.b16 %v5689, %v5686
          %v6230 = vpack.c.b16 %v5693, %v5690
          %v6231 = vpack.c.b16 %v5694, %v5691
          %v6232 = vpack.c.b16 %v5695, %v5692
          %v6233 = vpack.c.b16 %v5699, %v5696
          %v6234 = vpack.c.b16 %v5700, %v5697
          %v6235 = vpack.c.b16 %v5701, %v5698
          %v6236 = vpack.c.b16 %v5705, %v5702
          %v6237 = vpack.c.b16 %v5706, %v5703
          %v6238 = vpack.c.b16 %v5707, %v5704
          %v6239 = vpack.c.b16 %v5711, %v5708
          %v6240 = vpack.c.b16 %v5712, %v5709
          %v6241 = vpack.c.b16 %v5713, %v5710
          %v6242 = vpack.c.b16 %v5717, %v5714
          %v6243 = vpack.c.b16 %v5718, %v5715
          %v6244 = vpack.c.b16 %v5719, %v5716
          %v6245 = vpack.c.b16 %v5723, %v5720
          %v6246 = vpack.c.b16 %v5724, %v5721
          %v6247 = vpack.c.b16 %v5725, %v5722
          %v6248 = vpack.c.b16 %v5729, %v5726
          %v6249 = vpack.c.b16 %v5730, %v5727
          %v6250 = vpack.c.b16 %v5731, %v5728
          %v6251 = vpack.c.b16 %v5735, %v5732
          %v6252 = vpack.c.b16 %v5736, %v5733
          %v6253 = vpack.c.b16 %v5737, %v5734
          %v6254 = vpack.c.b16 %v5741, %v5738
          %v6255 = vpack.c.b16 %v5742, %v5739
          %v6256 = vpack.c.b16 %v5743, %v5740
          %v6257 = vpack.c.b16 %v5747, %v5744
          %v6258 = vpack.c.b16 %v5748, %v5745
          %v6259 = vpack.c.b16 %v5749, %v5746
          %v6260 = vpack.c.b16 %v5753, %v5750
          %v6261 = vpack.c.b16 %v5754, %v5751
          %v6262 = vpack.c.b16 %v5755, %v5752
          %v6263 = vpack.c.b16 %v5759, %v5756
          %v6264 = vpack.c.b16 %v5760, %v5757
          %v6265 = vpack.c.b16 %v5761, %v5758
          %v6266 = vpack.c.b16 %v5765, %v5762
          %v6267 = vpack.c.b16 %v5766, %v5763
          %v6268 = vpack.c.b16 %v5767, %v5764
          %v6269 = vpack.c.b16 %v5771, %v5768
          %v6270 = vpack.c.b16 %v5772, %v5769
          %v6271 = vpack.c.b16 %v5773, %v5770
          %v6272 = vpack.c.b16 %v5777, %v5774
          %v6273 = vpack.c.b16 %v5778, %v5775
          %v6274 = vpack.c.b16 %v5779, %v5776
          %v6275 = vpack.c.b16 %v5783, %v5780
          %v6276 = vpack.c.b16 %v5784, %v5781
          %v6277 = vpack.c.b16 %v5785, %v5782
          %v6278 = vpack.c.b16 %v5789, %v5786
          %v6279 = vpack.c.b16 %v5790, %v5787
          %v6280 = vpack.c.b16 %v5791, %v5788
          %v6281 = vpack.c.b16 %v5795, %v5792
          %v6282 = vpack.c.b16 %v5796, %v5793
          %v6283 = vpack.c.b16 %v5797, %v5794
          %v6284 = vpack.c.b16 %v5801, %v5798
          %v6285 = vpack.c.b16 %v5802, %v5799
          %v6286 = vpack.c.b16 %v5803, %v5800
          %v6287 = vpack.c.b16 %v5807, %v5804
          %v6288 = vpack.c.b16 %v5808, %v5805
          %v6289 = vpack.c.b16 %v5809, %v5806
          %v6290 = vpack.c.b16 %v5813, %v5810
          %v6291 = vpack.c.b16 %v5814, %v5811
          %v6292 = vpack.c.b16 %v5815, %v5812
          %v6293 = vpack.c.b16 %v5819, %v5816
          %v6294 = vpack.c.b16 %v5820, %v5817
          %v6295 = vpack.c.b16 %v5821, %v5818
          %v6296 = vpack.c.b16 %v5825, %v5822
          %v6297 = vpack.c.b16 %v5826, %v5823
          %v6298 = vpack.c.b16 %v5827, %v5824
          %v6299 = vpack.c.b16 %v5831, %v5828
          %v6300 = vpack.c.b16 %v5832, %v5829
          %v6301 = vpack.c.b16 %v5833, %v5830
          %v6302 = vpack.c.b16 %v5837, %v5834
          %v6303 = vpack.c.b16 %v5838, %v5835
          %v6304 = vpack.c.b16 %v5839, %v5836
          %v6305 = vpack.c.b16 %v5843, %v5840
          %v6306 = vpack.c.b16 %v5844, %v5841
          %v6307 = vpack.c.b16 %v5845, %v5842
          %v6308 = vpack.c.b16 %v5849, %v5846
          %v6309 = vpack.c.b16 %v5850, %v5847
          %v6310 = vpack.c.b16 %v5851, %v5848
          %v6311 = vpack.c.b16 %v5855, %v5852
          %v6312 = vpack.c.b16 %v5856, %v5853
          %v6313 = vpack.c.b16 %v5857, %v5854
          %v6314 = vpack.c.b16 %v5861, %v5858
          %v6315 = vpack.c.b16 %v5862, %v5859
          %v6316 = vpack.c.b16 %v5863, %v5860
          %v6317 = vpack.c.b16 %v5867, %v5864
          %v6318 = vpack.c.b16 %v5868, %v5865
          %v6319 = vpack.c.b16 %v5869, %v5866
          %v6320 = vpack.c.b16 %v5873, %v5870
          %v6321 = vpack.c.b16 %v5874, %v5871
          %v6322 = vpack.c.b16 %v5875, %v5872
          %v6323 = vpack.c.b16 %v5879, %v5876
          %v6324 = vpack.c.b16 %v5880, %v5877
          %v6325 = vpack.c.b16 %v5881, %v5878
          %v6326 = vpack.c.b16 %v5885, %v5882
          %v6327 = vpack.c.b16 %v5886, %v5883
          %v6328 = vpack.c.b16 %v5887, %v5884
          %v6329 = vpack.c.b16 %v5891, %v5888
          %v6330 = vpack.c.b16 %v5892, %v5889
          %v6331 = vpack.c.b16 %v5893, %v5890
          %v6332 = vpack.c.b16 %v5897, %v5894
          %v6333 = vpack.c.b16 %v5898, %v5895
          %v6334 = vpack.c.b16 %v5899, %v5896
          %v6335 = vpack.c.b16 %v5903, %v5900
          %v6336 = vpack.c.b16 %v5904, %v5901
          %v6337 = vpack.c.b16 %v5905, %v5902
          %v6338 = vpack.c.b16 %v5909, %v5906
          %v6339 = vpack.c.b16 %v5910, %v5907
          %v6340 = vpack.c.b16 %v5911, %v5908
          %v6341 = vpack.c.b16 %v5915, %v5912
          %v6342 = vpack.c.b16 %v5916, %v5913
          %v6343 = vpack.c.b16 %v5917, %v5914
          %v6344 = vpack.c.b16 %v5921, %v5918
          %v6345 = vpack.c.b16 %v5922, %v5919
          %v6346 = vpack.c.b16 %v5923, %v5920
          %v6347 = vpack.c.b16 %v5927, %v5924
          %v6348 = vpack.c.b16 %v5928, %v5925
          %v6349 = vpack.c.b16 %v5929, %v5926
          %v6350 = vpack.c.b16 %v5933, %v5930
          %v6351 = vpack.c.b16 %v5934, %v5931
          %v6352 = vpack.c.b16 %v5935, %v5932
          %v6353 = vpack.c.b16 %v5939, %v5936
          %v6354 = vpack.c.b16 %v5940, %v5937
          %v6355 = vpack.c.b16 %v5941, %v5938
          %v6356 = vpack.c.b16 %v5945, %v5942
          %v6357 = vpack.c.b16 %v5946, %v5943
          %v6358 = vpack.c.b16 %v5947, %v5944
          %v6359 = vpack.c.b16 %v5951, %v5948
          %v6360 = vpack.c.b16 %v5952, %v5949
          %v6361 = vpack.c.b16 %v5953, %v5950
          %v6362 = vpack.c.b16 %v5957, %v5954
          %v6363 = vpack.c.b16 %v5958, %v5955
          %v6364 = vpack.c.b16 %v5959, %v5956
          %v6365 = vpack.c.b16 %v5963, %v5960
          %v6366 = vpack.c.b16 %v5964, %v5961
          %v6367 = vpack.c.b16 %v5965, %v5962
          %v6368 = vpack.c.b16 %v5969, %v5966
          %v6369 = vpack.c.b16 %v5970, %v5967
          %v6370 = vpack.c.b16 %v5971, %v5968
          %v6371 = vpack.c.b16 %v5975, %v5972
          %v6372 = vpack.c.b16 %v5976, %v5973
          %v6373 = vpack.c.b16 %v5977, %v5974
          %v6374 = vpack.c.b16 %v5981, %v5978
          %v6375 = vpack.c.b16 %v5982, %v5979
          %v6376 = vpack.c.b16 %v5983, %v5980
          %v6377 = vpack.c.b16 %v5987, %v5984
          %v6378 = vpack.c.b16 %v5988, %v5985
          %v6379 = vpack.c.b16 %v5989, %v5986
          %v6380 = vpack.c.b16 %v5993, %v5990
          %v6381 = vpack.c.b16 %v5994, %v5991
          %v6382 = vpack.c.b16 %v5995, %v5992
          %v6383 = vpack.c.b16 %v5999, %v5996
          %v6384 = vpack.c.b16 %v6000, %v5997
          %v6385 = vpack.c.b16 %v6001, %v5998
          %v6386 = vpack.c.b16 %v6005, %v6002
          %v6387 = vpack.c.b16 %v6006, %v6003
          %v6388 = vpack.c.b16 %v6007, %v6004
          %v6389 = vpack.c.b16 %v6011, %v6008
          %v6390 = vpack.c.b16 %v6012, %v6009
          %v6391 = vpack.c.b16 %v6013, %v6010
          %v6392 = vpack.c.b16 %v6017, %v6014
          %v6393 = vpack.c.b16 %v6018, %v6015
          %v6394 = vpack.c.b16 %v6019, %v6016
          %v6395 = vpack.c.b16 %v6023, %v6020
          %v6396 = vpack.c.b16 %v6024, %v6021
          %v6397 = vpack.c.b16 %v6025, %v6022
          %v6398 = vpack.c.b16 %v6029, %v6026
          %v6399 = vpack.c.b16 %v6030, %v6027
          %v6400 = vpack.c.b16 %v6031, %v6028
          %v6401 = vpack.c.b16 %v6035, %v6032
          %v6402 = vpack.c.b16 %v6036, %v6033
          %v6403 = vpack.c.b16 %v6037, %v6034
          %v6404 = vpack.c.b16 %v6041, %v6038
          %v6405 = vpack.c.b16 %v6042, %v6039
          %v6406 = vpack.c.b16 %v6043, %v6040
          %v6407 = vpack.c.b16 %v6047, %v6044
          %v6408 = vpack.c.b16 %v6048, %v6045
          %v6409 = vpack.c.b16 %v6049, %v6046
          %6770 = vmatprep.subr.bf16.mxu0 %v6072
          %6771 = vmatpush1.bf16.msra.mxu0 %v6071
          %6772 = vmatprep.subr.bf16.mxu0 %v6069
          %6773 = vmatpush1.bf16.msra.mxu0 %v6068
          %6774 = vmatprep.subr.bf16.mxu0 %v6066
          %6775 = vmatpush1.bf16.msra.mxu0 %v6065
          %6776 = vmatprep.subr.bf16.mxu0 %v6063
          %6777 = vmatpush1.bf16.msra.mxu0 %v6062
          %6778 = vmatprep.subr.bf16.mxu0 %v6060
          %6779 = vmatpush1.bf16.msra.mxu0 %v6059
          %6780 = vmatprep.subr.bf16.mxu0 %v6057
          %6781 = vmatpush1.bf16.msra.mxu0 %v6056
          %6782 = vmatprep.subr.bf16.mxu0 %v6054
          %6783 = vmatpush1.bf16.msra.mxu0 %v6053
          %6784 = vmatprep.subr.bf16.mxu0 %v6051
          %6785 = vmatpush1.bf16.msra.mxu0 %v6050
          %6786 = vmatprep.subr.bf16.mxu0 %v6096
          %6787 = vmatpush2.bf16.msra.mxu0 %v6095
          %6788 = vmatprep.subr.bf16.mxu0 %v6093
          %6789 = vmatpush2.bf16.msra.mxu0 %v6092
          %6790 = vmatprep.subr.bf16.mxu0 %v6090
          %6791 = vmatpush2.bf16.msra.mxu0 %v6089
          %6792 = vmatprep.subr.bf16.mxu0 %v6087
          %6793 = vmatpush2.bf16.msra.mxu0 %v6086
          %6794 = vmatprep.subr.bf16.mxu0 %v6084
          %6795 = vmatpush2.bf16.msra.mxu0 %v6083
          %6796 = vmatprep.subr.bf16.mxu0 %v6081
          %6797 = vmatpush2.bf16.msra.mxu0 %v6080
          %6798 = vmatprep.subr.bf16.mxu0 %v6078
          %6799 = vmatpush2.bf16.msra.mxu0 %v6077
          %6800 = vmatprep.subr.bf16.mxu0 %v6075
          %6801 = vmatpush2.bf16.msra.mxu0 %v6074
          %6802 = vmatprep.mubr.bf16.mxu0 %v4339
          %6803 = vmatmul.mubr.bf16.gmra.mxu0 %v4338
          %v6804 = vpop.f32.mrf.mxu0
          %v6805 = vadd.f32 %v4838, %v6804
          %v6806 = vpop.f32.mrf.mxu0
          %v6807 = vadd.f32 %v4842, %v6806
          %v6808 = vpop.f32.mrf.mxu0
          %v6809 = vpop.f32.mrf.mxu0
          %6810 = vdwg.mxu0
          %6811 = vmatprep.subr.bf16.mxu0 %v6120
          %6812 = vmatpush1.bf16.msra.mxu0 %v6119
          %6813 = vmatprep.subr.bf16.mxu0 %v6117
          %6814 = vmatpush1.bf16.msra.mxu0 %v6116
          %6815 = vmatprep.subr.bf16.mxu0 %v6114
          %6816 = vmatpush1.bf16.msra.mxu0 %v6113
          %6817 = vmatprep.subr.bf16.mxu0 %v6111
          %6818 = vmatpush1.bf16.msra.mxu0 %v6110
          %6819 = vmatprep.subr.bf16.mxu0 %v6108
          %6820 = vmatpush1.bf16.msra.mxu0 %v6107
          %6821 = vmatprep.subr.bf16.mxu0 %v6105
          %6822 = vmatpush1.bf16.msra.mxu0 %v6104
          %6823 = vmatprep.subr.bf16.mxu0 %v6102
          %6824 = vmatpush1.bf16.msra.mxu0 %v6101
          %6825 = vmatprep.subr.bf16.mxu0 %v6099
          %6826 = vmatpush1.bf16.msra.mxu0 %v6098
          %6827 = vmatprep.subr.bf16.mxu0 %v6144
          %6828 = vmatpush2.bf16.msra.mxu0 %v6143
          %6829 = vmatprep.subr.bf16.mxu0 %v6141
          %6830 = vmatpush2.bf16.msra.mxu0 %v6140
          %6831 = vmatprep.subr.bf16.mxu0 %v6138
          %6832 = vmatpush2.bf16.msra.mxu0 %v6137
          %6833 = vmatprep.subr.bf16.mxu0 %v6135
          %6834 = vmatpush2.bf16.msra.mxu0 %v6134
          %6835 = vmatprep.subr.bf16.mxu0 %v6132
          %6836 = vmatpush2.bf16.msra.mxu0 %v6131
          %6837 = vmatprep.subr.bf16.mxu0 %v6129
          %6838 = vmatpush2.bf16.msra.mxu0 %v6128
          %6839 = vmatprep.subr.bf16.mxu0 %v6126
          %6840 = vmatpush2.bf16.msra.mxu0 %v6125
          %6841 = vmatprep.subr.bf16.mxu0 %v6123
          %6842 = vmatpush2.bf16.msra.mxu0 %v6122
          %6843 = vmatprep.mubr.bf16.mxu0 %v4341
          %6844 = vmatmul.mubr.bf16.gmra.mxu0 %v4340
          %v6845 = vpop.f32.mrf.mxu0
          %v6846 = vadd.f32 %v6805, %v6845
          %v6847 = vpop.f32.mrf.mxu0
          %v6848 = vadd.f32 %v6807, %v6847
          %v6849 = vpop.f32.mrf.mxu0
          %v6850 = vpop.f32.mrf.mxu0
          %6851 = vdwg.mxu0
          %6852 = vmatprep.subr.bf16.mxu0 %v6168
          %6853 = vmatpush1.bf16.msra.mxu0 %v6167
          %6854 = vmatprep.subr.bf16.mxu0 %v6165
          %6855 = vmatpush1.bf16.msra.mxu0 %v6164
          %6856 = vmatprep.subr.bf16.mxu0 %v6162
          %6857 = vmatpush1.bf16.msra.mxu0 %v6161
          %6858 = vmatprep.subr.bf16.mxu0 %v6159
          %6859 = vmatpush1.bf16.msra.mxu0 %v6158
          %6860 = vmatprep.subr.bf16.mxu0 %v6156
          %6861 = vmatpush1.bf16.msra.mxu0 %v6155
          %6862 = vmatprep.subr.bf16.mxu0 %v6153
          %6863 = vmatpush1.bf16.msra.mxu0 %v6152
          %6864 = vmatprep.subr.bf16.mxu0 %v6150
          %6865 = vmatpush1.bf16.msra.mxu0 %v6149
          %6866 = vmatprep.subr.bf16.mxu0 %v6147
          %6867 = vmatpush1.bf16.msra.mxu0 %v6146
          %6868 = vmatprep.subr.bf16.mxu0 %v6192
          %6869 = vmatpush2.bf16.msra.mxu0 %v6191
          %6870 = vmatprep.subr.bf16.mxu0 %v6189
          %6871 = vmatpush2.bf16.msra.mxu0 %v6188
          %6872 = vmatprep.subr.bf16.mxu0 %v6186
          %6873 = vmatpush2.bf16.msra.mxu0 %v6185
          %6874 = vmatprep.subr.bf16.mxu0 %v6183
          %6875 = vmatpush2.bf16.msra.mxu0 %v6182
          %6876 = vmatprep.subr.bf16.mxu0 %v6180
          %6877 = vmatpush2.bf16.msra.mxu0 %v6179
          %6878 = vmatprep.subr.bf16.mxu0 %v6177
          %6879 = vmatpush2.bf16.msra.mxu0 %v6176
          %6880 = vmatprep.subr.bf16.mxu0 %v6174
          %6881 = vmatpush2.bf16.msra.mxu0 %v6173
          %6882 = vmatprep.subr.bf16.mxu0 %v6171
          %6883 = vmatpush2.bf16.msra.mxu0 %v6170
          %6884 = vmatprep.mubr.bf16.mxu0 %v4343
          %6885 = vmatmul.mubr.bf16.gmra.mxu0 %v4342
          %v6886 = vpop.f32.mrf.mxu0
          %v6887 = vadd.f32 %v6846, %v6886
          %v6888 = vpop.f32.mrf.mxu0
          %v6889 = vadd.f32 %v6848, %v6888
          %v6890 = vpop.f32.mrf.mxu0
          %v6891 = vpop.f32.mrf.mxu0
          %6892 = vdwg.mxu0
          %6893 = vmatprep.subr.bf16.mxu0 %v6216
          %6894 = vmatpush1.bf16.msra.mxu0 %v6215
          %6895 = vmatprep.subr.bf16.mxu0 %v6213
          %6896 = vmatpush1.bf16.msra.mxu0 %v6212
          %6897 = vmatprep.subr.bf16.mxu0 %v6210
          %6898 = vmatpush1.bf16.msra.mxu0 %v6209
          %6899 = vmatprep.subr.bf16.mxu0 %v6207
          %6900 = vmatpush1.bf16.msra.mxu0 %v6206
          %6901 = vmatprep.subr.bf16.mxu0 %v6204
          %6902 = vmatpush1.bf16.msra.mxu0 %v6203
          %6903 = vmatprep.subr.bf16.mxu0 %v6201
          %6904 = vmatpush1.bf16.msra.mxu0 %v6200
          %6905 = vmatprep.subr.bf16.mxu0 %v6198
          %6906 = vmatpush1.bf16.msra.mxu0 %v6197
          %6907 = vmatprep.subr.bf16.mxu0 %v6195
          %6908 = vmatpush1.bf16.msra.mxu0 %v6194
          %6909 = vmatprep.subr.bf16.mxu0 %v6240
          %6910 = vmatpush2.bf16.msra.mxu0 %v6239
          %6911 = vmatprep.subr.bf16.mxu0 %v6237
          %6912 = vmatpush2.bf16.msra.mxu0 %v6236
          %6913 = vmatprep.subr.bf16.mxu0 %v6234
          %6914 = vmatpush2.bf16.msra.mxu0 %v6233
          %6915 = vmatprep.subr.bf16.mxu0 %v6231
          %6916 = vmatpush2.bf16.msra.mxu0 %v6230
          %6917 = vmatprep.subr.bf16.mxu0 %v6228
          %6918 = vmatpush2.bf16.msra.mxu0 %v6227
          %6919 = vmatprep.subr.bf16.mxu0 %v6225
          %6920 = vmatpush2.bf16.msra.mxu0 %v6224
          %6921 = vmatprep.subr.bf16.mxu0 %v6222
          %6922 = vmatpush2.bf16.msra.mxu0 %v6221
          %6923 = vmatprep.subr.bf16.mxu0 %v6219
          %6924 = vmatpush2.bf16.msra.mxu0 %v6218
          %6925 = vmatprep.mubr.bf16.mxu0 %v4345
          %6926 = vmatmul.mubr.bf16.gmra.mxu0 %v4344
          %v6927 = vpop.f32.mrf.mxu0
          %v6928 = vadd.f32 %v6887, %v6927
          %v6929 = vpop.f32.mrf.mxu0
          %v6930 = vadd.f32 %v6889, %v6929
          %v6931 = vpop.f32.mrf.mxu0
          %v6932 = vpop.f32.mrf.mxu0
          %6933 = vdwg.mxu0
          %6934 = vmatprep.subr.bf16.mxu0 %v6264
          %6935 = vmatpush1.bf16.msra.mxu0 %v6263
          %6936 = vmatprep.subr.bf16.mxu0 %v6261
          %6937 = vmatpush1.bf16.msra.mxu0 %v6260
          %6938 = vmatprep.subr.bf16.mxu0 %v6258
          %6939 = vmatpush1.bf16.msra.mxu0 %v6257
          %6940 = vmatprep.subr.bf16.mxu0 %v6255
          %6941 = vmatpush1.bf16.msra.mxu0 %v6254
          %6942 = vmatprep.subr.bf16.mxu0 %v6252
          %6943 = vmatpush1.bf16.msra.mxu0 %v6251
          %6944 = vmatprep.subr.bf16.mxu0 %v6249
          %6945 = vmatpush1.bf16.msra.mxu0 %v6248
          %6946 = vmatprep.subr.bf16.mxu0 %v6246
          %6947 = vmatpush1.bf16.msra.mxu0 %v6245
          %6948 = vmatprep.subr.bf16.mxu0 %v6243
          %6949 = vmatpush1.bf16.msra.mxu0 %v6242
          %6950 = vmatprep.subr.bf16.mxu0 %v6288
          %6951 = vmatpush2.bf16.msra.mxu0 %v6287
          %6952 = vmatprep.subr.bf16.mxu0 %v6285
          %6953 = vmatpush2.bf16.msra.mxu0 %v6284
          %6954 = vmatprep.subr.bf16.mxu0 %v6282
          %6955 = vmatpush2.bf16.msra.mxu0 %v6281
          %6956 = vmatprep.subr.bf16.mxu0 %v6279
          %6957 = vmatpush2.bf16.msra.mxu0 %v6278
          %6958 = vmatprep.subr.bf16.mxu0 %v6276
          %6959 = vmatpush2.bf16.msra.mxu0 %v6275
          %6960 = vmatprep.subr.bf16.mxu0 %v6273
          %6961 = vmatpush2.bf16.msra.mxu0 %v6272
          %6962 = vmatprep.subr.bf16.mxu0 %v6270
          %6963 = vmatpush2.bf16.msra.mxu0 %v6269
          %6964 = vmatprep.subr.bf16.mxu0 %v6267
          %6965 = vmatpush2.bf16.msra.mxu0 %v6266
          %6966 = vmatprep.mubr.bf16.mxu0 %v4347
          %6967 = vmatmul.mubr.bf16.gmra.mxu0 %v4346
          %v6968 = vpop.f32.mrf.mxu0
          %v6969 = vadd.f32 %v6928, %v6968
          %v6970 = vpop.f32.mrf.mxu0
          %v6971 = vadd.f32 %v6930, %v6970
          %v6972 = vpop.f32.mrf.mxu0
          %v6973 = vpop.f32.mrf.mxu0
          %6974 = vdwg.mxu0
          %6975 = vmatprep.subr.bf16.mxu0 %v6312
          %6976 = vmatpush1.bf16.msra.mxu0 %v6311
          %6977 = vmatprep.subr.bf16.mxu0 %v6309
          %6978 = vmatpush1.bf16.msra.mxu0 %v6308
          %6979 = vmatprep.subr.bf16.mxu0 %v6306
          %6980 = vmatpush1.bf16.msra.mxu0 %v6305
          %6981 = vmatprep.subr.bf16.mxu0 %v6303
          %6982 = vmatpush1.bf16.msra.mxu0 %v6302
          %6983 = vmatprep.subr.bf16.mxu0 %v6300
          %6984 = vmatpush1.bf16.msra.mxu0 %v6299
          %6985 = vmatprep.subr.bf16.mxu0 %v6297
          %6986 = vmatpush1.bf16.msra.mxu0 %v6296
          %6987 = vmatprep.subr.bf16.mxu0 %v6294
          %6988 = vmatpush1.bf16.msra.mxu0 %v6293
          %6989 = vmatprep.subr.bf16.mxu0 %v6291
          %6990 = vmatpush1.bf16.msra.mxu0 %v6290
          %6991 = vmatprep.subr.bf16.mxu0 %v6336
          %6992 = vmatpush2.bf16.msra.mxu0 %v6335
          %6993 = vmatprep.subr.bf16.mxu0 %v6333
          %6994 = vmatpush2.bf16.msra.mxu0 %v6332
          %6995 = vmatprep.subr.bf16.mxu0 %v6330
          %6996 = vmatpush2.bf16.msra.mxu0 %v6329
          %6997 = vmatprep.subr.bf16.mxu0 %v6327
          %6998 = vmatpush2.bf16.msra.mxu0 %v6326
          %6999 = vmatprep.subr.bf16.mxu0 %v6324
          %7000 = vmatpush2.bf16.msra.mxu0 %v6323
          %7001 = vmatprep.subr.bf16.mxu0 %v6321
          %7002 = vmatpush2.bf16.msra.mxu0 %v6320
          %7003 = vmatprep.subr.bf16.mxu0 %v6318
          %7004 = vmatpush2.bf16.msra.mxu0 %v6317
          %7005 = vmatprep.subr.bf16.mxu0 %v6315
          %7006 = vmatpush2.bf16.msra.mxu0 %v6314
          %7007 = vmatprep.mubr.bf16.mxu0 %v4349
          %7008 = vmatmul.mubr.bf16.gmra.mxu0 %v4348
          %v7009 = vpop.f32.mrf.mxu0
          %v7010 = vadd.f32 %v6969, %v7009
          %v7011 = vpop.f32.mrf.mxu0
          %v7012 = vadd.f32 %v6971, %v7011
          %v7013 = vpop.f32.mrf.mxu0
          %v7014 = vpop.f32.mrf.mxu0
          %7015 = vdwg.mxu0
          %7016 = vmatprep.subr.bf16.mxu0 %v6360
          %7017 = vmatpush1.bf16.msra.mxu0 %v6359
          %7018 = vmatprep.subr.bf16.mxu0 %v6357
          %7019 = vmatpush1.bf16.msra.mxu0 %v6356
          %7020 = vmatprep.subr.bf16.mxu0 %v6354
          %7021 = vmatpush1.bf16.msra.mxu0 %v6353
          %7022 = vmatprep.subr.bf16.mxu0 %v6351
          %7023 = vmatpush1.bf16.msra.mxu0 %v6350
          %7024 = vmatprep.subr.bf16.mxu0 %v6348
          %7025 = vmatpush1.bf16.msra.mxu0 %v6347
          %7026 = vmatprep.subr.bf16.mxu0 %v6345
          %7027 = vmatpush1.bf16.msra.mxu0 %v6344
          %7028 = vmatprep.subr.bf16.mxu0 %v6342
          %7029 = vmatpush1.bf16.msra.mxu0 %v6341
          %7030 = vmatprep.subr.bf16.mxu0 %v6339
          %7031 = vmatpush1.bf16.msra.mxu0 %v6338
          %7032 = vmatprep.subr.bf16.mxu0 %v6384
          %7033 = vmatpush2.bf16.msra.mxu0 %v6383
          %7034 = vmatprep.subr.bf16.mxu0 %v6381
          %7035 = vmatpush2.bf16.msra.mxu0 %v6380
          %7036 = vmatprep.subr.bf16.mxu0 %v6378
          %7037 = vmatpush2.bf16.msra.mxu0 %v6377
          %7038 = vmatprep.subr.bf16.mxu0 %v6375
          %7039 = vmatpush2.bf16.msra.mxu0 %v6374
          %7040 = vmatprep.subr.bf16.mxu0 %v6372
          %7041 = vmatpush2.bf16.msra.mxu0 %v6371
          %7042 = vmatprep.subr.bf16.mxu0 %v6369
          %7043 = vmatpush2.bf16.msra.mxu0 %v6368
          %7044 = vmatprep.subr.bf16.mxu0 %v6366
          %7045 = vmatpush2.bf16.msra.mxu0 %v6365
          %7046 = vmatprep.subr.bf16.mxu0 %v6363
          %7047 = vmatpush2.bf16.msra.mxu0 %v6362
          %7048 = vmatprep.mubr.bf16.mxu0 %v4351
          %7049 = vmatmul.mubr.bf16.gmra.mxu0 %v4350
          %v7050 = vpop.f32.mrf.mxu0
          %v7051 = vadd.f32 %v7010, %v7050
          %v7052 = vpop.f32.mrf.mxu0
          %v7053 = vadd.f32 %v7012, %v7052
          %v7054 = vpop.f32.mrf.mxu0
          %v7055 = vpop.f32.mrf.mxu0
          %7056 = vdwg.mxu0
          %7057 = vmatprep.subr.bf16.mxu0 %v6408
          %7058 = vmatpush1.bf16.msra.mxu0 %v6407
          %7059 = vmatprep.subr.bf16.mxu0 %v6405
          %7060 = vmatpush1.bf16.msra.mxu0 %v6404
          %7061 = vmatprep.subr.bf16.mxu0 %v6402
          %7062 = vmatpush1.bf16.msra.mxu0 %v6401
          %7063 = vmatprep.subr.bf16.mxu0 %v6399
          %7064 = vmatpush1.bf16.msra.mxu0 %v6398
          %7065 = vmatprep.subr.bf16.mxu0 %v6396
          %7066 = vmatpush1.bf16.msra.mxu0 %v6395
          %7067 = vmatprep.subr.bf16.mxu0 %v6393
          %7068 = vmatpush1.bf16.msra.mxu0 %v6392
          %7069 = vmatprep.subr.bf16.mxu0 %v6390
          %7070 = vmatpush1.bf16.msra.mxu0 %v6389
          %7071 = vmatprep.subr.bf16.mxu0 %v6387
          %7072 = vmatpush1.bf16.msra.mxu0 %v6386
          %7073 = vmatprep.subr.bf16.mxu0 0
          %7074 = vmatpush2.bf16.msra.mxu0 0
          %7075 = vmatprep.subr.bf16.mxu0 0
          %7076 = vmatpush2.bf16.msra.mxu0 0
          %7077 = vmatprep.subr.bf16.mxu0 0
          %7078 = vmatpush2.bf16.msra.mxu0 0
          %7079 = vmatprep.subr.bf16.mxu0 0
          %7080 = vmatpush2.bf16.msra.mxu0 0
          %7081 = vmatprep.subr.bf16.mxu0 0
          %7082 = vmatpush2.bf16.msra.mxu0 0
          %7083 = vmatprep.subr.bf16.mxu0 0
          %7084 = vmatpush2.bf16.msra.mxu0 0
          %7085 = vmatprep.subr.bf16.mxu0 0
          %7086 = vmatpush2.bf16.msra.mxu0 0
          %7087 = vmatprep.subr.bf16.mxu0 0
          %7088 = vmatpush2.bf16.msra.mxu0 0
          %7089 = vmatprep.mubr.bf16.mxu0 0
          %7090 = vmatmul.mubr.bf16.gmra.mxu0 %v4352
          %v7091 = vpop.f32.mrf.mxu0
          %v7092 = vadd.f32 %v7051, %v7091
          %v7093 = vpop.f32.mrf.mxu0
          %v7094 = vadd.f32 %v7053, %v7093
          %v7095 = vpop.f32.mrf.mxu0
          %v7096 = vpop.f32.mrf.mxu0
          %7097 = vdwg.mxu0
          %7098 = vmatprep.subr.bf16.mxu0 0
          %7099 = vmatpush1.bf16.msra.mxu0 %v6073
          %7100 = vmatprep.subr.bf16.mxu0 0
          %7101 = vmatpush1.bf16.msra.mxu0 %v6070
          %7102 = vmatprep.subr.bf16.mxu0 0
          %7103 = vmatpush1.bf16.msra.mxu0 %v6067
          %7104 = vmatprep.subr.bf16.mxu0 0
          %7105 = vmatpush1.bf16.msra.mxu0 %v6064
          %7106 = vmatprep.subr.bf16.mxu0 0
          %7107 = vmatpush1.bf16.msra.mxu0 %v6061
          %7108 = vmatprep.subr.bf16.mxu0 0
          %7109 = vmatpush1.bf16.msra.mxu0 %v6058
          %7110 = vmatprep.subr.bf16.mxu0 0
          %7111 = vmatpush1.bf16.msra.mxu0 %v6055
          %7112 = vmatprep.subr.bf16.mxu0 0
          %7113 = vmatpush1.bf16.msra.mxu0 %v6052
          %7114 = vmatprep.subr.bf16.mxu0 0
          %7115 = vmatpush2.bf16.msra.mxu0 %v6097
          %7116 = vmatprep.subr.bf16.mxu0 0
          %7117 = vmatpush2.bf16.msra.mxu0 %v6094
          %7118 = vmatprep.subr.bf16.mxu0 0
          %7119 = vmatpush2.bf16.msra.mxu0 %v6091
          %7120 = vmatprep.subr.bf16.mxu0 0
          %7121 = vmatpush2.bf16.msra.mxu0 %v6088
          %7122 = vmatprep.subr.bf16.mxu0 0
          %7123 = vmatpush2.bf16.msra.mxu0 %v6085
          %7124 = vmatprep.subr.bf16.mxu0 0
          %7125 = vmatpush2.bf16.msra.mxu0 %v6082
          %7126 = vmatprep.subr.bf16.mxu0 0
          %7127 = vmatpush2.bf16.msra.mxu0 %v6079
          %7128 = vmatprep.subr.bf16.mxu0 0
          %7129 = vmatpush2.bf16.msra.mxu0 %v6076
          %7130 = vmatprep.mubr.bf16.mxu0 %v4339
          %7131 = vmatmul.mubr.bf16.gmra.mxu0 %v4338
          %v7132 = vpop.f32.mrf.mxu0
          %v7133 = vadd.f32 %v4846, %v7132
          %v7134 = vpop.f32.mrf.mxu0
          %v7135 = vpop.f32.mrf.mxu0
          %v7136 = vpop.f32.mrf.mxu0
          %7137 = vdwg.mxu0
          %7138 = vmatprep.subr.bf16.mxu0 0
          %7139 = vmatpush1.bf16.msra.mxu0 %v6121
          %7140 = vmatprep.subr.bf16.mxu0 0
          %7141 = vmatpush1.bf16.msra.mxu0 %v6118
          %7142 = vmatprep.subr.bf16.mxu0 0
          %7143 = vmatpush1.bf16.msra.mxu0 %v6115
          %7144 = vmatprep.subr.bf16.mxu0 0
          %7145 = vmatpush1.bf16.msra.mxu0 %v6112
          %7146 = vmatprep.subr.bf16.mxu0 0
          %7147 = vmatpush1.bf16.msra.mxu0 %v6109
          %7148 = vmatprep.subr.bf16.mxu0 0
          %7149 = vmatpush1.bf16.msra.mxu0 %v6106
          %7150 = vmatprep.subr.bf16.mxu0 0
          %7151 = vmatpush1.bf16.msra.mxu0 %v6103
          %7152 = vmatprep.subr.bf16.mxu0 0
          %7153 = vmatpush1.bf16.msra.mxu0 %v6100
          %7154 = vmatprep.subr.bf16.mxu0 0
          %7155 = vmatpush2.bf16.msra.mxu0 %v6145
          %7156 = vmatprep.subr.bf16.mxu0 0
          %7157 = vmatpush2.bf16.msra.mxu0 %v6142
          %7158 = vmatprep.subr.bf16.mxu0 0
          %7159 = vmatpush2.bf16.msra.mxu0 %v6139
          %7160 = vmatprep.subr.bf16.mxu0 0
          %7161 = vmatpush2.bf16.msra.mxu0 %v6136
          %7162 = vmatprep.subr.bf16.mxu0 0
          %7163 = vmatpush2.bf16.msra.mxu0 %v6133
          %7164 = vmatprep.subr.bf16.mxu0 0
          %7165 = vmatpush2.bf16.msra.mxu0 %v6130
          %7166 = vmatprep.subr.bf16.mxu0 0
          %7167 = vmatpush2.bf16.msra.mxu0 %v6127
          %7168 = vmatprep.subr.bf16.mxu0 0
          %7169 = vmatpush2.bf16.msra.mxu0 %v6124
          %7170 = vmatprep.mubr.bf16.mxu0 %v4341
          %7171 = vmatmul.mubr.bf16.gmra.mxu0 %v4340
          %v7172 = vpop.f32.mrf.mxu0
          %v7173 = vadd.f32 %v7133, %v7172
          %v7174 = vpop.f32.mrf.mxu0
          %v7175 = vpop.f32.mrf.mxu0
          %v7176 = vpop.f32.mrf.mxu0
          %7177 = vdwg.mxu0
          %7178 = vmatprep.subr.bf16.mxu0 0
          %7179 = vmatpush1.bf16.msra.mxu0 %v6169
          %7180 = vmatprep.subr.bf16.mxu0 0
          %7181 = vmatpush1.bf16.msra.mxu0 %v6166
          %7182 = vmatprep.subr.bf16.mxu0 0
          %7183 = vmatpush1.bf16.msra.mxu0 %v6163
          %7184 = vmatprep.subr.bf16.mxu0 0
          %7185 = vmatpush1.bf16.msra.mxu0 %v6160
          %7186 = vmatprep.subr.bf16.mxu0 0
          %7187 = vmatpush1.bf16.msra.mxu0 %v6157
          %7188 = vmatprep.subr.bf16.mxu0 0
          %7189 = vmatpush1.bf16.msra.mxu0 %v6154
          %7190 = vmatprep.subr.bf16.mxu0 0
          %7191 = vmatpush1.bf16.msra.mxu0 %v6151
          %7192 = vmatprep.subr.bf16.mxu0 0
          %7193 = vmatpush1.bf16.msra.mxu0 %v6148
          %7194 = vmatprep.subr.bf16.mxu0 0
          %7195 = vmatpush2.bf16.msra.mxu0 %v6193
          %7196 = vmatprep.subr.bf16.mxu0 0
          %7197 = vmatpush2.bf16.msra.mxu0 %v6190
          %7198 = vmatprep.subr.bf16.mxu0 0
          %7199 = vmatpush2.bf16.msra.mxu0 %v6187
          %7200 = vmatprep.subr.bf16.mxu0 0
          %7201 = vmatpush2.bf16.msra.mxu0 %v6184
          %7202 = vmatprep.subr.bf16.mxu0 0
          %7203 = vmatpush2.bf16.msra.mxu0 %v6181
          %7204 = vmatprep.subr.bf16.mxu0 0
          %7205 = vmatpush2.bf16.msra.mxu0 %v6178
          %7206 = vmatprep.subr.bf16.mxu0 0
          %7207 = vmatpush2.bf16.msra.mxu0 %v6175
          %7208 = vmatprep.subr.bf16.mxu0 0
          %7209 = vmatpush2.bf16.msra.mxu0 %v6172
          %7210 = vmatprep.mubr.bf16.mxu0 %v4343
          %7211 = vmatmul.mubr.bf16.gmra.mxu0 %v4342
          %v7212 = vpop.f32.mrf.mxu0
          %v7213 = vadd.f32 %v7173, %v7212
          %v7214 = vpop.f32.mrf.mxu0
          %v7215 = vpop.f32.mrf.mxu0
          %v7216 = vpop.f32.mrf.mxu0
          %7217 = vdwg.mxu0
          %7218 = vmatprep.subr.bf16.mxu0 0
          %7219 = vmatpush1.bf16.msra.mxu0 %v6217
          %7220 = vmatprep.subr.bf16.mxu0 0
          %7221 = vmatpush1.bf16.msra.mxu0 %v6214
          %7222 = vmatprep.subr.bf16.mxu0 0
          %7223 = vmatpush1.bf16.msra.mxu0 %v6211
          %7224 = vmatprep.subr.bf16.mxu0 0
          %7225 = vmatpush1.bf16.msra.mxu0 %v6208
          %7226 = vmatprep.subr.bf16.mxu0 0
          %7227 = vmatpush1.bf16.msra.mxu0 %v6205
          %7228 = vmatprep.subr.bf16.mxu0 0
          %7229 = vmatpush1.bf16.msra.mxu0 %v6202
          %7230 = vmatprep.subr.bf16.mxu0 0
          %7231 = vmatpush1.bf16.msra.mxu0 %v6199
          %7232 = vmatprep.subr.bf16.mxu0 0
          %7233 = vmatpush1.bf16.msra.mxu0 %v6196
          %7234 = vmatprep.subr.bf16.mxu0 0
          %7235 = vmatpush2.bf16.msra.mxu0 %v6241
          %7236 = vmatprep.subr.bf16.mxu0 0
          %7237 = vmatpush2.bf16.msra.mxu0 %v6238
          %7238 = vmatprep.subr.bf16.mxu0 0
          %7239 = vmatpush2.bf16.msra.mxu0 %v6235
          %7240 = vmatprep.subr.bf16.mxu0 0
          %7241 = vmatpush2.bf16.msra.mxu0 %v6232
          %7242 = vmatprep.subr.bf16.mxu0 0
          %7243 = vmatpush2.bf16.msra.mxu0 %v6229
          %7244 = vmatprep.subr.bf16.mxu0 0
          %7245 = vmatpush2.bf16.msra.mxu0 %v6226
          %7246 = vmatprep.subr.bf16.mxu0 0
          %7247 = vmatpush2.bf16.msra.mxu0 %v6223
          %7248 = vmatprep.subr.bf16.mxu0 0
          %7249 = vmatpush2.bf16.msra.mxu0 %v6220
          %7250 = vmatprep.mubr.bf16.mxu0 %v4345
          %7251 = vmatmul.mubr.bf16.gmra.mxu0 %v4344
          %v7252 = vpop.f32.mrf.mxu0
          %v7253 = vadd.f32 %v7213, %v7252
          %v7254 = vpop.f32.mrf.mxu0
          %v7255 = vpop.f32.mrf.mxu0
          %v7256 = vpop.f32.mrf.mxu0
          %7257 = vdwg.mxu0
          %7258 = vmatprep.subr.bf16.mxu0 0
          %7259 = vmatpush1.bf16.msra.mxu0 %v6265
          %7260 = vmatprep.subr.bf16.mxu0 0
          %7261 = vmatpush1.bf16.msra.mxu0 %v6262
          %7262 = vmatprep.subr.bf16.mxu0 0
          %7263 = vmatpush1.bf16.msra.mxu0 %v6259
          %7264 = vmatprep.subr.bf16.mxu0 0
          %7265 = vmatpush1.bf16.msra.mxu0 %v6256
          %7266 = vmatprep.subr.bf16.mxu0 0
          %7267 = vmatpush1.bf16.msra.mxu0 %v6253
          %7268 = vmatprep.subr.bf16.mxu0 0
          %7269 = vmatpush1.bf16.msra.mxu0 %v6250
          %7270 = vmatprep.subr.bf16.mxu0 0
          %7271 = vmatpush1.bf16.msra.mxu0 %v6247
          %7272 = vmatprep.subr.bf16.mxu0 0
          %7273 = vmatpush1.bf16.msra.mxu0 %v6244
          %7274 = vmatprep.subr.bf16.mxu0 0
          %7275 = vmatpush2.bf16.msra.mxu0 %v6289
          %7276 = vmatprep.subr.bf16.mxu0 0
          %7277 = vmatpush2.bf16.msra.mxu0 %v6286
          %7278 = vmatprep.subr.bf16.mxu0 0
          %7279 = vmatpush2.bf16.msra.mxu0 %v6283
          %7280 = vmatprep.subr.bf16.mxu0 0
          %7281 = vmatpush2.bf16.msra.mxu0 %v6280
          %7282 = vmatprep.subr.bf16.mxu0 0
          %7283 = vmatpush2.bf16.msra.mxu0 %v6277
          %7284 = vmatprep.subr.bf16.mxu0 0
          %7285 = vmatpush2.bf16.msra.mxu0 %v6274
          %7286 = vmatprep.subr.bf16.mxu0 0
          %7287 = vmatpush2.bf16.msra.mxu0 %v6271
          %7288 = vmatprep.subr.bf16.mxu0 0
          %7289 = vmatpush2.bf16.msra.mxu0 %v6268
          %7290 = vmatprep.mubr.bf16.mxu0 %v4347
          %7291 = vmatmul.mubr.bf16.gmra.mxu0 %v4346
          %v7292 = vpop.f32.mrf.mxu0
          %v7293 = vadd.f32 %v7253, %v7292
          %v7294 = vpop.f32.mrf.mxu0
          %v7295 = vpop.f32.mrf.mxu0
          %v7296 = vpop.f32.mrf.mxu0
          %7297 = vdwg.mxu0
          %7298 = vmatprep.subr.bf16.mxu0 0
          %7299 = vmatpush1.bf16.msra.mxu0 %v6313
          %7300 = vmatprep.subr.bf16.mxu0 0
          %7301 = vmatpush1.bf16.msra.mxu0 %v6310
          %7302 = vmatprep.subr.bf16.mxu0 0
          %7303 = vmatpush1.bf16.msra.mxu0 %v6307
          %7304 = vmatprep.subr.bf16.mxu0 0
          %7305 = vmatpush1.bf16.msra.mxu0 %v6304
          %7306 = vmatprep.subr.bf16.mxu0 0
          %7307 = vmatpush1.bf16.msra.mxu0 %v6301
          %7308 = vmatprep.subr.bf16.mxu0 0
          %7309 = vmatpush1.bf16.msra.mxu0 %v6298
          %7310 = vmatprep.subr.bf16.mxu0 0
          %7311 = vmatpush1.bf16.msra.mxu0 %v6295
          %7312 = vmatprep.subr.bf16.mxu0 0
          %7313 = vmatpush1.bf16.msra.mxu0 %v6292
          %7314 = vmatprep.subr.bf16.mxu0 0
          %7315 = vmatpush2.bf16.msra.mxu0 %v6337
          %7316 = vmatprep.subr.bf16.mxu0 0
          %7317 = vmatpush2.bf16.msra.mxu0 %v6334
          %7318 = vmatprep.subr.bf16.mxu0 0
          %7319 = vmatpush2.bf16.msra.mxu0 %v6331
          %7320 = vmatprep.subr.bf16.mxu0 0
          %7321 = vmatpush2.bf16.msra.mxu0 %v6328
          %7322 = vmatprep.subr.bf16.mxu0 0
          %7323 = vmatpush2.bf16.msra.mxu0 %v6325
          %7324 = vmatprep.subr.bf16.mxu0 0
          %7325 = vmatpush2.bf16.msra.mxu0 %v6322
          %7326 = vmatprep.subr.bf16.mxu0 0
          %7327 = vmatpush2.bf16.msra.mxu0 %v6319
          %7328 = vmatprep.subr.bf16.mxu0 0
          %7329 = vmatpush2.bf16.msra.mxu0 %v6316
          %7330 = vmatprep.mubr.bf16.mxu0 %v4349
          %7331 = vmatmul.mubr.bf16.gmra.mxu0 %v4348
          %v7332 = vpop.f32.mrf.mxu0
          %v7333 = vadd.f32 %v7293, %v7332
          %v7334 = vpop.f32.mrf.mxu0
          %v7335 = vpop.f32.mrf.mxu0
          %v7336 = vpop.f32.mrf.mxu0
          %7337 = vdwg.mxu0
          %7338 = vmatprep.subr.bf16.mxu0 0
          %7339 = vmatpush1.bf16.msra.mxu0 %v6361
          %7340 = vmatprep.subr.bf16.mxu0 0
          %7341 = vmatpush1.bf16.msra.mxu0 %v6358
          %7342 = vmatprep.subr.bf16.mxu0 0
          %7343 = vmatpush1.bf16.msra.mxu0 %v6355
          %7344 = vmatprep.subr.bf16.mxu0 0
          %7345 = vmatpush1.bf16.msra.mxu0 %v6352
          %7346 = vmatprep.subr.bf16.mxu0 0
          %7347 = vmatpush1.bf16.msra.mxu0 %v6349
          %7348 = vmatprep.subr.bf16.mxu0 0
          %7349 = vmatpush1.bf16.msra.mxu0 %v6346
          %7350 = vmatprep.subr.bf16.mxu0 0
          %7351 = vmatpush1.bf16.msra.mxu0 %v6343
          %7352 = vmatprep.subr.bf16.mxu0 0
          %7353 = vmatpush1.bf16.msra.mxu0 %v6340
          %7354 = vmatprep.subr.bf16.mxu0 0
          %7355 = vmatpush2.bf16.msra.mxu0 %v6385
          %7356 = vmatprep.subr.bf16.mxu0 0
          %7357 = vmatpush2.bf16.msra.mxu0 %v6382
          %7358 = vmatprep.subr.bf16.mxu0 0
          %7359 = vmatpush2.bf16.msra.mxu0 %v6379
          %7360 = vmatprep.subr.bf16.mxu0 0
          %7361 = vmatpush2.bf16.msra.mxu0 %v6376
          %7362 = vmatprep.subr.bf16.mxu0 0
          %7363 = vmatpush2.bf16.msra.mxu0 %v6373
          %7364 = vmatprep.subr.bf16.mxu0 0
          %7365 = vmatpush2.bf16.msra.mxu0 %v6370
          %7366 = vmatprep.subr.bf16.mxu0 0
          %7367 = vmatpush2.bf16.msra.mxu0 %v6367
          %7368 = vmatprep.subr.bf16.mxu0 0
          %7369 = vmatpush2.bf16.msra.mxu0 %v6364
          %7370 = vmatprep.mubr.bf16.mxu0 %v4351
          %7371 = vmatmul.mubr.bf16.gmra.mxu0 %v4350
          %v7372 = vpop.f32.mrf.mxu0
          %v7373 = vadd.f32 %v7333, %v7372
          %v7374 = vpop.f32.mrf.mxu0
          %v7375 = vpop.f32.mrf.mxu0
          %v7376 = vpop.f32.mrf.mxu0
          %7377 = vdwg.mxu0
          %7378 = vmatprep.subr.bf16.mxu0 0
          %7379 = vmatpush1.bf16.msra.mxu0 %v6409
          %7380 = vmatprep.subr.bf16.mxu0 0
          %7381 = vmatpush1.bf16.msra.mxu0 %v6406
          %7382 = vmatprep.subr.bf16.mxu0 0
          %7383 = vmatpush1.bf16.msra.mxu0 %v6403
          %7384 = vmatprep.subr.bf16.mxu0 0
          %7385 = vmatpush1.bf16.msra.mxu0 %v6400
          %7386 = vmatprep.subr.bf16.mxu0 0
          %7387 = vmatpush1.bf16.msra.mxu0 %v6397
          %7388 = vmatprep.subr.bf16.mxu0 0
          %7389 = vmatpush1.bf16.msra.mxu0 %v6394
          %7390 = vmatprep.subr.bf16.mxu0 0
          %7391 = vmatpush1.bf16.msra.mxu0 %v6391
          %7392 = vmatprep.subr.bf16.mxu0 0
          %7393 = vmatpush1.bf16.msra.mxu0 %v6388
          %7394 = vmatprep.subr.bf16.mxu0 0
          %7395 = vmatpush2.bf16.msra.mxu0 0
          %7396 = vmatprep.subr.bf16.mxu0 0
          %7397 = vmatpush2.bf16.msra.mxu0 0
          %7398 = vmatprep.subr.bf16.mxu0 0
          %7399 = vmatpush2.bf16.msra.mxu0 0
          %7400 = vmatprep.subr.bf16.mxu0 0
          %7401 = vmatpush2.bf16.msra.mxu0 0
          %7402 = vmatprep.subr.bf16.mxu0 0
          %7403 = vmatpush2.bf16.msra.mxu0 0
          %7404 = vmatprep.subr.bf16.mxu0 0
          %7405 = vmatpush2.bf16.msra.mxu0 0
          %7406 = vmatprep.subr.bf16.mxu0 0
          %7407 = vmatpush2.bf16.msra.mxu0 0
          %7408 = vmatprep.subr.bf16.mxu0 0
          %7409 = vmatpush2.bf16.msra.mxu0 0
          %7410 = vmatprep.mubr.bf16.mxu0 0
          %7411 = vmatmul.mubr.bf16.gmra.mxu0 %v4352
          %v7412 = vpop.f32.mrf.mxu0
          %v7413 = vadd.f32 %v7373, %v7412
          %v7414 = vpop.f32.mrf.mxu0
          %v7415 = vpop.f32.mrf.mxu0
          %v7416 = vpop.f32.mrf.mxu0
          %7417 = vdwg.mxu0
          %v7418 = vmax.f32 %v7092, 0.0
          %v7419 = vmax.f32 %v7094, 0.0
          %v7420 = vmax.f32 %v7413, 0.0
          %v7421 = vpack.c.bf16 %v7418, %v7418
          %v7422 = vpack.c.bf16 %v7419, %v7419
          %v7423 = vpack.c.bf16 %v7420, %v7420
          %v7424 = vld [vmem:[#allocation11] sm:$0xf]
          %v7425 = vld [vmem:[#allocation11 + $0x4] sm:$0xf]
          %v7426 = vld [vmem:[#allocation11 + $0x8] sm:$0xf]
          %v7427 = vld [vmem:[#allocation11 + $0xc] sm:$0xf]
          %v7428 = vld [vmem:[#allocation11 + $0x10] sm:$0xf]
          %v7429 = vld [vmem:[#allocation11 + $0x14] sm:$0xf]
          %v7430 = vld [vmem:[#allocation11 + $0x18] sm:$0xf]
          %v7431 = vld [vmem:[#allocation11 + $0x1c] sm:$0xf]
          %v7432 = vld [vmem:[#allocation11 + $0x20] sm:$0xf]
          %v7433 = vld [vmem:[#allocation11 + $0x24] sm:$0xf]
          %v7434 = vld [vmem:[#allocation11 + $0x28] sm:$0xf]
          %v7435 = vld [vmem:[#allocation11 + $0x2c] sm:$0xf]
          %v7436 = vld [vmem:[#allocation11 + $0x30] sm:$0xf]
          %v7437 = vld [vmem:[#allocation11 + $0x34] sm:$0xf]
          %v7438 = vld [vmem:[#allocation11 + $0x38] sm:$0xf]
          %v7439 = vld [vmem:[#allocation11 + $0x3c] sm:$0xf]
          %v7440 = vld [vmem:[#allocation11 + $0x40] sm:$0xf]
          %v7441 = vld [vmem:[#allocation11 + $0x44] sm:$0xf]
          %v7442 = vld [vmem:[#allocation11 + $0x48] sm:$0xf]
          %v7443 = vld [vmem:[#allocation11 + $0x4c] sm:$0xf]
          %v7444 = vld [vmem:[#allocation11 + $0x50] sm:$0xf]
          %v7445 = vld [vmem:[#allocation11 + $0x54] sm:$0xf]
          %v7446 = vld [vmem:[#allocation11 + $0x58] sm:$0xf]
          %v7447 = vld [vmem:[#allocation11 + $0x5c] sm:$0xf]
          %v7448 = vld [vmem:[#allocation11 + $0x60] sm:$0xf]
          %v7449 = vld [vmem:[#allocation11 + $0x64] sm:$0xf]
          %v7450 = vld [vmem:[#allocation11 + $0x68] sm:$0xf]
          %v7451 = vld [vmem:[#allocation11 + $0x6c] sm:$0xf]
          %v7452 = vld [vmem:[#allocation11 + $0x70] sm:$0xf]
          %v7453 = vld [vmem:[#allocation11 + $0x74] sm:$0xf]
          %v7454 = vld [vmem:[#allocation11 + $0x78] sm:$0xf]
          %v7455 = vld [vmem:[#allocation11 + $0x7c] sm:$0xf]
          %v7456 = vld [vmem:[#allocation11 + $0x80] sm:$0xf]
          %v7457 = vld [vmem:[#allocation11 + $0x84] sm:$0xf]
          %v7458 = vld [vmem:[#allocation11 + $0x88] sm:$0xf]
          %v7459 = vld [vmem:[#allocation11 + $0x8c] sm:$0xf]
          %v7460 = vld [vmem:[#allocation11 + $0x90] sm:$0xf]
          %v7461 = vld [vmem:[#allocation11 + $0x94] sm:$0xf]
          %v7462 = vld [vmem:[#allocation11 + $0x98] sm:$0xf]
          %v7463 = vld [vmem:[#allocation11 + $0x9c] sm:$0xf]
          %v7464 = vld [vmem:[#allocation11 + $0xa0] sm:$0xf]
          %v7465 = vld [vmem:[#allocation11 + $0xa4] sm:$0xf]
          %v7466 = vld [vmem:[#allocation11 + $0xa8] sm:$0xf]
          %v7467 = vld [vmem:[#allocation11 + $0xac] sm:$0xf]
          %v7468 = vld [vmem:[#allocation11 + $0xb0] sm:$0xf]
          %v7469 = vld [vmem:[#allocation11 + $0xb4] sm:$0xf]
          %v7470 = vld [vmem:[#allocation11 + $0xb8] sm:$0xf]
          %v7471 = vld [vmem:[#allocation11 + $0xbc] sm:$0xf]
          %v7472 = vld [vmem:[#allocation13] sm:$0x1]
          %v7474 = vlaneseq
          %v7475 = vshrl.u32 %v7474, 7
          %v7476 = vsub.s32 0, %v7475
          %v7477 = vrot.slane %v7472, %v7476
          %v7527 = vunpack.c.l.b16 %v7424
          %v7528 = vunpack.c.l.b16 %v7425
          %v7529 = vunpack.c.l.b16 %v7426
          %v7530 = vunpack.c.l.b16 %v7427
          %v7531 = vunpack.c.l.b16 %v7428
          %v7532 = vunpack.c.l.b16 %v7429
          %v7533 = vunpack.c.l.b16 %v7430
          %v7534 = vunpack.c.l.b16 %v7431
          %v7535 = vunpack.c.l.b16 %v7432
          %v7536 = vunpack.c.l.b16 %v7433
          %v7537 = vunpack.c.l.b16 %v7434
          %v7538 = vunpack.c.l.b16 %v7435
          %v7539 = vunpack.c.l.b16 %v7436
          %v7540 = vunpack.c.l.b16 %v7437
          %v7541 = vunpack.c.l.b16 %v7438
          %v7542 = vunpack.c.l.b16 %v7439
          %v7543 = vunpack.c.l.b16 %v7440
          %v7544 = vunpack.c.l.b16 %v7441
          %v7545 = vunpack.c.l.b16 %v7442
          %v7546 = vunpack.c.l.b16 %v7443
          %v7547 = vunpack.c.l.b16 %v7444
          %v7548 = vunpack.c.l.b16 %v7445
          %v7549 = vunpack.c.l.b16 %v7446
          %v7550 = vunpack.c.l.b16 %v7447
          %v7551 = vunpack.c.l.b16 %v7448
          %v7552 = vunpack.c.l.b16 %v7449
          %v7553 = vunpack.c.l.b16 %v7450
          %v7554 = vunpack.c.l.b16 %v7451
          %v7555 = vunpack.c.l.b16 %v7452
          %v7556 = vunpack.c.l.b16 %v7453
          %v7557 = vunpack.c.l.b16 %v7454
          %v7558 = vunpack.c.l.b16 %v7455
          %v7559 = vunpack.c.l.b16 %v7456
          %v7560 = vunpack.c.l.b16 %v7457
          %v7561 = vunpack.c.l.b16 %v7458
          %v7562 = vunpack.c.l.b16 %v7459
          %v7563 = vunpack.c.l.b16 %v7460
          %v7564 = vunpack.c.l.b16 %v7461
          %v7565 = vunpack.c.l.b16 %v7462
          %v7566 = vunpack.c.l.b16 %v7463
          %v7567 = vunpack.c.l.b16 %v7464
          %v7568 = vunpack.c.l.b16 %v7465
          %v7569 = vunpack.c.l.b16 %v7466
          %v7570 = vunpack.c.l.b16 %v7467
          %v7571 = vunpack.c.l.b16 %v7468
          %v7572 = vunpack.c.l.b16 %v7469
          %v7573 = vunpack.c.l.b16 %v7470
          %v7574 = vunpack.c.l.b16 %v7471
          %v7575 = vpack.c.b16 %v7528, %v7527
          %v7576 = vpack.c.b16 %v7530, %v7529
          %v7577 = vpack.c.b16 %v7532, %v7531
          %v7578 = vpack.c.b16 %v7534, %v7533
          %v7579 = vpack.c.b16 %v7536, %v7535
          %v7580 = vpack.c.b16 %v7538, %v7537
          %v7581 = vpack.c.b16 %v7540, %v7539
          %v7582 = vpack.c.b16 %v7542, %v7541
          %v7583 = vpack.c.b16 %v7544, %v7543
          %v7584 = vpack.c.b16 %v7546, %v7545
          %v7585 = vpack.c.b16 %v7548, %v7547
          %v7586 = vpack.c.b16 %v7550, %v7549
          %v7587 = vpack.c.b16 %v7552, %v7551
          %v7588 = vpack.c.b16 %v7554, %v7553
          %v7589 = vpack.c.b16 %v7556, %v7555
          %v7590 = vpack.c.b16 %v7558, %v7557
          %v7591 = vpack.c.b16 %v7560, %v7559
          %v7592 = vpack.c.b16 %v7562, %v7561
          %v7593 = vpack.c.b16 %v7564, %v7563
          %v7594 = vpack.c.b16 %v7566, %v7565
          %v7595 = vpack.c.b16 %v7568, %v7567
          %v7596 = vpack.c.b16 %v7570, %v7569
          %v7597 = vpack.c.b16 %v7572, %v7571
          %v7598 = vpack.c.b16 %v7574, %v7573
          %7623 = vmatprep.subr.bf16.mxu0 0
          %7624 = vmatpush1.bf16.msra.mxu0 %v7582
          %7625 = vmatprep.subr.bf16.mxu0 0
          %7626 = vmatpush1.bf16.msra.mxu0 %v7581
          %7627 = vmatprep.subr.bf16.mxu0 0
          %7628 = vmatpush1.bf16.msra.mxu0 %v7580
          %7629 = vmatprep.subr.bf16.mxu0 0
          %7630 = vmatpush1.bf16.msra.mxu0 %v7579
          %7631 = vmatprep.subr.bf16.mxu0 0
          %7632 = vmatpush1.bf16.msra.mxu0 %v7578
          %7633 = vmatprep.subr.bf16.mxu0 0
          %7634 = vmatpush1.bf16.msra.mxu0 %v7577
          %7635 = vmatprep.subr.bf16.mxu0 0
          %7636 = vmatpush1.bf16.msra.mxu0 %v7576
          %7637 = vmatprep.subr.bf16.mxu0 0
          %7638 = vmatpush1.bf16.msra.mxu0 %v7575
          %7639 = vmatprep.subr.bf16.mxu0 0
          %7640 = vmatpush2.bf16.msra.mxu0 %v7590
          %7641 = vmatprep.subr.bf16.mxu0 0
          %7642 = vmatpush2.bf16.msra.mxu0 %v7589
          %7643 = vmatprep.subr.bf16.mxu0 0
          %7644 = vmatpush2.bf16.msra.mxu0 %v7588
          %7645 = vmatprep.subr.bf16.mxu0 0
          %7646 = vmatpush2.bf16.msra.mxu0 %v7587
          %7647 = vmatprep.subr.bf16.mxu0 0
          %7648 = vmatpush2.bf16.msra.mxu0 %v7586
          %7649 = vmatprep.subr.bf16.mxu0 0
          %7650 = vmatpush2.bf16.msra.mxu0 %v7585
          %7651 = vmatprep.subr.bf16.mxu0 0
          %7652 = vmatpush2.bf16.msra.mxu0 %v7584
          %7653 = vmatprep.subr.bf16.mxu0 0
          %7654 = vmatpush2.bf16.msra.mxu0 %v7583
          %7655 = vmatprep.mubr.bf16.mxu0 %v7422
          %7656 = vmatmul.mubr.bf16.gmra.mxu0 %v7421
          %v7657 = vpop.f32.mrf.mxu0
          %v7658 = vadd.f32 %v7477, %v7657
          %v7659 = vpop.f32.mrf.mxu0
          %v7660 = vpop.f32.mrf.mxu0
          %v7661 = vpop.f32.mrf.mxu0
          %7662 = vdwg.mxu0
          %7663 = vmatprep.subr.bf16.mxu0 0
          %7664 = vmatpush1.bf16.msra.mxu0 %v7598
          %7665 = vmatprep.subr.bf16.mxu0 0
          %7666 = vmatpush1.bf16.msra.mxu0 %v7597
          %7667 = vmatprep.subr.bf16.mxu0 0
          %7668 = vmatpush1.bf16.msra.mxu0 %v7596
          %7669 = vmatprep.subr.bf16.mxu0 0
          %7670 = vmatpush1.bf16.msra.mxu0 %v7595
          %7671 = vmatprep.subr.bf16.mxu0 0
          %7672 = vmatpush1.bf16.msra.mxu0 %v7594
          %7673 = vmatprep.subr.bf16.mxu0 0
          %7674 = vmatpush1.bf16.msra.mxu0 %v7593
          %7675 = vmatprep.subr.bf16.mxu0 0
          %7676 = vmatpush1.bf16.msra.mxu0 %v7592
          %7677 = vmatprep.subr.bf16.mxu0 0
          %7678 = vmatpush1.bf16.msra.mxu0 %v7591
          %7679 = vmatprep.subr.bf16.mxu0 0
          %7680 = vmatpush2.bf16.msra.mxu0 0
          %7681 = vmatprep.subr.bf16.mxu0 0
          %7682 = vmatpush2.bf16.msra.mxu0 0
          %7683 = vmatprep.subr.bf16.mxu0 0
          %7684 = vmatpush2.bf16.msra.mxu0 0
          %7685 = vmatprep.subr.bf16.mxu0 0
          %7686 = vmatpush2.bf16.msra.mxu0 0
          %7687 = vmatprep.subr.bf16.mxu0 0
          %7688 = vmatpush2.bf16.msra.mxu0 0
          %7689 = vmatprep.subr.bf16.mxu0 0
          %7690 = vmatpush2.bf16.msra.mxu0 0
          %7691 = vmatprep.subr.bf16.mxu0 0
          %7692 = vmatpush2.bf16.msra.mxu0 0
          %7693 = vmatprep.subr.bf16.mxu0 0
          %7694 = vmatpush2.bf16.msra.mxu0 0
          %7695 = vmatprep.mubr.bf16.mxu0 0
          %7696 = vmatmul.mubr.bf16.gmra.mxu0 %v7423
          %v7697 = vpop.f32.mrf.mxu0
          %v7698 = vadd.f32 %v7658, %v7697
          %v7699 = vpop.f32.mrf.mxu0
          %v7700 = vpop.f32.mrf.mxu0
          %v7701 = vpop.f32.mrf.mxu0
          %7702 = vdwg.mxu0
          %v7703 = vmax.f32 %v7698, 0.0
          %v7704 = vpack.c.bf16 %v7703, %v7703
          %v7705 = vld [vmem:[#allocation14] sm:$0xf]
          %v7706 = vld [vmem:[#allocation14 + $0x4] sm:$0xf]
          %v7707 = vld [vmem:[#allocation14 + $0x8] sm:$0xf]
          %v7708 = vld [vmem:[#allocation14 + $0xc] sm:$0xf]
          %v7709 = vld [vmem:[#allocation14 + $0x10] sm:$0xf]
          %v7710 = vld [vmem:[#allocation14 + $0x14] sm:$0xf]
          %v7711 = vld [vmem:[#allocation14 + $0x18] sm:$0xf]
          %v7712 = vld [vmem:[#allocation14 + $0x1c] sm:$0xf]
          %v7713 = vld [vmem:[#allocation14 + $0x20] sm:$0xf]
          %v7714 = vld [vmem:[#allocation14 + $0x24] sm:$0xf]
          %v7715 = vld [vmem:[#allocation14 + $0x28] sm:$0xf]
          %v7716 = vld [vmem:[#allocation14 + $0x2c] sm:$0xf]
          %v7717 = vld [vmem:[#allocation14 + $0x30] sm:$0xf]
          %v7718 = vld [vmem:[#allocation14 + $0x34] sm:$0xf]
          %v7719 = vld [vmem:[#allocation14 + $0x38] sm:$0xf]
          %v7720 = vld [vmem:[#allocation14 + $0x3c] sm:$0xf]
          %v7721 = vld [vmem:[#allocation16] sm:$0x1]
          %v7723 = vlaneseq
          %v7724 = vshrl.u32 %v7723, 7
          %v7725 = vsub.s32 0, %v7724
          %v7726 = vrot.slane %v7721, %v7725
          %v7744 = vunpack.c.l.b16 %v7705
          %v7745 = vunpack.c.l.b16 %v7706
          %v7746 = vunpack.c.l.b16 %v7707
          %v7747 = vunpack.c.l.b16 %v7708
          %v7748 = vunpack.c.l.b16 %v7709
          %v7749 = vunpack.c.l.b16 %v7710
          %v7750 = vunpack.c.l.b16 %v7711
          %v7751 = vunpack.c.l.b16 %v7712
          %v7752 = vunpack.c.l.b16 %v7713
          %v7753 = vunpack.c.l.b16 %v7714
          %v7754 = vunpack.c.l.b16 %v7715
          %v7755 = vunpack.c.l.b16 %v7716
          %v7756 = vunpack.c.l.b16 %v7717
          %v7757 = vunpack.c.l.b16 %v7718
          %v7758 = vunpack.c.l.b16 %v7719
          %v7759 = vunpack.c.l.b16 %v7720
          %v7760 = vpack.c.b16 %v7745, %v7744
          %v7761 = vpack.c.b16 %v7747, %v7746
          %v7762 = vpack.c.b16 %v7749, %v7748
          %v7763 = vpack.c.b16 %v7751, %v7750
          %v7764 = vpack.c.b16 %v7753, %v7752
          %v7765 = vpack.c.b16 %v7755, %v7754
          %v7766 = vpack.c.b16 %v7757, %v7756
          %v7767 = vpack.c.b16 %v7759, %v7758
          %7776 = vmatprep.subr.bf16.mxu0 0
          %7777 = vmatpush1.bf16.msra.mxu0 %v7767
          %7778 = vmatprep.subr.bf16.mxu0 0
          %7779 = vmatpush1.bf16.msra.mxu0 %v7766
          %7780 = vmatprep.subr.bf16.mxu0 0
          %7781 = vmatpush1.bf16.msra.mxu0 %v7765
          %7782 = vmatprep.subr.bf16.mxu0 0
          %7783 = vmatpush1.bf16.msra.mxu0 %v7764
          %7784 = vmatprep.subr.bf16.mxu0 0
          %7785 = vmatpush1.bf16.msra.mxu0 %v7763
          %7786 = vmatprep.subr.bf16.mxu0 0
          %7787 = vmatpush1.bf16.msra.mxu0 %v7762
          %7788 = vmatprep.subr.bf16.mxu0 0
          %7789 = vmatpush1.bf16.msra.mxu0 %v7761
          %7790 = vmatprep.subr.bf16.mxu0 0
          %7791 = vmatpush1.bf16.msra.mxu0 %v7760
          %7792 = vmatprep.subr.bf16.mxu0 0
          %7793 = vmatpush2.bf16.msra.mxu0 0
          %7794 = vmatprep.subr.bf16.mxu0 0
          %7795 = vmatpush2.bf16.msra.mxu0 0
          %7796 = vmatprep.subr.bf16.mxu0 0
          %7797 = vmatpush2.bf16.msra.mxu0 0
          %7798 = vmatprep.subr.bf16.mxu0 0
          %7799 = vmatpush2.bf16.msra.mxu0 0
          %7800 = vmatprep.subr.bf16.mxu0 0
          %7801 = vmatpush2.bf16.msra.mxu0 0
          %7802 = vmatprep.subr.bf16.mxu0 0
          %7803 = vmatpush2.bf16.msra.mxu0 0
          %7804 = vmatprep.subr.bf16.mxu0 0
          %7805 = vmatpush2.bf16.msra.mxu0 0
          %7806 = vmatprep.subr.bf16.mxu0 0
          %7807 = vmatpush2.bf16.msra.mxu0 0
          %7808 = vmatprep.mubr.bf16.mxu0 0
          %7809 = vmatmul.mubr.bf16.gmra.mxu0 %v7704
          %v7810 = vpop.f32.mrf.mxu0
          %v7811 = vadd.f32 %v7726, %v7810
          %v7812 = vpop.f32.mrf.mxu0
          %v7813 = vpop.f32.mrf.mxu0
          %v7814 = vpop.f32.mrf.mxu0
          %7815 = vdwg.mxu0
          %v7816 = vmax.f32 %v7811, 0.0
          %v7817 = vpack.c.bf16 %v7816, %v7816
          %v7818 = vld [vmem:[#allocation17] sm:$0xf]
          %v7819 = vld [vmem:[#allocation17 + $0x4] sm:$0xf]
          %v7820 = vld [vmem:[#allocation17 + $0x8] sm:$0xf]
          %v7821 = vld [vmem:[#allocation17 + $0xc] sm:$0xf]
          %v7822 = vld [vmem:[#allocation17 + $0x10] sm:$0xf]
          %v7823 = vld [vmem:[#allocation17 + $0x14] sm:$0xf]
          %v7824 = vld [vmem:[#allocation17 + $0x18] sm:$0xf]
          %v7825 = vld [vmem:[#allocation17 + $0x1c] sm:$0xf]
          %v7826 = vld [vmem:[#allocation17 + $0x20] sm:$0xf]
          %v7827 = vld [vmem:[#allocation17 + $0x24] sm:$0xf]
          %v7828 = vld [vmem:[#allocation17 + $0x28] sm:$0xf]
          %v7829 = vld [vmem:[#allocation17 + $0x2c] sm:$0xf]
          %v7830 = vld [vmem:[#allocation17 + $0x30] sm:$0xf]
          %v7831 = vld [vmem:[#allocation17 + $0x34] sm:$0xf]
          %v7832 = vld [vmem:[#allocation17 + $0x38] sm:$0xf]
          %v7833 = vld [vmem:[#allocation17 + $0x3c] sm:$0xf]
          %v7834 = vld [vmem:[#allocation19] sm:$0x1]
          %v7836 = vlaneseq
          %v7837 = vshrl.u32 %v7836, 7
          %v7838 = vsub.s32 0, %v7837
          %v7839 = vrot.slane %v7834, %v7838
          %v7857 = vunpack.c.l.b16 %v7818
          %v7858 = vunpack.c.l.b16 %v7819
          %v7859 = vunpack.c.l.b16 %v7820
          %v7860 = vunpack.c.l.b16 %v7821
          %v7861 = vunpack.c.l.b16 %v7822
          %v7862 = vunpack.c.l.b16 %v7823
          %v7863 = vunpack.c.l.b16 %v7824
          %v7864 = vunpack.c.l.b16 %v7825
          %v7865 = vunpack.c.l.b16 %v7826
          %v7866 = vunpack.c.l.b16 %v7827
          %v7867 = vunpack.c.l.b16 %v7828
          %v7868 = vunpack.c.l.b16 %v7829
          %v7869 = vunpack.c.l.b16 %v7830
          %v7870 = vunpack.c.l.b16 %v7831
          %v7871 = vunpack.c.l.b16 %v7832
          %v7872 = vunpack.c.l.b16 %v7833
          %v7873 = vpack.c.b16 %v7858, %v7857
          %v7874 = vpack.c.b16 %v7860, %v7859
          %v7875 = vpack.c.b16 %v7862, %v7861
          %v7876 = vpack.c.b16 %v7864, %v7863
          %v7877 = vpack.c.b16 %v7866, %v7865
          %v7878 = vpack.c.b16 %v7868, %v7867
          %v7879 = vpack.c.b16 %v7870, %v7869
          %v7880 = vpack.c.b16 %v7872, %v7871
          %7889 = vmatprep.subr.bf16.mxu0 0
          %7890 = vmatpush1.bf16.msra.mxu0 %v7880
          %7891 = vmatprep.subr.bf16.mxu0 0
          %7892 = vmatpush1.bf16.msra.mxu0 %v7879
          %7893 = vmatprep.subr.bf16.mxu0 0
          %7894 = vmatpush1.bf16.msra.mxu0 %v7878
          %7895 = vmatprep.subr.bf16.mxu0 0
          %7896 = vmatpush1.bf16.msra.mxu0 %v7877
          %7897 = vmatprep.subr.bf16.mxu0 0
          %7898 = vmatpush1.bf16.msra.mxu0 %v7876
          %7899 = vmatprep.subr.bf16.mxu0 0
          %7900 = vmatpush1.bf16.msra.mxu0 %v7875
          %7901 = vmatprep.subr.bf16.mxu0 0
          %7902 = vmatpush1.bf16.msra.mxu0 %v7874
          %7903 = vmatprep.subr.bf16.mxu0 0
          %7904 = vmatpush1.bf16.msra.mxu0 %v7873
          %7905 = vmatprep.subr.bf16.mxu0 0
          %7906 = vmatpush2.bf16.msra.mxu0 0
          %7907 = vmatprep.subr.bf16.mxu0 0
          %7908 = vmatpush2.bf16.msra.mxu0 0
          %7909 = vmatprep.subr.bf16.mxu0 0
          %7910 = vmatpush2.bf16.msra.mxu0 0
          %7911 = vmatprep.subr.bf16.mxu0 0
          %7912 = vmatpush2.bf16.msra.mxu0 0
          %7913 = vmatprep.subr.bf16.mxu0 0
          %7914 = vmatpush2.bf16.msra.mxu0 0
          %7915 = vmatprep.subr.bf16.mxu0 0
          %7916 = vmatpush2.bf16.msra.mxu0 0
          %7917 = vmatprep.subr.bf16.mxu0 0
          %7918 = vmatpush2.bf16.msra.mxu0 0
          %7919 = vmatprep.subr.bf16.mxu0 0
          %7920 = vmatpush2.bf16.msra.mxu0 0
          %7921 = vmatprep.mubr.bf16.mxu0 0
          %7922 = vmatmul.mubr.bf16.gmra.mxu0 %v7817
          %v7923 = vpop.f32.mrf.mxu0
          %v7924 = vadd.f32 %v7839, %v7923
          %v7925 = vpop.f32.mrf.mxu0
          %v7926 = vpop.f32.mrf.mxu0
          %v7927 = vpop.f32.mrf.mxu0
          %7928 = vdwg.mxu0
          %v7929 = vmax.f32 %v7924, 0.0
          %v7930 = vxor.u32 %v7929, 2147483648
          %v7931 = vmul.f32 %v7930, 1.442695
          %v7932 = vpow.pop %v7931
          %v7933 = vadd.f32 %v7932, 1.0
          %v7934 = vrcp.pop %v7933
          %v7935 = vmul.f32 1.0, %v7934
          %7936 = vst [vmem:[%s12] sm:$0xff] %v7935
        $region120: #{classify_forward.1} parent=67 // pred_fallthru
          _
        // Predicated region
        $region121: #{classify_forward.1} parent=67 // pred_check
          %p7937 = pneg %p306
        $region122: #{classify_forward.1} parent=67 // pred_check_branch
          %7939 = sbr.rel (%p7937) target = $region124
        $region123: #{classify_forward.1} parent=67 // pred_region
          _
        $region124: #{classify_forward.1} parent=67 // pred_fallthru
          _
        // Predicated region
        $region125: #{classify_forward.1} parent=67 // pred_check
          %p7940 = pneg %p306
        $region126: #{classify_forward.1} parent=67 // pred_check_branch
          %7942 = sbr.rel (%p7940) target = $region128
        $region127: #{classify_forward.1} parent=67 // pred_region
          _
        $region128: #{classify_forward.1} parent=67 // pred_fallthru
          _
      $region68: #{classify_forward.1} parent=5 // pred_fallthru
        _
      %p7943 = scmp.le.s32.totalorder 2, %s26
      // Predicated region
      $region129: #{classify_forward.1} parent=5 // pred_check
        %p7944 = pneg %p7943
      $region130: #{classify_forward.1} parent=5 // pred_check_branch
        %7946 = sbr.rel (%p7944) target = $region132
      $region131: #{classify_forward.1} parent=5 // pred_region
        %s7947 = ssub.s32 %s26, 2
      $region132: #{classify_forward.1} parent=5 // pred_fallthru
        _
    $region6: #{classify_forward.1} parent=1 // loop_footer
      %s30 = sadd.s32 1, %s26
    $region7: #{classify_forward.1} parent=1 // loop_footer_branch
      %25 = sbr.rel target = $region3
    $region8: #{classify_forward.1} parent=1 // loop_exit
      _
    %7948 = vsyncpa [#allocation4], 1
    %s7949 = scalar_lea.sflag [#allocation4], 1
    %7950 = vsyncpa %s7949, 1
    %7951 = vsyncpa [#allocation6], 1
    %7952 = vsyncpa [#allocation9], 1
    %7953 = vsyncpa [#allocation12], 1
    %7954 = vsyncpa [#allocation15], 1
    %7955 = vsyncpa [#allocation18], 1

</llo_original>
